<compile_context>
chip_gen: v6e
topology: v6e:2x2x1
jax: 0.10.0
libtpu: 0.0.40
codegen_flags: <defaults>
</compile_context>

<pallas_src>
import math
import numpy as np
import jax
import jax.numpy as jnp
from jax.experimental import pallas as pl
from jax.experimental.pallas import tpu as pltpu

# bf16 MXU inputs (accumulation, bias and outputs stay f32).  Set to
# jnp.float32 to reproduce the PyTorch f32 reference bit-closely.
MXU_DTYPE = jnp.bfloat16


# ----------------------------------------------------------------------------
# device-aware tiling policy
# ----------------------------------------------------------------------------
_NUM_TC_CACHE = None


def _num_tensorcores():
    """2 on v7x (two TensorCores/chip), 1 on v5e/v6e and anything unknown."""
    global _NUM_TC_CACHE
    if _NUM_TC_CACHE is None:
        n = 1
        try:
            kind = jax.devices()[0].device_kind.lower()
            if "v7" in kind:
                n = 2
        except Exception:
            n = 1
        _NUM_TC_CACHE = n
    return _NUM_TC_CACHE


def _pick_tm(M):
    # Never split M on single-TC chips (grid is a serial loop; ~0.35us/step of
    # pure overhead).  On v7x split only the large fused tiles so each core
    # gets a meaningful half.
    if _num_tensorcores() >= 2 and M >= 512 and M % 16 == 0:
        return M // 2
    return M


# ----------------------------------------------------------------------------
# Pallas kernels
# ----------------------------------------------------------------------------
def _matmul_bias_kernel(x_ref, w_ref, b_ref, o_ref):
    # Shared by the 2-D tiled path and the batched (leading dim squeezed) path.
    o_ref[...] = (
        jnp.dot(x_ref[...], w_ref[...], preferred_element_type=jnp.float32)
        + b_ref[...]
    ).astype(o_ref.dtype)


def matmul_bias(x, w, b):
    """x: (M,K) MXU_DTYPE, w: (K,N) MXU_DTYPE, b: (1,N) f32 -> (M,N) f32."""
    M, K = x.shape
    N = w.shape[1]
    tm = _pick_tm(M)
    return pl.pallas_call(
        _matmul_bias_kernel,
        out_shape=jax.ShapeDtypeStruct((M, N), jnp.float32),
        grid_spec=pltpu.PrefetchScalarGridSpec(
            num_scalar_prefetch=0,
            grid=(M // tm,),
            in_specs=[
                pl.BlockSpec((tm, K), lambda i: (i, 0)),
                pl.BlockSpec((K, N), lambda i: (0, 0)),
                pl.BlockSpec((1, N), lambda i: (0, 0)),
            ],
            out_specs=pl.BlockSpec((tm, N), lambda i: (i, 0)),
        ),
        compiler_params=pltpu.CompilerParams(dimension_semantics=("parallel",)),
    )(x.astype(MXU_DTYPE), w, b)


def batched_matmul_bias(x, w, b):
    """x: (G,M,K), w: (G,K,N), b: (G,1,N) -> (G,M,N); one launch, grid over G."""
    G, M, K = x.shape
    N = w.shape[2]
    return pl.pallas_call(
        _matmul_bias_kernel,
        out_shape=jax.ShapeDtypeStruct((G, M, N), jnp.float32),
        grid_spec=pltpu.PrefetchScalarGridSpec(
            num_scalar_prefetch=0,
            grid=(G,),
            in_specs=[
                pl.BlockSpec((None, M, K), lambda g: (g, 0, 0)),
                pl.BlockSpec((None, K, N), lambda g: (g, 0, 0)),
                pl.BlockSpec((None, 1, N), lambda g: (g, 0, 0)),
            ],
            out_specs=pl.BlockSpec((None, M, N), lambda g: (g, 0, 0)),
        ),
        compiler_params=pltpu.CompilerParams(dimension_semantics=("parallel",)),
    )(x.astype(MXU_DTYPE), w, b)


def _sq_sum_partial_kernel(x_ref, o_ref):
    @pl.when(pl.program_id(0) == 0)
    def _():
        o_ref[...] = jnp.zeros_like(o_ref)

    x = x_ref[...]                                  # (tile, 8, 128)
    # Leading-axis reduce = plain vector adds (VPU); cross-lane reduce stays in XLA.
    o_ref[...] = o_ref[...] + jnp.sum(x * x, axis=0)


_SQ_MAX_TILE = 256   # 256 * 8 * 128 * 4B = 1 MiB f32 per grid step


def weighted_sq_sum(v):
    """sum(v*v) of a flat f32 vector; usually one grid step, (8,128) partial."""
    n = v.shape[0]
    pad = (-n) % (8 * 128)
    if pad:
        v = jnp.pad(v, (0, pad))                    # zeros contribute 0
    m = v.reshape(-1, 8, 128)
    nblk = m.shape[0]
    tile = nblk if nblk <= _SQ_MAX_TILE else _SQ_MAX_TILE
    extra = (-nblk) % tile
    if extra:
        m = jnp.pad(m, ((0, extra), (0, 0), (0, 0)))
        nblk = m.shape[0]
    partial = pl.pallas_call(
        _sq_sum_partial_kernel,
        out_shape=jax.ShapeDtypeStruct((8, 128), jnp.float32),
        grid_spec=pltpu.PrefetchScalarGridSpec(
            num_scalar_prefetch=0,
            grid=(nblk // tile,),
            in_specs=[pl.BlockSpec((tile, 8, 128), lambda i: (i, 0, 0))],
            out_specs=pl.BlockSpec((8, 128), lambda i: (0, 0)),
        ),
        compiler_params=pltpu.CompilerParams(dimension_semantics=("arbitrary",)),
    )(m)
    return jnp.sum(partial)


# ----------------------------------------------------------------------------
# NHWC glue (im2col, upsample, pooling) — XLA ops feeding the Pallas matmuls
# ----------------------------------------------------------------------------
def _im2col_nhwc(x, k, stride, pad, k_cols):
    """NHWC im2col in MXU_DTYPE, patch order (kh, kw, C); K zero-pad folded in."""
    B, H, W, C = x.shape
    x = x.astype(MXU_DTYPE)
    xp = jnp.pad(x, ((0, 0), (pad, pad), (pad, pad), (0, 0)))
    Ho = (H + 2 * pad - k) // stride + 1
    Wo = (W + 2 * pad - k) // stride + 1
    patches = []
    for i in range(k):
        for j in range(k):
            patches.append(xp[:, i:i + stride * Ho:stride, j:j + stride * Wo:stride, :])
    extra = k_cols - k * k * C
    if extra > 0:
        patches.append(jnp.zeros((B, Ho, Wo, extra), x.dtype))
    col = jnp.concatenate(patches, axis=-1).reshape(B * Ho * Wo, k_cols)
    return col, Ho, Wo


def _bilinear_matrix(in_size, out_size):
    m = np.zeros((out_size, in_size), np.float32)
    if out_size == 1:
        m[0, 0] = 1.0
        return m
    scale = (in_size - 1) / (out_size - 1)          # align_corners=True
    for i in range(out_size):
        src = i * scale
        i0 = min(int(np.floor(src)), in_size - 1)
        i1 = min(i0 + 1, in_size - 1)
        f = src - i0
        m[i, i0] += 1.0 - f
        m[i, i1] += f
    return m


def upsample_bilinear_nhwc(x, out_h, out_w):
    """Bilinear upsample, align_corners=True (matches nn.Upsample in the module)."""
    B, H, W, C = x.shape
    Mh = jnp.asarray(_bilinear_matrix(H, out_h))
    Mw = jnp.asarray(_bilinear_matrix(W, out_w))
    return jnp.einsum('bhwc,Hh,Ww->bHWc', x, Mh, Mw)


def avg_pool2_nhwc(x):
    B, H, W, C = x.shape
    return x.reshape(B, H // 2, 2, W // 2, 2, C).mean(axis=(2, 4))


# ----------------------------------------------------------------------------
# OctaveConv2 (frequency_transfer), fully fused across all 8 features
# ----------------------------------------------------------------------------
def octave_transfer_all(feats, ow, B):
    """All 8 OctaveConv2 calls share one weight set; batch by spatial size,
    fuse the spatial groups along M and h2h/h2l (and l2h/l2l) along N so the
    whole stage is exactly two MXU launches."""
    K_H = ow['hx_w'].shape[0]       # 640  (64*9 padded to lane multiple)
    K_L = ow['l_w'].shape[0]        # 1792 (192*9 padded to lane multiple)

    groups = {}
    for name, t in feats.items():
        groups.setdefault(t.shape[1:3], []).append(name)

    col_h, col_hp, col_l, meta = [], [], [], []
    for (H, W), names in groups.items():
        xcat = jnp.concatenate([feats[n] for n in names], axis=0)   # (nB,H,W,256)
        X_h = xcat[..., :64]
        X_l = avg_pool2_nhwc(xcat[..., 64:])
        X_hp = avg_pool2_nhwc(X_h)
        Hl, Wl = H // 2, W // 2
        ch, _, _ = _im2col_nhwc(X_h, 3, 1, 1, K_H)
        chp, _, _ = _im2col_nhwc(X_hp, 3, 1, 1, K_H)
        cl, _, _ = _im2col_nhwc(X_l, 3, 1, 1, K_L)
        col_h.append(ch); col_hp.append(chp); col_l.append(cl)
        meta.append((names, xcat.shape[0], H, W, Hl, Wl))

    # Fused h launch: rows = [all col_h | all col_hp]; cols [:64]=h2h, [64:]=h2l.
    h_all = matmul_bias(jnp.concatenate(col_h + col_hp, axis=0), ow['hx_w'], ow['hx_b'])
    # Fused l launch: cols [:64]=l2h, [64:]=l2l.
    l_all = matmul_bias(jnp.concatenate(col_l, axis=0), ow['l_w'], ow['l_b'])

    h_sizes = [c.shape[0] for c in col_h]
    hp_sizes = [c.shape[0] for c in col_hp]
    l_sizes = [c.shape[0] for c in col_l]

    h_out, l_out = {}, {}
    oh, ohp, ol = 0, int(np.sum(h_sizes)), 0
    for g, (names, n, H, W, Hl, Wl) in enumerate(meta):
        X_h2h = h_all[oh:oh + h_sizes[g], :64].reshape(n, H, W, 64)
        X_h2l = h_all[ohp:ohp + hp_sizes[g], 64:].reshape(n, Hl, Wl, 192)
        lblk = l_all[ol:ol + l_sizes[g]]
        X_l2h = lblk[:, :64].reshape(n, Hl, Wl, 64)
        X_l2l = lblk[:, 64:].reshape(n, Hl, Wl, 192)
        oh += h_sizes[g]; ohp += hp_sizes[g]; ol += l_sizes[g]

        # Even spatial sizes -> a single align_corners=True resize to (H,W)
        # equals the module's upsample(+optional re-interp) path exactly.
        # TODO(synk): odd-size OctaveConv2 double-interpolation fallback is not reproduced.
        X_l2h = upsample_bilinear_nhwc(X_l2h, H, W)
        Xh = X_l2h + X_h2h
        Xl = X_h2l + X_l2l
        for idx, nm in enumerate(names):
            h_out[nm] = Xh[idx * B:(idx + 1) * B]
            l_out[nm] = Xl[idx * B:(idx + 1) * B]
    return h_out, l_out


# ----------------------------------------------------------------------------
# hcl (weighted-square-sum formulation, hierarchical pooling)
# ----------------------------------------------------------------------------
def hcl_weighted_terms(diff, outer, pair_numel):
    """Return scaled flattened tensors whose total sum of squares equals
    outer * sum over pairs of hcl(fs, ft).  `diff` may hold several same-shape
    (fs - ft) pairs concatenated along batch (pooling is per-sample, so this is
    exact).  Pool levels are computed hierarchically (8->4->2->1)."""
    h = diff.shape[1]
    levels = [(diff, 1.0)]
    cur = diff
    cnt, tot = 1.0, 1.0
    for l in (4, 2, 1):
        if l >= h:
            continue
        cnt /= 2.0
        n, hh, ww, c = cur.shape
        f = hh // l
        cur = cur.reshape(n, l, f, l, f, c).mean(axis=(2, 4))
        levels.append((cur, cnt))
        tot += cnt
    segs = []
    for t, c in levels:
        scale = outer * c / (tot * pair_numel)
        segs.append(t.reshape(-1) * np.float32(math.sqrt(scale)))
    return segs


# ----------------------------------------------------------------------------
# frequency_kd2 forward (functional)
# ----------------------------------------------------------------------------
def frequency_kd2_forward(prep, F4, F3, F2, F1, f4, f3, f2, f1):
    to_nhwc = lambda t: jnp.transpose(t, (0, 2, 3, 1))
    F4, F3, F2, F1 = map(to_nhwc, (F4, F3, F2, F1))
    f4, f3, f2, f1 = map(to_nhwc, (f4, f3, f2, f1))
    B = F4.shape[0]

    # --- stem conv4_T / conv4_S (3x3, stride 2, pad 1): one batched launch ---
    K4 = prep['conv4_w'].shape[1]
    colT, Ho4, Wo4 = _im2col_nhwc(F4, 3, 2, 1, K4)
    colS, _, _ = _im2col_nhwc(f4, 3, 2, 1, K4)
    o4 = batched_matmul_bias(jnp.stack([colT, colS]), prep['conv4_w'], prep['conv4_b'])
    F4 = o4[0].reshape(B, Ho4, Wo4, 256)
    f4 = o4[1].reshape(B, Ho4, Wo4, 256)

    # --- all six 1x1 stem convs: ONE batched launch (small M zero-padded) ---
    def rows_of(t):
        return t.shape[0] * t.shape[1] * t.shape[2]

    mrow = max(rows_of(F3), rows_of(F2), rows_of(F1))

    def as_rows(t):
        r = t.reshape(-1, t.shape[-1]).astype(MXU_DTYPE)
        if r.shape[0] < mrow:
            r = jnp.pad(r, ((0, mrow - r.shape[0]), (0, 0)))
        return r

    po = batched_matmul_bias(
        jnp.stack([as_rows(F3), as_rows(f3), as_rows(F2), as_rows(f2),
                   as_rows(F1), as_rows(f1)]),
        prep['pw_w'], prep['pw_b'])
    F3 = po[0, :rows_of(F3)].reshape(F3.shape)
    f3 = po[1, :rows_of(f3)].reshape(f3.shape)
    F2 = po[2, :rows_of(F2)].reshape(F2.shape)
    f2 = po[3, :rows_of(f2)].reshape(f2.shape)
    F1 = po[4, :rows_of(F1)].reshape(F1.shape)
    f1 = po[5, :rows_of(f1)].reshape(f1.shape)

    # --- upsamples (align_corners=True, as in the module) ---
    F2 = upsample_bilinear_nhwc(F2, F2.shape[1] * 2, F2.shape[2] * 2)
    f2 = upsample_bilinear_nhwc(f2, f2.shape[1] * 2, f2.shape[2] * 2)
    F1 = upsample_bilinear_nhwc(F1, F1.shape[1] * 4, F1.shape[2] * 4)
    f1 = upsample_bilinear_nhwc(f1, f1.shape[1] * 4, f1.shape[2] * 4)

    # --- shared frequency_transfer (OctaveConv2): two fused MXU launches ---
    feats = {'F4': F4, 'f4': f4, 'F3': F3, 'f3': f3,
             'F2': F2, 'f2': f2, 'F1': F1, 'f1': f1}
    h_out, l_out = octave_transfer_all(feats, prep['octave'], B)

    # --- hcl: bundle same-shape pairs, collapse everything into ONE reduction ---
    bundles = {}
    for lvl in ('1', '2', '3', '4'):
        for d in (h_out, l_out):
            fs, ft = d['f' + lvl], d['F' + lvl]
            bundles.setdefault(fs.shape, []).append(fs - ft)

    segs = []
    for shape, diffs in bundles.items():
        dcat = diffs[0] if len(diffs) == 1 else jnp.concatenate(diffs, axis=0)
        segs.extend(hcl_weighted_terms(dcat, 0.25, int(np.prod(shape))))
    return weighted_sq_sum(jnp.concatenate(segs))


# ----------------------------------------------------------------------------
# Parameters: raw (torch-layout) construction + one-time preparation
# ----------------------------------------------------------------------------
def _conv_params(key, cout, cin, k):
    kw_key, kb_key = jax.random.split(key)
    fan_in = cin * k * k
    scale = 1.0 / np.sqrt(fan_in)
    w = jax.random.normal(kw_key, (cout, cin, k, k), jnp.float32) * scale
    b = jax.random.normal(kb_key, (cout,), jnp.float32) * scale
    return w, b


def make_params(key):
    keys = jax.random.split(key, 16)
    p = {}
    p['conv4_T_w'], p['conv4_T_b'] = _conv_params(keys[0], 256, 256, 3)
    p['conv4_S_w'], p['conv4_S_b'] = _conv_params(keys[1], 256, 256, 3)
    p['conv3_T_w'], p['conv3_T_b'] = _conv_params(keys[2], 256, 256, 1)
    p['conv3_S_w'], p['conv3_S_b'] = _conv_params(keys[3], 256, 256, 1)
    p['conv2_T_w'], p['conv2_T_b'] = _conv_params(keys[4], 256, 256, 1)
    p['conv2_S_w'], p['conv2_S_b'] = _conv_params(keys[5], 256, 256, 1)
    p['conv1_T_w'], p['conv1_T_b'] = _conv_params(keys[6], 256, 256, 1)
    p['conv1_S_w'], p['conv1_S_b'] = _conv_params(keys[7], 256, 256, 1)
    # OctaveConv2: alpha=0.75, in=out=256 -> low=192, high=64
    oct_p = {}
    oct_p['l2l_w'], oct_p['l2l_b'] = _conv_params(keys[8], 192, 192, 3)
    oct_p['l2h_w'], oct_p['l2h_b'] = _conv_params(keys[9], 64, 192, 3)
    oct_p['h2l_w'], oct_p['h2l_b'] = _conv_params(keys[10], 192, 64, 3)
    oct_p['h2h_w'], oct_p['h2h_b'] = _conv_params(keys[11], 64, 64, 3)
    p['octave'] = oct_p
    return p


def prepare_params(p):
    """One-time weight layout prep: (Cout,Cin,kh,kw) -> (kh*kw*Cin, Cout) in
    MXU_DTYPE, K zero-padded to lane multiples, h2h/h2l and l2h/l2l fused along
    N, stems stacked for the batched launches.  Biases stay f32."""
    K_H, K_L, K4 = 640, 1792, 2304   # 64*9->640, 192*9->1792, 256*9=2304

    def prep3(w, b, kpad):
        cout, cin, kh, kw = w.shape
        w2 = jnp.transpose(w, (2, 3, 1, 0)).reshape(kh * kw * cin, cout)
        if kpad > w2.shape[0]:
            w2 = jnp.pad(w2, ((0, kpad - w2.shape[0]), (0, 0)))
        return w2.astype(MXU_DTYPE), b.reshape(1, cout)

    def prep1(w, b):
        cout, cin = w.shape[0], w.shape[1]
        return w.reshape(cout, cin).T.astype(MXU_DTYPE), b.reshape(1, cout)

    prep = {}
    c4tw, c4tb = prep3(p['conv4_T_w'], p['conv4_T_b'], K4)
    c4sw, c4sb = prep3(p['conv4_S_w'], p['conv4_S_b'], K4)
    prep['conv4_w'] = jnp.stack([c4tw, c4sw])
    prep['conv4_b'] = jnp.stack([c4tb, c4sb])

    ws, bs = [], []
    for name in ('conv3_T', 'conv3_S', 'conv2_T', 'conv2_S', 'conv1_T', 'conv1_S'):
        w2, b2 = prep1(p[name + '_w'], p[name + '_b'])
        ws.append(w2); bs.append(b2)
    prep['pw_w'] = jnp.stack(ws)          # (6, 256, 256)
    prep['pw_b'] = jnp.stack(bs)          # (6, 1, 256)

    op = p['octave']
    h2h_w, h2h_b = prep3(op['h2h_w'], op['h2h_b'], K_H)
    h2l_w, h2l_b = prep3(op['h2l_w'], op['h2l_b'], K_H)
    l2h_w, l2h_b = prep3(op['l2h_w'], op['l2h_b'], K_L)
    l2l_w, l2l_b = prep3(op['l2l_w'], op['l2l_b'], K_L)
    prep['octave'] = {
        'hx_w': jnp.concatenate([h2h_w, h2l_w], axis=1),   # [:, :64]=h2h, [:, 64:]=h2l
        'hx_b': jnp.concatenate([h2h_b, h2l_b], axis=1),
        'l_w': jnp.concatenate([l2h_w, l2l_w], axis=1),    # [:, :64]=l2h, [:, 64:]=l2l
        'l_b': jnp.concatenate([l2h_b, l2l_b], axis=1),
    }
    return prep


# ----------------------------------------------------------------------------
# main
# ----------------------------------------------------------------------------
if __name__ == "__main__":
    key = jax.random.PRNGKey(0)
    pkey, dkey = jax.random.split(key)
    params = make_params(pkey)
    prep = prepare_params(params)   # one-time weight layout prep (hoisted)

    ks = jax.random.split(dkey, 8)
    # Channels fixed at 256 by the module; small spatial sizes chosen so every
    # stride/upsample/octave/pool stage stays well-defined.
    F4 = jax.random.normal(ks[0], (2, 256, 8, 8), jnp.float32)
    F3 = jax.random.normal(ks[1], (2, 256, 4, 4), jnp.float32)
    F2 = jax.random.normal(ks[2], (2, 256, 4, 4), jnp.float32)
    F1 = jax.random.normal(ks[3], (2, 256, 2, 2), jnp.float32)
    f4 = jax.random.normal(ks[4], (2, 256, 8, 8), jnp.float32)
    f3 = jax.random.normal(ks[5], (2, 256, 4, 4), jnp.float32)
    f2 = jax.random.normal(ks[6], (2, 256, 4, 4), jnp.float32)
    f1 = jax.random.normal(ks[7], (2, 256, 2, 2), jnp.float32)

    fwd = jax.jit(frequency_kd2_forward)
    loss = fwd(prep, F4, F3, F2, F1, f4, f3, f2, f1)
    loss = jax.block_until_ready(loss)
    assert jnp.isfinite(loss), "loss is not finite"
    print("KERNEL_OK")
</pallas_src>

<mosaic_0001>
module attributes {stable_mosaic.version = 11 : i64} {
  func.func @_matmul_bias_kernel(%arg0: i32, %arg1: memref<1x32x2304xbf16, #tpu.memory_space<vmem>>, %arg2: memref<1x2304x256xbf16, #tpu.memory_space<vmem>>, %arg3: memref<1x1x256xf32, #tpu.memory_space<vmem>>, %arg4: memref<1x32x256xf32, #tpu.memory_space<vmem>>) attributes {dimension_semantics = [#tpu.dimension_semantics<parallel>], iteration_bounds = array<i64: 2>, scalar_prefetch = 0 : i64, scratch_operands = 0 : i64, tpu.core_type = #tpu.core_type<tc>, window_params = [{transform_indices = @transform_0, window_bounds = array<i64: 1, 32, 2304>}, {transform_indices = @transform_1, window_bounds = array<i64: 1, 2304, 256>}, {transform_indices = @transform_2, window_bounds = array<i64: 1, 1, 256>}, {transform_indices = @transform_3, window_bounds = array<i64: 1, 32, 256>}]} {
    %c0 = arith.constant 0 : index
    %c0_0 = arith.constant 0 : index
    %c0_1 = arith.constant 0 : index
    %0 = vector.load %arg1[%c0, %c0_0, %c0_1] : memref<1x32x2304xbf16, #tpu.memory_space<vmem>>, vector<1x32x2304xbf16>
    %1 = vector.shape_cast %0 : vector<1x32x2304xbf16> to vector<32x2304xbf16>
    %c0_2 = arith.constant 0 : index
    %c0_3 = arith.constant 0 : index
    %c0_4 = arith.constant 0 : index
    %2 = vector.load %arg2[%c0_2, %c0_3, %c0_4] : memref<1x2304x256xbf16, #tpu.memory_space<vmem>>, vector<1x2304x256xbf16>
    %3 = vector.shape_cast %2 : vector<1x2304x256xbf16> to vector<2304x256xbf16>
    %cst = arith.constant dense<0.000000e+00> : vector<32x256xf32>
    %4 = tpu.matmul %1, %3, %cst {dimension_numbers = #tpu.dot_dimension_numbers<[1], [0], [0], [1], [0, 0, 1, 1], [], []>} : vector<32x2304xbf16>, vector<2304x256xbf16>, vector<32x256xf32> -> vector<32x256xf32>
    %c0_5 = arith.constant 0 : index
    %c0_6 = arith.constant 0 : index
    %c0_7 = arith.constant 0 : index
    %5 = vector.load %arg3[%c0_5, %c0_6, %c0_7] : memref<1x1x256xf32, #tpu.memory_space<vmem>>, vector<1x1x256xf32>
    %6 = vector.shape_cast %5 : vector<1x1x256xf32> to vector<1x256xf32>
    %7 = vector.broadcast %6 : vector<1x256xf32> to vector<32x256xf32>
    %8 = arith.addf %4, %7 : vector<32x256xf32>
    %c0_8 = arith.constant 0 : index
    %c0_9 = arith.constant 0 : index
    %c0_10 = arith.constant 0 : index
    %9 = vector.load %arg4[%c0_8, %c0_9, %c0_10] : memref<1x32x256xf32, #tpu.memory_space<vmem>>, vector<1x32x256xf32>
    %10 = vector.shape_cast %9 : vector<1x32x256xf32> to vector<32x256xf32>
    %11 = vector.shape_cast %8 : vector<32x256xf32> to vector<1x32x256xf32>
    tpu.vector_store %arg4[%c0_8, %c0_9, %c0_10], %11 {strides = array<i32>} : memref<1x32x256xf32, #tpu.memory_space<vmem>>, vector<1x32x256xf32>,
    return
  }
  func.func @transform_0(%arg0: i32) -> (i32, i32, i32) {
    %c0_i32 = arith.constant 0 : i32
    %c0_i32_0 = arith.constant 0 : i32
    %c0_i32_1 = arith.constant 0 : i32
    return %arg0, %c0_i32, %c0_i32_0 : i32, i32, i32
  }
  func.func @transform_1(%arg0: i32) -> (i32, i32, i32) {
    %c0_i32 = arith.constant 0 : i32
    %c0_i32_0 = arith.constant 0 : i32
    %c0_i32_1 = arith.constant 0 : i32
    return %arg0, %c0_i32, %c0_i32_0 : i32, i32, i32
  }
  func.func @transform_2(%arg0: i32) -> (i32, i32, i32) {
    %c0_i32 = arith.constant 0 : i32
    %c0_i32_0 = arith.constant 0 : i32
    %c0_i32_1 = arith.constant 0 : i32
    return %arg0, %c0_i32, %c0_i32_0 : i32, i32, i32
  }
  func.func @transform_3(%arg0: i32) -> (i32, i32, i32) {
    %c0_i32 = arith.constant 0 : i32
    %c0_i32_0 = arith.constant 0 : i32
    %c0_i32_1 = arith.constant 0 : i32
    return %arg0, %c0_i32, %c0_i32_0 : i32, i32, i32
  }
}

module attributes {stable_mosaic.version = 11 : i64} {
  func.func @_matmul_bias_kernel(%arg0: i32, %arg1: memref<1x32x256xbf16, #tpu.memory_space<vmem>>, %arg2: memref<1x256x256xbf16, #tpu.memory_space<vmem>>, %arg3: memref<1x1x256xf32, #tpu.memory_space<vmem>>, %arg4: memref<1x32x256xf32, #tpu.memory_space<vmem>>) attributes {dimension_semantics = [#tpu.dimension_semantics<parallel>], iteration_bounds = array<i64: 6>, scalar_prefetch = 0 : i64, scratch_operands = 0 : i64, tpu.core_type = #tpu.core_type<tc>, window_params = [{transform_indices = @transform_0, window_bounds = array<i64: 1, 32, 256>}, {transform_indices = @transform_1, window_bounds = array<i64: 1, 256, 256>}, {transform_indices = @transform_2, window_bounds = array<i64: 1, 1, 256>}, {transform_indices = @transform_3, window_bounds = array<i64: 1, 32, 256>}]} {
    %c0 = arith.constant 0 : index
    %c0_0 = arith.constant 0 : index
    %c0_1 = arith.constant 0 : index
    %0 = vector.load %arg1[%c0, %c0_0, %c0_1] : memref<1x32x256xbf16, #tpu.memory_space<vmem>>, vector<1x32x256xbf16>
    %1 = vector.shape_cast %0 : vector<1x32x256xbf16> to vector<32x256xbf16>
    %c0_2 = arith.constant 0 : index
    %c0_3 = arith.constant 0 : index
    %c0_4 = arith.constant 0 : index
    %2 = vector.load %arg2[%c0_2, %c0_3, %c0_4] : memref<1x256x256xbf16, #tpu.memory_space<vmem>>, vector<1x256x256xbf16>
    %3 = vector.shape_cast %2 : vector<1x256x256xbf16> to vector<256x256xbf16>
    %cst = arith.constant dense<0.000000e+00> : vector<32x256xf32>
    %4 = tpu.matmul %1, %3, %cst {dimension_numbers = #tpu.dot_dimension_numbers<[1], [0], [0], [1], [0, 0, 1, 1], [], []>} : vector<32x256xbf16>, vector<256x256xbf16>, vector<32x256xf32> -> vector<32x256xf32>
    %c0_5 = arith.constant 0 : index
    %c0_6 = arith.constant 0 : index
    %c0_7 = arith.constant 0 : index
    %5 = vector.load %arg3[%c0_5, %c0_6, %c0_7] : memref<1x1x256xf32, #tpu.memory_space<vmem>>, vector<1x1x256xf32>
    %6 = vector.shape_cast %5 : vector<1x1x256xf32> to vector<1x256xf32>
    %7 = vector.broadcast %6 : vector<1x256xf32> to vector<32x256xf32>
    %8 = arith.addf %4, %7 : vector<32x256xf32>
    %c0_8 = arith.constant 0 : index
    %c0_9 = arith.constant 0 : index
    %c0_10 = arith.constant 0 : index
    %9 = vector.load %arg4[%c0_8, %c0_9, %c0_10] : memref<1x32x256xf32, #tpu.memory_space<vmem>>, vector<1x32x256xf32>
    %10 = vector.shape_cast %9 : vector<1x32x256xf32> to vector<32x256xf32>
    %11 = vector.shape_cast %8 : vector<32x256xf32> to vector<1x32x256xf32>
    tpu.vector_store %arg4[%c0_8, %c0_9, %c0_10], %11 {strides = array<i32>} : memref<1x32x256xf32, #tpu.memory_space<vmem>>, vector<1x32x256xf32>,
    return
  }
  func.func @transform_0(%arg0: i32) -> (i32, i32, i32) {
    %c0_i32 = arith.constant 0 : i32
    %c0_i32_0 = arith.constant 0 : i32
    %c0_i32_1 = arith.constant 0 : i32
    return %arg0, %c0_i32, %c0_i32_0 : i32, i32, i32
  }
  func.func @transform_1(%arg0: i32) -> (i32, i32, i32) {
    %c0_i32 = arith.constant 0 : i32
    %c0_i32_0 = arith.constant 0 : i32
    %c0_i32_1 = arith.constant 0 : i32
    return %arg0, %c0_i32, %c0_i32_0 : i32, i32, i32
  }
  func.func @transform_2(%arg0: i32) -> (i32, i32, i32) {
    %c0_i32 = arith.constant 0 : i32
    %c0_i32_0 = arith.constant 0 : i32
    %c0_i32_1 = arith.constant 0 : i32
    return %arg0, %c0_i32, %c0_i32_0 : i32, i32, i32
  }
  func.func @transform_3(%arg0: i32) -> (i32, i32, i32) {
    %c0_i32 = arith.constant 0 : i32
    %c0_i32_0 = arith.constant 0 : i32
    %c0_i32_1 = arith.constant 0 : i32
    return %arg0, %c0_i32, %c0_i32_0 : i32, i32, i32
  }
}

module attributes {stable_mosaic.version = 11 : i64} {
  func.func @_matmul_bias_kernel(%arg0: i32, %arg1: memref<160x1792xbf16, #tpu.memory_space<vmem>>, %arg2: memref<1792x256xbf16, #tpu.memory_space<vmem>>, %arg3: memref<1x256xf32, #tpu.memory_space<vmem>>, %arg4: memref<160x256xf32, #tpu.memory_space<vmem>>) attributes {dimension_semantics = [#tpu.dimension_semantics<parallel>], iteration_bounds = array<i64: 1>, scalar_prefetch = 0 : i64, scratch_operands = 0 : i64, tpu.core_type = #tpu.core_type<tc>, window_params = [{transform_indices = @transform_0, window_bounds = array<i64: 160, 1792>}, {pipeline_mode = #tpu.pipeline_mode<synchronous>, transform_indices = @transform_1, window_bounds = array<i64: 1792, 256>}, {pipeline_mode = #tpu.pipeline_mode<synchronous>, transform_indices = @transform_2, window_bounds = array<i64: 1, 256>}, {transform_indices = @transform_3, window_bounds = array<i64: 160, 256>}]} {
    %c0 = arith.constant 0 : index
    %c0_0 = arith.constant 0 : index
    %0 = vector.load %arg1[%c0, %c0_0] : memref<160x1792xbf16, #tpu.memory_space<vmem>>, vector<160x1792xbf16>
    %c0_1 = arith.constant 0 : index
    %c0_2 = arith.constant 0 : index
    %1 = vector.load %arg2[%c0_1, %c0_2] : memref<1792x256xbf16, #tpu.memory_space<vmem>>, vector<1792x256xbf16>
    %cst = arith.constant dense<0.000000e+00> : vector<160x256xf32>
    %2 = tpu.matmul %0, %1, %cst {dimension_numbers = #tpu.dot_dimension_numbers<[1], [0], [0], [1], [0, 0, 1, 1], [], []>} : vector<160x1792xbf16>, vector<1792x256xbf16>, vector<160x256xf32> -> vector<160x256xf32>
    %c0_3 = arith.constant 0 : index
    %c0_4 = arith.constant 0 : index
    %3 = vector.load %arg3[%c0_3, %c0_4] : memref<1x256xf32, #tpu.memory_space<vmem>>, vector<1x256xf32>
    %4 = vector.broadcast %3 : vector<1x256xf32> to vector<160x256xf32>
    %5 = arith.addf %2, %4 : vector<160x256xf32>
    %c0_5 = arith.constant 0 : index
    %c0_6 = arith.constant 0 : index
    %6 = vector.load %arg4[%c0_5, %c0_6] : memref<160x256xf32, #tpu.memory_space<vmem>>, vector<160x256xf32>
    tpu.vector_store %arg4[%c0_5, %c0_6], %5 {strides = array<i32>} : memref<160x256xf32, #tpu.memory_space<vmem>>, vector<160x256xf32>,
    return
  }
  func.func @transform_0(%arg0: i32) -> (i32, i32) {
    %c0_i32 = arith.constant 0 : i32
    %c0_i32_0 = arith.constant 0 : i32
    return %arg0, %c0_i32 : i32, i32
  }
  func.func @transform_1(%arg0: i32) -> (i32, i32) {
    %c0_i32 = arith.constant 0 : i32
    %c0_i32_0 = arith.constant 0 : i32
    %c0_i32_1 = arith.constant 0 : i32
    return %c0_i32, %c0_i32_0 : i32, i32
  }
  func.func @transform_2(%arg0: i32) -> (i32, i32) {
    %c0_i32 = arith.constant 0 : i32
    %c0_i32_0 = arith.constant 0 : i32
    %c0_i32_1 = arith.constant 0 : i32
    return %c0_i32, %c0_i32_0 : i32, i32
  }
  func.func @transform_3(%arg0: i32) -> (i32, i32) {
    %c0_i32 = arith.constant 0 : i32
    %c0_i32_0 = arith.constant 0 : i32
    return %arg0, %c0_i32 : i32, i32
  }
}

module attributes {stable_mosaic.version = 11 : i64} {
  func.func @_matmul_bias_kernel(%arg0: i32, %arg1: memref<800x640xbf16, #tpu.memory_space<vmem>>, %arg2: memref<640x256xbf16, #tpu.memory_space<vmem>>, %arg3: memref<1x256xf32, #tpu.memory_space<vmem>>, %arg4: memref<800x256xf32, #tpu.memory_space<vmem>>) attributes {dimension_semantics = [#tpu.dimension_semantics<parallel>], iteration_bounds = array<i64: 1>, scalar_prefetch = 0 : i64, scratch_operands = 0 : i64, tpu.core_type = #tpu.core_type<tc>, window_params = [{transform_indices = @transform_0, window_bounds = array<i64: 800, 640>}, {pipeline_mode = #tpu.pipeline_mode<synchronous>, transform_indices = @transform_1, window_bounds = array<i64: 640, 256>}, {pipeline_mode = #tpu.pipeline_mode<synchronous>, transform_indices = @transform_2, window_bounds = array<i64: 1, 256>}, {transform_indices = @transform_3, window_bounds = array<i64: 800, 256>}]} {
    %c0 = arith.constant 0 : index
    %c0_0 = arith.constant 0 : index
    %0 = vector.load %arg1[%c0, %c0_0] : memref<800x640xbf16, #tpu.memory_space<vmem>>, vector<800x640xbf16>
    %c0_1 = arith.constant 0 : index
    %c0_2 = arith.constant 0 : index
    %1 = vector.load %arg2[%c0_1, %c0_2] : memref<640x256xbf16, #tpu.memory_space<vmem>>, vector<640x256xbf16>
    %cst = arith.constant dense<0.000000e+00> : vector<800x256xf32>
    %2 = tpu.matmul %0, %1, %cst {dimension_numbers = #tpu.dot_dimension_numbers<[1], [0], [0], [1], [0, 0, 1, 1], [], []>} : vector<800x640xbf16>, vector<640x256xbf16>, vector<800x256xf32> -> vector<800x256xf32>
    %c0_3 = arith.constant 0 : index
    %c0_4 = arith.constant 0 : index
    %3 = vector.load %arg3[%c0_3, %c0_4] : memref<1x256xf32, #tpu.memory_space<vmem>>, vector<1x256xf32>
    %4 = vector.broadcast %3 : vector<1x256xf32> to vector<800x256xf32>
    %5 = arith.addf %2, %4 : vector<800x256xf32>
    %c0_5 = arith.constant 0 : index
    %c0_6 = arith.constant 0 : index
    %6 = vector.load %arg4[%c0_5, %c0_6] : memref<800x256xf32, #tpu.memory_space<vmem>>, vector<800x256xf32>
    tpu.vector_store %arg4[%c0_5, %c0_6], %5 {strides = array<i32>} : memref<800x256xf32, #tpu.memory_space<vmem>>, vector<800x256xf32>,
    return
  }
  func.func @transform_0(%arg0: i32) -> (i32, i32) {
    %c0_i32 = arith.constant 0 : i32
    %c0_i32_0 = arith.constant 0 : i32
    return %arg0, %c0_i32 : i32, i32
  }
  func.func @transform_1(%arg0: i32) -> (i32, i32) {
    %c0_i32 = arith.constant 0 : i32
    %c0_i32_0 = arith.constant 0 : i32
    %c0_i32_1 = arith.constant 0 : i32
    return %c0_i32, %c0_i32_0 : i32, i32
  }
  func.func @transform_2(%arg0: i32) -> (i32, i32) {
    %c0_i32 = arith.constant 0 : i32
    %c0_i32_0 = arith.constant 0 : i32
    %c0_i32_1 = arith.constant 0 : i32
    return %c0_i32, %c0_i32_0 : i32, i32
  }
  func.func @transform_3(%arg0: i32) -> (i32, i32) {
    %c0_i32 = arith.constant 0 : i32
    %c0_i32_0 = arith.constant 0 : i32
    return %arg0, %c0_i32 : i32, i32
  }
}

module attributes {stable_mosaic.version = 11 : i64} {
  func.func @_sq_sum_partial_kernel(%arg0: i32, %arg1: memref<46x8x128xf32, #tpu.memory_space<vmem>>, %arg2: memref<8x128xf32, #tpu.memory_space<vmem>>) attributes {dimension_semantics = [#tpu.dimension_semantics<arbitrary>], iteration_bounds = array<i64: 1>, scalar_prefetch = 0 : i64, scratch_operands = 0 : i64, tpu.core_type = #tpu.core_type<tc>, window_params = [{transform_indices = @transform_0, window_bounds = array<i64: 46, 8, 128>}, {pipeline_mode = #tpu.pipeline_mode<synchronous>, transform_indices = @transform_1, window_bounds = array<i64: 8, 128>}]} {
    %c0_i32 = arith.constant 0 : i32
    %0 = arith.cmpi eq, %arg0, %c0_i32 : i32
    %1 = arith.extui %0 : i1 to i32
    %c0_i32_0 = arith.constant 0 : i32
    %2 = arith.cmpi ne, %1, %c0_i32_0 : i32
    scf.if %2 {
      %cst_7 = arith.constant 0.000000e+00 : f32
      %9 = vector.broadcast %cst_7 : f32 to vector<8x128xf32>
      %c0_8 = arith.constant 0 : index
      %c0_9 = arith.constant 0 : index
      %10 = vector.load %arg2[%c0_8, %c0_9] : memref<8x128xf32, #tpu.memory_space<vmem>>, vector<8x128xf32>
      tpu.vector_store %arg2[%c0_8, %c0_9], %9 {strides = array<i32>} : memref<8x128xf32, #tpu.memory_space<vmem>>, vector<8x128xf32>,
    } else {
    }
    %c0 = arith.constant 0 : index
    %c0_1 = arith.constant 0 : index
    %c0_2 = arith.constant 0 : index
    %3 = vector.load %arg1[%c0, %c0_1, %c0_2] : memref<46x8x128xf32, #tpu.memory_space<vmem>>, vector<46x8x128xf32>
    %c0_3 = arith.constant 0 : index
    %c0_4 = arith.constant 0 : index
    %4 = vector.load %arg2[%c0_3, %c0_4] : memref<8x128xf32, #tpu.memory_space<vmem>>, vector<8x128xf32>
    %5 = arith.mulf %3, %3 : vector<46x8x128xf32>
    %cst = arith.constant dense<0.000000e+00> : vector<8x128xf32>
    %6 = vector.multi_reduction <add>, %5, %cst [0] : vector<46x8x128xf32> to vector<8x128xf32>
    %7 = arith.addf %4, %6 : vector<8x128xf32>
    %c0_5 = arith.constant 0 : index
    %c0_6 = arith.constant 0 : index
    %8 = vector.load %arg2[%c0_5, %c0_6] : memref<8x128xf32, #tpu.memory_space<vmem>>, vector<8x128xf32>
    tpu.vector_store %arg2[%c0_5, %c0_6], %7 {strides = array<i32>} : memref<8x128xf32, #tpu.memory_space<vmem>>, vector<8x128xf32>,
    return
  }
  func.func @transform_0(%arg0: i32) -> (i32, i32, i32) {
    %c0_i32 = arith.constant 0 : i32
    %c0_i32_0 = arith.constant 0 : i32
    %c0_i32_1 = arith.constant 0 : i32
    return %arg0, %c0_i32, %c0_i32_0 : i32, i32, i32
  }
  func.func @transform_1(%arg0: i32) -> (i32, i32) {
    %c0_i32 = arith.constant 0 : i32
    %c0_i32_0 = arith.constant 0 : i32
    %c0_i32_1 = arith.constant 0 : i32
    return %c0_i32, %c0_i32_0 : i32, i32
  }
}

</mosaic_0001>

<llo_original>
// kernel: squeeze.8
$region0: #{squeeze.8}
  %s0 = inlined_call_operand.vmem [shape: f32[1,32,256], index: 0, kind: input, shape index: {}]
  %s1 = inlined_call_operand.vmem [shape: f32[2,4,4,256], index: 1, kind: output, shape index: {}]
  $region1: #{squeeze.8} parent=0
    #allocation0 [shape = 'u8[65536]{0}', space=vmem, size = 0x10000, scoped, tag = 'scoped mem for output reshape']
    %v2 = vld [vmem:[%s0] sm:$0xff]
    %3 = vst [vmem:[#allocation0] sm:$0xf] %v2
    %s4 = scalar_lea.vmem [#allocation0], 12
    %5 = vst [vmem:[%s4] sm:$0xf0] %v2
    %s6 = scalar_lea.vmem %s0, 8
    %v7 = vld [vmem:[%s6] sm:$0xff]
    %s8 = scalar_lea.vmem [#allocation0], 8
    %9 = vst [vmem:[%s8] sm:$0xf] %v7
    %s10 = scalar_lea.vmem [#allocation0], 20
    %11 = vst [vmem:[%s10] sm:$0xf0] %v7
    %s12 = scalar_lea.vmem %s0, 16
    %v13 = vld [vmem:[%s12] sm:$0xff]
    %s14 = scalar_lea.vmem [#allocation0], 32
    %15 = vst [vmem:[%s14] sm:$0xf] %v13
    %s16 = scalar_lea.vmem [#allocation0], 44
    %17 = vst [vmem:[%s16] sm:$0xf0] %v13
    %s18 = scalar_lea.vmem %s0, 24
    %v19 = vld [vmem:[%s18] sm:$0xff]
    %s20 = scalar_lea.vmem [#allocation0], 40
    %21 = vst [vmem:[%s20] sm:$0xf] %v19
    %s22 = scalar_lea.vmem [#allocation0], 52
    %23 = vst [vmem:[%s22] sm:$0xf0] %v19
    %s24 = scalar_lea.vmem %s0, 32
    %v25 = vld [vmem:[%s24] sm:$0xff]
    %s26 = scalar_lea.vmem [#allocation0], 64
    %27 = vst [vmem:[%s26] sm:$0xf] %v25
    %s28 = scalar_lea.vmem [#allocation0], 76
    %29 = vst [vmem:[%s28] sm:$0xf0] %v25
    %s30 = scalar_lea.vmem %s0, 40
    %v31 = vld [vmem:[%s30] sm:$0xff]
    %s32 = scalar_lea.vmem [#allocation0], 72
    %33 = vst [vmem:[%s32] sm:$0xf] %v31
    %s34 = scalar_lea.vmem [#allocation0], 84
    %35 = vst [vmem:[%s34] sm:$0xf0] %v31
    %s36 = scalar_lea.vmem %s0, 48
    %v37 = vld [vmem:[%s36] sm:$0xff]
    %s38 = scalar_lea.vmem [#allocation0], 96
    %39 = vst [vmem:[%s38] sm:$0xf] %v37
    %s40 = scalar_lea.vmem [#allocation0], 108
    %41 = vst [vmem:[%s40] sm:$0xf0] %v37
    %s42 = scalar_lea.vmem %s0, 56
    %v43 = vld [vmem:[%s42] sm:$0xff]
    %s44 = scalar_lea.vmem [#allocation0], 104
    %45 = vst [vmem:[%s44] sm:$0xf] %v43
    %s46 = scalar_lea.vmem [#allocation0], 116
    %47 = vst [vmem:[%s46] sm:$0xf0] %v43
    %s49 = sshll.u32 1, 4
    %s50 = ssub.s32 %s49, 1
    %v52 = vld [vmem:[#allocation0] sm:%s50]
    %s53 = sshll.u32 1, 4
    %s54 = ssub.s32 %s53, 1
    %55 = vst [vmem:[%s1] sm:%s54] %v52
    %s56 = scalar_lea.vmem [#allocation0], 8
    %v57 = vld [vmem:[%s56] sm:%s50]
    %s58 = sshll.u32 1, 4
    %s59 = ssub.s32 %s58, 1
    %s60 = scalar_lea.vmem %s1, 4
    %61 = vst [vmem:[%s60] sm:%s59] %v57
    %s62 = scalar_lea.vmem [#allocation0], 16
    %v63 = vld [vmem:[%s62] sm:%s50]
    %s64 = sshll.u32 1, 4
    %s65 = ssub.s32 %s64, 1
    %s66 = smul.addr 4, 2
    %s67 = scalar_lea.vmem %s1, %s66
    %68 = vst [vmem:[%s67] sm:%s65] %v63
    %s69 = scalar_lea.vmem [#allocation0], 24
    %v70 = vld [vmem:[%s69] sm:%s50]
    %s71 = sshll.u32 1, 4
    %s72 = ssub.s32 %s71, 1
    %s73 = smul.addr 4, 3
    %s74 = scalar_lea.vmem %s1, %s73
    %75 = vst [vmem:[%s74] sm:%s72] %v70
    %s76 = scalar_lea.vmem [#allocation0], 32
    %v77 = vld [vmem:[%s76] sm:%s50]
    %s78 = sshll.u32 1, 4
    %s79 = ssub.s32 %s78, 1
    %s80 = smul.addr 4, 4
    %s81 = scalar_lea.vmem %s1, %s80
    %82 = vst [vmem:[%s81] sm:%s79] %v77
    %s83 = scalar_lea.vmem [#allocation0], 40
    %v84 = vld [vmem:[%s83] sm:%s50]
    %s85 = sshll.u32 1, 4
    %s86 = ssub.s32 %s85, 1
    %s87 = smul.addr 4, 5
    %s88 = scalar_lea.vmem %s1, %s87
    %89 = vst [vmem:[%s88] sm:%s86] %v84
    %s90 = scalar_lea.vmem [#allocation0], 48
    %v91 = vld [vmem:[%s90] sm:%s50]
    %s92 = sshll.u32 1, 4
    %s93 = ssub.s32 %s92, 1
    %s94 = smul.addr 4, 6
    %s95 = scalar_lea.vmem %s1, %s94
    %96 = vst [vmem:[%s95] sm:%s93] %v91
    %s97 = scalar_lea.vmem [#allocation0], 56
    %v98 = vld [vmem:[%s97] sm:%s50]
    %s99 = sshll.u32 1, 4
    %s100 = ssub.s32 %s99, 1
    %s101 = smul.addr 4, 7
    %s102 = scalar_lea.vmem %s1, %s101
    %103 = vst [vmem:[%s102] sm:%s100] %v98
    %s104 = scalar_lea.vmem [#allocation0], 64
    %v105 = vld [vmem:[%s104] sm:%s50]
    %s106 = sshll.u32 1, 4
    %s107 = ssub.s32 %s106, 1
    %s108 = smul.addr 4, 8
    %s109 = scalar_lea.vmem %s1, %s108
    %110 = vst [vmem:[%s109] sm:%s107] %v105
    %s111 = scalar_lea.vmem [#allocation0], 72
    %v112 = vld [vmem:[%s111] sm:%s50]
    %s113 = sshll.u32 1, 4
    %s114 = ssub.s32 %s113, 1
    %s115 = smul.addr 4, 9
    %s116 = scalar_lea.vmem %s1, %s115
    %117 = vst [vmem:[%s116] sm:%s114] %v112
    %s118 = scalar_lea.vmem [#allocation0], 80
    %v119 = vld [vmem:[%s118] sm:%s50]
    %s120 = sshll.u32 1, 4
    %s121 = ssub.s32 %s120, 1
    %s122 = smul.addr 4, 10
    %s123 = scalar_lea.vmem %s1, %s122
    %124 = vst [vmem:[%s123] sm:%s121] %v119
    %s125 = scalar_lea.vmem [#allocation0], 88
    %v126 = vld [vmem:[%s125] sm:%s50]
    %s127 = sshll.u32 1, 4
    %s128 = ssub.s32 %s127, 1
    %s129 = smul.addr 4, 11
    %s130 = scalar_lea.vmem %s1, %s129
    %131 = vst [vmem:[%s130] sm:%s128] %v126
    %s132 = scalar_lea.vmem [#allocation0], 96
    %v133 = vld [vmem:[%s132] sm:%s50]
    %s134 = sshll.u32 1, 4
    %s135 = ssub.s32 %s134, 1
    %s136 = smul.addr 4, 12
    %s137 = scalar_lea.vmem %s1, %s136
    %138 = vst [vmem:[%s137] sm:%s135] %v133
    %s139 = scalar_lea.vmem [#allocation0], 104
    %v140 = vld [vmem:[%s139] sm:%s50]
    %s141 = sshll.u32 1, 4
    %s142 = ssub.s32 %s141, 1
    %s143 = smul.addr 4, 13
    %s144 = scalar_lea.vmem %s1, %s143
    %145 = vst [vmem:[%s144] sm:%s142] %v140
    %s146 = scalar_lea.vmem [#allocation0], 112
    %v147 = vld [vmem:[%s146] sm:%s50]
    %s148 = sshll.u32 1, 4
    %s149 = ssub.s32 %s148, 1
    %s150 = smul.addr 4, 14
    %s151 = scalar_lea.vmem %s1, %s150
    %152 = vst [vmem:[%s151] sm:%s149] %v147
    %s153 = scalar_lea.vmem [#allocation0], 120
    %v154 = vld [vmem:[%s153] sm:%s50]
    %s155 = sshll.u32 1, 4
    %s156 = ssub.s32 %s155, 1
    %s157 = smul.addr 4, 15
    %s158 = scalar_lea.vmem %s1, %s157
    %159 = vst [vmem:[%s158] sm:%s156] %v154

// kernel: frequency_kd2_forward.6
$region0: #{frequency_kd2_forward.6}
  #allocation0 [shape = 'u32[]', space=smem, size = 0x4, offset = 0x4, fixed_abs, tag = 'smem constant byte address 0x4 - core index']
  #allocation1 [shape = 'u32[144,128]{1,0:T(1,128)}', space=vmem, size = 0x12000, scoped, tag = 'internal scratch']
  %s0 = inlined_call_operand.vmem [shape: bf16[6,32,256], index: 0, kind: input, shape index: {}]
  %s1 = inlined_call_operand.vmem [shape: bf16[6,256,256], index: 1, kind: input, shape index: {}]
  %s2 = inlined_call_operand.vmem [shape: f32[6,1,256], index: 2, kind: input, shape index: {}]
  %s3 = inlined_call_operand.vmem [shape: f32[6,32,256], index: 3, kind: output, shape index: {}]
  %s4 = sld [smem:[#allocation0]]
  $region45: #{frequency_kd2_forward.6} parent=0
    _
  %s6 = ssub.s32 1, %s4
  %s7 = scalar_select 0, %s6, %s4
  loop: start=0, step=1, limit=8
  $region2: #{frequency_kd2_forward.6} parent=0 // loop_pre_header
    _
  $region3: #{frequency_kd2_forward.6} parent=0 // loop_header
    %s9 = sphi 0, %s13
    %p10 = scmp.ge.s32.totalorder %s9, 8
    %s19 = sphi 0, %s21
    %s22 = sphi 0, %s19
    %s23 = sphi 0, %s22
    %s39 = sphi 0, %s23
    %s45 = sphi 0, %s47
    %s48 = sphi 0, %s45
    %s49 = sphi 0, %s48
    %s65 = sphi 0, %s49
    %s71 = sphi 0, %s73
    %s74 = sphi 0, %s71
    %s75 = sphi 0, %s74
    %s91 = sphi 0, %s75
    %s97 = sphi 0, %s99
    %s100 = sphi 0, %s97
    %s101 = sphi 0, %s100
    %s117 = sphi 0, %s101
  $region4: #{frequency_kd2_forward.6} parent=0 // loop_header_branch
    %12 = sbr.rel (%p10) target = $region8
  $region5: #{frequency_kd2_forward.6} parent=0 // loop_body
    %s14 = ssub.s32 %s9, 1
    %s15 = ssub.s32 %s9, 2
    %s16 = sadd.s32 %s9, 1
    %s17 = ssub.s32 %s9, %s16
    %p18 = scmp.eq.s32.totalorder %s17, 0
    %s20 = sadd.s32 %s19, 1
    %s21 = scalar_select %p18, %s19, %s20
    %p24 = pneg %p18
    %p25 = scmp.eq.s32.totalorder %s9, 5
    %p26 = por %p24, %p25
    %p27 = scmp.ne.s32.totalorder %s19, %s22
    %p28 = scmp.eq.s32.totalorder %s9, 0
    %p29 = por %p27, %p28
    %p30 = scmp.ne.s32.totalorder %s19, %s22
    %p31 = scmp.eq.s32.totalorder %s14, 5
    %p32 = por %p30, %p31
    %p33 = scmp.ne.s32.totalorder %s22, %s23
    %p34 = scmp.eq.s32.totalorder %s14, 0
    %p35 = por %p33, %p34
    %p36 = scmp.ne.s32.totalorder %s22, %s23
    %p37 = scmp.eq.s32.totalorder %s15, 5
    %p38 = por %p36, %p37
    %p40 = scmp.ne.s32.totalorder %s23, %s39
    %p41 = scmp.eq.s32.totalorder %s15, 0
    %p42 = por %p40, %p41
    %s43 = ssub.s32 %s9, %s16
    %p44 = scmp.eq.s32.totalorder %s43, 0
    %s46 = sadd.s32 %s45, 1
    %s47 = scalar_select %p44, %s45, %s46
    %p50 = pneg %p44
    %p51 = scmp.eq.s32.totalorder %s9, 5
    %p52 = por %p50, %p51
    %p53 = scmp.ne.s32.totalorder %s45, %s48
    %p54 = scmp.eq.s32.totalorder %s9, 0
    %p55 = por %p53, %p54
    %p56 = scmp.ne.s32.totalorder %s45, %s48
    %p57 = scmp.eq.s32.totalorder %s14, 5
    %p58 = por %p56, %p57
    %p59 = scmp.ne.s32.totalorder %s48, %s49
    %p60 = scmp.eq.s32.totalorder %s14, 0
    %p61 = por %p59, %p60
    %p62 = scmp.ne.s32.totalorder %s48, %s49
    %p63 = scmp.eq.s32.totalorder %s15, 5
    %p64 = por %p62, %p63
    %p66 = scmp.ne.s32.totalorder %s49, %s65
    %p67 = scmp.eq.s32.totalorder %s15, 0
    %p68 = por %p66, %p67
    %s69 = ssub.s32 %s9, %s16
    %p70 = scmp.eq.s32.totalorder %s69, 0
    %s72 = sadd.s32 %s71, 1
    %s73 = scalar_select %p70, %s71, %s72
    %p76 = pneg %p70
    %p77 = scmp.eq.s32.totalorder %s9, 5
    %p78 = por %p76, %p77
    %p79 = scmp.ne.s32.totalorder %s71, %s74
    %p80 = scmp.eq.s32.totalorder %s9, 0
    %p81 = por %p79, %p80
    %p82 = scmp.ne.s32.totalorder %s71, %s74
    %p83 = scmp.eq.s32.totalorder %s14, 5
    %p84 = por %p82, %p83
    %p85 = scmp.ne.s32.totalorder %s74, %s75
    %p86 = scmp.eq.s32.totalorder %s14, 0
    %p87 = por %p85, %p86
    %p88 = scmp.ne.s32.totalorder %s74, %s75
    %p89 = scmp.eq.s32.totalorder %s15, 5
    %p90 = por %p88, %p89
    %p92 = scmp.ne.s32.totalorder %s75, %s91
    %p93 = scmp.eq.s32.totalorder %s15, 0
    %p94 = por %p92, %p93
    %s95 = ssub.s32 %s9, %s16
    %p96 = scmp.eq.s32.totalorder %s95, 0
    %s98 = sadd.s32 %s97, 1
    %s99 = scalar_select %p96, %s97, %s98
    %p102 = pneg %p96
    %p103 = scmp.eq.s32.totalorder %s9, 5
    %p104 = por %p102, %p103
    %p105 = scmp.ne.s32.totalorder %s97, %s100
    %p106 = scmp.eq.s32.totalorder %s9, 0
    %p107 = por %p105, %p106
    %p108 = scmp.ne.s32.totalorder %s97, %s100
    %p109 = scmp.eq.s32.totalorder %s14, 5
    %p110 = por %p108, %p109
    %p111 = scmp.ne.s32.totalorder %s100, %s101
    %p112 = scmp.eq.s32.totalorder %s14, 0
    %p113 = por %p111, %p112
    %p114 = scmp.ne.s32.totalorder %s100, %s101
    %p115 = scmp.eq.s32.totalorder %s15, 5
    %p116 = por %p114, %p115
    %p118 = scmp.ne.s32.totalorder %s101, %s117
    %p119 = scmp.eq.s32.totalorder %s15, 0
    %p120 = por %p118, %p119
    %p121 = scmp.le.s32.totalorder 1, %s9
    %p122 = scmp.lt.s32.totalorder %s9, 7
    %p123 = pnand %p121, %p122
    %p124 = pneg %p123
    // Predicated region
    $region9: #{frequency_kd2_forward.6} parent=5 // pred_check
      _
    $region10: #{frequency_kd2_forward.6} parent=5 // pred_check_branch
      %126 = sbr.rel (%p123) target = $region12
    $region11: #{frequency_kd2_forward.6} parent=5 // pred_region
      %s127 = ssub.s32 %s9, 1
    $region12: #{frequency_kd2_forward.6} parent=5 // pred_fallthru
      _
    %p128 = scmp.lt.s32.totalorder %s9, 6
    // Predicated region
    $region13: #{frequency_kd2_forward.6} parent=5 // pred_check
      %p129 = pneg %p128
    $region14: #{frequency_kd2_forward.6} parent=5 // pred_check_branch
      %131 = sbr.rel (%p129) target = $region16
    $region15: #{frequency_kd2_forward.6} parent=5 // pred_region
      // Predicated region
      $region17: #{frequency_kd2_forward.6} parent=15 // pred_check
        %p132 = pneg %p29
      $region18: #{frequency_kd2_forward.6} parent=15 // pred_check_branch
        %134 = sbr.rel (%p132) target = $region20
      $region19: #{frequency_kd2_forward.6} parent=15 // pred_region
        %p135 = scmp.lt.s32.totalorder %s9, 5
        %s136 = scalar_select %p135, %s9, 5
        %s137 = smul.addr %s136, 8
        %s138 = smul.addr %s137, 4
        %s139 = scalar_lea.vmem %s0, %s138
      $region20: #{frequency_kd2_forward.6} parent=15 // pred_fallthru
        _
      // Predicated region
      $region21: #{frequency_kd2_forward.6} parent=15 // pred_check
        %p140 = pneg %p55
      $region22: #{frequency_kd2_forward.6} parent=15 // pred_check_branch
        %142 = sbr.rel (%p140) target = $region24
      $region23: #{frequency_kd2_forward.6} parent=15 // pred_region
        %p143 = scmp.lt.s32.totalorder %s9, 5
        %s144 = scalar_select %p143, %s9, 5
        %s145 = smul.addr %s144, 64
        %s146 = smul.addr %s145, 4
        %s147 = scalar_lea.vmem %s1, %s146
      $region24: #{frequency_kd2_forward.6} parent=15 // pred_fallthru
        _
      // Predicated region
      $region25: #{frequency_kd2_forward.6} parent=15 // pred_check
        %p148 = pneg %p81
      $region26: #{frequency_kd2_forward.6} parent=15 // pred_check_branch
        %150 = sbr.rel (%p148) target = $region28
      $region27: #{frequency_kd2_forward.6} parent=15 // pred_region
        %p151 = scmp.lt.s32.totalorder %s9, 5
        %s152 = scalar_select %p151, %s9, 5
        %s153 = smul.addr %s152, 2
        %s154 = scalar_lea.vmem %s2, %s153
      $region28: #{frequency_kd2_forward.6} parent=15 // pred_fallthru
        _
    $region16: #{frequency_kd2_forward.6} parent=5 // pred_fallthru
      _
    %p155 = scmp.le.s32.totalorder 1, %s9
    %p156 = scmp.lt.s32.totalorder %s9, 7
    %p157 = pnand %p155, %p156
    %p158 = pneg %p157
    // Predicated region
    $region29: #{frequency_kd2_forward.6} parent=5 // pred_check
      _
    $region30: #{frequency_kd2_forward.6} parent=5 // pred_check_branch
      %160 = sbr.rel (%p157) target = $region32
    $region31: #{frequency_kd2_forward.6} parent=5 // pred_region
      %s161 = ssub.s32 %s9, 1
      %p162 = scmp.lt.s32.totalorder %s14, 5
      %s163 = scalar_select %p162, %s14, 5
      %s164 = smul.addr %s163, 8
      %s165 = smul.addr %s164, 4
      %s166 = scalar_lea.vmem %s0, %s165
      %p167 = pneg %p35
      %p168 = pneg %p32
      %p169 = scmp.lt.s32.totalorder %s14, 5
      %s170 = scalar_select %p169, %s14, 5
      %s171 = smul.addr %s170, 64
      %s172 = smul.addr %s171, 4
      %s173 = scalar_lea.vmem %s1, %s172
      %p174 = pneg %p61
      %p175 = pneg %p58
      %p176 = scmp.lt.s32.totalorder %s14, 5
      %s177 = scalar_select %p176, %s14, 5
      %s178 = smul.addr %s177, 2
      %s179 = scalar_lea.vmem %s2, %s178
      %p180 = pneg %p87
      %p181 = pneg %p84
      %p182 = pneg %p113
      %p183 = pneg %p110
      %p184 = scmp.lt.s32.totalorder %s14, 5
      %s185 = scalar_select %p184, %s14, 5
      %s186 = smul.addr %s185, 8
      %s187 = smul.addr %s186, 8
      %s188 = scalar_lea.vmem %s3, %s187
      %p189 = scmp.lt.s32.totalorder %s14, 5
      %s190 = scalar_select %p189, %s14, 5
      %s191 = smul.addr %s190, 8
      %s192 = smul.addr %s191, 4
      %s193 = scalar_lea.vmem %s0, %s192
      %p194 = scmp.lt.s32.totalorder %s14, 5
      %s195 = scalar_select %p194, %s14, 5
      %s196 = smul.addr %s195, 64
      %s197 = smul.addr %s196, 4
      %s198 = scalar_lea.vmem %s1, %s197
      %p199 = scmp.lt.s32.totalorder %s14, 5
      %s200 = scalar_select %p199, %s14, 5
      %s201 = smul.addr %s200, 2
      %s202 = scalar_lea.vmem %s2, %s201
      %p203 = scmp.lt.s32.totalorder %s14, 5
      %s204 = scalar_select %p203, %s14, 5
      %s205 = smul.addr %s204, 8
      %s206 = smul.addr %s205, 8
      %s207 = scalar_lea.vmem %s3, %s206
      %v208 = vld [vmem:[%s193] sm:$0xff]
      %v209 = vld [vmem:[%s193 + $0x8] sm:$0xff]
      %v210 = vld [vmem:[%s193 + $0x10] sm:$0xff]
      %v211 = vld [vmem:[%s193 + $0x18] sm:$0xff]
      %v212 = vld [vmem:[%s198] sm:$0xff]
      %v213 = vld [vmem:[%s198 + $0x8] sm:$0xff]
      %v214 = vld [vmem:[%s198 + $0x10] sm:$0xff]
      %v215 = vld [vmem:[%s198 + $0x18] sm:$0xff]
      %v216 = vld [vmem:[%s198 + $0x20] sm:$0xff]
      %v217 = vld [vmem:[%s198 + $0x28] sm:$0xff]
      %v218 = vld [vmem:[%s198 + $0x30] sm:$0xff]
      %v219 = vld [vmem:[%s198 + $0x38] sm:$0xff]
      %v220 = vld [vmem:[%s198 + $0x40] sm:$0xff]
      %v221 = vld [vmem:[%s198 + $0x48] sm:$0xff]
      %v222 = vld [vmem:[%s198 + $0x50] sm:$0xff]
      %v223 = vld [vmem:[%s198 + $0x58] sm:$0xff]
      %v224 = vld [vmem:[%s198 + $0x60] sm:$0xff]
      %v225 = vld [vmem:[%s198 + $0x68] sm:$0xff]
      %v226 = vld [vmem:[%s198 + $0x70] sm:$0xff]
      %v227 = vld [vmem:[%s198 + $0x78] sm:$0xff]
      %v228 = vld [vmem:[%s198 + $0x80] sm:$0xff]
      %v229 = vld [vmem:[%s198 + $0x88] sm:$0xff]
      %v230 = vld [vmem:[%s198 + $0x90] sm:$0xff]
      %v231 = vld [vmem:[%s198 + $0x98] sm:$0xff]
      %v232 = vld [vmem:[%s198 + $0xa0] sm:$0xff]
      %v233 = vld [vmem:[%s198 + $0xa8] sm:$0xff]
      %v234 = vld [vmem:[%s198 + $0xb0] sm:$0xff]
      %v235 = vld [vmem:[%s198 + $0xb8] sm:$0xff]
      %v236 = vld [vmem:[%s198 + $0xc0] sm:$0xff]
      %v237 = vld [vmem:[%s198 + $0xc8] sm:$0xff]
      %v238 = vld [vmem:[%s198 + $0xd0] sm:$0xff]
      %v239 = vld [vmem:[%s198 + $0xd8] sm:$0xff]
      %v240 = vld [vmem:[%s198 + $0xe0] sm:$0xff]
      %v241 = vld [vmem:[%s198 + $0xe8] sm:$0xff]
      %v242 = vld [vmem:[%s198 + $0xf0] sm:$0xff]
      %v243 = vld [vmem:[%s198 + $0xf8] sm:$0xff]
      %v244 = vld [vmem:[%s202] sm:$0x3]
      %v246 = vlaneseq
      %v247 = vshrl.u32 %v246, 7
      %v248 = vsub.s32 0, %v247
      %v249 = vrot.slane %v244, %v248
      %v250 = vlaneseq
      %v251 = vshrl.u32 %v250, 7
      %v252 = vsub.s32 1, %v251
      %v253 = vrot.slane %v244, %v252
      %v260 = vunpack.c.l.b16 %v208
      %v261 = vunpack.c.h.b16 %v208
      %v262 = vunpack.c.l.b16 %v209
      %v263 = vunpack.c.h.b16 %v209
      %v264 = vunpack.c.l.b16 %v210
      %v265 = vunpack.c.h.b16 %v210
      %v266 = vunpack.c.l.b16 %v211
      %v267 = vunpack.c.h.b16 %v211
      %v268 = vpack.c.b16 %v262, %v260
      %v269 = vpack.c.b16 %v263, %v261
      %v270 = vpack.c.b16 %v266, %v264
      %v271 = vpack.c.b16 %v267, %v265
      %v308 = vunpack.c.l.b16 %v212
      %v309 = vunpack.c.h.b16 %v212
      %v310 = vunpack.c.l.b16 %v213
      %v311 = vunpack.c.h.b16 %v213
      %v312 = vunpack.c.l.b16 %v214
      %v313 = vunpack.c.h.b16 %v214
      %v314 = vunpack.c.l.b16 %v215
      %v315 = vunpack.c.h.b16 %v215
      %v316 = vunpack.c.l.b16 %v216
      %v317 = vunpack.c.h.b16 %v216
      %v318 = vunpack.c.l.b16 %v217
      %v319 = vunpack.c.h.b16 %v217
      %v320 = vunpack.c.l.b16 %v218
      %v321 = vunpack.c.h.b16 %v218
      %v322 = vunpack.c.l.b16 %v219
      %v323 = vunpack.c.h.b16 %v219
      %v324 = vunpack.c.l.b16 %v220
      %v325 = vunpack.c.h.b16 %v220
      %v326 = vunpack.c.l.b16 %v221
      %v327 = vunpack.c.h.b16 %v221
      %v328 = vunpack.c.l.b16 %v222
      %v329 = vunpack.c.h.b16 %v222
      %v330 = vunpack.c.l.b16 %v223
      %v331 = vunpack.c.h.b16 %v223
      %v332 = vunpack.c.l.b16 %v224
      %v333 = vunpack.c.h.b16 %v224
      %v334 = vunpack.c.l.b16 %v225
      %v335 = vunpack.c.h.b16 %v225
      %v336 = vunpack.c.l.b16 %v226
      %v337 = vunpack.c.h.b16 %v226
      %v338 = vunpack.c.l.b16 %v227
      %v339 = vunpack.c.h.b16 %v227
      %v340 = vunpack.c.l.b16 %v228
      %v341 = vunpack.c.h.b16 %v228
      %v342 = vunpack.c.l.b16 %v229
      %v343 = vunpack.c.h.b16 %v229
      %v344 = vunpack.c.l.b16 %v230
      %v345 = vunpack.c.h.b16 %v230
      %v346 = vunpack.c.l.b16 %v231
      %v347 = vunpack.c.h.b16 %v231
      %v348 = vunpack.c.l.b16 %v232
      %v349 = vunpack.c.h.b16 %v232
      %v350 = vunpack.c.l.b16 %v233
      %v351 = vunpack.c.h.b16 %v233
      %v352 = vunpack.c.l.b16 %v234
      %v353 = vunpack.c.h.b16 %v234
      %v354 = vunpack.c.l.b16 %v235
      %v355 = vunpack.c.h.b16 %v235
      %v356 = vunpack.c.l.b16 %v236
      %v357 = vunpack.c.h.b16 %v236
      %v358 = vunpack.c.l.b16 %v237
      %v359 = vunpack.c.h.b16 %v237
      %v360 = vunpack.c.l.b16 %v238
      %v361 = vunpack.c.h.b16 %v238
      %v362 = vunpack.c.l.b16 %v239
      %v363 = vunpack.c.h.b16 %v239
      %v364 = vunpack.c.l.b16 %v240
      %v365 = vunpack.c.h.b16 %v240
      %v366 = vunpack.c.l.b16 %v241
      %v367 = vunpack.c.h.b16 %v241
      %v368 = vunpack.c.l.b16 %v242
      %v369 = vunpack.c.h.b16 %v242
      %v370 = vunpack.c.l.b16 %v243
      %v371 = vunpack.c.h.b16 %v243
      %v372 = vpack.c.b16 %v310, %v308
      %v373 = vpack.c.b16 %v311, %v309
      %v374 = vpack.c.b16 %v314, %v312
      %v375 = vpack.c.b16 %v315, %v313
      %v376 = vpack.c.b16 %v318, %v316
      %v377 = vpack.c.b16 %v319, %v317
      %v378 = vpack.c.b16 %v322, %v320
      %v379 = vpack.c.b16 %v323, %v321
      %v380 = vpack.c.b16 %v326, %v324
      %v381 = vpack.c.b16 %v327, %v325
      %v382 = vpack.c.b16 %v330, %v328
      %v383 = vpack.c.b16 %v331, %v329
      %v384 = vpack.c.b16 %v334, %v332
      %v385 = vpack.c.b16 %v335, %v333
      %v386 = vpack.c.b16 %v338, %v336
      %v387 = vpack.c.b16 %v339, %v337
      %v388 = vpack.c.b16 %v342, %v340
      %v389 = vpack.c.b16 %v343, %v341
      %v390 = vpack.c.b16 %v346, %v344
      %v391 = vpack.c.b16 %v347, %v345
      %v392 = vpack.c.b16 %v350, %v348
      %v393 = vpack.c.b16 %v351, %v349
      %v394 = vpack.c.b16 %v354, %v352
      %v395 = vpack.c.b16 %v355, %v353
      %v396 = vpack.c.b16 %v358, %v356
      %v397 = vpack.c.b16 %v359, %v357
      %v398 = vpack.c.b16 %v362, %v360
      %v399 = vpack.c.b16 %v363, %v361
      %v400 = vpack.c.b16 %v366, %v364
      %v401 = vpack.c.b16 %v367, %v365
      %v402 = vpack.c.b16 %v370, %v368
      %v403 = vpack.c.b16 %v371, %v369
      %436 = vmatprep.subr.bf16.mxu0 %v387
      %437 = vmatpush1.bf16.msra.mxu0 %v386
      %438 = vmatprep.subr.bf16.mxu0 %v385
      %439 = vmatpush1.bf16.msra.mxu0 %v384
      %440 = vmatprep.subr.bf16.mxu0 %v383
      %441 = vmatpush1.bf16.msra.mxu0 %v382
      %442 = vmatprep.subr.bf16.mxu0 %v381
      %443 = vmatpush1.bf16.msra.mxu0 %v380
      %444 = vmatprep.subr.bf16.mxu0 %v379
      %445 = vmatpush1.bf16.msra.mxu0 %v378
      %446 = vmatprep.subr.bf16.mxu0 %v377
      %447 = vmatpush1.bf16.msra.mxu0 %v376
      %448 = vmatprep.subr.bf16.mxu0 %v375
      %449 = vmatpush1.bf16.msra.mxu0 %v374
      %450 = vmatprep.subr.bf16.mxu0 %v373
      %451 = vmatpush1.bf16.msra.mxu0 %v372
      %452 = vmatprep.subr.bf16.mxu0 %v403
      %453 = vmatpush2.bf16.msra.mxu0 %v402
      %454 = vmatprep.subr.bf16.mxu0 %v401
      %455 = vmatpush2.bf16.msra.mxu0 %v400
      %456 = vmatprep.subr.bf16.mxu0 %v399
      %457 = vmatpush2.bf16.msra.mxu0 %v398
      %458 = vmatprep.subr.bf16.mxu0 %v397
      %459 = vmatpush2.bf16.msra.mxu0 %v396
      %460 = vmatprep.subr.bf16.mxu0 %v395
      %461 = vmatpush2.bf16.msra.mxu0 %v394
      %462 = vmatprep.subr.bf16.mxu0 %v393
      %463 = vmatpush2.bf16.msra.mxu0 %v392
      %464 = vmatprep.subr.bf16.mxu0 %v391
      %465 = vmatpush2.bf16.msra.mxu0 %v390
      %466 = vmatprep.subr.bf16.mxu0 %v389
      %467 = vmatpush2.bf16.msra.mxu0 %v388
      %468 = vmatprep.mubr.bf16.mxu0 %v269
      %469 = vmatmul.mubr.bf16.gmra.mxu0 %v268
      %v470 = vpop.f32.mrf.mxu0
      %v471 = vadd.f32 %v249, %v470
      %v472 = vpop.f32.mrf.mxu0
      %v473 = vadd.f32 %v253, %v472
      %v474 = vpop.f32.mrf.mxu0
      %v475 = vadd.f32 %v249, %v474
      %v476 = vpop.f32.mrf.mxu0
      %v477 = vadd.f32 %v253, %v476
      %478 = vmatprep.mubr.bf16.mxu0 %v271
      %479 = vmatmul.mubr.bf16.gmra.mxu0 %v270
      %v480 = vpop.f32.mrf.mxu0
      %v481 = vadd.f32 %v249, %v480
      %v482 = vpop.f32.mrf.mxu0
      %v483 = vadd.f32 %v253, %v482
      %v484 = vpop.f32.mrf.mxu0
      %v485 = vadd.f32 %v249, %v484
      %v486 = vpop.f32.mrf.mxu0
      %v487 = vadd.f32 %v253, %v486
      %488 = vdwg.mxu0
      %489 = vst [vmem:[%s207] sm:$0xff] %v471
      %490 = vst [vmem:[%s207 + $0x8] sm:$0xff] %v473
      %491 = vst [vmem:[%s207 + $0x10] sm:$0xff] %v475
      %492 = vst [vmem:[%s207 + $0x18] sm:$0xff] %v477
      %493 = vst [vmem:[%s207 + $0x20] sm:$0xff] %v481
      %494 = vst [vmem:[%s207 + $0x28] sm:$0xff] %v483
      %495 = vst [vmem:[%s207 + $0x30] sm:$0xff] %v485
      %496 = vst [vmem:[%s207 + $0x38] sm:$0xff] %v487
      %p497 = scmp.lt.s32.totalorder %s14, 5
      %s498 = scalar_select %p497, %s14, 5
      %s499 = smul.addr %s498, 8
      %s500 = smul.addr %s499, 8
      %s501 = scalar_lea.vmem %s3, %s500
      // Predicated region
      $region33: #{frequency_kd2_forward.6} parent=31 // pred_check
        %p502 = pneg %p110
      $region34: #{frequency_kd2_forward.6} parent=31 // pred_check_branch
        %504 = sbr.rel (%p502) target = $region36
      $region35: #{frequency_kd2_forward.6} parent=31 // pred_region
        _
      $region36: #{frequency_kd2_forward.6} parent=31 // pred_fallthru
        _
    $region32: #{frequency_kd2_forward.6} parent=5 // pred_fallthru
      _
    %p505 = scmp.le.s32.totalorder 2, %s9
    // Predicated region
    $region37: #{frequency_kd2_forward.6} parent=5 // pred_check
      %p506 = pneg %p505
    $region38: #{frequency_kd2_forward.6} parent=5 // pred_check_branch
      %508 = sbr.rel (%p506) target = $region40
    $region39: #{frequency_kd2_forward.6} parent=5 // pred_region
      %s509 = ssub.s32 %s9, 2
      // Predicated region
      $region41: #{frequency_kd2_forward.6} parent=39 // pred_check
        %p510 = pneg %p116
      $region42: #{frequency_kd2_forward.6} parent=39 // pred_check_branch
        %512 = sbr.rel (%p510) target = $region44
      $region43: #{frequency_kd2_forward.6} parent=39 // pred_region
        %p513 = scmp.lt.s32.totalorder %s15, 5
        %s514 = scalar_select %p513, %s15, 5
        %s515 = smul.addr %s514, 8
        %s516 = smul.addr %s515, 8
        %s517 = scalar_lea.vmem %s3, %s516
      $region44: #{frequency_kd2_forward.6} parent=39 // pred_fallthru
        _
    $region40: #{frequency_kd2_forward.6} parent=5 // pred_fallthru
      _
  $region6: #{frequency_kd2_forward.6} parent=0 // loop_footer
    %s13 = sadd.s32 1, %s9
  $region7: #{frequency_kd2_forward.6} parent=0 // loop_footer_branch
    %8 = sbr.rel target = $region3
  $region8: #{frequency_kd2_forward.6} parent=0 // loop_exit
    _

// kernel: frequency_kd2_forward.5
$region0: #{frequency_kd2_forward.5}
  #allocation0 [shape = 'u32[]', space=smem, size = 0x4, offset = 0x4, fixed_abs, tag = 'smem constant byte address 0x4 - core index']
  #allocation1 [shape = 'u32[144,128]{1,0:T(1,128)}', space=vmem, size = 0x12000, scoped, tag = 'internal scratch']
  %s0 = inlined_call_operand.vmem [shape: bf16[2,32,2304], index: 0, kind: input, shape index: {}]
  %s1 = inlined_call_operand.vmem [shape: bf16[2,2304,256], index: 1, kind: input, shape index: {}]
  %s2 = inlined_call_operand.vmem [shape: f32[2,1,256], index: 2, kind: input, shape index: {}]
  %s3 = inlined_call_operand.vmem [shape: f32[2,32,256], index: 3, kind: output, shape index: {}]
  %s4 = sld [smem:[#allocation0]]
  $region45: #{frequency_kd2_forward.5} parent=0
    _
  %s6 = ssub.s32 1, %s4
  %s7 = scalar_select 0, %s6, %s4
  loop: start=0, step=1, limit=4
  $region2: #{frequency_kd2_forward.5} parent=0 // loop_pre_header
    _
  $region3: #{frequency_kd2_forward.5} parent=0 // loop_header
    %s9 = sphi 0, %s13
    %p10 = scmp.ge.s32.totalorder %s9, 4
    %s19 = sphi 0, %s21
    %s22 = sphi 0, %s19
    %s23 = sphi 0, %s22
    %s39 = sphi 0, %s23
    %s45 = sphi 0, %s47
    %s48 = sphi 0, %s45
    %s49 = sphi 0, %s48
    %s65 = sphi 0, %s49
    %s71 = sphi 0, %s73
    %s74 = sphi 0, %s71
    %s75 = sphi 0, %s74
    %s91 = sphi 0, %s75
    %s97 = sphi 0, %s99
    %s100 = sphi 0, %s97
    %s101 = sphi 0, %s100
    %s117 = sphi 0, %s101
  $region4: #{frequency_kd2_forward.5} parent=0 // loop_header_branch
    %12 = sbr.rel (%p10) target = $region8
  $region5: #{frequency_kd2_forward.5} parent=0 // loop_body
    %s14 = ssub.s32 %s9, 1
    %s15 = ssub.s32 %s9, 2
    %s16 = sadd.s32 %s9, 1
    %s17 = ssub.s32 %s9, %s16
    %p18 = scmp.eq.s32.totalorder %s17, 0
    %s20 = sadd.s32 %s19, 1
    %s21 = scalar_select %p18, %s19, %s20
    %p24 = pneg %p18
    %p25 = scmp.eq.s32.totalorder %s9, 1
    %p26 = por %p24, %p25
    %p27 = scmp.ne.s32.totalorder %s19, %s22
    %p28 = scmp.eq.s32.totalorder %s9, 0
    %p29 = por %p27, %p28
    %p30 = scmp.ne.s32.totalorder %s19, %s22
    %p31 = scmp.eq.s32.totalorder %s14, 1
    %p32 = por %p30, %p31
    %p33 = scmp.ne.s32.totalorder %s22, %s23
    %p34 = scmp.eq.s32.totalorder %s14, 0
    %p35 = por %p33, %p34
    %p36 = scmp.ne.s32.totalorder %s22, %s23
    %p37 = scmp.eq.s32.totalorder %s15, 1
    %p38 = por %p36, %p37
    %p40 = scmp.ne.s32.totalorder %s23, %s39
    %p41 = scmp.eq.s32.totalorder %s15, 0
    %p42 = por %p40, %p41
    %s43 = ssub.s32 %s9, %s16
    %p44 = scmp.eq.s32.totalorder %s43, 0
    %s46 = sadd.s32 %s45, 1
    %s47 = scalar_select %p44, %s45, %s46
    %p50 = pneg %p44
    %p51 = scmp.eq.s32.totalorder %s9, 1
    %p52 = por %p50, %p51
    %p53 = scmp.ne.s32.totalorder %s45, %s48
    %p54 = scmp.eq.s32.totalorder %s9, 0
    %p55 = por %p53, %p54
    %p56 = scmp.ne.s32.totalorder %s45, %s48
    %p57 = scmp.eq.s32.totalorder %s14, 1
    %p58 = por %p56, %p57
    %p59 = scmp.ne.s32.totalorder %s48, %s49
    %p60 = scmp.eq.s32.totalorder %s14, 0
    %p61 = por %p59, %p60
    %p62 = scmp.ne.s32.totalorder %s48, %s49
    %p63 = scmp.eq.s32.totalorder %s15, 1
    %p64 = por %p62, %p63
    %p66 = scmp.ne.s32.totalorder %s49, %s65
    %p67 = scmp.eq.s32.totalorder %s15, 0
    %p68 = por %p66, %p67
    %s69 = ssub.s32 %s9, %s16
    %p70 = scmp.eq.s32.totalorder %s69, 0
    %s72 = sadd.s32 %s71, 1
    %s73 = scalar_select %p70, %s71, %s72
    %p76 = pneg %p70
    %p77 = scmp.eq.s32.totalorder %s9, 1
    %p78 = por %p76, %p77
    %p79 = scmp.ne.s32.totalorder %s71, %s74
    %p80 = scmp.eq.s32.totalorder %s9, 0
    %p81 = por %p79, %p80
    %p82 = scmp.ne.s32.totalorder %s71, %s74
    %p83 = scmp.eq.s32.totalorder %s14, 1
    %p84 = por %p82, %p83
    %p85 = scmp.ne.s32.totalorder %s74, %s75
    %p86 = scmp.eq.s32.totalorder %s14, 0
    %p87 = por %p85, %p86
    %p88 = scmp.ne.s32.totalorder %s74, %s75
    %p89 = scmp.eq.s32.totalorder %s15, 1
    %p90 = por %p88, %p89
    %p92 = scmp.ne.s32.totalorder %s75, %s91
    %p93 = scmp.eq.s32.totalorder %s15, 0
    %p94 = por %p92, %p93
    %s95 = ssub.s32 %s9, %s16
    %p96 = scmp.eq.s32.totalorder %s95, 0
    %s98 = sadd.s32 %s97, 1
    %s99 = scalar_select %p96, %s97, %s98
    %p102 = pneg %p96
    %p103 = scmp.eq.s32.totalorder %s9, 1
    %p104 = por %p102, %p103
    %p105 = scmp.ne.s32.totalorder %s97, %s100
    %p106 = scmp.eq.s32.totalorder %s9, 0
    %p107 = por %p105, %p106
    %p108 = scmp.ne.s32.totalorder %s97, %s100
    %p109 = scmp.eq.s32.totalorder %s14, 1
    %p110 = por %p108, %p109
    %p111 = scmp.ne.s32.totalorder %s100, %s101
    %p112 = scmp.eq.s32.totalorder %s14, 0
    %p113 = por %p111, %p112
    %p114 = scmp.ne.s32.totalorder %s100, %s101
    %p115 = scmp.eq.s32.totalorder %s15, 1
    %p116 = por %p114, %p115
    %p118 = scmp.ne.s32.totalorder %s101, %s117
    %p119 = scmp.eq.s32.totalorder %s15, 0
    %p120 = por %p118, %p119
    %p121 = scmp.le.s32.totalorder 1, %s9
    %p122 = scmp.lt.s32.totalorder %s9, 3
    %p123 = pnand %p121, %p122
    %p124 = pneg %p123
    // Predicated region
    $region9: #{frequency_kd2_forward.5} parent=5 // pred_check
      _
    $region10: #{frequency_kd2_forward.5} parent=5 // pred_check_branch
      %126 = sbr.rel (%p123) target = $region12
    $region11: #{frequency_kd2_forward.5} parent=5 // pred_region
      %s127 = ssub.s32 %s9, 1
    $region12: #{frequency_kd2_forward.5} parent=5 // pred_fallthru
      _
    %p128 = scmp.lt.s32.totalorder %s9, 2
    // Predicated region
    $region13: #{frequency_kd2_forward.5} parent=5 // pred_check
      %p129 = pneg %p128
    $region14: #{frequency_kd2_forward.5} parent=5 // pred_check_branch
      %131 = sbr.rel (%p129) target = $region16
    $region15: #{frequency_kd2_forward.5} parent=5 // pred_region
      // Predicated region
      $region17: #{frequency_kd2_forward.5} parent=15 // pred_check
        %p132 = pneg %p29
      $region18: #{frequency_kd2_forward.5} parent=15 // pred_check_branch
        %134 = sbr.rel (%p132) target = $region20
      $region19: #{frequency_kd2_forward.5} parent=15 // pred_region
        %p135 = scmp.lt.s32.totalorder %s9, 1
        %s136 = scalar_select %p135, %s9, 1
        %s137 = smul.addr %s136, 72
        %s138 = smul.addr %s137, 4
        %s139 = scalar_lea.vmem %s0, %s138
      $region20: #{frequency_kd2_forward.5} parent=15 // pred_fallthru
        _
      // Predicated region
      $region21: #{frequency_kd2_forward.5} parent=15 // pred_check
        %p140 = pneg %p55
      $region22: #{frequency_kd2_forward.5} parent=15 // pred_check_branch
        %142 = sbr.rel (%p140) target = $region24
      $region23: #{frequency_kd2_forward.5} parent=15 // pred_region
        %p143 = scmp.lt.s32.totalorder %s9, 1
        %s144 = scalar_select %p143, %s9, 1
        %s145 = smul.addr %s144, 576
        %s146 = smul.addr %s145, 4
        %s147 = scalar_lea.vmem %s1, %s146
      $region24: #{frequency_kd2_forward.5} parent=15 // pred_fallthru
        _
      // Predicated region
      $region25: #{frequency_kd2_forward.5} parent=15 // pred_check
        %p148 = pneg %p81
      $region26: #{frequency_kd2_forward.5} parent=15 // pred_check_branch
        %150 = sbr.rel (%p148) target = $region28
      $region27: #{frequency_kd2_forward.5} parent=15 // pred_region
        %p151 = scmp.lt.s32.totalorder %s9, 1
        %s152 = scalar_select %p151, %s9, 1
        %s153 = smul.addr %s152, 2
        %s154 = scalar_lea.vmem %s2, %s153
      $region28: #{frequency_kd2_forward.5} parent=15 // pred_fallthru
        _
    $region16: #{frequency_kd2_forward.5} parent=5 // pred_fallthru
      _
    %p155 = scmp.le.s32.totalorder 1, %s9
    %p156 = scmp.lt.s32.totalorder %s9, 3
    %p157 = pnand %p155, %p156
    %p158 = pneg %p157
    // Predicated region
    $region29: #{frequency_kd2_forward.5} parent=5 // pred_check
      _
    $region30: #{frequency_kd2_forward.5} parent=5 // pred_check_branch
      %160 = sbr.rel (%p157) target = $region32
    $region31: #{frequency_kd2_forward.5} parent=5 // pred_region
      %s161 = ssub.s32 %s9, 1
      %p162 = scmp.lt.s32.totalorder %s14, 1
      %s163 = scalar_select %p162, %s14, 1
      %s164 = smul.addr %s163, 72
      %s165 = smul.addr %s164, 4
      %s166 = scalar_lea.vmem %s0, %s165
      %p167 = pneg %p35
      %p168 = pneg %p32
      %p169 = scmp.lt.s32.totalorder %s14, 1
      %s170 = scalar_select %p169, %s14, 1
      %s171 = smul.addr %s170, 576
      %s172 = smul.addr %s171, 4
      %s173 = scalar_lea.vmem %s1, %s172
      %p174 = pneg %p61
      %p175 = pneg %p58
      %p176 = scmp.lt.s32.totalorder %s14, 1
      %s177 = scalar_select %p176, %s14, 1
      %s178 = smul.addr %s177, 2
      %s179 = scalar_lea.vmem %s2, %s178
      %p180 = pneg %p87
      %p181 = pneg %p84
      %p182 = pneg %p113
      %p183 = pneg %p110
      %p184 = scmp.lt.s32.totalorder %s14, 1
      %s185 = scalar_select %p184, %s14, 1
      %s186 = smul.addr %s185, 8
      %s187 = smul.addr %s186, 8
      %s188 = scalar_lea.vmem %s3, %s187
      %p189 = scmp.lt.s32.totalorder %s14, 1
      %s190 = scalar_select %p189, %s14, 1
      %s191 = smul.addr %s190, 72
      %s192 = smul.addr %s191, 4
      %s193 = scalar_lea.vmem %s0, %s192
      %p194 = scmp.lt.s32.totalorder %s14, 1
      %s195 = scalar_select %p194, %s14, 1
      %s196 = smul.addr %s195, 576
      %s197 = smul.addr %s196, 4
      %s198 = scalar_lea.vmem %s1, %s197
      %p199 = scmp.lt.s32.totalorder %s14, 1
      %s200 = scalar_select %p199, %s14, 1
      %s201 = smul.addr %s200, 2
      %s202 = scalar_lea.vmem %s2, %s201
      %p203 = scmp.lt.s32.totalorder %s14, 1
      %s204 = scalar_select %p203, %s14, 1
      %s205 = smul.addr %s204, 8
      %s206 = smul.addr %s205, 8
      %s207 = scalar_lea.vmem %s3, %s206
      %v208 = vld [vmem:[%s193] sm:$0xff]
      %v209 = vld [vmem:[%s193 + $0x8] sm:$0xff]
      %v210 = vld [vmem:[%s193 + $0x10] sm:$0xff]
      %v211 = vld [vmem:[%s193 + $0x18] sm:$0xff]
      %v212 = vld [vmem:[%s193 + $0x20] sm:$0xff]
      %v213 = vld [vmem:[%s193 + $0x28] sm:$0xff]
      %v214 = vld [vmem:[%s193 + $0x30] sm:$0xff]
      %v215 = vld [vmem:[%s193 + $0x38] sm:$0xff]
      %v216 = vld [vmem:[%s193 + $0x40] sm:$0xff]
      %v217 = vld [vmem:[%s193 + $0x48] sm:$0xff]
      %v218 = vld [vmem:[%s193 + $0x50] sm:$0xff]
      %v219 = vld [vmem:[%s193 + $0x58] sm:$0xff]
      %v220 = vld [vmem:[%s193 + $0x60] sm:$0xff]
      %v221 = vld [vmem:[%s193 + $0x68] sm:$0xff]
      %v222 = vld [vmem:[%s193 + $0x70] sm:$0xff]
      %v223 = vld [vmem:[%s193 + $0x78] sm:$0xff]
      %v224 = vld [vmem:[%s193 + $0x80] sm:$0xff]
      %v225 = vld [vmem:[%s193 + $0x88] sm:$0xff]
      %v226 = vld [vmem:[%s193 + $0x90] sm:$0xff]
      %v227 = vld [vmem:[%s193 + $0x98] sm:$0xff]
      %v228 = vld [vmem:[%s193 + $0xa0] sm:$0xff]
      %v229 = vld [vmem:[%s193 + $0xa8] sm:$0xff]
      %v230 = vld [vmem:[%s193 + $0xb0] sm:$0xff]
      %v231 = vld [vmem:[%s193 + $0xb8] sm:$0xff]
      %v232 = vld [vmem:[%s193 + $0xc0] sm:$0xff]
      %v233 = vld [vmem:[%s193 + $0xc8] sm:$0xff]
      %v234 = vld [vmem:[%s193 + $0xd0] sm:$0xff]
      %v235 = vld [vmem:[%s193 + $0xd8] sm:$0xff]
      %v236 = vld [vmem:[%s193 + $0xe0] sm:$0xff]
      %v237 = vld [vmem:[%s193 + $0xe8] sm:$0xff]
      %v238 = vld [vmem:[%s193 + $0xf0] sm:$0xff]
      %v239 = vld [vmem:[%s193 + $0xf8] sm:$0xff]
      %v240 = vld [vmem:[%s193 + $0x100] sm:$0xff]
      %v241 = vld [vmem:[%s193 + $0x108] sm:$0xff]
      %v242 = vld [vmem:[%s193 + $0x110] sm:$0xff]
      %v243 = vld [vmem:[%s193 + $0x118] sm:$0xff]
      %v244 = vld [vmem:[%s198] sm:$0xff]
      %v245 = vld [vmem:[%s198 + $0x8] sm:$0xff]
      %v246 = vld [vmem:[%s198 + $0x10] sm:$0xff]
      %v247 = vld [vmem:[%s198 + $0x18] sm:$0xff]
      %v248 = vld [vmem:[%s198 + $0x20] sm:$0xff]
      %v249 = vld [vmem:[%s198 + $0x28] sm:$0xff]
      %v250 = vld [vmem:[%s198 + $0x30] sm:$0xff]
      %v251 = vld [vmem:[%s198 + $0x38] sm:$0xff]
      %v252 = vld [vmem:[%s198 + $0x40] sm:$0xff]
      %v253 = vld [vmem:[%s198 + $0x48] sm:$0xff]
      %v254 = vld [vmem:[%s198 + $0x50] sm:$0xff]
      %v255 = vld [vmem:[%s198 + $0x58] sm:$0xff]
      %v256 = vld [vmem:[%s198 + $0x60] sm:$0xff]
      %v257 = vld [vmem:[%s198 + $0x68] sm:$0xff]
      %v258 = vld [vmem:[%s198 + $0x70] sm:$0xff]
      %v259 = vld [vmem:[%s198 + $0x78] sm:$0xff]
      %v260 = vld [vmem:[%s198 + $0x80] sm:$0xff]
      %v261 = vld [vmem:[%s198 + $0x88] sm:$0xff]
      %v262 = vld [vmem:[%s198 + $0x90] sm:$0xff]
      %v263 = vld [vmem:[%s198 + $0x98] sm:$0xff]
      %v264 = vld [vmem:[%s198 + $0xa0] sm:$0xff]
      %v265 = vld [vmem:[%s198 + $0xa8] sm:$0xff]
      %v266 = vld [vmem:[%s198 + $0xb0] sm:$0xff]
      %v267 = vld [vmem:[%s198 + $0xb8] sm:$0xff]
      %v268 = vld [vmem:[%s198 + $0xc0] sm:$0xff]
      %v269 = vld [vmem:[%s198 + $0xc8] sm:$0xff]
      %v270 = vld [vmem:[%s198 + $0xd0] sm:$0xff]
      %v271 = vld [vmem:[%s198 + $0xd8] sm:$0xff]
      %v272 = vld [vmem:[%s198 + $0xe0] sm:$0xff]
      %v273 = vld [vmem:[%s198 + $0xe8] sm:$0xff]
      %v274 = vld [vmem:[%s198 + $0xf0] sm:$0xff]
      %v275 = vld [vmem:[%s198 + $0xf8] sm:$0xff]
      %v276 = vld [vmem:[%s198 + $0x100] sm:$0xff]
      %v277 = vld [vmem:[%s198 + $0x108] sm:$0xff]
      %v278 = vld [vmem:[%s198 + $0x110] sm:$0xff]
      %v279 = vld [vmem:[%s198 + $0x118] sm:$0xff]
      %v280 = vld [vmem:[%s198 + $0x120] sm:$0xff]
      %v281 = vld [vmem:[%s198 + $0x128] sm:$0xff]
      %v282 = vld [vmem:[%s198 + $0x130] sm:$0xff]
      %v283 = vld [vmem:[%s198 + $0x138] sm:$0xff]
      %v284 = vld [vmem:[%s198 + $0x140] sm:$0xff]
      %v285 = vld [vmem:[%s198 + $0x148] sm:$0xff]
      %v286 = vld [vmem:[%s198 + $0x150] sm:$0xff]
      %v287 = vld [vmem:[%s198 + $0x158] sm:$0xff]
      %v288 = vld [vmem:[%s198 + $0x160] sm:$0xff]
      %v289 = vld [vmem:[%s198 + $0x168] sm:$0xff]
      %v290 = vld [vmem:[%s198 + $0x170] sm:$0xff]
      %v291 = vld [vmem:[%s198 + $0x178] sm:$0xff]
      %v292 = vld [vmem:[%s198 + $0x180] sm:$0xff]
      %v293 = vld [vmem:[%s198 + $0x188] sm:$0xff]
      %v294 = vld [vmem:[%s198 + $0x190] sm:$0xff]
      %v295 = vld [vmem:[%s198 + $0x198] sm:$0xff]
      %v296 = vld [vmem:[%s198 + $0x1a0] sm:$0xff]
      %v297 = vld [vmem:[%s198 + $0x1a8] sm:$0xff]
      %v298 = vld [vmem:[%s198 + $0x1b0] sm:$0xff]
      %v299 = vld [vmem:[%s198 + $0x1b8] sm:$0xff]
      %v300 = vld [vmem:[%s198 + $0x1c0] sm:$0xff]
      %v301 = vld [vmem:[%s198 + $0x1c8] sm:$0xff]
      %v302 = vld [vmem:[%s198 + $0x1d0] sm:$0xff]
      %v303 = vld [vmem:[%s198 + $0x1d8] sm:$0xff]
      %v304 = vld [vmem:[%s198 + $0x1e0] sm:$0xff]
      %v305 = vld [vmem:[%s198 + $0x1e8] sm:$0xff]
      %v306 = vld [vmem:[%s198 + $0x1f0] sm:$0xff]
      %v307 = vld [vmem:[%s198 + $0x1f8] sm:$0xff]
      %v308 = vld [vmem:[%s198 + $0x200] sm:$0xff]
      %v309 = vld [vmem:[%s198 + $0x208] sm:$0xff]
      %v310 = vld [vmem:[%s198 + $0x210] sm:$0xff]
      %v311 = vld [vmem:[%s198 + $0x218] sm:$0xff]
      %v312 = vld [vmem:[%s198 + $0x220] sm:$0xff]
      %v313 = vld [vmem:[%s198 + $0x228] sm:$0xff]
      %v314 = vld [vmem:[%s198 + $0x230] sm:$0xff]
      %v315 = vld [vmem:[%s198 + $0x238] sm:$0xff]
      %v316 = vld [vmem:[%s198 + $0x240] sm:$0xff]
      %v317 = vld [vmem:[%s198 + $0x248] sm:$0xff]
      %v318 = vld [vmem:[%s198 + $0x250] sm:$0xff]
      %v319 = vld [vmem:[%s198 + $0x258] sm:$0xff]
      %v320 = vld [vmem:[%s198 + $0x260] sm:$0xff]
      %v321 = vld [vmem:[%s198 + $0x268] sm:$0xff]
      %v322 = vld [vmem:[%s198 + $0x270] sm:$0xff]
      %v323 = vld [vmem:[%s198 + $0x278] sm:$0xff]
      %v324 = vld [vmem:[%s198 + $0x280] sm:$0xff]
      %v325 = vld [vmem:[%s198 + $0x288] sm:$0xff]
      %v326 = vld [vmem:[%s198 + $0x290] sm:$0xff]
      %v327 = vld [vmem:[%s198 + $0x298] sm:$0xff]
      %v328 = vld [vmem:[%s198 + $0x2a0] sm:$0xff]
      %v329 = vld [vmem:[%s198 + $0x2a8] sm:$0xff]
      %v330 = vld [vmem:[%s198 + $0x2b0] sm:$0xff]
      %v331 = vld [vmem:[%s198 + $0x2b8] sm:$0xff]
      %v332 = vld [vmem:[%s198 + $0x2c0] sm:$0xff]
      %v333 = vld [vmem:[%s198 + $0x2c8] sm:$0xff]
      %v334 = vld [vmem:[%s198 + $0x2d0] sm:$0xff]
      %v335 = vld [vmem:[%s198 + $0x2d8] sm:$0xff]
      %v336 = vld [vmem:[%s198 + $0x2e0] sm:$0xff]
      %v337 = vld [vmem:[%s198 + $0x2e8] sm:$0xff]
      %v338 = vld [vmem:[%s198 + $0x2f0] sm:$0xff]
      %v339 = vld [vmem:[%s198 + $0x2f8] sm:$0xff]
      %v340 = vld [vmem:[%s198 + $0x300] sm:$0xff]
      %v341 = vld [vmem:[%s198 + $0x308] sm:$0xff]
      %v342 = vld [vmem:[%s198 + $0x310] sm:$0xff]
      %v343 = vld [vmem:[%s198 + $0x318] sm:$0xff]
      %v344 = vld [vmem:[%s198 + $0x320] sm:$0xff]
      %v345 = vld [vmem:[%s198 + $0x328] sm:$0xff]
      %v346 = vld [vmem:[%s198 + $0x330] sm:$0xff]
      %v347 = vld [vmem:[%s198 + $0x338] sm:$0xff]
      %v348 = vld [vmem:[%s198 + $0x340] sm:$0xff]
      %v349 = vld [vmem:[%s198 + $0x348] sm:$0xff]
      %v350 = vld [vmem:[%s198 + $0x350] sm:$0xff]
      %v351 = vld [vmem:[%s198 + $0x358] sm:$0xff]
      %v352 = vld [vmem:[%s198 + $0x360] sm:$0xff]
      %v353 = vld [vmem:[%s198 + $0x368] sm:$0xff]
      %v354 = vld [vmem:[%s198 + $0x370] sm:$0xff]
      %v355 = vld [vmem:[%s198 + $0x378] sm:$0xff]
      %v356 = vld [vmem:[%s198 + $0x380] sm:$0xff]
      %v357 = vld [vmem:[%s198 + $0x388] sm:$0xff]
      %v358 = vld [vmem:[%s198 + $0x390] sm:$0xff]
      %v359 = vld [vmem:[%s198 + $0x398] sm:$0xff]
      %v360 = vld [vmem:[%s198 + $0x3a0] sm:$0xff]
      %v361 = vld [vmem:[%s198 + $0x3a8] sm:$0xff]
      %v362 = vld [vmem:[%s198 + $0x3b0] sm:$0xff]
      %v363 = vld [vmem:[%s198 + $0x3b8] sm:$0xff]
      %v364 = vld [vmem:[%s198 + $0x3c0] sm:$0xff]
      %v365 = vld [vmem:[%s198 + $0x3c8] sm:$0xff]
      %v366 = vld [vmem:[%s198 + $0x3d0] sm:$0xff]
      %v367 = vld [vmem:[%s198 + $0x3d8] sm:$0xff]
      %v368 = vld [vmem:[%s198 + $0x3e0] sm:$0xff]
      %v369 = vld [vmem:[%s198 + $0x3e8] sm:$0xff]
      %v370 = vld [vmem:[%s198 + $0x3f0] sm:$0xff]
      %v371 = vld [vmem:[%s198 + $0x3f8] sm:$0xff]
      %v372 = vld [vmem:[%s198 + $0x400] sm:$0xff]
      %v373 = vld [vmem:[%s198 + $0x408] sm:$0xff]
      %v374 = vld [vmem:[%s198 + $0x410] sm:$0xff]
      %v375 = vld [vmem:[%s198 + $0x418] sm:$0xff]
      %v376 = vld [vmem:[%s198 + $0x420] sm:$0xff]
      %v377 = vld [vmem:[%s198 + $0x428] sm:$0xff]
      %v378 = vld [vmem:[%s198 + $0x430] sm:$0xff]
      %v379 = vld [vmem:[%s198 + $0x438] sm:$0xff]
      %v380 = vld [vmem:[%s198 + $0x440] sm:$0xff]
      %v381 = vld [vmem:[%s198 + $0x448] sm:$0xff]
      %v382 = vld [vmem:[%s198 + $0x450] sm:$0xff]
      %v383 = vld [vmem:[%s198 + $0x458] sm:$0xff]
      %v384 = vld [vmem:[%s198 + $0x460] sm:$0xff]
      %v385 = vld [vmem:[%s198 + $0x468] sm:$0xff]
      %v386 = vld [vmem:[%s198 + $0x470] sm:$0xff]
      %v387 = vld [vmem:[%s198 + $0x478] sm:$0xff]
      %v388 = vld [vmem:[%s198 + $0x480] sm:$0xff]
      %v389 = vld [vmem:[%s198 + $0x488] sm:$0xff]
      %v390 = vld [vmem:[%s198 + $0x490] sm:$0xff]
      %v391 = vld [vmem:[%s198 + $0x498] sm:$0xff]
      %v392 = vld [vmem:[%s198 + $0x4a0] sm:$0xff]
      %v393 = vld [vmem:[%s198 + $0x4a8] sm:$0xff]
      %v394 = vld [vmem:[%s198 + $0x4b0] sm:$0xff]
      %v395 = vld [vmem:[%s198 + $0x4b8] sm:$0xff]
      %v396 = vld [vmem:[%s198 + $0x4c0] sm:$0xff]
      %v397 = vld [vmem:[%s198 + $0x4c8] sm:$0xff]
      %v398 = vld [vmem:[%s198 + $0x4d0] sm:$0xff]
      %v399 = vld [vmem:[%s198 + $0x4d8] sm:$0xff]
      %v400 = vld [vmem:[%s198 + $0x4e0] sm:$0xff]
      %v401 = vld [vmem:[%s198 + $0x4e8] sm:$0xff]
      %v402 = vld [vmem:[%s198 + $0x4f0] sm:$0xff]
      %v403 = vld [vmem:[%s198 + $0x4f8] sm:$0xff]
      %v404 = vld [vmem:[%s198 + $0x500] sm:$0xff]
      %v405 = vld [vmem:[%s198 + $0x508] sm:$0xff]
      %v406 = vld [vmem:[%s198 + $0x510] sm:$0xff]
      %v407 = vld [vmem:[%s198 + $0x518] sm:$0xff]
      %v408 = vld [vmem:[%s198 + $0x520] sm:$0xff]
      %v409 = vld [vmem:[%s198 + $0x528] sm:$0xff]
      %v410 = vld [vmem:[%s198 + $0x530] sm:$0xff]
      %v411 = vld [vmem:[%s198 + $0x538] sm:$0xff]
      %v412 = vld [vmem:[%s198 + $0x540] sm:$0xff]
      %v413 = vld [vmem:[%s198 + $0x548] sm:$0xff]
      %v414 = vld [vmem:[%s198 + $0x550] sm:$0xff]
      %v415 = vld [vmem:[%s198 + $0x558] sm:$0xff]
      %v416 = vld [vmem:[%s198 + $0x560] sm:$0xff]
      %v417 = vld [vmem:[%s198 + $0x568] sm:$0xff]
      %v418 = vld [vmem:[%s198 + $0x570] sm:$0xff]
      %v419 = vld [vmem:[%s198 + $0x578] sm:$0xff]
      %v420 = vld [vmem:[%s198 + $0x580] sm:$0xff]
      %v421 = vld [vmem:[%s198 + $0x588] sm:$0xff]
      %v422 = vld [vmem:[%s198 + $0x590] sm:$0xff]
      %v423 = vld [vmem:[%s198 + $0x598] sm:$0xff]
      %v424 = vld [vmem:[%s198 + $0x5a0] sm:$0xff]
      %v425 = vld [vmem:[%s198 + $0x5a8] sm:$0xff]
      %v426 = vld [vmem:[%s198 + $0x5b0] sm:$0xff]
      %v427 = vld [vmem:[%s198 + $0x5b8] sm:$0xff]
      %v428 = vld [vmem:[%s198 + $0x5c0] sm:$0xff]
      %v429 = vld [vmem:[%s198 + $0x5c8] sm:$0xff]
      %v430 = vld [vmem:[%s198 + $0x5d0] sm:$0xff]
      %v431 = vld [vmem:[%s198 + $0x5d8] sm:$0xff]
      %v432 = vld [vmem:[%s198 + $0x5e0] sm:$0xff]
      %v433 = vld [vmem:[%s198 + $0x5e8] sm:$0xff]
      %v434 = vld [vmem:[%s198 + $0x5f0] sm:$0xff]
      %v435 = vld [vmem:[%s198 + $0x5f8] sm:$0xff]
      %v436 = vld [vmem:[%s198 + $0x600] sm:$0xff]
      %v437 = vld [vmem:[%s198 + $0x608] sm:$0xff]
      %v438 = vld [vmem:[%s198 + $0x610] sm:$0xff]
      %v439 = vld [vmem:[%s198 + $0x618] sm:$0xff]
      %v440 = vld [vmem:[%s198 + $0x620] sm:$0xff]
      %v441 = vld [vmem:[%s198 + $0x628] sm:$0xff]
      %v442 = vld [vmem:[%s198 + $0x630] sm:$0xff]
      %v443 = vld [vmem:[%s198 + $0x638] sm:$0xff]
      %v444 = vld [vmem:[%s198 + $0x640] sm:$0xff]
      %v445 = vld [vmem:[%s198 + $0x648] sm:$0xff]
      %v446 = vld [vmem:[%s198 + $0x650] sm:$0xff]
      %v447 = vld [vmem:[%s198 + $0x658] sm:$0xff]
      %v448 = vld [vmem:[%s198 + $0x660] sm:$0xff]
      %v449 = vld [vmem:[%s198 + $0x668] sm:$0xff]
      %v450 = vld [vmem:[%s198 + $0x670] sm:$0xff]
      %v451 = vld [vmem:[%s198 + $0x678] sm:$0xff]
      %v452 = vld [vmem:[%s198 + $0x680] sm:$0xff]
      %v453 = vld [vmem:[%s198 + $0x688] sm:$0xff]
      %v454 = vld [vmem:[%s198 + $0x690] sm:$0xff]
      %v455 = vld [vmem:[%s198 + $0x698] sm:$0xff]
      %v456 = vld [vmem:[%s198 + $0x6a0] sm:$0xff]
      %v457 = vld [vmem:[%s198 + $0x6a8] sm:$0xff]
      %v458 = vld [vmem:[%s198 + $0x6b0] sm:$0xff]
      %v459 = vld [vmem:[%s198 + $0x6b8] sm:$0xff]
      %v460 = vld [vmem:[%s198 + $0x6c0] sm:$0xff]
      %v461 = vld [vmem:[%s198 + $0x6c8] sm:$0xff]
      %v462 = vld [vmem:[%s198 + $0x6d0] sm:$0xff]
      %v463 = vld [vmem:[%s198 + $0x6d8] sm:$0xff]
      %v464 = vld [vmem:[%s198 + $0x6e0] sm:$0xff]
      %v465 = vld [vmem:[%s198 + $0x6e8] sm:$0xff]
      %v466 = vld [vmem:[%s198 + $0x6f0] sm:$0xff]
      %v467 = vld [vmem:[%s198 + $0x6f8] sm:$0xff]
      %v468 = vld [vmem:[%s198 + $0x700] sm:$0xff]
      %v469 = vld [vmem:[%s198 + $0x708] sm:$0xff]
      %v470 = vld [vmem:[%s198 + $0x710] sm:$0xff]
      %v471 = vld [vmem:[%s198 + $0x718] sm:$0xff]
      %v472 = vld [vmem:[%s198 + $0x720] sm:$0xff]
      %v473 = vld [vmem:[%s198 + $0x728] sm:$0xff]
      %v474 = vld [vmem:[%s198 + $0x730] sm:$0xff]
      %v475 = vld [vmem:[%s198 + $0x738] sm:$0xff]
      %v476 = vld [vmem:[%s198 + $0x740] sm:$0xff]
      %v477 = vld [vmem:[%s198 + $0x748] sm:$0xff]
      %v478 = vld [vmem:[%s198 + $0x750] sm:$0xff]
      %v479 = vld [vmem:[%s198 + $0x758] sm:$0xff]
      %v480 = vld [vmem:[%s198 + $0x760] sm:$0xff]
      %v481 = vld [vmem:[%s198 + $0x768] sm:$0xff]
      %v482 = vld [vmem:[%s198 + $0x770] sm:$0xff]
      %v483 = vld [vmem:[%s198 + $0x778] sm:$0xff]
      %v484 = vld [vmem:[%s198 + $0x780] sm:$0xff]
      %v485 = vld [vmem:[%s198 + $0x788] sm:$0xff]
      %v486 = vld [vmem:[%s198 + $0x790] sm:$0xff]
      %v487 = vld [vmem:[%s198 + $0x798] sm:$0xff]
      %v488 = vld [vmem:[%s198 + $0x7a0] sm:$0xff]
      %v489 = vld [vmem:[%s198 + $0x7a8] sm:$0xff]
      %v490 = vld [vmem:[%s198 + $0x7b0] sm:$0xff]
      %v491 = vld [vmem:[%s198 + $0x7b8] sm:$0xff]
      %v492 = vld [vmem:[%s198 + $0x7c0] sm:$0xff]
      %v493 = vld [vmem:[%s198 + $0x7c8] sm:$0xff]
      %v494 = vld [vmem:[%s198 + $0x7d0] sm:$0xff]
      %v495 = vld [vmem:[%s198 + $0x7d8] sm:$0xff]
      %v496 = vld [vmem:[%s198 + $0x7e0] sm:$0xff]
      %v497 = vld [vmem:[%s198 + $0x7e8] sm:$0xff]
      %v498 = vld [vmem:[%s198 + $0x7f0] sm:$0xff]
      %v499 = vld [vmem:[%s198 + $0x7f8] sm:$0xff]
      %v500 = vld [vmem:[%s198 + $0x800] sm:$0xff]
      %v501 = vld [vmem:[%s198 + $0x808] sm:$0xff]
      %v502 = vld [vmem:[%s198 + $0x810] sm:$0xff]
      %v503 = vld [vmem:[%s198 + $0x818] sm:$0xff]
      %v504 = vld [vmem:[%s198 + $0x820] sm:$0xff]
      %v505 = vld [vmem:[%s198 + $0x828] sm:$0xff]
      %v506 = vld [vmem:[%s198 + $0x830] sm:$0xff]
      %v507 = vld [vmem:[%s198 + $0x838] sm:$0xff]
      %v508 = vld [vmem:[%s198 + $0x840] sm:$0xff]
      %v509 = vld [vmem:[%s198 + $0x848] sm:$0xff]
      %v510 = vld [vmem:[%s198 + $0x850] sm:$0xff]
      %v511 = vld [vmem:[%s198 + $0x858] sm:$0xff]
      %v512 = vld [vmem:[%s198 + $0x860] sm:$0xff]
      %v513 = vld [vmem:[%s198 + $0x868] sm:$0xff]
      %v514 = vld [vmem:[%s198 + $0x870] sm:$0xff]
      %v515 = vld [vmem:[%s198 + $0x878] sm:$0xff]
      %v516 = vld [vmem:[%s198 + $0x880] sm:$0xff]
      %v517 = vld [vmem:[%s198 + $0x888] sm:$0xff]
      %v518 = vld [vmem:[%s198 + $0x890] sm:$0xff]
      %v519 = vld [vmem:[%s198 + $0x898] sm:$0xff]
      %v520 = vld [vmem:[%s198 + $0x8a0] sm:$0xff]
      %v521 = vld [vmem:[%s198 + $0x8a8] sm:$0xff]
      %v522 = vld [vmem:[%s198 + $0x8b0] sm:$0xff]
      %v523 = vld [vmem:[%s198 + $0x8b8] sm:$0xff]
      %v524 = vld [vmem:[%s198 + $0x8c0] sm:$0xff]
      %v525 = vld [vmem:[%s198 + $0x8c8] sm:$0xff]
      %v526 = vld [vmem:[%s198 + $0x8d0] sm:$0xff]
      %v527 = vld [vmem:[%s198 + $0x8d8] sm:$0xff]
      %v528 = vld [vmem:[%s198 + $0x8e0] sm:$0xff]
      %v529 = vld [vmem:[%s198 + $0x8e8] sm:$0xff]
      %v530 = vld [vmem:[%s198 + $0x8f0] sm:$0xff]
      %v531 = vld [vmem:[%s198 + $0x8f8] sm:$0xff]
      %v532 = vld [vmem:[%s202] sm:$0x3]
      %v534 = vlaneseq
      %v535 = vshrl.u32 %v534, 7
      %v536 = vsub.s32 0, %v535
      %v537 = vrot.slane %v532, %v536
      %v538 = vlaneseq
      %v539 = vshrl.u32 %v538, 7
      %v540 = vsub.s32 1, %v539
      %v541 = vrot.slane %v532, %v540
      %v580 = vunpack.c.l.b16 %v208
      %v581 = vunpack.c.h.b16 %v208
      %v582 = vunpack.c.l.b16 %v209
      %v583 = vunpack.c.h.b16 %v209
      %v584 = vunpack.c.l.b16 %v210
      %v585 = vunpack.c.h.b16 %v210
      %v586 = vunpack.c.l.b16 %v211
      %v587 = vunpack.c.h.b16 %v211
      %v588 = vunpack.c.l.b16 %v212
      %v589 = vunpack.c.h.b16 %v212
      %v590 = vunpack.c.l.b16 %v213
      %v591 = vunpack.c.h.b16 %v213
      %v592 = vunpack.c.l.b16 %v214
      %v593 = vunpack.c.h.b16 %v214
      %v594 = vunpack.c.l.b16 %v215
      %v595 = vunpack.c.h.b16 %v215
      %v596 = vunpack.c.l.b16 %v216
      %v597 = vunpack.c.h.b16 %v216
      %v598 = vunpack.c.l.b16 %v217
      %v599 = vunpack.c.h.b16 %v217
      %v600 = vunpack.c.l.b16 %v218
      %v601 = vunpack.c.h.b16 %v218
      %v602 = vunpack.c.l.b16 %v219
      %v603 = vunpack.c.h.b16 %v219
      %v604 = vunpack.c.l.b16 %v220
      %v605 = vunpack.c.h.b16 %v220
      %v606 = vunpack.c.l.b16 %v221
      %v607 = vunpack.c.h.b16 %v221
      %v608 = vunpack.c.l.b16 %v222
      %v609 = vunpack.c.h.b16 %v222
      %v610 = vunpack.c.l.b16 %v223
      %v611 = vunpack.c.h.b16 %v223
      %v612 = vunpack.c.l.b16 %v224
      %v613 = vunpack.c.h.b16 %v224
      %v614 = vunpack.c.l.b16 %v225
      %v615 = vunpack.c.h.b16 %v225
      %v616 = vunpack.c.l.b16 %v226
      %v617 = vunpack.c.h.b16 %v226
      %v618 = vunpack.c.l.b16 %v227
      %v619 = vunpack.c.h.b16 %v227
      %v620 = vunpack.c.l.b16 %v228
      %v621 = vunpack.c.h.b16 %v228
      %v622 = vunpack.c.l.b16 %v229
      %v623 = vunpack.c.h.b16 %v229
      %v624 = vunpack.c.l.b16 %v230
      %v625 = vunpack.c.h.b16 %v230
      %v626 = vunpack.c.l.b16 %v231
      %v627 = vunpack.c.h.b16 %v231
      %v628 = vunpack.c.l.b16 %v232
      %v629 = vunpack.c.h.b16 %v232
      %v630 = vunpack.c.l.b16 %v233
      %v631 = vunpack.c.h.b16 %v233
      %v632 = vunpack.c.l.b16 %v234
      %v633 = vunpack.c.h.b16 %v234
      %v634 = vunpack.c.l.b16 %v235
      %v635 = vunpack.c.h.b16 %v235
      %v636 = vunpack.c.l.b16 %v236
      %v637 = vunpack.c.h.b16 %v236
      %v638 = vunpack.c.l.b16 %v237
      %v639 = vunpack.c.h.b16 %v237
      %v640 = vunpack.c.l.b16 %v238
      %v641 = vunpack.c.h.b16 %v238
      %v642 = vunpack.c.l.b16 %v239
      %v643 = vunpack.c.h.b16 %v239
      %v644 = vunpack.c.l.b16 %v240
      %v645 = vunpack.c.h.b16 %v240
      %v646 = vunpack.c.l.b16 %v241
      %v647 = vunpack.c.h.b16 %v241
      %v648 = vunpack.c.l.b16 %v242
      %v649 = vunpack.c.h.b16 %v242
      %v650 = vunpack.c.l.b16 %v243
      %v651 = vunpack.c.h.b16 %v243
      %v652 = vpack.c.b16 %v598, %v580
      %v653 = vpack.c.b16 %v599, %v581
      %v654 = vpack.c.b16 %v600, %v582
      %v655 = vpack.c.b16 %v601, %v583
      %v656 = vpack.c.b16 %v602, %v584
      %v657 = vpack.c.b16 %v603, %v585
      %v658 = vpack.c.b16 %v604, %v586
      %v659 = vpack.c.b16 %v605, %v587
      %v660 = vpack.c.b16 %v606, %v588
      %v661 = vpack.c.b16 %v607, %v589
      %v662 = vpack.c.b16 %v608, %v590
      %v663 = vpack.c.b16 %v609, %v591
      %v664 = vpack.c.b16 %v610, %v592
      %v665 = vpack.c.b16 %v611, %v593
      %v666 = vpack.c.b16 %v612, %v594
      %v667 = vpack.c.b16 %v613, %v595
      %v668 = vpack.c.b16 %v614, %v596
      %v669 = vpack.c.b16 %v615, %v597
      %v670 = vpack.c.b16 %v634, %v616
      %v671 = vpack.c.b16 %v635, %v617
      %v672 = vpack.c.b16 %v636, %v618
      %v673 = vpack.c.b16 %v637, %v619
      %v674 = vpack.c.b16 %v638, %v620
      %v675 = vpack.c.b16 %v639, %v621
      %v676 = vpack.c.b16 %v640, %v622
      %v677 = vpack.c.b16 %v641, %v623
      %v678 = vpack.c.b16 %v642, %v624
      %v679 = vpack.c.b16 %v643, %v625
      %v680 = vpack.c.b16 %v644, %v626
      %v681 = vpack.c.b16 %v645, %v627
      %v682 = vpack.c.b16 %v646, %v628
      %v683 = vpack.c.b16 %v647, %v629
      %v684 = vpack.c.b16 %v648, %v630
      %v685 = vpack.c.b16 %v649, %v631
      %v686 = vpack.c.b16 %v650, %v632
      %v687 = vpack.c.b16 %v651, %v633
      %v1012 = vunpack.c.l.b16 %v244
      %v1013 = vunpack.c.h.b16 %v244
      %v1014 = vunpack.c.l.b16 %v245
      %v1015 = vunpack.c.h.b16 %v245
      %v1016 = vunpack.c.l.b16 %v246
      %v1017 = vunpack.c.h.b16 %v246
      %v1018 = vunpack.c.l.b16 %v247
      %v1019 = vunpack.c.h.b16 %v247
      %v1020 = vunpack.c.l.b16 %v248
      %v1021 = vunpack.c.h.b16 %v248
      %v1022 = vunpack.c.l.b16 %v249
      %v1023 = vunpack.c.h.b16 %v249
      %v1024 = vunpack.c.l.b16 %v250
      %v1025 = vunpack.c.h.b16 %v250
      %v1026 = vunpack.c.l.b16 %v251
      %v1027 = vunpack.c.h.b16 %v251
      %v1028 = vunpack.c.l.b16 %v252
      %v1029 = vunpack.c.h.b16 %v252
      %v1030 = vunpack.c.l.b16 %v253
      %v1031 = vunpack.c.h.b16 %v253
      %v1032 = vunpack.c.l.b16 %v254
      %v1033 = vunpack.c.h.b16 %v254
      %v1034 = vunpack.c.l.b16 %v255
      %v1035 = vunpack.c.h.b16 %v255
      %v1036 = vunpack.c.l.b16 %v256
      %v1037 = vunpack.c.h.b16 %v256
      %v1038 = vunpack.c.l.b16 %v257
      %v1039 = vunpack.c.h.b16 %v257
      %v1040 = vunpack.c.l.b16 %v258
      %v1041 = vunpack.c.h.b16 %v258
      %v1042 = vunpack.c.l.b16 %v259
      %v1043 = vunpack.c.h.b16 %v259
      %v1044 = vunpack.c.l.b16 %v260
      %v1045 = vunpack.c.h.b16 %v260
      %v1046 = vunpack.c.l.b16 %v261
      %v1047 = vunpack.c.h.b16 %v261
      %v1048 = vunpack.c.l.b16 %v262
      %v1049 = vunpack.c.h.b16 %v262
      %v1050 = vunpack.c.l.b16 %v263
      %v1051 = vunpack.c.h.b16 %v263
      %v1052 = vunpack.c.l.b16 %v264
      %v1053 = vunpack.c.h.b16 %v264
      %v1054 = vunpack.c.l.b16 %v265
      %v1055 = vunpack.c.h.b16 %v265
      %v1056 = vunpack.c.l.b16 %v266
      %v1057 = vunpack.c.h.b16 %v266
      %v1058 = vunpack.c.l.b16 %v267
      %v1059 = vunpack.c.h.b16 %v267
      %v1060 = vunpack.c.l.b16 %v268
      %v1061 = vunpack.c.h.b16 %v268
      %v1062 = vunpack.c.l.b16 %v269
      %v1063 = vunpack.c.h.b16 %v269
      %v1064 = vunpack.c.l.b16 %v270
      %v1065 = vunpack.c.h.b16 %v270
      %v1066 = vunpack.c.l.b16 %v271
      %v1067 = vunpack.c.h.b16 %v271
      %v1068 = vunpack.c.l.b16 %v272
      %v1069 = vunpack.c.h.b16 %v272
      %v1070 = vunpack.c.l.b16 %v273
      %v1071 = vunpack.c.h.b16 %v273
      %v1072 = vunpack.c.l.b16 %v274
      %v1073 = vunpack.c.h.b16 %v274
      %v1074 = vunpack.c.l.b16 %v275
      %v1075 = vunpack.c.h.b16 %v275
      %v1076 = vunpack.c.l.b16 %v276
      %v1077 = vunpack.c.h.b16 %v276
      %v1078 = vunpack.c.l.b16 %v277
      %v1079 = vunpack.c.h.b16 %v277
      %v1080 = vunpack.c.l.b16 %v278
      %v1081 = vunpack.c.h.b16 %v278
      %v1082 = vunpack.c.l.b16 %v279
      %v1083 = vunpack.c.h.b16 %v279
      %v1084 = vunpack.c.l.b16 %v280
      %v1085 = vunpack.c.h.b16 %v280
      %v1086 = vunpack.c.l.b16 %v281
      %v1087 = vunpack.c.h.b16 %v281
      %v1088 = vunpack.c.l.b16 %v282
      %v1089 = vunpack.c.h.b16 %v282
      %v1090 = vunpack.c.l.b16 %v283
      %v1091 = vunpack.c.h.b16 %v283
      %v1092 = vunpack.c.l.b16 %v284
      %v1093 = vunpack.c.h.b16 %v284
      %v1094 = vunpack.c.l.b16 %v285
      %v1095 = vunpack.c.h.b16 %v285
      %v1096 = vunpack.c.l.b16 %v286
      %v1097 = vunpack.c.h.b16 %v286
      %v1098 = vunpack.c.l.b16 %v287
      %v1099 = vunpack.c.h.b16 %v287
      %v1100 = vunpack.c.l.b16 %v288
      %v1101 = vunpack.c.h.b16 %v288
      %v1102 = vunpack.c.l.b16 %v289
      %v1103 = vunpack.c.h.b16 %v289
      %v1104 = vunpack.c.l.b16 %v290
      %v1105 = vunpack.c.h.b16 %v290
      %v1106 = vunpack.c.l.b16 %v291
      %v1107 = vunpack.c.h.b16 %v291
      %v1108 = vunpack.c.l.b16 %v292
      %v1109 = vunpack.c.h.b16 %v292
      %v1110 = vunpack.c.l.b16 %v293
      %v1111 = vunpack.c.h.b16 %v293
      %v1112 = vunpack.c.l.b16 %v294
      %v1113 = vunpack.c.h.b16 %v294
      %v1114 = vunpack.c.l.b16 %v295
      %v1115 = vunpack.c.h.b16 %v295
      %v1116 = vunpack.c.l.b16 %v296
      %v1117 = vunpack.c.h.b16 %v296
      %v1118 = vunpack.c.l.b16 %v297
      %v1119 = vunpack.c.h.b16 %v297
      %v1120 = vunpack.c.l.b16 %v298
      %v1121 = vunpack.c.h.b16 %v298
      %v1122 = vunpack.c.l.b16 %v299
      %v1123 = vunpack.c.h.b16 %v299
      %v1124 = vunpack.c.l.b16 %v300
      %v1125 = vunpack.c.h.b16 %v300
      %v1126 = vunpack.c.l.b16 %v301
      %v1127 = vunpack.c.h.b16 %v301
      %v1128 = vunpack.c.l.b16 %v302
      %v1129 = vunpack.c.h.b16 %v302
      %v1130 = vunpack.c.l.b16 %v303
      %v1131 = vunpack.c.h.b16 %v303
      %v1132 = vunpack.c.l.b16 %v304
      %v1133 = vunpack.c.h.b16 %v304
      %v1134 = vunpack.c.l.b16 %v305
      %v1135 = vunpack.c.h.b16 %v305
      %v1136 = vunpack.c.l.b16 %v306
      %v1137 = vunpack.c.h.b16 %v306
      %v1138 = vunpack.c.l.b16 %v307
      %v1139 = vunpack.c.h.b16 %v307
      %v1140 = vunpack.c.l.b16 %v308
      %v1141 = vunpack.c.h.b16 %v308
      %v1142 = vunpack.c.l.b16 %v309
      %v1143 = vunpack.c.h.b16 %v309
      %v1144 = vunpack.c.l.b16 %v310
      %v1145 = vunpack.c.h.b16 %v310
      %v1146 = vunpack.c.l.b16 %v311
      %v1147 = vunpack.c.h.b16 %v311
      %v1148 = vunpack.c.l.b16 %v312
      %v1149 = vunpack.c.h.b16 %v312
      %v1150 = vunpack.c.l.b16 %v313
      %v1151 = vunpack.c.h.b16 %v313
      %v1152 = vunpack.c.l.b16 %v314
      %v1153 = vunpack.c.h.b16 %v314
      %v1154 = vunpack.c.l.b16 %v315
      %v1155 = vunpack.c.h.b16 %v315
      %v1156 = vunpack.c.l.b16 %v316
      %v1157 = vunpack.c.h.b16 %v316
      %v1158 = vunpack.c.l.b16 %v317
      %v1159 = vunpack.c.h.b16 %v317
      %v1160 = vunpack.c.l.b16 %v318
      %v1161 = vunpack.c.h.b16 %v318
      %v1162 = vunpack.c.l.b16 %v319
      %v1163 = vunpack.c.h.b16 %v319
      %v1164 = vunpack.c.l.b16 %v320
      %v1165 = vunpack.c.h.b16 %v320
      %v1166 = vunpack.c.l.b16 %v321
      %v1167 = vunpack.c.h.b16 %v321
      %v1168 = vunpack.c.l.b16 %v322
      %v1169 = vunpack.c.h.b16 %v322
      %v1170 = vunpack.c.l.b16 %v323
      %v1171 = vunpack.c.h.b16 %v323
      %v1172 = vunpack.c.l.b16 %v324
      %v1173 = vunpack.c.h.b16 %v324
      %v1174 = vunpack.c.l.b16 %v325
      %v1175 = vunpack.c.h.b16 %v325
      %v1176 = vunpack.c.l.b16 %v326
      %v1177 = vunpack.c.h.b16 %v326
      %v1178 = vunpack.c.l.b16 %v327
      %v1179 = vunpack.c.h.b16 %v327
      %v1180 = vunpack.c.l.b16 %v328
      %v1181 = vunpack.c.h.b16 %v328
      %v1182 = vunpack.c.l.b16 %v329
      %v1183 = vunpack.c.h.b16 %v329
      %v1184 = vunpack.c.l.b16 %v330
      %v1185 = vunpack.c.h.b16 %v330
      %v1186 = vunpack.c.l.b16 %v331
      %v1187 = vunpack.c.h.b16 %v331
      %v1188 = vunpack.c.l.b16 %v332
      %v1189 = vunpack.c.h.b16 %v332
      %v1190 = vunpack.c.l.b16 %v333
      %v1191 = vunpack.c.h.b16 %v333
      %v1192 = vunpack.c.l.b16 %v334
      %v1193 = vunpack.c.h.b16 %v334
      %v1194 = vunpack.c.l.b16 %v335
      %v1195 = vunpack.c.h.b16 %v335
      %v1196 = vunpack.c.l.b16 %v336
      %v1197 = vunpack.c.h.b16 %v336
      %v1198 = vunpack.c.l.b16 %v337
      %v1199 = vunpack.c.h.b16 %v337
      %v1200 = vunpack.c.l.b16 %v338
      %v1201 = vunpack.c.h.b16 %v338
      %v1202 = vunpack.c.l.b16 %v339
      %v1203 = vunpack.c.h.b16 %v339
      %v1204 = vunpack.c.l.b16 %v340
      %v1205 = vunpack.c.h.b16 %v340
      %v1206 = vunpack.c.l.b16 %v341
      %v1207 = vunpack.c.h.b16 %v341
      %v1208 = vunpack.c.l.b16 %v342
      %v1209 = vunpack.c.h.b16 %v342
      %v1210 = vunpack.c.l.b16 %v343
      %v1211 = vunpack.c.h.b16 %v343
      %v1212 = vunpack.c.l.b16 %v344
      %v1213 = vunpack.c.h.b16 %v344
      %v1214 = vunpack.c.l.b16 %v345
      %v1215 = vunpack.c.h.b16 %v345
      %v1216 = vunpack.c.l.b16 %v346
      %v1217 = vunpack.c.h.b16 %v346
      %v1218 = vunpack.c.l.b16 %v347
      %v1219 = vunpack.c.h.b16 %v347
      %v1220 = vunpack.c.l.b16 %v348
      %v1221 = vunpack.c.h.b16 %v348
      %v1222 = vunpack.c.l.b16 %v349
      %v1223 = vunpack.c.h.b16 %v349
      %v1224 = vunpack.c.l.b16 %v350
      %v1225 = vunpack.c.h.b16 %v350
      %v1226 = vunpack.c.l.b16 %v351
      %v1227 = vunpack.c.h.b16 %v351
      %v1228 = vunpack.c.l.b16 %v352
      %v1229 = vunpack.c.h.b16 %v352
      %v1230 = vunpack.c.l.b16 %v353
      %v1231 = vunpack.c.h.b16 %v353
      %v1232 = vunpack.c.l.b16 %v354
      %v1233 = vunpack.c.h.b16 %v354
      %v1234 = vunpack.c.l.b16 %v355
      %v1235 = vunpack.c.h.b16 %v355
      %v1236 = vunpack.c.l.b16 %v356
      %v1237 = vunpack.c.h.b16 %v356
      %v1238 = vunpack.c.l.b16 %v357
      %v1239 = vunpack.c.h.b16 %v357
      %v1240 = vunpack.c.l.b16 %v358
      %v1241 = vunpack.c.h.b16 %v358
      %v1242 = vunpack.c.l.b16 %v359
      %v1243 = vunpack.c.h.b16 %v359
      %v1244 = vunpack.c.l.b16 %v360
      %v1245 = vunpack.c.h.b16 %v360
      %v1246 = vunpack.c.l.b16 %v361
      %v1247 = vunpack.c.h.b16 %v361
      %v1248 = vunpack.c.l.b16 %v362
      %v1249 = vunpack.c.h.b16 %v362
      %v1250 = vunpack.c.l.b16 %v363
      %v1251 = vunpack.c.h.b16 %v363
      %v1252 = vunpack.c.l.b16 %v364
      %v1253 = vunpack.c.h.b16 %v364
      %v1254 = vunpack.c.l.b16 %v365
      %v1255 = vunpack.c.h.b16 %v365
      %v1256 = vunpack.c.l.b16 %v366
      %v1257 = vunpack.c.h.b16 %v366
      %v1258 = vunpack.c.l.b16 %v367
      %v1259 = vunpack.c.h.b16 %v367
      %v1260 = vunpack.c.l.b16 %v368
      %v1261 = vunpack.c.h.b16 %v368
      %v1262 = vunpack.c.l.b16 %v369
      %v1263 = vunpack.c.h.b16 %v369
      %v1264 = vunpack.c.l.b16 %v370
      %v1265 = vunpack.c.h.b16 %v370
      %v1266 = vunpack.c.l.b16 %v371
      %v1267 = vunpack.c.h.b16 %v371
      %v1268 = vunpack.c.l.b16 %v372
      %v1269 = vunpack.c.h.b16 %v372
      %v1270 = vunpack.c.l.b16 %v373
      %v1271 = vunpack.c.h.b16 %v373
      %v1272 = vunpack.c.l.b16 %v374
      %v1273 = vunpack.c.h.b16 %v374
      %v1274 = vunpack.c.l.b16 %v375
      %v1275 = vunpack.c.h.b16 %v375
      %v1276 = vunpack.c.l.b16 %v376
      %v1277 = vunpack.c.h.b16 %v376
      %v1278 = vunpack.c.l.b16 %v377
      %v1279 = vunpack.c.h.b16 %v377
      %v1280 = vunpack.c.l.b16 %v378
      %v1281 = vunpack.c.h.b16 %v378
      %v1282 = vunpack.c.l.b16 %v379
      %v1283 = vunpack.c.h.b16 %v379
      %v1284 = vunpack.c.l.b16 %v380
      %v1285 = vunpack.c.h.b16 %v380
      %v1286 = vunpack.c.l.b16 %v381
      %v1287 = vunpack.c.h.b16 %v381
      %v1288 = vunpack.c.l.b16 %v382
      %v1289 = vunpack.c.h.b16 %v382
      %v1290 = vunpack.c.l.b16 %v383
      %v1291 = vunpack.c.h.b16 %v383
      %v1292 = vunpack.c.l.b16 %v384
      %v1293 = vunpack.c.h.b16 %v384
      %v1294 = vunpack.c.l.b16 %v385
      %v1295 = vunpack.c.h.b16 %v385
      %v1296 = vunpack.c.l.b16 %v386
      %v1297 = vunpack.c.h.b16 %v386
      %v1298 = vunpack.c.l.b16 %v387
      %v1299 = vunpack.c.h.b16 %v387
      %v1300 = vunpack.c.l.b16 %v388
      %v1301 = vunpack.c.h.b16 %v388
      %v1302 = vunpack.c.l.b16 %v389
      %v1303 = vunpack.c.h.b16 %v389
      %v1304 = vunpack.c.l.b16 %v390
      %v1305 = vunpack.c.h.b16 %v390
      %v1306 = vunpack.c.l.b16 %v391
      %v1307 = vunpack.c.h.b16 %v391
      %v1308 = vunpack.c.l.b16 %v392
      %v1309 = vunpack.c.h.b16 %v392
      %v1310 = vunpack.c.l.b16 %v393
      %v1311 = vunpack.c.h.b16 %v393
      %v1312 = vunpack.c.l.b16 %v394
      %v1313 = vunpack.c.h.b16 %v394
      %v1314 = vunpack.c.l.b16 %v395
      %v1315 = vunpack.c.h.b16 %v395
      %v1316 = vunpack.c.l.b16 %v396
      %v1317 = vunpack.c.h.b16 %v396
      %v1318 = vunpack.c.l.b16 %v397
      %v1319 = vunpack.c.h.b16 %v397
      %v1320 = vunpack.c.l.b16 %v398
      %v1321 = vunpack.c.h.b16 %v398
      %v1322 = vunpack.c.l.b16 %v399
      %v1323 = vunpack.c.h.b16 %v399
      %v1324 = vunpack.c.l.b16 %v400
      %v1325 = vunpack.c.h.b16 %v400
      %v1326 = vunpack.c.l.b16 %v401
      %v1327 = vunpack.c.h.b16 %v401
      %v1328 = vunpack.c.l.b16 %v402
      %v1329 = vunpack.c.h.b16 %v402
      %v1330 = vunpack.c.l.b16 %v403
      %v1331 = vunpack.c.h.b16 %v403
      %v1332 = vunpack.c.l.b16 %v404
      %v1333 = vunpack.c.h.b16 %v404
      %v1334 = vunpack.c.l.b16 %v405
      %v1335 = vunpack.c.h.b16 %v405
      %v1336 = vunpack.c.l.b16 %v406
      %v1337 = vunpack.c.h.b16 %v406
      %v1338 = vunpack.c.l.b16 %v407
      %v1339 = vunpack.c.h.b16 %v407
      %v1340 = vunpack.c.l.b16 %v408
      %v1341 = vunpack.c.h.b16 %v408
      %v1342 = vunpack.c.l.b16 %v409
      %v1343 = vunpack.c.h.b16 %v409
      %v1344 = vunpack.c.l.b16 %v410
      %v1345 = vunpack.c.h.b16 %v410
      %v1346 = vunpack.c.l.b16 %v411
      %v1347 = vunpack.c.h.b16 %v411
      %v1348 = vunpack.c.l.b16 %v412
      %v1349 = vunpack.c.h.b16 %v412
      %v1350 = vunpack.c.l.b16 %v413
      %v1351 = vunpack.c.h.b16 %v413
      %v1352 = vunpack.c.l.b16 %v414
      %v1353 = vunpack.c.h.b16 %v414
      %v1354 = vunpack.c.l.b16 %v415
      %v1355 = vunpack.c.h.b16 %v415
      %v1356 = vunpack.c.l.b16 %v416
      %v1357 = vunpack.c.h.b16 %v416
      %v1358 = vunpack.c.l.b16 %v417
      %v1359 = vunpack.c.h.b16 %v417
      %v1360 = vunpack.c.l.b16 %v418
      %v1361 = vunpack.c.h.b16 %v418
      %v1362 = vunpack.c.l.b16 %v419
      %v1363 = vunpack.c.h.b16 %v419
      %v1364 = vunpack.c.l.b16 %v420
      %v1365 = vunpack.c.h.b16 %v420
      %v1366 = vunpack.c.l.b16 %v421
      %v1367 = vunpack.c.h.b16 %v421
      %v1368 = vunpack.c.l.b16 %v422
      %v1369 = vunpack.c.h.b16 %v422
      %v1370 = vunpack.c.l.b16 %v423
      %v1371 = vunpack.c.h.b16 %v423
      %v1372 = vunpack.c.l.b16 %v424
      %v1373 = vunpack.c.h.b16 %v424
      %v1374 = vunpack.c.l.b16 %v425
      %v1375 = vunpack.c.h.b16 %v425
      %v1376 = vunpack.c.l.b16 %v426
      %v1377 = vunpack.c.h.b16 %v426
      %v1378 = vunpack.c.l.b16 %v427
      %v1379 = vunpack.c.h.b16 %v427
      %v1380 = vunpack.c.l.b16 %v428
      %v1381 = vunpack.c.h.b16 %v428
      %v1382 = vunpack.c.l.b16 %v429
      %v1383 = vunpack.c.h.b16 %v429
      %v1384 = vunpack.c.l.b16 %v430
      %v1385 = vunpack.c.h.b16 %v430
      %v1386 = vunpack.c.l.b16 %v431
      %v1387 = vunpack.c.h.b16 %v431
      %v1388 = vunpack.c.l.b16 %v432
      %v1389 = vunpack.c.h.b16 %v432
      %v1390 = vunpack.c.l.b16 %v433
      %v1391 = vunpack.c.h.b16 %v433
      %v1392 = vunpack.c.l.b16 %v434
      %v1393 = vunpack.c.h.b16 %v434
      %v1394 = vunpack.c.l.b16 %v435
      %v1395 = vunpack.c.h.b16 %v435
      %v1396 = vunpack.c.l.b16 %v436
      %v1397 = vunpack.c.h.b16 %v436
      %v1398 = vunpack.c.l.b16 %v437
      %v1399 = vunpack.c.h.b16 %v437
      %v1400 = vunpack.c.l.b16 %v438
      %v1401 = vunpack.c.h.b16 %v438
      %v1402 = vunpack.c.l.b16 %v439
      %v1403 = vunpack.c.h.b16 %v439
      %v1404 = vunpack.c.l.b16 %v440
      %v1405 = vunpack.c.h.b16 %v440
      %v1406 = vunpack.c.l.b16 %v441
      %v1407 = vunpack.c.h.b16 %v441
      %v1408 = vunpack.c.l.b16 %v442
      %v1409 = vunpack.c.h.b16 %v442
      %v1410 = vunpack.c.l.b16 %v443
      %v1411 = vunpack.c.h.b16 %v443
      %v1412 = vunpack.c.l.b16 %v444
      %v1413 = vunpack.c.h.b16 %v444
      %v1414 = vunpack.c.l.b16 %v445
      %v1415 = vunpack.c.h.b16 %v445
      %v1416 = vunpack.c.l.b16 %v446
      %v1417 = vunpack.c.h.b16 %v446
      %v1418 = vunpack.c.l.b16 %v447
      %v1419 = vunpack.c.h.b16 %v447
      %v1420 = vunpack.c.l.b16 %v448
      %v1421 = vunpack.c.h.b16 %v448
      %v1422 = vunpack.c.l.b16 %v449
      %v1423 = vunpack.c.h.b16 %v449
      %v1424 = vunpack.c.l.b16 %v450
      %v1425 = vunpack.c.h.b16 %v450
      %v1426 = vunpack.c.l.b16 %v451
      %v1427 = vunpack.c.h.b16 %v451
      %v1428 = vunpack.c.l.b16 %v452
      %v1429 = vunpack.c.h.b16 %v452
      %v1430 = vunpack.c.l.b16 %v453
      %v1431 = vunpack.c.h.b16 %v453
      %v1432 = vunpack.c.l.b16 %v454
      %v1433 = vunpack.c.h.b16 %v454
      %v1434 = vunpack.c.l.b16 %v455
      %v1435 = vunpack.c.h.b16 %v455
      %v1436 = vunpack.c.l.b16 %v456
      %v1437 = vunpack.c.h.b16 %v456
      %v1438 = vunpack.c.l.b16 %v457
      %v1439 = vunpack.c.h.b16 %v457
      %v1440 = vunpack.c.l.b16 %v458
      %v1441 = vunpack.c.h.b16 %v458
      %v1442 = vunpack.c.l.b16 %v459
      %v1443 = vunpack.c.h.b16 %v459
      %v1444 = vunpack.c.l.b16 %v460
      %v1445 = vunpack.c.h.b16 %v460
      %v1446 = vunpack.c.l.b16 %v461
      %v1447 = vunpack.c.h.b16 %v461
      %v1448 = vunpack.c.l.b16 %v462
      %v1449 = vunpack.c.h.b16 %v462
      %v1450 = vunpack.c.l.b16 %v463
      %v1451 = vunpack.c.h.b16 %v463
      %v1452 = vunpack.c.l.b16 %v464
      %v1453 = vunpack.c.h.b16 %v464
      %v1454 = vunpack.c.l.b16 %v465
      %v1455 = vunpack.c.h.b16 %v465
      %v1456 = vunpack.c.l.b16 %v466
      %v1457 = vunpack.c.h.b16 %v466
      %v1458 = vunpack.c.l.b16 %v467
      %v1459 = vunpack.c.h.b16 %v467
      %v1460 = vunpack.c.l.b16 %v468
      %v1461 = vunpack.c.h.b16 %v468
      %v1462 = vunpack.c.l.b16 %v469
      %v1463 = vunpack.c.h.b16 %v469
      %v1464 = vunpack.c.l.b16 %v470
      %v1465 = vunpack.c.h.b16 %v470
      %v1466 = vunpack.c.l.b16 %v471
      %v1467 = vunpack.c.h.b16 %v471
      %v1468 = vunpack.c.l.b16 %v472
      %v1469 = vunpack.c.h.b16 %v472
      %v1470 = vunpack.c.l.b16 %v473
      %v1471 = vunpack.c.h.b16 %v473
      %v1472 = vunpack.c.l.b16 %v474
      %v1473 = vunpack.c.h.b16 %v474
      %v1474 = vunpack.c.l.b16 %v475
      %v1475 = vunpack.c.h.b16 %v475
      %v1476 = vunpack.c.l.b16 %v476
      %v1477 = vunpack.c.h.b16 %v476
      %v1478 = vunpack.c.l.b16 %v477
      %v1479 = vunpack.c.h.b16 %v477
      %v1480 = vunpack.c.l.b16 %v478
      %v1481 = vunpack.c.h.b16 %v478
      %v1482 = vunpack.c.l.b16 %v479
      %v1483 = vunpack.c.h.b16 %v479
      %v1484 = vunpack.c.l.b16 %v480
      %v1485 = vunpack.c.h.b16 %v480
      %v1486 = vunpack.c.l.b16 %v481
      %v1487 = vunpack.c.h.b16 %v481
      %v1488 = vunpack.c.l.b16 %v482
      %v1489 = vunpack.c.h.b16 %v482
      %v1490 = vunpack.c.l.b16 %v483
      %v1491 = vunpack.c.h.b16 %v483
      %v1492 = vunpack.c.l.b16 %v484
      %v1493 = vunpack.c.h.b16 %v484
      %v1494 = vunpack.c.l.b16 %v485
      %v1495 = vunpack.c.h.b16 %v485
      %v1496 = vunpack.c.l.b16 %v486
      %v1497 = vunpack.c.h.b16 %v486
      %v1498 = vunpack.c.l.b16 %v487
      %v1499 = vunpack.c.h.b16 %v487
      %v1500 = vunpack.c.l.b16 %v488
      %v1501 = vunpack.c.h.b16 %v488
      %v1502 = vunpack.c.l.b16 %v489
      %v1503 = vunpack.c.h.b16 %v489
      %v1504 = vunpack.c.l.b16 %v490
      %v1505 = vunpack.c.h.b16 %v490
      %v1506 = vunpack.c.l.b16 %v491
      %v1507 = vunpack.c.h.b16 %v491
      %v1508 = vunpack.c.l.b16 %v492
      %v1509 = vunpack.c.h.b16 %v492
      %v1510 = vunpack.c.l.b16 %v493
      %v1511 = vunpack.c.h.b16 %v493
      %v1512 = vunpack.c.l.b16 %v494
      %v1513 = vunpack.c.h.b16 %v494
      %v1514 = vunpack.c.l.b16 %v495
      %v1515 = vunpack.c.h.b16 %v495
      %v1516 = vunpack.c.l.b16 %v496
      %v1517 = vunpack.c.h.b16 %v496
      %v1518 = vunpack.c.l.b16 %v497
      %v1519 = vunpack.c.h.b16 %v497
      %v1520 = vunpack.c.l.b16 %v498
      %v1521 = vunpack.c.h.b16 %v498
      %v1522 = vunpack.c.l.b16 %v499
      %v1523 = vunpack.c.h.b16 %v499
      %v1524 = vunpack.c.l.b16 %v500
      %v1525 = vunpack.c.h.b16 %v500
      %v1526 = vunpack.c.l.b16 %v501
      %v1527 = vunpack.c.h.b16 %v501
      %v1528 = vunpack.c.l.b16 %v502
      %v1529 = vunpack.c.h.b16 %v502
      %v1530 = vunpack.c.l.b16 %v503
      %v1531 = vunpack.c.h.b16 %v503
      %v1532 = vunpack.c.l.b16 %v504
      %v1533 = vunpack.c.h.b16 %v504
      %v1534 = vunpack.c.l.b16 %v505
      %v1535 = vunpack.c.h.b16 %v505
      %v1536 = vunpack.c.l.b16 %v506
      %v1537 = vunpack.c.h.b16 %v506
      %v1538 = vunpack.c.l.b16 %v507
      %v1539 = vunpack.c.h.b16 %v507
      %v1540 = vunpack.c.l.b16 %v508
      %v1541 = vunpack.c.h.b16 %v508
      %v1542 = vunpack.c.l.b16 %v509
      %v1543 = vunpack.c.h.b16 %v509
      %v1544 = vunpack.c.l.b16 %v510
      %v1545 = vunpack.c.h.b16 %v510
      %v1546 = vunpack.c.l.b16 %v511
      %v1547 = vunpack.c.h.b16 %v511
      %v1548 = vunpack.c.l.b16 %v512
      %v1549 = vunpack.c.h.b16 %v512
      %v1550 = vunpack.c.l.b16 %v513
      %v1551 = vunpack.c.h.b16 %v513
      %v1552 = vunpack.c.l.b16 %v514
      %v1553 = vunpack.c.h.b16 %v514
      %v1554 = vunpack.c.l.b16 %v515
      %v1555 = vunpack.c.h.b16 %v515
      %v1556 = vunpack.c.l.b16 %v516
      %v1557 = vunpack.c.h.b16 %v516
      %v1558 = vunpack.c.l.b16 %v517
      %v1559 = vunpack.c.h.b16 %v517
      %v1560 = vunpack.c.l.b16 %v518
      %v1561 = vunpack.c.h.b16 %v518
      %v1562 = vunpack.c.l.b16 %v519
      %v1563 = vunpack.c.h.b16 %v519
      %v1564 = vunpack.c.l.b16 %v520
      %v1565 = vunpack.c.h.b16 %v520
      %v1566 = vunpack.c.l.b16 %v521
      %v1567 = vunpack.c.h.b16 %v521
      %v1568 = vunpack.c.l.b16 %v522
      %v1569 = vunpack.c.h.b16 %v522
      %v1570 = vunpack.c.l.b16 %v523
      %v1571 = vunpack.c.h.b16 %v523
      %v1572 = vunpack.c.l.b16 %v524
      %v1573 = vunpack.c.h.b16 %v524
      %v1574 = vunpack.c.l.b16 %v525
      %v1575 = vunpack.c.h.b16 %v525
      %v1576 = vunpack.c.l.b16 %v526
      %v1577 = vunpack.c.h.b16 %v526
      %v1578 = vunpack.c.l.b16 %v527
      %v1579 = vunpack.c.h.b16 %v527
      %v1580 = vunpack.c.l.b16 %v528
      %v1581 = vunpack.c.h.b16 %v528
      %v1582 = vunpack.c.l.b16 %v529
      %v1583 = vunpack.c.h.b16 %v529
      %v1584 = vunpack.c.l.b16 %v530
      %v1585 = vunpack.c.h.b16 %v530
      %v1586 = vunpack.c.l.b16 %v531
      %v1587 = vunpack.c.h.b16 %v531
      %v1588 = vpack.c.b16 %v1014, %v1012
      %v1589 = vpack.c.b16 %v1015, %v1013
      %v1590 = vpack.c.b16 %v1018, %v1016
      %v1591 = vpack.c.b16 %v1019, %v1017
      %v1592 = vpack.c.b16 %v1022, %v1020
      %v1593 = vpack.c.b16 %v1023, %v1021
      %v1594 = vpack.c.b16 %v1026, %v1024
      %v1595 = vpack.c.b16 %v1027, %v1025
      %v1596 = vpack.c.b16 %v1030, %v1028
      %v1597 = vpack.c.b16 %v1031, %v1029
      %v1598 = vpack.c.b16 %v1034, %v1032
      %v1599 = vpack.c.b16 %v1035, %v1033
      %v1600 = vpack.c.b16 %v1038, %v1036
      %v1601 = vpack.c.b16 %v1039, %v1037
      %v1602 = vpack.c.b16 %v1042, %v1040
      %v1603 = vpack.c.b16 %v1043, %v1041
      %v1604 = vpack.c.b16 %v1046, %v1044
      %v1605 = vpack.c.b16 %v1047, %v1045
      %v1606 = vpack.c.b16 %v1050, %v1048
      %v1607 = vpack.c.b16 %v1051, %v1049
      %v1608 = vpack.c.b16 %v1054, %v1052
      %v1609 = vpack.c.b16 %v1055, %v1053
      %v1610 = vpack.c.b16 %v1058, %v1056
      %v1611 = vpack.c.b16 %v1059, %v1057
      %v1612 = vpack.c.b16 %v1062, %v1060
      %v1613 = vpack.c.b16 %v1063, %v1061
      %v1614 = vpack.c.b16 %v1066, %v1064
      %v1615 = vpack.c.b16 %v1067, %v1065
      %v1616 = vpack.c.b16 %v1070, %v1068
      %v1617 = vpack.c.b16 %v1071, %v1069
      %v1618 = vpack.c.b16 %v1074, %v1072
      %v1619 = vpack.c.b16 %v1075, %v1073
      %v1620 = vpack.c.b16 %v1078, %v1076
      %v1621 = vpack.c.b16 %v1079, %v1077
      %v1622 = vpack.c.b16 %v1082, %v1080
      %v1623 = vpack.c.b16 %v1083, %v1081
      %v1624 = vpack.c.b16 %v1086, %v1084
      %v1625 = vpack.c.b16 %v1087, %v1085
      %v1626 = vpack.c.b16 %v1090, %v1088
      %v1627 = vpack.c.b16 %v1091, %v1089
      %v1628 = vpack.c.b16 %v1094, %v1092
      %v1629 = vpack.c.b16 %v1095, %v1093
      %v1630 = vpack.c.b16 %v1098, %v1096
      %v1631 = vpack.c.b16 %v1099, %v1097
      %v1632 = vpack.c.b16 %v1102, %v1100
      %v1633 = vpack.c.b16 %v1103, %v1101
      %v1634 = vpack.c.b16 %v1106, %v1104
      %v1635 = vpack.c.b16 %v1107, %v1105
      %v1636 = vpack.c.b16 %v1110, %v1108
      %v1637 = vpack.c.b16 %v1111, %v1109
      %v1638 = vpack.c.b16 %v1114, %v1112
      %v1639 = vpack.c.b16 %v1115, %v1113
      %v1640 = vpack.c.b16 %v1118, %v1116
      %v1641 = vpack.c.b16 %v1119, %v1117
      %v1642 = vpack.c.b16 %v1122, %v1120
      %v1643 = vpack.c.b16 %v1123, %v1121
      %v1644 = vpack.c.b16 %v1126, %v1124
      %v1645 = vpack.c.b16 %v1127, %v1125
      %v1646 = vpack.c.b16 %v1130, %v1128
      %v1647 = vpack.c.b16 %v1131, %v1129
      %v1648 = vpack.c.b16 %v1134, %v1132
      %v1649 = vpack.c.b16 %v1135, %v1133
      %v1650 = vpack.c.b16 %v1138, %v1136
      %v1651 = vpack.c.b16 %v1139, %v1137
      %v1652 = vpack.c.b16 %v1142, %v1140
      %v1653 = vpack.c.b16 %v1143, %v1141
      %v1654 = vpack.c.b16 %v1146, %v1144
      %v1655 = vpack.c.b16 %v1147, %v1145
      %v1656 = vpack.c.b16 %v1150, %v1148
      %v1657 = vpack.c.b16 %v1151, %v1149
      %v1658 = vpack.c.b16 %v1154, %v1152
      %v1659 = vpack.c.b16 %v1155, %v1153
      %v1660 = vpack.c.b16 %v1158, %v1156
      %v1661 = vpack.c.b16 %v1159, %v1157
      %v1662 = vpack.c.b16 %v1162, %v1160
      %v1663 = vpack.c.b16 %v1163, %v1161
      %v1664 = vpack.c.b16 %v1166, %v1164
      %v1665 = vpack.c.b16 %v1167, %v1165
      %v1666 = vpack.c.b16 %v1170, %v1168
      %v1667 = vpack.c.b16 %v1171, %v1169
      %v1668 = vpack.c.b16 %v1174, %v1172
      %v1669 = vpack.c.b16 %v1175, %v1173
      %v1670 = vpack.c.b16 %v1178, %v1176
      %v1671 = vpack.c.b16 %v1179, %v1177
      %v1672 = vpack.c.b16 %v1182, %v1180
      %v1673 = vpack.c.b16 %v1183, %v1181
      %v1674 = vpack.c.b16 %v1186, %v1184
      %v1675 = vpack.c.b16 %v1187, %v1185
      %v1676 = vpack.c.b16 %v1190, %v1188
      %v1677 = vpack.c.b16 %v1191, %v1189
      %v1678 = vpack.c.b16 %v1194, %v1192
      %v1679 = vpack.c.b16 %v1195, %v1193
      %v1680 = vpack.c.b16 %v1198, %v1196
      %v1681 = vpack.c.b16 %v1199, %v1197
      %v1682 = vpack.c.b16 %v1202, %v1200
      %v1683 = vpack.c.b16 %v1203, %v1201
      %v1684 = vpack.c.b16 %v1206, %v1204
      %v1685 = vpack.c.b16 %v1207, %v1205
      %v1686 = vpack.c.b16 %v1210, %v1208
      %v1687 = vpack.c.b16 %v1211, %v1209
      %v1688 = vpack.c.b16 %v1214, %v1212
      %v1689 = vpack.c.b16 %v1215, %v1213
      %v1690 = vpack.c.b16 %v1218, %v1216
      %v1691 = vpack.c.b16 %v1219, %v1217
      %v1692 = vpack.c.b16 %v1222, %v1220
      %v1693 = vpack.c.b16 %v1223, %v1221
      %v1694 = vpack.c.b16 %v1226, %v1224
      %v1695 = vpack.c.b16 %v1227, %v1225
      %v1696 = vpack.c.b16 %v1230, %v1228
      %v1697 = vpack.c.b16 %v1231, %v1229
      %v1698 = vpack.c.b16 %v1234, %v1232
      %v1699 = vpack.c.b16 %v1235, %v1233
      %v1700 = vpack.c.b16 %v1238, %v1236
      %v1701 = vpack.c.b16 %v1239, %v1237
      %v1702 = vpack.c.b16 %v1242, %v1240
      %v1703 = vpack.c.b16 %v1243, %v1241
      %v1704 = vpack.c.b16 %v1246, %v1244
      %v1705 = vpack.c.b16 %v1247, %v1245
      %v1706 = vpack.c.b16 %v1250, %v1248
      %v1707 = vpack.c.b16 %v1251, %v1249
      %v1708 = vpack.c.b16 %v1254, %v1252
      %v1709 = vpack.c.b16 %v1255, %v1253
      %v1710 = vpack.c.b16 %v1258, %v1256
      %v1711 = vpack.c.b16 %v1259, %v1257
      %v1712 = vpack.c.b16 %v1262, %v1260
      %v1713 = vpack.c.b16 %v1263, %v1261
      %v1714 = vpack.c.b16 %v1266, %v1264
      %v1715 = vpack.c.b16 %v1267, %v1265
      %v1716 = vpack.c.b16 %v1270, %v1268
      %v1717 = vpack.c.b16 %v1271, %v1269
      %v1718 = vpack.c.b16 %v1274, %v1272
      %v1719 = vpack.c.b16 %v1275, %v1273
      %v1720 = vpack.c.b16 %v1278, %v1276
      %v1721 = vpack.c.b16 %v1279, %v1277
      %v1722 = vpack.c.b16 %v1282, %v1280
      %v1723 = vpack.c.b16 %v1283, %v1281
      %v1724 = vpack.c.b16 %v1286, %v1284
      %v1725 = vpack.c.b16 %v1287, %v1285
      %v1726 = vpack.c.b16 %v1290, %v1288
      %v1727 = vpack.c.b16 %v1291, %v1289
      %v1728 = vpack.c.b16 %v1294, %v1292
      %v1729 = vpack.c.b16 %v1295, %v1293
      %v1730 = vpack.c.b16 %v1298, %v1296
      %v1731 = vpack.c.b16 %v1299, %v1297
      %v1732 = vpack.c.b16 %v1302, %v1300
      %v1733 = vpack.c.b16 %v1303, %v1301
      %v1734 = vpack.c.b16 %v1306, %v1304
      %v1735 = vpack.c.b16 %v1307, %v1305
      %v1736 = vpack.c.b16 %v1310, %v1308
      %v1737 = vpack.c.b16 %v1311, %v1309
      %v1738 = vpack.c.b16 %v1314, %v1312
      %v1739 = vpack.c.b16 %v1315, %v1313
      %v1740 = vpack.c.b16 %v1318, %v1316
      %v1741 = vpack.c.b16 %v1319, %v1317
      %v1742 = vpack.c.b16 %v1322, %v1320
      %v1743 = vpack.c.b16 %v1323, %v1321
      %v1744 = vpack.c.b16 %v1326, %v1324
      %v1745 = vpack.c.b16 %v1327, %v1325
      %v1746 = vpack.c.b16 %v1330, %v1328
      %v1747 = vpack.c.b16 %v1331, %v1329
      %v1748 = vpack.c.b16 %v1334, %v1332
      %v1749 = vpack.c.b16 %v1335, %v1333
      %v1750 = vpack.c.b16 %v1338, %v1336
      %v1751 = vpack.c.b16 %v1339, %v1337
      %v1752 = vpack.c.b16 %v1342, %v1340
      %v1753 = vpack.c.b16 %v1343, %v1341
      %v1754 = vpack.c.b16 %v1346, %v1344
      %v1755 = vpack.c.b16 %v1347, %v1345
      %v1756 = vpack.c.b16 %v1350, %v1348
      %v1757 = vpack.c.b16 %v1351, %v1349
      %v1758 = vpack.c.b16 %v1354, %v1352
      %v1759 = vpack.c.b16 %v1355, %v1353
      %v1760 = vpack.c.b16 %v1358, %v1356
      %v1761 = vpack.c.b16 %v1359, %v1357
      %v1762 = vpack.c.b16 %v1362, %v1360
      %v1763 = vpack.c.b16 %v1363, %v1361
      %v1764 = vpack.c.b16 %v1366, %v1364
      %v1765 = vpack.c.b16 %v1367, %v1365
      %v1766 = vpack.c.b16 %v1370, %v1368
      %v1767 = vpack.c.b16 %v1371, %v1369
      %v1768 = vpack.c.b16 %v1374, %v1372
      %v1769 = vpack.c.b16 %v1375, %v1373
      %v1770 = vpack.c.b16 %v1378, %v1376
      %v1771 = vpack.c.b16 %v1379, %v1377
      %v1772 = vpack.c.b16 %v1382, %v1380
      %v1773 = vpack.c.b16 %v1383, %v1381
      %v1774 = vpack.c.b16 %v1386, %v1384
      %v1775 = vpack.c.b16 %v1387, %v1385
      %v1776 = vpack.c.b16 %v1390, %v1388
      %v1777 = vpack.c.b16 %v1391, %v1389
      %v1778 = vpack.c.b16 %v1394, %v1392
      %v1779 = vpack.c.b16 %v1395, %v1393
      %v1780 = vpack.c.b16 %v1398, %v1396
      %v1781 = vpack.c.b16 %v1399, %v1397
      %v1782 = vpack.c.b16 %v1402, %v1400
      %v1783 = vpack.c.b16 %v1403, %v1401
      %v1784 = vpack.c.b16 %v1406, %v1404
      %v1785 = vpack.c.b16 %v1407, %v1405
      %v1786 = vpack.c.b16 %v1410, %v1408
      %v1787 = vpack.c.b16 %v1411, %v1409
      %v1788 = vpack.c.b16 %v1414, %v1412
      %v1789 = vpack.c.b16 %v1415, %v1413
      %v1790 = vpack.c.b16 %v1418, %v1416
      %v1791 = vpack.c.b16 %v1419, %v1417
      %v1792 = vpack.c.b16 %v1422, %v1420
      %v1793 = vpack.c.b16 %v1423, %v1421
      %v1794 = vpack.c.b16 %v1426, %v1424
      %v1795 = vpack.c.b16 %v1427, %v1425
      %v1796 = vpack.c.b16 %v1430, %v1428
      %v1797 = vpack.c.b16 %v1431, %v1429
      %v1798 = vpack.c.b16 %v1434, %v1432
      %v1799 = vpack.c.b16 %v1435, %v1433
      %v1800 = vpack.c.b16 %v1438, %v1436
      %v1801 = vpack.c.b16 %v1439, %v1437
      %v1802 = vpack.c.b16 %v1442, %v1440
      %v1803 = vpack.c.b16 %v1443, %v1441
      %v1804 = vpack.c.b16 %v1446, %v1444
      %v1805 = vpack.c.b16 %v1447, %v1445
      %v1806 = vpack.c.b16 %v1450, %v1448
      %v1807 = vpack.c.b16 %v1451, %v1449
      %v1808 = vpack.c.b16 %v1454, %v1452
      %v1809 = vpack.c.b16 %v1455, %v1453
      %v1810 = vpack.c.b16 %v1458, %v1456
      %v1811 = vpack.c.b16 %v1459, %v1457
      %v1812 = vpack.c.b16 %v1462, %v1460
      %v1813 = vpack.c.b16 %v1463, %v1461
      %v1814 = vpack.c.b16 %v1466, %v1464
      %v1815 = vpack.c.b16 %v1467, %v1465
      %v1816 = vpack.c.b16 %v1470, %v1468
      %v1817 = vpack.c.b16 %v1471, %v1469
      %v1818 = vpack.c.b16 %v1474, %v1472
      %v1819 = vpack.c.b16 %v1475, %v1473
      %v1820 = vpack.c.b16 %v1478, %v1476
      %v1821 = vpack.c.b16 %v1479, %v1477
      %v1822 = vpack.c.b16 %v1482, %v1480
      %v1823 = vpack.c.b16 %v1483, %v1481
      %v1824 = vpack.c.b16 %v1486, %v1484
      %v1825 = vpack.c.b16 %v1487, %v1485
      %v1826 = vpack.c.b16 %v1490, %v1488
      %v1827 = vpack.c.b16 %v1491, %v1489
      %v1828 = vpack.c.b16 %v1494, %v1492
      %v1829 = vpack.c.b16 %v1495, %v1493
      %v1830 = vpack.c.b16 %v1498, %v1496
      %v1831 = vpack.c.b16 %v1499, %v1497
      %v1832 = vpack.c.b16 %v1502, %v1500
      %v1833 = vpack.c.b16 %v1503, %v1501
      %v1834 = vpack.c.b16 %v1506, %v1504
      %v1835 = vpack.c.b16 %v1507, %v1505
      %v1836 = vpack.c.b16 %v1510, %v1508
      %v1837 = vpack.c.b16 %v1511, %v1509
      %v1838 = vpack.c.b16 %v1514, %v1512
      %v1839 = vpack.c.b16 %v1515, %v1513
      %v1840 = vpack.c.b16 %v1518, %v1516
      %v1841 = vpack.c.b16 %v1519, %v1517
      %v1842 = vpack.c.b16 %v1522, %v1520
      %v1843 = vpack.c.b16 %v1523, %v1521
      %v1844 = vpack.c.b16 %v1526, %v1524
      %v1845 = vpack.c.b16 %v1527, %v1525
      %v1846 = vpack.c.b16 %v1530, %v1528
      %v1847 = vpack.c.b16 %v1531, %v1529
      %v1848 = vpack.c.b16 %v1534, %v1532
      %v1849 = vpack.c.b16 %v1535, %v1533
      %v1850 = vpack.c.b16 %v1538, %v1536
      %v1851 = vpack.c.b16 %v1539, %v1537
      %v1852 = vpack.c.b16 %v1542, %v1540
      %v1853 = vpack.c.b16 %v1543, %v1541
      %v1854 = vpack.c.b16 %v1546, %v1544
      %v1855 = vpack.c.b16 %v1547, %v1545
      %v1856 = vpack.c.b16 %v1550, %v1548
      %v1857 = vpack.c.b16 %v1551, %v1549
      %v1858 = vpack.c.b16 %v1554, %v1552
      %v1859 = vpack.c.b16 %v1555, %v1553
      %v1860 = vpack.c.b16 %v1558, %v1556
      %v1861 = vpack.c.b16 %v1559, %v1557
      %v1862 = vpack.c.b16 %v1562, %v1560
      %v1863 = vpack.c.b16 %v1563, %v1561
      %v1864 = vpack.c.b16 %v1566, %v1564
      %v1865 = vpack.c.b16 %v1567, %v1565
      %v1866 = vpack.c.b16 %v1570, %v1568
      %v1867 = vpack.c.b16 %v1571, %v1569
      %v1868 = vpack.c.b16 %v1574, %v1572
      %v1869 = vpack.c.b16 %v1575, %v1573
      %v1870 = vpack.c.b16 %v1578, %v1576
      %v1871 = vpack.c.b16 %v1579, %v1577
      %v1872 = vpack.c.b16 %v1582, %v1580
      %v1873 = vpack.c.b16 %v1583, %v1581
      %v1874 = vpack.c.b16 %v1586, %v1584
      %v1875 = vpack.c.b16 %v1587, %v1585
      %2164 = vmatprep.subr.bf16.mxu0 %v1603
      %2165 = vmatpush1.bf16.msra.mxu0 %v1602
      %2166 = vmatprep.subr.bf16.mxu0 %v1601
      %2167 = vmatpush1.bf16.msra.mxu0 %v1600
      %2168 = vmatprep.subr.bf16.mxu0 %v1599
      %2169 = vmatpush1.bf16.msra.mxu0 %v1598
      %2170 = vmatprep.subr.bf16.mxu0 %v1597
      %2171 = vmatpush1.bf16.msra.mxu0 %v1596
      %2172 = vmatprep.subr.bf16.mxu0 %v1595
      %2173 = vmatpush1.bf16.msra.mxu0 %v1594
      %2174 = vmatprep.subr.bf16.mxu0 %v1593
      %2175 = vmatpush1.bf16.msra.mxu0 %v1592
      %2176 = vmatprep.subr.bf16.mxu0 %v1591
      %2177 = vmatpush1.bf16.msra.mxu0 %v1590
      %2178 = vmatprep.subr.bf16.mxu0 %v1589
      %2179 = vmatpush1.bf16.msra.mxu0 %v1588
      %2180 = vmatprep.subr.bf16.mxu0 %v1619
      %2181 = vmatpush2.bf16.msra.mxu0 %v1618
      %2182 = vmatprep.subr.bf16.mxu0 %v1617
      %2183 = vmatpush2.bf16.msra.mxu0 %v1616
      %2184 = vmatprep.subr.bf16.mxu0 %v1615
      %2185 = vmatpush2.bf16.msra.mxu0 %v1614
      %2186 = vmatprep.subr.bf16.mxu0 %v1613
      %2187 = vmatpush2.bf16.msra.mxu0 %v1612
      %2188 = vmatprep.subr.bf16.mxu0 %v1611
      %2189 = vmatpush2.bf16.msra.mxu0 %v1610
      %2190 = vmatprep.subr.bf16.mxu0 %v1609
      %2191 = vmatpush2.bf16.msra.mxu0 %v1608
      %2192 = vmatprep.subr.bf16.mxu0 %v1607
      %2193 = vmatpush2.bf16.msra.mxu0 %v1606
      %2194 = vmatprep.subr.bf16.mxu0 %v1605
      %2195 = vmatpush2.bf16.msra.mxu0 %v1604
      %2196 = vmatprep.mubr.bf16.mxu0 %v653
      %2197 = vmatmul.mubr.bf16.gmra.mxu0 %v652
      %v2198 = vpop.f32.mrf.mxu0
      %v2199 = vadd.f32 %v537, %v2198
      %v2200 = vpop.f32.mrf.mxu0
      %v2201 = vadd.f32 %v541, %v2200
      %v2202 = vpop.f32.mrf.mxu0
      %v2203 = vadd.f32 %v537, %v2202
      %v2204 = vpop.f32.mrf.mxu0
      %v2205 = vadd.f32 %v541, %v2204
      %2206 = vmatprep.mubr.bf16.mxu0 %v671
      %2207 = vmatmul.mubr.bf16.gmra.mxu0 %v670
      %v2208 = vpop.f32.mrf.mxu0
      %v2209 = vadd.f32 %v537, %v2208
      %v2210 = vpop.f32.mrf.mxu0
      %v2211 = vadd.f32 %v541, %v2210
      %v2212 = vpop.f32.mrf.mxu0
      %v2213 = vadd.f32 %v537, %v2212
      %v2214 = vpop.f32.mrf.mxu0
      %v2215 = vadd.f32 %v541, %v2214
      %2216 = vdwg.mxu0
      %2217 = vmatprep.subr.bf16.mxu0 %v1635
      %2218 = vmatpush1.bf16.msra.mxu0 %v1634
      %2219 = vmatprep.subr.bf16.mxu0 %v1633
      %2220 = vmatpush1.bf16.msra.mxu0 %v1632
      %2221 = vmatprep.subr.bf16.mxu0 %v1631
      %2222 = vmatpush1.bf16.msra.mxu0 %v1630
      %2223 = vmatprep.subr.bf16.mxu0 %v1629
      %2224 = vmatpush1.bf16.msra.mxu0 %v1628
      %2225 = vmatprep.subr.bf16.mxu0 %v1627
      %2226 = vmatpush1.bf16.msra.mxu0 %v1626
      %2227 = vmatprep.subr.bf16.mxu0 %v1625
      %2228 = vmatpush1.bf16.msra.mxu0 %v1624
      %2229 = vmatprep.subr.bf16.mxu0 %v1623
      %2230 = vmatpush1.bf16.msra.mxu0 %v1622
      %2231 = vmatprep.subr.bf16.mxu0 %v1621
      %2232 = vmatpush1.bf16.msra.mxu0 %v1620
      %2233 = vmatprep.subr.bf16.mxu0 %v1651
      %2234 = vmatpush2.bf16.msra.mxu0 %v1650
      %2235 = vmatprep.subr.bf16.mxu0 %v1649
      %2236 = vmatpush2.bf16.msra.mxu0 %v1648
      %2237 = vmatprep.subr.bf16.mxu0 %v1647
      %2238 = vmatpush2.bf16.msra.mxu0 %v1646
      %2239 = vmatprep.subr.bf16.mxu0 %v1645
      %2240 = vmatpush2.bf16.msra.mxu0 %v1644
      %2241 = vmatprep.subr.bf16.mxu0 %v1643
      %2242 = vmatpush2.bf16.msra.mxu0 %v1642
      %2243 = vmatprep.subr.bf16.mxu0 %v1641
      %2244 = vmatpush2.bf16.msra.mxu0 %v1640
      %2245 = vmatprep.subr.bf16.mxu0 %v1639
      %2246 = vmatpush2.bf16.msra.mxu0 %v1638
      %2247 = vmatprep.subr.bf16.mxu0 %v1637
      %2248 = vmatpush2.bf16.msra.mxu0 %v1636
      %2249 = vmatprep.mubr.bf16.mxu0 %v655
      %2250 = vmatmul.mubr.bf16.gmra.mxu0 %v654
      %v2251 = vpop.f32.mrf.mxu0
      %v2252 = vadd.f32 %v2199, %v2251
      %v2253 = vpop.f32.mrf.mxu0
      %v2254 = vadd.f32 %v2201, %v2253
      %v2255 = vpop.f32.mrf.mxu0
      %v2256 = vadd.f32 %v2203, %v2255
      %v2257 = vpop.f32.mrf.mxu0
      %v2258 = vadd.f32 %v2205, %v2257
      %2259 = vmatprep.mubr.bf16.mxu0 %v673
      %2260 = vmatmul.mubr.bf16.gmra.mxu0 %v672
      %v2261 = vpop.f32.mrf.mxu0
      %v2262 = vadd.f32 %v2209, %v2261
      %v2263 = vpop.f32.mrf.mxu0
      %v2264 = vadd.f32 %v2211, %v2263
      %v2265 = vpop.f32.mrf.mxu0
      %v2266 = vadd.f32 %v2213, %v2265
      %v2267 = vpop.f32.mrf.mxu0
      %v2268 = vadd.f32 %v2215, %v2267
      %2269 = vdwg.mxu0
      %2270 = vmatprep.subr.bf16.mxu0 %v1667
      %2271 = vmatpush1.bf16.msra.mxu0 %v1666
      %2272 = vmatprep.subr.bf16.mxu0 %v1665
      %2273 = vmatpush1.bf16.msra.mxu0 %v1664
      %2274 = vmatprep.subr.bf16.mxu0 %v1663
      %2275 = vmatpush1.bf16.msra.mxu0 %v1662
      %2276 = vmatprep.subr.bf16.mxu0 %v1661
      %2277 = vmatpush1.bf16.msra.mxu0 %v1660
      %2278 = vmatprep.subr.bf16.mxu0 %v1659
      %2279 = vmatpush1.bf16.msra.mxu0 %v1658
      %2280 = vmatprep.subr.bf16.mxu0 %v1657
      %2281 = vmatpush1.bf16.msra.mxu0 %v1656
      %2282 = vmatprep.subr.bf16.mxu0 %v1655
      %2283 = vmatpush1.bf16.msra.mxu0 %v1654
      %2284 = vmatprep.subr.bf16.mxu0 %v1653
      %2285 = vmatpush1.bf16.msra.mxu0 %v1652
      %2286 = vmatprep.subr.bf16.mxu0 %v1683
      %2287 = vmatpush2.bf16.msra.mxu0 %v1682
      %2288 = vmatprep.subr.bf16.mxu0 %v1681
      %2289 = vmatpush2.bf16.msra.mxu0 %v1680
      %2290 = vmatprep.subr.bf16.mxu0 %v1679
      %2291 = vmatpush2.bf16.msra.mxu0 %v1678
      %2292 = vmatprep.subr.bf16.mxu0 %v1677
      %2293 = vmatpush2.bf16.msra.mxu0 %v1676
      %2294 = vmatprep.subr.bf16.mxu0 %v1675
      %2295 = vmatpush2.bf16.msra.mxu0 %v1674
      %2296 = vmatprep.subr.bf16.mxu0 %v1673
      %2297 = vmatpush2.bf16.msra.mxu0 %v1672
      %2298 = vmatprep.subr.bf16.mxu0 %v1671
      %2299 = vmatpush2.bf16.msra.mxu0 %v1670
      %2300 = vmatprep.subr.bf16.mxu0 %v1669
      %2301 = vmatpush2.bf16.msra.mxu0 %v1668
      %2302 = vmatprep.mubr.bf16.mxu0 %v657
      %2303 = vmatmul.mubr.bf16.gmra.mxu0 %v656
      %v2304 = vpop.f32.mrf.mxu0
      %v2305 = vadd.f32 %v2252, %v2304
      %v2306 = vpop.f32.mrf.mxu0
      %v2307 = vadd.f32 %v2254, %v2306
      %v2308 = vpop.f32.mrf.mxu0
      %v2309 = vadd.f32 %v2256, %v2308
      %v2310 = vpop.f32.mrf.mxu0
      %v2311 = vadd.f32 %v2258, %v2310
      %2312 = vmatprep.mubr.bf16.mxu0 %v675
      %2313 = vmatmul.mubr.bf16.gmra.mxu0 %v674
      %v2314 = vpop.f32.mrf.mxu0
      %v2315 = vadd.f32 %v2262, %v2314
      %v2316 = vpop.f32.mrf.mxu0
      %v2317 = vadd.f32 %v2264, %v2316
      %v2318 = vpop.f32.mrf.mxu0
      %v2319 = vadd.f32 %v2266, %v2318
      %v2320 = vpop.f32.mrf.mxu0
      %v2321 = vadd.f32 %v2268, %v2320
      %2322 = vdwg.mxu0
      %2323 = vmatprep.subr.bf16.mxu0 %v1699
      %2324 = vmatpush1.bf16.msra.mxu0 %v1698
      %2325 = vmatprep.subr.bf16.mxu0 %v1697
      %2326 = vmatpush1.bf16.msra.mxu0 %v1696
      %2327 = vmatprep.subr.bf16.mxu0 %v1695
      %2328 = vmatpush1.bf16.msra.mxu0 %v1694
      %2329 = vmatprep.subr.bf16.mxu0 %v1693
      %2330 = vmatpush1.bf16.msra.mxu0 %v1692
      %2331 = vmatprep.subr.bf16.mxu0 %v1691
      %2332 = vmatpush1.bf16.msra.mxu0 %v1690
      %2333 = vmatprep.subr.bf16.mxu0 %v1689
      %2334 = vmatpush1.bf16.msra.mxu0 %v1688
      %2335 = vmatprep.subr.bf16.mxu0 %v1687
      %2336 = vmatpush1.bf16.msra.mxu0 %v1686
      %2337 = vmatprep.subr.bf16.mxu0 %v1685
      %2338 = vmatpush1.bf16.msra.mxu0 %v1684
      %2339 = vmatprep.subr.bf16.mxu0 %v1715
      %2340 = vmatpush2.bf16.msra.mxu0 %v1714
      %2341 = vmatprep.subr.bf16.mxu0 %v1713
      %2342 = vmatpush2.bf16.msra.mxu0 %v1712
      %2343 = vmatprep.subr.bf16.mxu0 %v1711
      %2344 = vmatpush2.bf16.msra.mxu0 %v1710
      %2345 = vmatprep.subr.bf16.mxu0 %v1709
      %2346 = vmatpush2.bf16.msra.mxu0 %v1708
      %2347 = vmatprep.subr.bf16.mxu0 %v1707
      %2348 = vmatpush2.bf16.msra.mxu0 %v1706
      %2349 = vmatprep.subr.bf16.mxu0 %v1705
      %2350 = vmatpush2.bf16.msra.mxu0 %v1704
      %2351 = vmatprep.subr.bf16.mxu0 %v1703
      %2352 = vmatpush2.bf16.msra.mxu0 %v1702
      %2353 = vmatprep.subr.bf16.mxu0 %v1701
      %2354 = vmatpush2.bf16.msra.mxu0 %v1700
      %2355 = vmatprep.mubr.bf16.mxu0 %v659
      %2356 = vmatmul.mubr.bf16.gmra.mxu0 %v658
      %v2357 = vpop.f32.mrf.mxu0
      %v2358 = vadd.f32 %v2305, %v2357
      %v2359 = vpop.f32.mrf.mxu0
      %v2360 = vadd.f32 %v2307, %v2359
      %v2361 = vpop.f32.mrf.mxu0
      %v2362 = vadd.f32 %v2309, %v2361
      %v2363 = vpop.f32.mrf.mxu0
      %v2364 = vadd.f32 %v2311, %v2363
      %2365 = vmatprep.mubr.bf16.mxu0 %v677
      %2366 = vmatmul.mubr.bf16.gmra.mxu0 %v676
      %v2367 = vpop.f32.mrf.mxu0
      %v2368 = vadd.f32 %v2315, %v2367
      %v2369 = vpop.f32.mrf.mxu0
      %v2370 = vadd.f32 %v2317, %v2369
      %v2371 = vpop.f32.mrf.mxu0
      %v2372 = vadd.f32 %v2319, %v2371
      %v2373 = vpop.f32.mrf.mxu0
      %v2374 = vadd.f32 %v2321, %v2373
      %2375 = vdwg.mxu0
      %2376 = vmatprep.subr.bf16.mxu0 %v1731
      %2377 = vmatpush1.bf16.msra.mxu0 %v1730
      %2378 = vmatprep.subr.bf16.mxu0 %v1729
      %2379 = vmatpush1.bf16.msra.mxu0 %v1728
      %2380 = vmatprep.subr.bf16.mxu0 %v1727
      %2381 = vmatpush1.bf16.msra.mxu0 %v1726
      %2382 = vmatprep.subr.bf16.mxu0 %v1725
      %2383 = vmatpush1.bf16.msra.mxu0 %v1724
      %2384 = vmatprep.subr.bf16.mxu0 %v1723
      %2385 = vmatpush1.bf16.msra.mxu0 %v1722
      %2386 = vmatprep.subr.bf16.mxu0 %v1721
      %2387 = vmatpush1.bf16.msra.mxu0 %v1720
      %2388 = vmatprep.subr.bf16.mxu0 %v1719
      %2389 = vmatpush1.bf16.msra.mxu0 %v1718
      %2390 = vmatprep.subr.bf16.mxu0 %v1717
      %2391 = vmatpush1.bf16.msra.mxu0 %v1716
      %2392 = vmatprep.subr.bf16.mxu0 %v1747
      %2393 = vmatpush2.bf16.msra.mxu0 %v1746
      %2394 = vmatprep.subr.bf16.mxu0 %v1745
      %2395 = vmatpush2.bf16.msra.mxu0 %v1744
      %2396 = vmatprep.subr.bf16.mxu0 %v1743
      %2397 = vmatpush2.bf16.msra.mxu0 %v1742
      %2398 = vmatprep.subr.bf16.mxu0 %v1741
      %2399 = vmatpush2.bf16.msra.mxu0 %v1740
      %2400 = vmatprep.subr.bf16.mxu0 %v1739
      %2401 = vmatpush2.bf16.msra.mxu0 %v1738
      %2402 = vmatprep.subr.bf16.mxu0 %v1737
      %2403 = vmatpush2.bf16.msra.mxu0 %v1736
      %2404 = vmatprep.subr.bf16.mxu0 %v1735
      %2405 = vmatpush2.bf16.msra.mxu0 %v1734
      %2406 = vmatprep.subr.bf16.mxu0 %v1733
      %2407 = vmatpush2.bf16.msra.mxu0 %v1732
      %2408 = vmatprep.mubr.bf16.mxu0 %v661
      %2409 = vmatmul.mubr.bf16.gmra.mxu0 %v660
      %v2410 = vpop.f32.mrf.mxu0
      %v2411 = vadd.f32 %v2358, %v2410
      %v2412 = vpop.f32.mrf.mxu0
      %v2413 = vadd.f32 %v2360, %v2412
      %v2414 = vpop.f32.mrf.mxu0
      %v2415 = vadd.f32 %v2362, %v2414
      %v2416 = vpop.f32.mrf.mxu0
      %v2417 = vadd.f32 %v2364, %v2416
      %2418 = vmatprep.mubr.bf16.mxu0 %v679
      %2419 = vmatmul.mubr.bf16.gmra.mxu0 %v678
      %v2420 = vpop.f32.mrf.mxu0
      %v2421 = vadd.f32 %v2368, %v2420
      %v2422 = vpop.f32.mrf.mxu0
      %v2423 = vadd.f32 %v2370, %v2422
      %v2424 = vpop.f32.mrf.mxu0
      %v2425 = vadd.f32 %v2372, %v2424
      %v2426 = vpop.f32.mrf.mxu0
      %v2427 = vadd.f32 %v2374, %v2426
      %2428 = vdwg.mxu0
      %2429 = vmatprep.subr.bf16.mxu0 %v1763
      %2430 = vmatpush1.bf16.msra.mxu0 %v1762
      %2431 = vmatprep.subr.bf16.mxu0 %v1761
      %2432 = vmatpush1.bf16.msra.mxu0 %v1760
      %2433 = vmatprep.subr.bf16.mxu0 %v1759
      %2434 = vmatpush1.bf16.msra.mxu0 %v1758
      %2435 = vmatprep.subr.bf16.mxu0 %v1757
      %2436 = vmatpush1.bf16.msra.mxu0 %v1756
      %2437 = vmatprep.subr.bf16.mxu0 %v1755
      %2438 = vmatpush1.bf16.msra.mxu0 %v1754
      %2439 = vmatprep.subr.bf16.mxu0 %v1753
      %2440 = vmatpush1.bf16.msra.mxu0 %v1752
      %2441 = vmatprep.subr.bf16.mxu0 %v1751
      %2442 = vmatpush1.bf16.msra.mxu0 %v1750
      %2443 = vmatprep.subr.bf16.mxu0 %v1749
      %2444 = vmatpush1.bf16.msra.mxu0 %v1748
      %2445 = vmatprep.subr.bf16.mxu0 %v1779
      %2446 = vmatpush2.bf16.msra.mxu0 %v1778
      %2447 = vmatprep.subr.bf16.mxu0 %v1777
      %2448 = vmatpush2.bf16.msra.mxu0 %v1776
      %2449 = vmatprep.subr.bf16.mxu0 %v1775
      %2450 = vmatpush2.bf16.msra.mxu0 %v1774
      %2451 = vmatprep.subr.bf16.mxu0 %v1773
      %2452 = vmatpush2.bf16.msra.mxu0 %v1772
      %2453 = vmatprep.subr.bf16.mxu0 %v1771
      %2454 = vmatpush2.bf16.msra.mxu0 %v1770
      %2455 = vmatprep.subr.bf16.mxu0 %v1769
      %2456 = vmatpush2.bf16.msra.mxu0 %v1768
      %2457 = vmatprep.subr.bf16.mxu0 %v1767
      %2458 = vmatpush2.bf16.msra.mxu0 %v1766
      %2459 = vmatprep.subr.bf16.mxu0 %v1765
      %2460 = vmatpush2.bf16.msra.mxu0 %v1764
      %2461 = vmatprep.mubr.bf16.mxu0 %v663
      %2462 = vmatmul.mubr.bf16.gmra.mxu0 %v662
      %v2463 = vpop.f32.mrf.mxu0
      %v2464 = vadd.f32 %v2411, %v2463
      %v2465 = vpop.f32.mrf.mxu0
      %v2466 = vadd.f32 %v2413, %v2465
      %v2467 = vpop.f32.mrf.mxu0
      %v2468 = vadd.f32 %v2415, %v2467
      %v2469 = vpop.f32.mrf.mxu0
      %v2470 = vadd.f32 %v2417, %v2469
      %2471 = vmatprep.mubr.bf16.mxu0 %v681
      %2472 = vmatmul.mubr.bf16.gmra.mxu0 %v680
      %v2473 = vpop.f32.mrf.mxu0
      %v2474 = vadd.f32 %v2421, %v2473
      %v2475 = vpop.f32.mrf.mxu0
      %v2476 = vadd.f32 %v2423, %v2475
      %v2477 = vpop.f32.mrf.mxu0
      %v2478 = vadd.f32 %v2425, %v2477
      %v2479 = vpop.f32.mrf.mxu0
      %v2480 = vadd.f32 %v2427, %v2479
      %2481 = vdwg.mxu0
      %2482 = vmatprep.subr.bf16.mxu0 %v1795
      %2483 = vmatpush1.bf16.msra.mxu0 %v1794
      %2484 = vmatprep.subr.bf16.mxu0 %v1793
      %2485 = vmatpush1.bf16.msra.mxu0 %v1792
      %2486 = vmatprep.subr.bf16.mxu0 %v1791
      %2487 = vmatpush1.bf16.msra.mxu0 %v1790
      %2488 = vmatprep.subr.bf16.mxu0 %v1789
      %2489 = vmatpush1.bf16.msra.mxu0 %v1788
      %2490 = vmatprep.subr.bf16.mxu0 %v1787
      %2491 = vmatpush1.bf16.msra.mxu0 %v1786
      %2492 = vmatprep.subr.bf16.mxu0 %v1785
      %2493 = vmatpush1.bf16.msra.mxu0 %v1784
      %2494 = vmatprep.subr.bf16.mxu0 %v1783
      %2495 = vmatpush1.bf16.msra.mxu0 %v1782
      %2496 = vmatprep.subr.bf16.mxu0 %v1781
      %2497 = vmatpush1.bf16.msra.mxu0 %v1780
      %2498 = vmatprep.subr.bf16.mxu0 %v1811
      %2499 = vmatpush2.bf16.msra.mxu0 %v1810
      %2500 = vmatprep.subr.bf16.mxu0 %v1809
      %2501 = vmatpush2.bf16.msra.mxu0 %v1808
      %2502 = vmatprep.subr.bf16.mxu0 %v1807
      %2503 = vmatpush2.bf16.msra.mxu0 %v1806
      %2504 = vmatprep.subr.bf16.mxu0 %v1805
      %2505 = vmatpush2.bf16.msra.mxu0 %v1804
      %2506 = vmatprep.subr.bf16.mxu0 %v1803
      %2507 = vmatpush2.bf16.msra.mxu0 %v1802
      %2508 = vmatprep.subr.bf16.mxu0 %v1801
      %2509 = vmatpush2.bf16.msra.mxu0 %v1800
      %2510 = vmatprep.subr.bf16.mxu0 %v1799
      %2511 = vmatpush2.bf16.msra.mxu0 %v1798
      %2512 = vmatprep.subr.bf16.mxu0 %v1797
      %2513 = vmatpush2.bf16.msra.mxu0 %v1796
      %2514 = vmatprep.mubr.bf16.mxu0 %v665
      %2515 = vmatmul.mubr.bf16.gmra.mxu0 %v664
      %v2516 = vpop.f32.mrf.mxu0
      %v2517 = vadd.f32 %v2464, %v2516
      %v2518 = vpop.f32.mrf.mxu0
      %v2519 = vadd.f32 %v2466, %v2518
      %v2520 = vpop.f32.mrf.mxu0
      %v2521 = vadd.f32 %v2468, %v2520
      %v2522 = vpop.f32.mrf.mxu0
      %v2523 = vadd.f32 %v2470, %v2522
      %2524 = vmatprep.mubr.bf16.mxu0 %v683
      %2525 = vmatmul.mubr.bf16.gmra.mxu0 %v682
      %v2526 = vpop.f32.mrf.mxu0
      %v2527 = vadd.f32 %v2474, %v2526
      %v2528 = vpop.f32.mrf.mxu0
      %v2529 = vadd.f32 %v2476, %v2528
      %v2530 = vpop.f32.mrf.mxu0
      %v2531 = vadd.f32 %v2478, %v2530
      %v2532 = vpop.f32.mrf.mxu0
      %v2533 = vadd.f32 %v2480, %v2532
      %2534 = vdwg.mxu0
      %2535 = vmatprep.subr.bf16.mxu0 %v1827
      %2536 = vmatpush1.bf16.msra.mxu0 %v1826
      %2537 = vmatprep.subr.bf16.mxu0 %v1825
      %2538 = vmatpush1.bf16.msra.mxu0 %v1824
      %2539 = vmatprep.subr.bf16.mxu0 %v1823
      %2540 = vmatpush1.bf16.msra.mxu0 %v1822
      %2541 = vmatprep.subr.bf16.mxu0 %v1821
      %2542 = vmatpush1.bf16.msra.mxu0 %v1820
      %2543 = vmatprep.subr.bf16.mxu0 %v1819
      %2544 = vmatpush1.bf16.msra.mxu0 %v1818
      %2545 = vmatprep.subr.bf16.mxu0 %v1817
      %2546 = vmatpush1.bf16.msra.mxu0 %v1816
      %2547 = vmatprep.subr.bf16.mxu0 %v1815
      %2548 = vmatpush1.bf16.msra.mxu0 %v1814
      %2549 = vmatprep.subr.bf16.mxu0 %v1813
      %2550 = vmatpush1.bf16.msra.mxu0 %v1812
      %2551 = vmatprep.subr.bf16.mxu0 %v1843
      %2552 = vmatpush2.bf16.msra.mxu0 %v1842
      %2553 = vmatprep.subr.bf16.mxu0 %v1841
      %2554 = vmatpush2.bf16.msra.mxu0 %v1840
      %2555 = vmatprep.subr.bf16.mxu0 %v1839
      %2556 = vmatpush2.bf16.msra.mxu0 %v1838
      %2557 = vmatprep.subr.bf16.mxu0 %v1837
      %2558 = vmatpush2.bf16.msra.mxu0 %v1836
      %2559 = vmatprep.subr.bf16.mxu0 %v1835
      %2560 = vmatpush2.bf16.msra.mxu0 %v1834
      %2561 = vmatprep.subr.bf16.mxu0 %v1833
      %2562 = vmatpush2.bf16.msra.mxu0 %v1832
      %2563 = vmatprep.subr.bf16.mxu0 %v1831
      %2564 = vmatpush2.bf16.msra.mxu0 %v1830
      %2565 = vmatprep.subr.bf16.mxu0 %v1829
      %2566 = vmatpush2.bf16.msra.mxu0 %v1828
      %2567 = vmatprep.mubr.bf16.mxu0 %v667
      %2568 = vmatmul.mubr.bf16.gmra.mxu0 %v666
      %v2569 = vpop.f32.mrf.mxu0
      %v2570 = vadd.f32 %v2517, %v2569
      %v2571 = vpop.f32.mrf.mxu0
      %v2572 = vadd.f32 %v2519, %v2571
      %v2573 = vpop.f32.mrf.mxu0
      %v2574 = vadd.f32 %v2521, %v2573
      %v2575 = vpop.f32.mrf.mxu0
      %v2576 = vadd.f32 %v2523, %v2575
      %2577 = vmatprep.mubr.bf16.mxu0 %v685
      %2578 = vmatmul.mubr.bf16.gmra.mxu0 %v684
      %v2579 = vpop.f32.mrf.mxu0
      %v2580 = vadd.f32 %v2527, %v2579
      %v2581 = vpop.f32.mrf.mxu0
      %v2582 = vadd.f32 %v2529, %v2581
      %v2583 = vpop.f32.mrf.mxu0
      %v2584 = vadd.f32 %v2531, %v2583
      %v2585 = vpop.f32.mrf.mxu0
      %v2586 = vadd.f32 %v2533, %v2585
      %2587 = vdwg.mxu0
      %2588 = vmatprep.subr.bf16.mxu0 %v1859
      %2589 = vmatpush1.bf16.msra.mxu0 %v1858
      %2590 = vmatprep.subr.bf16.mxu0 %v1857
      %2591 = vmatpush1.bf16.msra.mxu0 %v1856
      %2592 = vmatprep.subr.bf16.mxu0 %v1855
      %2593 = vmatpush1.bf16.msra.mxu0 %v1854
      %2594 = vmatprep.subr.bf16.mxu0 %v1853
      %2595 = vmatpush1.bf16.msra.mxu0 %v1852
      %2596 = vmatprep.subr.bf16.mxu0 %v1851
      %2597 = vmatpush1.bf16.msra.mxu0 %v1850
      %2598 = vmatprep.subr.bf16.mxu0 %v1849
      %2599 = vmatpush1.bf16.msra.mxu0 %v1848
      %2600 = vmatprep.subr.bf16.mxu0 %v1847
      %2601 = vmatpush1.bf16.msra.mxu0 %v1846
      %2602 = vmatprep.subr.bf16.mxu0 %v1845
      %2603 = vmatpush1.bf16.msra.mxu0 %v1844
      %2604 = vmatprep.subr.bf16.mxu0 %v1875
      %2605 = vmatpush2.bf16.msra.mxu0 %v1874
      %2606 = vmatprep.subr.bf16.mxu0 %v1873
      %2607 = vmatpush2.bf16.msra.mxu0 %v1872
      %2608 = vmatprep.subr.bf16.mxu0 %v1871
      %2609 = vmatpush2.bf16.msra.mxu0 %v1870
      %2610 = vmatprep.subr.bf16.mxu0 %v1869
      %2611 = vmatpush2.bf16.msra.mxu0 %v1868
      %2612 = vmatprep.subr.bf16.mxu0 %v1867
      %2613 = vmatpush2.bf16.msra.mxu0 %v1866
      %2614 = vmatprep.subr.bf16.mxu0 %v1865
      %2615 = vmatpush2.bf16.msra.mxu0 %v1864
      %2616 = vmatprep.subr.bf16.mxu0 %v1863
      %2617 = vmatpush2.bf16.msra.mxu0 %v1862
      %2618 = vmatprep.subr.bf16.mxu0 %v1861
      %2619 = vmatpush2.bf16.msra.mxu0 %v1860
      %2620 = vmatprep.mubr.bf16.mxu0 %v669
      %2621 = vmatmul.mubr.bf16.gmra.mxu0 %v668
      %v2622 = vpop.f32.mrf.mxu0
      %v2623 = vadd.f32 %v2570, %v2622
      %v2624 = vpop.f32.mrf.mxu0
      %v2625 = vadd.f32 %v2572, %v2624
      %v2626 = vpop.f32.mrf.mxu0
      %v2627 = vadd.f32 %v2574, %v2626
      %v2628 = vpop.f32.mrf.mxu0
      %v2629 = vadd.f32 %v2576, %v2628
      %2630 = vmatprep.mubr.bf16.mxu0 %v687
      %2631 = vmatmul.mubr.bf16.gmra.mxu0 %v686
      %v2632 = vpop.f32.mrf.mxu0
      %v2633 = vadd.f32 %v2580, %v2632
      %v2634 = vpop.f32.mrf.mxu0
      %v2635 = vadd.f32 %v2582, %v2634
      %v2636 = vpop.f32.mrf.mxu0
      %v2637 = vadd.f32 %v2584, %v2636
      %v2638 = vpop.f32.mrf.mxu0
      %v2639 = vadd.f32 %v2586, %v2638
      %2640 = vdwg.mxu0
      %2641 = vst [vmem:[%s207] sm:$0xff] %v2623
      %2642 = vst [vmem:[%s207 + $0x8] sm:$0xff] %v2625
      %2643 = vst [vmem:[%s207 + $0x10] sm:$0xff] %v2627
      %2644 = vst [vmem:[%s207 + $0x18] sm:$0xff] %v2629
      %2645 = vst [vmem:[%s207 + $0x20] sm:$0xff] %v2633
      %2646 = vst [vmem:[%s207 + $0x28] sm:$0xff] %v2635
      %2647 = vst [vmem:[%s207 + $0x30] sm:$0xff] %v2637
      %2648 = vst [vmem:[%s207 + $0x38] sm:$0xff] %v2639
      %p2649 = scmp.lt.s32.totalorder %s14, 1
      %s2650 = scalar_select %p2649, %s14, 1
      %s2651 = smul.addr %s2650, 8
      %s2652 = smul.addr %s2651, 8
      %s2653 = scalar_lea.vmem %s3, %s2652
      // Predicated region
      $region33: #{frequency_kd2_forward.5} parent=31 // pred_check
        %p2654 = pneg %p110
      $region34: #{frequency_kd2_forward.5} parent=31 // pred_check_branch
        %2656 = sbr.rel (%p2654) target = $region36
      $region35: #{frequency_kd2_forward.5} parent=31 // pred_region
        _
      $region36: #{frequency_kd2_forward.5} parent=31 // pred_fallthru
        _
    $region32: #{frequency_kd2_forward.5} parent=5 // pred_fallthru
      _
    %p2657 = scmp.le.s32.totalorder 2, %s9
    // Predicated region
    $region37: #{frequency_kd2_forward.5} parent=5 // pred_check
      %p2658 = pneg %p2657
    $region38: #{frequency_kd2_forward.5} parent=5 // pred_check_branch
      %2660 = sbr.rel (%p2658) target = $region40
    $region39: #{frequency_kd2_forward.5} parent=5 // pred_region
      %s2661 = ssub.s32 %s9, 2
      // Predicated region
      $region41: #{frequency_kd2_forward.5} parent=39 // pred_check
        %p2662 = pneg %p116
      $region42: #{frequency_kd2_forward.5} parent=39 // pred_check_branch
        %2664 = sbr.rel (%p2662) target = $region44
      $region43: #{frequency_kd2_forward.5} parent=39 // pred_region
        %p2665 = scmp.lt.s32.totalorder %s15, 1
        %s2666 = scalar_select %p2665, %s15, 1
        %s2667 = smul.addr %s2666, 8
        %s2668 = smul.addr %s2667, 8
        %s2669 = scalar_lea.vmem %s3, %s2668
      $region44: #{frequency_kd2_forward.5} parent=39 // pred_fallthru
        _
    $region40: #{frequency_kd2_forward.5} parent=5 // pred_fallthru
      _
  $region6: #{frequency_kd2_forward.5} parent=0 // loop_footer
    %s13 = sadd.s32 1, %s9
  $region7: #{frequency_kd2_forward.5} parent=0 // loop_footer_branch
    %8 = sbr.rel target = $region3
  $region8: #{frequency_kd2_forward.5} parent=0 // loop_exit
    _

// kernel: squeeze.13
$region0: #{squeeze.13}
  %s0 = inlined_call_operand.vmem [shape: bf16[1,32,256], index: 0, kind: input, shape index: {}]
  %s1 = inlined_call_operand.vmem [shape: bf16[2,4,4,256], index: 1, kind: output, shape index: {}]
  $region1: #{squeeze.13} parent=0
    #allocation0 [shape = 'u8[65536]{0}', space=vmem, size = 0x10000, scoped, tag = 'scoped mem for output reshape']
    #allocation1 [shape = 'u8[32768]{0}', space=vmem, size = 0x8000, scoped, tag = 'scoped mem for input reshape']
    %s3 = smul.u32 4, 2
    %s4 = sshll.u32 1, %s3
    %s5 = ssub.s32 %s4, 1
    %s6 = smul.addr 4, 7
    %s7 = scalar_lea.vmem %s0, %s6
    %s8 = sshrl.u32 %s5, 1
    %s9 = sor.u32 %s5, %s8
    %s10 = sand.u32 %s9, 85
    %s11 = sshrl.u32 %s10, 1
    %s12 = sor.u32 %s10, %s11
    %s13 = sand.u32 51, %s12
    %s14 = sshrl.u32 %s13, 2
    %s15 = sor.u32 %s13, %s14
    %s16 = sand.u32 15, %s15
    %v17 = vld [vmem:[%s7] sm:%s16]
    %v18 = vunpack.c.l.bf16 %v17
    %v19 = vunpack.c.h.bf16 %v17
    %s20 = scalar_lea.vmem [#allocation1], 56
    %21 = vst [vmem:[%s20] sm:%s5] %v18
    %s22 = smul.addr 4, 6
    %s23 = scalar_lea.vmem %s0, %s22
    %s24 = sshrl.u32 %s5, 1
    %s25 = sor.u32 %s5, %s24
    %s26 = sand.u32 %s25, 85
    %s27 = sshrl.u32 %s26, 1
    %s28 = sor.u32 %s26, %s27
    %s29 = sand.u32 51, %s28
    %s30 = sshrl.u32 %s29, 2
    %s31 = sor.u32 %s29, %s30
    %s32 = sand.u32 15, %s31
    %v33 = vld [vmem:[%s23] sm:%s32]
    %v34 = vunpack.c.l.bf16 %v33
    %v35 = vunpack.c.h.bf16 %v33
    %s36 = scalar_lea.vmem [#allocation1], 48
    %37 = vst [vmem:[%s36] sm:%s5] %v34
    %s38 = smul.addr 4, 5
    %s39 = scalar_lea.vmem %s0, %s38
    %s40 = sshrl.u32 %s5, 1
    %s41 = sor.u32 %s5, %s40
    %s42 = sand.u32 %s41, 85
    %s43 = sshrl.u32 %s42, 1
    %s44 = sor.u32 %s42, %s43
    %s45 = sand.u32 51, %s44
    %s46 = sshrl.u32 %s45, 2
    %s47 = sor.u32 %s45, %s46
    %s48 = sand.u32 15, %s47
    %v49 = vld [vmem:[%s39] sm:%s48]
    %v50 = vunpack.c.l.bf16 %v49
    %v51 = vunpack.c.h.bf16 %v49
    %s52 = scalar_lea.vmem [#allocation1], 40
    %53 = vst [vmem:[%s52] sm:%s5] %v50
    %s54 = smul.addr 4, 4
    %s55 = scalar_lea.vmem %s0, %s54
    %s56 = sshrl.u32 %s5, 1
    %s57 = sor.u32 %s5, %s56
    %s58 = sand.u32 %s57, 85
    %s59 = sshrl.u32 %s58, 1
    %s60 = sor.u32 %s58, %s59
    %s61 = sand.u32 51, %s60
    %s62 = sshrl.u32 %s61, 2
    %s63 = sor.u32 %s61, %s62
    %s64 = sand.u32 15, %s63
    %v65 = vld [vmem:[%s55] sm:%s64]
    %v66 = vunpack.c.l.bf16 %v65
    %v67 = vunpack.c.h.bf16 %v65
    %s68 = scalar_lea.vmem [#allocation1], 32
    %69 = vst [vmem:[%s68] sm:%s5] %v66
    %s70 = smul.addr 4, 3
    %s71 = scalar_lea.vmem %s0, %s70
    %s72 = sshrl.u32 %s5, 1
    %s73 = sor.u32 %s5, %s72
    %s74 = sand.u32 %s73, 85
    %s75 = sshrl.u32 %s74, 1
    %s76 = sor.u32 %s74, %s75
    %s77 = sand.u32 51, %s76
    %s78 = sshrl.u32 %s77, 2
    %s79 = sor.u32 %s77, %s78
    %s80 = sand.u32 15, %s79
    %v81 = vld [vmem:[%s71] sm:%s80]
    %v82 = vunpack.c.l.bf16 %v81
    %v83 = vunpack.c.h.bf16 %v81
    %s84 = scalar_lea.vmem [#allocation1], 24
    %85 = vst [vmem:[%s84] sm:%s5] %v82
    %s86 = smul.addr 4, 2
    %s87 = scalar_lea.vmem %s0, %s86
    %s88 = sshrl.u32 %s5, 1
    %s89 = sor.u32 %s5, %s88
    %s90 = sand.u32 %s89, 85
    %s91 = sshrl.u32 %s90, 1
    %s92 = sor.u32 %s90, %s91
    %s93 = sand.u32 51, %s92
    %s94 = sshrl.u32 %s93, 2
    %s95 = sor.u32 %s93, %s94
    %s96 = sand.u32 15, %s95
    %v97 = vld [vmem:[%s87] sm:%s96]
    %v98 = vunpack.c.l.bf16 %v97
    %v99 = vunpack.c.h.bf16 %v97
    %s100 = scalar_lea.vmem [#allocation1], 16
    %101 = vst [vmem:[%s100] sm:%s5] %v98
    %s102 = scalar_lea.vmem %s0, 4
    %s103 = sshrl.u32 %s5, 1
    %s104 = sor.u32 %s5, %s103
    %s105 = sand.u32 %s104, 85
    %s106 = sshrl.u32 %s105, 1
    %s107 = sor.u32 %s105, %s106
    %s108 = sand.u32 51, %s107
    %s109 = sshrl.u32 %s108, 2
    %s110 = sor.u32 %s108, %s109
    %s111 = sand.u32 15, %s110
    %v112 = vld [vmem:[%s102] sm:%s111]
    %v113 = vunpack.c.l.bf16 %v112
    %v114 = vunpack.c.h.bf16 %v112
    %s115 = scalar_lea.vmem [#allocation1], 8
    %116 = vst [vmem:[%s115] sm:%s5] %v113
    %s117 = sshrl.u32 %s5, 1
    %s118 = sor.u32 %s5, %s117
    %s119 = sand.u32 %s118, 85
    %s120 = sshrl.u32 %s119, 1
    %s121 = sor.u32 %s119, %s120
    %s122 = sand.u32 51, %s121
    %s123 = sshrl.u32 %s122, 2
    %s124 = sor.u32 %s122, %s123
    %s125 = sand.u32 15, %s124
    %v126 = vld [vmem:[%s0] sm:%s125]
    %v127 = vunpack.c.l.bf16 %v126
    %v128 = vunpack.c.h.bf16 %v126
    %129 = vst [vmem:[#allocation1] sm:%s5] %v127
    %v130 = vld [vmem:[#allocation1] sm:$0xff]
    %131 = vst [vmem:[#allocation0] sm:$0xf] %v130
    %s132 = scalar_lea.vmem [#allocation0], 12
    %133 = vst [vmem:[%s132] sm:$0xf0] %v130
    %s134 = scalar_lea.vmem [#allocation1], 8
    %v135 = vld [vmem:[%s134] sm:$0xff]
    %s136 = scalar_lea.vmem [#allocation0], 8
    %137 = vst [vmem:[%s136] sm:$0xf] %v135
    %s138 = scalar_lea.vmem [#allocation0], 20
    %139 = vst [vmem:[%s138] sm:$0xf0] %v135
    %s140 = scalar_lea.vmem [#allocation1], 16
    %v141 = vld [vmem:[%s140] sm:$0xff]
    %s142 = scalar_lea.vmem [#allocation0], 32
    %143 = vst [vmem:[%s142] sm:$0xf] %v141
    %s144 = scalar_lea.vmem [#allocation0], 44
    %145 = vst [vmem:[%s144] sm:$0xf0] %v141
    %s146 = scalar_lea.vmem [#allocation1], 24
    %v147 = vld [vmem:[%s146] sm:$0xff]
    %s148 = scalar_lea.vmem [#allocation0], 40
    %149 = vst [vmem:[%s148] sm:$0xf] %v147
    %s150 = scalar_lea.vmem [#allocation0], 52
    %151 = vst [vmem:[%s150] sm:$0xf0] %v147
    %s152 = scalar_lea.vmem [#allocation1], 32
    %v153 = vld [vmem:[%s152] sm:$0xff]
    %s154 = scalar_lea.vmem [#allocation0], 64
    %155 = vst [vmem:[%s154] sm:$0xf] %v153
    %s156 = scalar_lea.vmem [#allocation0], 76
    %157 = vst [vmem:[%s156] sm:$0xf0] %v153
    %s158 = scalar_lea.vmem [#allocation1], 40
    %v159 = vld [vmem:[%s158] sm:$0xff]
    %s160 = scalar_lea.vmem [#allocation0], 72
    %161 = vst [vmem:[%s160] sm:$0xf] %v159
    %s162 = scalar_lea.vmem [#allocation0], 84
    %163 = vst [vmem:[%s162] sm:$0xf0] %v159
    %s164 = scalar_lea.vmem [#allocation1], 48
    %v165 = vld [vmem:[%s164] sm:$0xff]
    %s166 = scalar_lea.vmem [#allocation0], 96
    %167 = vst [vmem:[%s166] sm:$0xf] %v165
    %s168 = scalar_lea.vmem [#allocation0], 108
    %169 = vst [vmem:[%s168] sm:$0xf0] %v165
    %s170 = scalar_lea.vmem [#allocation1], 56
    %v171 = vld [vmem:[%s170] sm:$0xff]
    %s172 = scalar_lea.vmem [#allocation0], 104
    %173 = vst [vmem:[%s172] sm:$0xf] %v171
    %s174 = scalar_lea.vmem [#allocation0], 116
    %175 = vst [vmem:[%s174] sm:$0xf0] %v171
    %s177 = smul.u32 2, 2
    %s178 = sshll.u32 1, %s177
    %s179 = ssub.s32 %s178, 1
    %s180 = sshrl.u32 %s177, 1
    %v181 = vld [vmem:[#allocation0] sm:%s179]
    %v182 = vpack.c.bf16 0.0, %v181
    %s183 = sshll.u32 1, %s180
    %s184 = ssub.s32 %s183, 1
    %185 = vst [vmem:[%s1] sm:%s184] %v182
    %s186 = scalar_lea.vmem [#allocation0], 8
    %v187 = vld [vmem:[%s186] sm:%s179]
    %v188 = vpack.c.bf16 0.0, %v187
    %s189 = sshll.u32 1, %s180
    %s190 = ssub.s32 %s189, 1
    %s191 = scalar_lea.vmem %s1, 2
    %192 = vst [vmem:[%s191] sm:%s190] %v188
    %s193 = scalar_lea.vmem [#allocation0], 16
    %v194 = vld [vmem:[%s193] sm:%s179]
    %v195 = vpack.c.bf16 0.0, %v194
    %s196 = sshll.u32 1, %s180
    %s197 = ssub.s32 %s196, 1
    %s198 = smul.addr 2, 2
    %s199 = scalar_lea.vmem %s1, %s198
    %200 = vst [vmem:[%s199] sm:%s197] %v195
    %s201 = scalar_lea.vmem [#allocation0], 24
    %v202 = vld [vmem:[%s201] sm:%s179]
    %v203 = vpack.c.bf16 0.0, %v202
    %s204 = sshll.u32 1, %s180
    %s205 = ssub.s32 %s204, 1
    %s206 = smul.addr 2, 3
    %s207 = scalar_lea.vmem %s1, %s206
    %208 = vst [vmem:[%s207] sm:%s205] %v203
    %s209 = scalar_lea.vmem [#allocation0], 32
    %v210 = vld [vmem:[%s209] sm:%s179]
    %v211 = vpack.c.bf16 0.0, %v210
    %s212 = sshll.u32 1, %s180
    %s213 = ssub.s32 %s212, 1
    %s214 = smul.addr 2, 4
    %s215 = scalar_lea.vmem %s1, %s214
    %216 = vst [vmem:[%s215] sm:%s213] %v211
    %s217 = scalar_lea.vmem [#allocation0], 40
    %v218 = vld [vmem:[%s217] sm:%s179]
    %v219 = vpack.c.bf16 0.0, %v218
    %s220 = sshll.u32 1, %s180
    %s221 = ssub.s32 %s220, 1
    %s222 = smul.addr 2, 5
    %s223 = scalar_lea.vmem %s1, %s222
    %224 = vst [vmem:[%s223] sm:%s221] %v219
    %s225 = scalar_lea.vmem [#allocation0], 48
    %v226 = vld [vmem:[%s225] sm:%s179]
    %v227 = vpack.c.bf16 0.0, %v226
    %s228 = sshll.u32 1, %s180
    %s229 = ssub.s32 %s228, 1
    %s230 = smul.addr 2, 6
    %s231 = scalar_lea.vmem %s1, %s230
    %232 = vst [vmem:[%s231] sm:%s229] %v227
    %s233 = scalar_lea.vmem [#allocation0], 56
    %v234 = vld [vmem:[%s233] sm:%s179]
    %v235 = vpack.c.bf16 0.0, %v234
    %s236 = sshll.u32 1, %s180
    %s237 = ssub.s32 %s236, 1
    %s238 = smul.addr 2, 7
    %s239 = scalar_lea.vmem %s1, %s238
    %240 = vst [vmem:[%s239] sm:%s237] %v235
    %s241 = scalar_lea.vmem [#allocation0], 64
    %v242 = vld [vmem:[%s241] sm:%s179]
    %v243 = vpack.c.bf16 0.0, %v242
    %s244 = sshll.u32 1, %s180
    %s245 = ssub.s32 %s244, 1
    %s246 = smul.addr 2, 8
    %s247 = scalar_lea.vmem %s1, %s246
    %248 = vst [vmem:[%s247] sm:%s245] %v243
    %s249 = scalar_lea.vmem [#allocation0], 72
    %v250 = vld [vmem:[%s249] sm:%s179]
    %v251 = vpack.c.bf16 0.0, %v250
    %s252 = sshll.u32 1, %s180
    %s253 = ssub.s32 %s252, 1
    %s254 = smul.addr 2, 9
    %s255 = scalar_lea.vmem %s1, %s254
    %256 = vst [vmem:[%s255] sm:%s253] %v251
    %s257 = scalar_lea.vmem [#allocation0], 80
    %v258 = vld [vmem:[%s257] sm:%s179]
    %v259 = vpack.c.bf16 0.0, %v258
    %s260 = sshll.u32 1, %s180
    %s261 = ssub.s32 %s260, 1
    %s262 = smul.addr 2, 10
    %s263 = scalar_lea.vmem %s1, %s262
    %264 = vst [vmem:[%s263] sm:%s261] %v259
    %s265 = scalar_lea.vmem [#allocation0], 88
    %v266 = vld [vmem:[%s265] sm:%s179]
    %v267 = vpack.c.bf16 0.0, %v266
    %s268 = sshll.u32 1, %s180
    %s269 = ssub.s32 %s268, 1
    %s270 = smul.addr 2, 11
    %s271 = scalar_lea.vmem %s1, %s270
    %272 = vst [vmem:[%s271] sm:%s269] %v267
    %s273 = scalar_lea.vmem [#allocation0], 96
    %v274 = vld [vmem:[%s273] sm:%s179]
    %v275 = vpack.c.bf16 0.0, %v274
    %s276 = sshll.u32 1, %s180
    %s277 = ssub.s32 %s276, 1
    %s278 = smul.addr 2, 12
    %s279 = scalar_lea.vmem %s1, %s278
    %280 = vst [vmem:[%s279] sm:%s277] %v275
    %s281 = scalar_lea.vmem [#allocation0], 104
    %v282 = vld [vmem:[%s281] sm:%s179]
    %v283 = vpack.c.bf16 0.0, %v282
    %s284 = sshll.u32 1, %s180
    %s285 = ssub.s32 %s284, 1
    %s286 = smul.addr 2, 13
    %s287 = scalar_lea.vmem %s1, %s286
    %288 = vst [vmem:[%s287] sm:%s285] %v283
    %s289 = scalar_lea.vmem [#allocation0], 112
    %v290 = vld [vmem:[%s289] sm:%s179]
    %v291 = vpack.c.bf16 0.0, %v290
    %s292 = sshll.u32 1, %s180
    %s293 = ssub.s32 %s292, 1
    %s294 = smul.addr 2, 14
    %s295 = scalar_lea.vmem %s1, %s294
    %296 = vst [vmem:[%s295] sm:%s293] %v291
    %s297 = scalar_lea.vmem [#allocation0], 120
    %v298 = vld [vmem:[%s297] sm:%s179]
    %v299 = vpack.c.bf16 0.0, %v298
    %s300 = sshll.u32 1, %s180
    %s301 = ssub.s32 %s300, 1
    %s302 = smul.addr 2, 15
    %s303 = scalar_lea.vmem %s1, %s302
    %304 = vst [vmem:[%s303] sm:%s301] %v299

// kernel: squeeze.15
$region0: #{squeeze.15}
  %s0 = inlined_call_operand.vmem [shape: bf16[1,8,256], index: 0, kind: input, shape index: {}]
  %s1 = inlined_call_operand.vmem [shape: bf16[2,2,2,256], index: 1, kind: output, shape index: {}]
  $region1: #{squeeze.15} parent=0
    #allocation0 [shape = 'u8[32768]{0}', space=vmem, size = 0x8000, scoped, tag = 'scoped mem for output reshape']
    #allocation1 [shape = 'u8[8192]{0}', space=vmem, size = 0x2000, scoped, tag = 'scoped mem for input reshape']
    %s3 = smul.u32 4, 2
    %s4 = sshll.u32 1, %s3
    %s5 = ssub.s32 %s4, 1
    %s6 = scalar_lea.vmem %s0, 4
    %s7 = sshrl.u32 %s5, 1
    %s8 = sor.u32 %s5, %s7
    %s9 = sand.u32 %s8, 85
    %s10 = sshrl.u32 %s9, 1
    %s11 = sor.u32 %s9, %s10
    %s12 = sand.u32 51, %s11
    %s13 = sshrl.u32 %s12, 2
    %s14 = sor.u32 %s12, %s13
    %s15 = sand.u32 15, %s14
    %v16 = vld [vmem:[%s6] sm:%s15]
    %v17 = vunpack.c.l.bf16 %v16
    %v18 = vunpack.c.h.bf16 %v16
    %s19 = scalar_lea.vmem [#allocation1], 8
    %20 = vst [vmem:[%s19] sm:%s5] %v17
    %s21 = sshrl.u32 %s5, 1
    %s22 = sor.u32 %s5, %s21
    %s23 = sand.u32 %s22, 85
    %s24 = sshrl.u32 %s23, 1
    %s25 = sor.u32 %s23, %s24
    %s26 = sand.u32 51, %s25
    %s27 = sshrl.u32 %s26, 2
    %s28 = sor.u32 %s26, %s27
    %s29 = sand.u32 15, %s28
    %v30 = vld [vmem:[%s0] sm:%s29]
    %v31 = vunpack.c.l.bf16 %v30
    %v32 = vunpack.c.h.bf16 %v30
    %33 = vst [vmem:[#allocation1] sm:%s5] %v31
    %v34 = vld [vmem:[#allocation1] sm:$0xff]
    %35 = vst [vmem:[#allocation0] sm:$0x3] %v34
    %s36 = scalar_lea.vmem [#allocation0], 14
    %37 = vst [vmem:[%s36] sm:$0xc] %v34
    %s38 = scalar_lea.vmem [#allocation0], 28
    %39 = vst [vmem:[%s38] sm:$0x30] %v34
    %s40 = scalar_lea.vmem [#allocation0], 42
    %41 = vst [vmem:[%s40] sm:$0xc0] %v34
    %s42 = scalar_lea.vmem [#allocation1], 8
    %v43 = vld [vmem:[%s42] sm:$0xff]
    %s44 = scalar_lea.vmem [#allocation0], 8
    %45 = vst [vmem:[%s44] sm:$0x3] %v43
    %s46 = scalar_lea.vmem [#allocation0], 22
    %47 = vst [vmem:[%s46] sm:$0xc] %v43
    %s48 = scalar_lea.vmem [#allocation0], 36
    %49 = vst [vmem:[%s48] sm:$0x30] %v43
    %s50 = scalar_lea.vmem [#allocation0], 50
    %51 = vst [vmem:[%s50] sm:$0xc0] %v43
    %s53 = smul.u32 1, 2
    %s54 = sshll.u32 1, %s53
    %s55 = ssub.s32 %s54, 1
    %s56 = sshrl.u32 %s53, 1
    %v57 = vld [vmem:[#allocation0] sm:%s55]
    %v58 = vpack.c.bf16 0.0, %v57
    %s59 = sshll.u32 1, %s56
    %s60 = ssub.s32 %s59, 1
    %61 = vst [vmem:[%s1] sm:%s60] %v58
    %s62 = scalar_lea.vmem [#allocation0], 8
    %v63 = vld [vmem:[%s62] sm:%s55]
    %v64 = vpack.c.bf16 0.0, %v63
    %s65 = sshll.u32 1, %s56
    %s66 = ssub.s32 %s65, 1
    %s67 = scalar_lea.vmem %s1, 1
    %68 = vst [vmem:[%s67] sm:%s66] %v64
    %s69 = scalar_lea.vmem [#allocation0], 16
    %v70 = vld [vmem:[%s69] sm:%s55]
    %v71 = vpack.c.bf16 0.0, %v70
    %s72 = sshll.u32 1, %s56
    %s73 = ssub.s32 %s72, 1
    %s74 = smul.addr 1, 2
    %s75 = scalar_lea.vmem %s1, %s74
    %76 = vst [vmem:[%s75] sm:%s73] %v71
    %s77 = scalar_lea.vmem [#allocation0], 24
    %v78 = vld [vmem:[%s77] sm:%s55]
    %v79 = vpack.c.bf16 0.0, %v78
    %s80 = sshll.u32 1, %s56
    %s81 = ssub.s32 %s80, 1
    %s82 = smul.addr 1, 3
    %s83 = scalar_lea.vmem %s1, %s82
    %84 = vst [vmem:[%s83] sm:%s81] %v79
    %s85 = scalar_lea.vmem [#allocation0], 32
    %v86 = vld [vmem:[%s85] sm:%s55]
    %v87 = vpack.c.bf16 0.0, %v86
    %s88 = sshll.u32 1, %s56
    %s89 = ssub.s32 %s88, 1
    %s90 = smul.addr 1, 4
    %s91 = scalar_lea.vmem %s1, %s90
    %92 = vst [vmem:[%s91] sm:%s89] %v87
    %s93 = scalar_lea.vmem [#allocation0], 40
    %v94 = vld [vmem:[%s93] sm:%s55]
    %v95 = vpack.c.bf16 0.0, %v94
    %s96 = sshll.u32 1, %s56
    %s97 = ssub.s32 %s96, 1
    %s98 = smul.addr 1, 5
    %s99 = scalar_lea.vmem %s1, %s98
    %100 = vst [vmem:[%s99] sm:%s97] %v95
    %s101 = scalar_lea.vmem [#allocation0], 48
    %v102 = vld [vmem:[%s101] sm:%s55]
    %v103 = vpack.c.bf16 0.0, %v102
    %s104 = sshll.u32 1, %s56
    %s105 = ssub.s32 %s104, 1
    %s106 = smul.addr 1, 6
    %s107 = scalar_lea.vmem %s1, %s106
    %108 = vst [vmem:[%s107] sm:%s105] %v103
    %s109 = scalar_lea.vmem [#allocation0], 56
    %v110 = vld [vmem:[%s109] sm:%s55]
    %v111 = vpack.c.bf16 0.0, %v110
    %s112 = sshll.u32 1, %s56
    %s113 = ssub.s32 %s112, 1
    %s114 = smul.addr 1, 7
    %s115 = scalar_lea.vmem %s1, %s114
    %116 = vst [vmem:[%s115] sm:%s113] %v111

// kernel: frequency_kd2_forward.8
$region0: #{frequency_kd2_forward.8}
  #allocation0 [shape = 'u32[]', space=smem, size = 0x4, offset = 0x4, fixed_abs, tag = 'smem constant byte address 0x4 - core index']
  #allocation1 [shape = 'u32[144,128]{1,0:T(1,128)}', space=vmem, size = 0x12000, scoped, tag = 'internal scratch']
  %s0 = inlined_call_operand.vmem [shape: bf16[160,1792], index: 0, kind: input, shape index: {}]
  %s1 = inlined_call_operand.vmem [shape: bf16[1792,256], index: 1, kind: input, shape index: {}]
  %s2 = inlined_call_operand.vmem [shape: f32[1,256], index: 2, kind: input, shape index: {}]
  %s3 = inlined_call_operand.vmem [shape: f32[160,256], index: 3, kind: output, shape index: {}]
  %s4 = sld [smem:[#allocation0]]
  $region22: #{frequency_kd2_forward.8} parent=0
    _
  %s6 = ssub.s32 1, %s4
  %s7 = scalar_select 0, %s6, %s4
  // Predicated region
  $region2: #{frequency_kd2_forward.8} parent=0 // pred_check
    _
  $region3: #{frequency_kd2_forward.8} parent=0 // pred_check_branch
    %9 = sbr.rel (0) target = $region5
  $region4: #{frequency_kd2_forward.8} parent=0 // pred_region
    _
  $region5: #{frequency_kd2_forward.8} parent=0 // pred_fallthru
    _
  // Predicated region
  $region6: #{frequency_kd2_forward.8} parent=0 // pred_check
    _
  $region7: #{frequency_kd2_forward.8} parent=0 // pred_check_branch
    %11 = sbr.rel (0) target = $region9
  $region8: #{frequency_kd2_forward.8} parent=0 // pred_region
    _
  $region9: #{frequency_kd2_forward.8} parent=0 // pred_fallthru
    _
  // Predicated region
  $region10: #{frequency_kd2_forward.8} parent=0 // pred_check
    _
  $region11: #{frequency_kd2_forward.8} parent=0 // pred_check_branch
    %13 = sbr.rel (0) target = $region13
  $region12: #{frequency_kd2_forward.8} parent=0 // pred_region
    _
  $region13: #{frequency_kd2_forward.8} parent=0 // pred_fallthru
    _
  %v14 = vld [vmem:[%s0] sm:$0xff]
  %v15 = vld [vmem:[%s0 + $0x8] sm:$0xff]
  %v16 = vld [vmem:[%s0 + $0x10] sm:$0xff]
  %v17 = vld [vmem:[%s0 + $0x18] sm:$0xff]
  %v18 = vld [vmem:[%s0 + $0x20] sm:$0xff]
  %v19 = vld [vmem:[%s0 + $0x28] sm:$0xff]
  %v20 = vld [vmem:[%s0 + $0x30] sm:$0xff]
  %v21 = vld [vmem:[%s0 + $0x38] sm:$0xff]
  %v22 = vld [vmem:[%s0 + $0x40] sm:$0xff]
  %v23 = vld [vmem:[%s0 + $0x48] sm:$0xff]
  %v24 = vld [vmem:[%s0 + $0x50] sm:$0xff]
  %v25 = vld [vmem:[%s0 + $0x58] sm:$0xff]
  %v26 = vld [vmem:[%s0 + $0x60] sm:$0xff]
  %v27 = vld [vmem:[%s0 + $0x68] sm:$0xff]
  %v28 = vld [vmem:[%s0 + $0x70] sm:$0xff]
  %v29 = vld [vmem:[%s0 + $0x78] sm:$0xff]
  %v30 = vld [vmem:[%s0 + $0x80] sm:$0xff]
  %v31 = vld [vmem:[%s0 + $0x88] sm:$0xff]
  %v32 = vld [vmem:[%s0 + $0x90] sm:$0xff]
  %v33 = vld [vmem:[%s0 + $0x98] sm:$0xff]
  %v34 = vld [vmem:[%s0 + $0xa0] sm:$0xff]
  %v35 = vld [vmem:[%s0 + $0xa8] sm:$0xff]
  %v36 = vld [vmem:[%s0 + $0xb0] sm:$0xff]
  %v37 = vld [vmem:[%s0 + $0xb8] sm:$0xff]
  %v38 = vld [vmem:[%s0 + $0xc0] sm:$0xff]
  %v39 = vld [vmem:[%s0 + $0xc8] sm:$0xff]
  %v40 = vld [vmem:[%s0 + $0xd0] sm:$0xff]
  %v41 = vld [vmem:[%s0 + $0xd8] sm:$0xff]
  %v42 = vld [vmem:[%s0 + $0xe0] sm:$0xff]
  %v43 = vld [vmem:[%s0 + $0xe8] sm:$0xff]
  %v44 = vld [vmem:[%s0 + $0xf0] sm:$0xff]
  %v45 = vld [vmem:[%s0 + $0xf8] sm:$0xff]
  %v46 = vld [vmem:[%s0 + $0x100] sm:$0xff]
  %v47 = vld [vmem:[%s0 + $0x108] sm:$0xff]
  %v48 = vld [vmem:[%s0 + $0x110] sm:$0xff]
  %v49 = vld [vmem:[%s0 + $0x118] sm:$0xff]
  %v50 = vld [vmem:[%s0 + $0x120] sm:$0xff]
  %v51 = vld [vmem:[%s0 + $0x128] sm:$0xff]
  %v52 = vld [vmem:[%s0 + $0x130] sm:$0xff]
  %v53 = vld [vmem:[%s0 + $0x138] sm:$0xff]
  %v54 = vld [vmem:[%s0 + $0x140] sm:$0xff]
  %v55 = vld [vmem:[%s0 + $0x148] sm:$0xff]
  %v56 = vld [vmem:[%s0 + $0x150] sm:$0xff]
  %v57 = vld [vmem:[%s0 + $0x158] sm:$0xff]
  %v58 = vld [vmem:[%s0 + $0x160] sm:$0xff]
  %v59 = vld [vmem:[%s0 + $0x168] sm:$0xff]
  %v60 = vld [vmem:[%s0 + $0x170] sm:$0xff]
  %v61 = vld [vmem:[%s0 + $0x178] sm:$0xff]
  %v62 = vld [vmem:[%s0 + $0x180] sm:$0xff]
  %v63 = vld [vmem:[%s0 + $0x188] sm:$0xff]
  %v64 = vld [vmem:[%s0 + $0x190] sm:$0xff]
  %v65 = vld [vmem:[%s0 + $0x198] sm:$0xff]
  %v66 = vld [vmem:[%s0 + $0x1a0] sm:$0xff]
  %v67 = vld [vmem:[%s0 + $0x1a8] sm:$0xff]
  %v68 = vld [vmem:[%s0 + $0x1b0] sm:$0xff]
  %v69 = vld [vmem:[%s0 + $0x1b8] sm:$0xff]
  %v70 = vld [vmem:[%s0 + $0x1c0] sm:$0xff]
  %v71 = vld [vmem:[%s0 + $0x1c8] sm:$0xff]
  %v72 = vld [vmem:[%s0 + $0x1d0] sm:$0xff]
  %v73 = vld [vmem:[%s0 + $0x1d8] sm:$0xff]
  %v74 = vld [vmem:[%s0 + $0x1e0] sm:$0xff]
  %v75 = vld [vmem:[%s0 + $0x1e8] sm:$0xff]
  %v76 = vld [vmem:[%s0 + $0x1f0] sm:$0xff]
  %v77 = vld [vmem:[%s0 + $0x1f8] sm:$0xff]
  %v78 = vld [vmem:[%s0 + $0x200] sm:$0xff]
  %v79 = vld [vmem:[%s0 + $0x208] sm:$0xff]
  %v80 = vld [vmem:[%s0 + $0x210] sm:$0xff]
  %v81 = vld [vmem:[%s0 + $0x218] sm:$0xff]
  %v82 = vld [vmem:[%s0 + $0x220] sm:$0xff]
  %v83 = vld [vmem:[%s0 + $0x228] sm:$0xff]
  %v84 = vld [vmem:[%s0 + $0x230] sm:$0xff]
  %v85 = vld [vmem:[%s0 + $0x238] sm:$0xff]
  %v86 = vld [vmem:[%s0 + $0x240] sm:$0xff]
  %v87 = vld [vmem:[%s0 + $0x248] sm:$0xff]
  %v88 = vld [vmem:[%s0 + $0x250] sm:$0xff]
  %v89 = vld [vmem:[%s0 + $0x258] sm:$0xff]
  %v90 = vld [vmem:[%s0 + $0x260] sm:$0xff]
  %v91 = vld [vmem:[%s0 + $0x268] sm:$0xff]
  %v92 = vld [vmem:[%s0 + $0x270] sm:$0xff]
  %v93 = vld [vmem:[%s0 + $0x278] sm:$0xff]
  %v94 = vld [vmem:[%s0 + $0x280] sm:$0xff]
  %v95 = vld [vmem:[%s0 + $0x288] sm:$0xff]
  %v96 = vld [vmem:[%s0 + $0x290] sm:$0xff]
  %v97 = vld [vmem:[%s0 + $0x298] sm:$0xff]
  %v98 = vld [vmem:[%s0 + $0x2a0] sm:$0xff]
  %v99 = vld [vmem:[%s0 + $0x2a8] sm:$0xff]
  %v100 = vld [vmem:[%s0 + $0x2b0] sm:$0xff]
  %v101 = vld [vmem:[%s0 + $0x2b8] sm:$0xff]
  %v102 = vld [vmem:[%s0 + $0x2c0] sm:$0xff]
  %v103 = vld [vmem:[%s0 + $0x2c8] sm:$0xff]
  %v104 = vld [vmem:[%s0 + $0x2d0] sm:$0xff]
  %v105 = vld [vmem:[%s0 + $0x2d8] sm:$0xff]
  %v106 = vld [vmem:[%s0 + $0x2e0] sm:$0xff]
  %v107 = vld [vmem:[%s0 + $0x2e8] sm:$0xff]
  %v108 = vld [vmem:[%s0 + $0x2f0] sm:$0xff]
  %v109 = vld [vmem:[%s0 + $0x2f8] sm:$0xff]
  %v110 = vld [vmem:[%s0 + $0x300] sm:$0xff]
  %v111 = vld [vmem:[%s0 + $0x308] sm:$0xff]
  %v112 = vld [vmem:[%s0 + $0x310] sm:$0xff]
  %v113 = vld [vmem:[%s0 + $0x318] sm:$0xff]
  %v114 = vld [vmem:[%s0 + $0x320] sm:$0xff]
  %v115 = vld [vmem:[%s0 + $0x328] sm:$0xff]
  %v116 = vld [vmem:[%s0 + $0x330] sm:$0xff]
  %v117 = vld [vmem:[%s0 + $0x338] sm:$0xff]
  %v118 = vld [vmem:[%s0 + $0x340] sm:$0xff]
  %v119 = vld [vmem:[%s0 + $0x348] sm:$0xff]
  %v120 = vld [vmem:[%s0 + $0x350] sm:$0xff]
  %v121 = vld [vmem:[%s0 + $0x358] sm:$0xff]
  %v122 = vld [vmem:[%s0 + $0x360] sm:$0xff]
  %v123 = vld [vmem:[%s0 + $0x368] sm:$0xff]
  %v124 = vld [vmem:[%s0 + $0x370] sm:$0xff]
  %v125 = vld [vmem:[%s0 + $0x378] sm:$0xff]
  %v126 = vld [vmem:[%s0 + $0x380] sm:$0xff]
  %v127 = vld [vmem:[%s0 + $0x388] sm:$0xff]
  %v128 = vld [vmem:[%s0 + $0x390] sm:$0xff]
  %v129 = vld [vmem:[%s0 + $0x398] sm:$0xff]
  %v130 = vld [vmem:[%s0 + $0x3a0] sm:$0xff]
  %v131 = vld [vmem:[%s0 + $0x3a8] sm:$0xff]
  %v132 = vld [vmem:[%s0 + $0x3b0] sm:$0xff]
  %v133 = vld [vmem:[%s0 + $0x3b8] sm:$0xff]
  %v134 = vld [vmem:[%s0 + $0x3c0] sm:$0xff]
  %v135 = vld [vmem:[%s0 + $0x3c8] sm:$0xff]
  %v136 = vld [vmem:[%s0 + $0x3d0] sm:$0xff]
  %v137 = vld [vmem:[%s0 + $0x3d8] sm:$0xff]
  %v138 = vld [vmem:[%s0 + $0x3e0] sm:$0xff]
  %v139 = vld [vmem:[%s0 + $0x3e8] sm:$0xff]
  %v140 = vld [vmem:[%s0 + $0x3f0] sm:$0xff]
  %v141 = vld [vmem:[%s0 + $0x3f8] sm:$0xff]
  %v142 = vld [vmem:[%s0 + $0x400] sm:$0xff]
  %v143 = vld [vmem:[%s0 + $0x408] sm:$0xff]
  %v144 = vld [vmem:[%s0 + $0x410] sm:$0xff]
  %v145 = vld [vmem:[%s0 + $0x418] sm:$0xff]
  %v146 = vld [vmem:[%s0 + $0x420] sm:$0xff]
  %v147 = vld [vmem:[%s0 + $0x428] sm:$0xff]
  %v148 = vld [vmem:[%s0 + $0x430] sm:$0xff]
  %v149 = vld [vmem:[%s0 + $0x438] sm:$0xff]
  %v150 = vld [vmem:[%s0 + $0x440] sm:$0xff]
  %v151 = vld [vmem:[%s0 + $0x448] sm:$0xff]
  %v152 = vld [vmem:[%s0 + $0x450] sm:$0xff]
  %v153 = vld [vmem:[%s0 + $0x458] sm:$0xff]
  %v154 = vld [vmem:[%s1] sm:$0xff]
  %v155 = vld [vmem:[%s1 + $0x8] sm:$0xff]
  %v156 = vld [vmem:[%s1 + $0x10] sm:$0xff]
  %v157 = vld [vmem:[%s1 + $0x18] sm:$0xff]
  %v158 = vld [vmem:[%s1 + $0x20] sm:$0xff]
  %v159 = vld [vmem:[%s1 + $0x28] sm:$0xff]
  %v160 = vld [vmem:[%s1 + $0x30] sm:$0xff]
  %v161 = vld [vmem:[%s1 + $0x38] sm:$0xff]
  %v162 = vld [vmem:[%s1 + $0x40] sm:$0xff]
  %v163 = vld [vmem:[%s1 + $0x48] sm:$0xff]
  %v164 = vld [vmem:[%s1 + $0x50] sm:$0xff]
  %v165 = vld [vmem:[%s1 + $0x58] sm:$0xff]
  %v166 = vld [vmem:[%s1 + $0x60] sm:$0xff]
  %v167 = vld [vmem:[%s1 + $0x68] sm:$0xff]
  %v168 = vld [vmem:[%s1 + $0x70] sm:$0xff]
  %v169 = vld [vmem:[%s1 + $0x78] sm:$0xff]
  %v170 = vld [vmem:[%s1 + $0x80] sm:$0xff]
  %v171 = vld [vmem:[%s1 + $0x88] sm:$0xff]
  %v172 = vld [vmem:[%s1 + $0x90] sm:$0xff]
  %v173 = vld [vmem:[%s1 + $0x98] sm:$0xff]
  %v174 = vld [vmem:[%s1 + $0xa0] sm:$0xff]
  %v175 = vld [vmem:[%s1 + $0xa8] sm:$0xff]
  %v176 = vld [vmem:[%s1 + $0xb0] sm:$0xff]
  %v177 = vld [vmem:[%s1 + $0xb8] sm:$0xff]
  %v178 = vld [vmem:[%s1 + $0xc0] sm:$0xff]
  %v179 = vld [vmem:[%s1 + $0xc8] sm:$0xff]
  %v180 = vld [vmem:[%s1 + $0xd0] sm:$0xff]
  %v181 = vld [vmem:[%s1 + $0xd8] sm:$0xff]
  %v182 = vld [vmem:[%s1 + $0xe0] sm:$0xff]
  %v183 = vld [vmem:[%s1 + $0xe8] sm:$0xff]
  %v184 = vld [vmem:[%s1 + $0xf0] sm:$0xff]
  %v185 = vld [vmem:[%s1 + $0xf8] sm:$0xff]
  %v186 = vld [vmem:[%s1 + $0x100] sm:$0xff]
  %v187 = vld [vmem:[%s1 + $0x108] sm:$0xff]
  %v188 = vld [vmem:[%s1 + $0x110] sm:$0xff]
  %v189 = vld [vmem:[%s1 + $0x118] sm:$0xff]
  %v190 = vld [vmem:[%s1 + $0x120] sm:$0xff]
  %v191 = vld [vmem:[%s1 + $0x128] sm:$0xff]
  %v192 = vld [vmem:[%s1 + $0x130] sm:$0xff]
  %v193 = vld [vmem:[%s1 + $0x138] sm:$0xff]
  %v194 = vld [vmem:[%s1 + $0x140] sm:$0xff]
  %v195 = vld [vmem:[%s1 + $0x148] sm:$0xff]
  %v196 = vld [vmem:[%s1 + $0x150] sm:$0xff]
  %v197 = vld [vmem:[%s1 + $0x158] sm:$0xff]
  %v198 = vld [vmem:[%s1 + $0x160] sm:$0xff]
  %v199 = vld [vmem:[%s1 + $0x168] sm:$0xff]
  %v200 = vld [vmem:[%s1 + $0x170] sm:$0xff]
  %v201 = vld [vmem:[%s1 + $0x178] sm:$0xff]
  %v202 = vld [vmem:[%s1 + $0x180] sm:$0xff]
  %v203 = vld [vmem:[%s1 + $0x188] sm:$0xff]
  %v204 = vld [vmem:[%s1 + $0x190] sm:$0xff]
  %v205 = vld [vmem:[%s1 + $0x198] sm:$0xff]
  %v206 = vld [vmem:[%s1 + $0x1a0] sm:$0xff]
  %v207 = vld [vmem:[%s1 + $0x1a8] sm:$0xff]
  %v208 = vld [vmem:[%s1 + $0x1b0] sm:$0xff]
  %v209 = vld [vmem:[%s1 + $0x1b8] sm:$0xff]
  %v210 = vld [vmem:[%s1 + $0x1c0] sm:$0xff]
  %v211 = vld [vmem:[%s1 + $0x1c8] sm:$0xff]
  %v212 = vld [vmem:[%s1 + $0x1d0] sm:$0xff]
  %v213 = vld [vmem:[%s1 + $0x1d8] sm:$0xff]
  %v214 = vld [vmem:[%s1 + $0x1e0] sm:$0xff]
  %v215 = vld [vmem:[%s1 + $0x1e8] sm:$0xff]
  %v216 = vld [vmem:[%s1 + $0x1f0] sm:$0xff]
  %v217 = vld [vmem:[%s1 + $0x1f8] sm:$0xff]
  %v218 = vld [vmem:[%s1 + $0x200] sm:$0xff]
  %v219 = vld [vmem:[%s1 + $0x208] sm:$0xff]
  %v220 = vld [vmem:[%s1 + $0x210] sm:$0xff]
  %v221 = vld [vmem:[%s1 + $0x218] sm:$0xff]
  %v222 = vld [vmem:[%s1 + $0x220] sm:$0xff]
  %v223 = vld [vmem:[%s1 + $0x228] sm:$0xff]
  %v224 = vld [vmem:[%s1 + $0x230] sm:$0xff]
  %v225 = vld [vmem:[%s1 + $0x238] sm:$0xff]
  %v226 = vld [vmem:[%s1 + $0x240] sm:$0xff]
  %v227 = vld [vmem:[%s1 + $0x248] sm:$0xff]
  %v228 = vld [vmem:[%s1 + $0x250] sm:$0xff]
  %v229 = vld [vmem:[%s1 + $0x258] sm:$0xff]
  %v230 = vld [vmem:[%s1 + $0x260] sm:$0xff]
  %v231 = vld [vmem:[%s1 + $0x268] sm:$0xff]
  %v232 = vld [vmem:[%s1 + $0x270] sm:$0xff]
  %v233 = vld [vmem:[%s1 + $0x278] sm:$0xff]
  %v234 = vld [vmem:[%s1 + $0x280] sm:$0xff]
  %v235 = vld [vmem:[%s1 + $0x288] sm:$0xff]
  %v236 = vld [vmem:[%s1 + $0x290] sm:$0xff]
  %v237 = vld [vmem:[%s1 + $0x298] sm:$0xff]
  %v238 = vld [vmem:[%s1 + $0x2a0] sm:$0xff]
  %v239 = vld [vmem:[%s1 + $0x2a8] sm:$0xff]
  %v240 = vld [vmem:[%s1 + $0x2b0] sm:$0xff]
  %v241 = vld [vmem:[%s1 + $0x2b8] sm:$0xff]
  %v242 = vld [vmem:[%s1 + $0x2c0] sm:$0xff]
  %v243 = vld [vmem:[%s1 + $0x2c8] sm:$0xff]
  %v244 = vld [vmem:[%s1 + $0x2d0] sm:$0xff]
  %v245 = vld [vmem:[%s1 + $0x2d8] sm:$0xff]
  %v246 = vld [vmem:[%s1 + $0x2e0] sm:$0xff]
  %v247 = vld [vmem:[%s1 + $0x2e8] sm:$0xff]
  %v248 = vld [vmem:[%s1 + $0x2f0] sm:$0xff]
  %v249 = vld [vmem:[%s1 + $0x2f8] sm:$0xff]
  %v250 = vld [vmem:[%s1 + $0x300] sm:$0xff]
  %v251 = vld [vmem:[%s1 + $0x308] sm:$0xff]
  %v252 = vld [vmem:[%s1 + $0x310] sm:$0xff]
  %v253 = vld [vmem:[%s1 + $0x318] sm:$0xff]
  %v254 = vld [vmem:[%s1 + $0x320] sm:$0xff]
  %v255 = vld [vmem:[%s1 + $0x328] sm:$0xff]
  %v256 = vld [vmem:[%s1 + $0x330] sm:$0xff]
  %v257 = vld [vmem:[%s1 + $0x338] sm:$0xff]
  %v258 = vld [vmem:[%s1 + $0x340] sm:$0xff]
  %v259 = vld [vmem:[%s1 + $0x348] sm:$0xff]
  %v260 = vld [vmem:[%s1 + $0x350] sm:$0xff]
  %v261 = vld [vmem:[%s1 + $0x358] sm:$0xff]
  %v262 = vld [vmem:[%s1 + $0x360] sm:$0xff]
  %v263 = vld [vmem:[%s1 + $0x368] sm:$0xff]
  %v264 = vld [vmem:[%s1 + $0x370] sm:$0xff]
  %v265 = vld [vmem:[%s1 + $0x378] sm:$0xff]
  %v266 = vld [vmem:[%s1 + $0x380] sm:$0xff]
  %v267 = vld [vmem:[%s1 + $0x388] sm:$0xff]
  %v268 = vld [vmem:[%s1 + $0x390] sm:$0xff]
  %v269 = vld [vmem:[%s1 + $0x398] sm:$0xff]
  %v270 = vld [vmem:[%s1 + $0x3a0] sm:$0xff]
  %v271 = vld [vmem:[%s1 + $0x3a8] sm:$0xff]
  %v272 = vld [vmem:[%s1 + $0x3b0] sm:$0xff]
  %v273 = vld [vmem:[%s1 + $0x3b8] sm:$0xff]
  %v274 = vld [vmem:[%s1 + $0x3c0] sm:$0xff]
  %v275 = vld [vmem:[%s1 + $0x3c8] sm:$0xff]
  %v276 = vld [vmem:[%s1 + $0x3d0] sm:$0xff]
  %v277 = vld [vmem:[%s1 + $0x3d8] sm:$0xff]
  %v278 = vld [vmem:[%s1 + $0x3e0] sm:$0xff]
  %v279 = vld [vmem:[%s1 + $0x3e8] sm:$0xff]
  %v280 = vld [vmem:[%s1 + $0x3f0] sm:$0xff]
  %v281 = vld [vmem:[%s1 + $0x3f8] sm:$0xff]
  %v282 = vld [vmem:[%s1 + $0x400] sm:$0xff]
  %v283 = vld [vmem:[%s1 + $0x408] sm:$0xff]
  %v284 = vld [vmem:[%s1 + $0x410] sm:$0xff]
  %v285 = vld [vmem:[%s1 + $0x418] sm:$0xff]
  %v286 = vld [vmem:[%s1 + $0x420] sm:$0xff]
  %v287 = vld [vmem:[%s1 + $0x428] sm:$0xff]
  %v288 = vld [vmem:[%s1 + $0x430] sm:$0xff]
  %v289 = vld [vmem:[%s1 + $0x438] sm:$0xff]
  %v290 = vld [vmem:[%s1 + $0x440] sm:$0xff]
  %v291 = vld [vmem:[%s1 + $0x448] sm:$0xff]
  %v292 = vld [vmem:[%s1 + $0x450] sm:$0xff]
  %v293 = vld [vmem:[%s1 + $0x458] sm:$0xff]
  %v294 = vld [vmem:[%s1 + $0x460] sm:$0xff]
  %v295 = vld [vmem:[%s1 + $0x468] sm:$0xff]
  %v296 = vld [vmem:[%s1 + $0x470] sm:$0xff]
  %v297 = vld [vmem:[%s1 + $0x478] sm:$0xff]
  %v298 = vld [vmem:[%s1 + $0x480] sm:$0xff]
  %v299 = vld [vmem:[%s1 + $0x488] sm:$0xff]
  %v300 = vld [vmem:[%s1 + $0x490] sm:$0xff]
  %v301 = vld [vmem:[%s1 + $0x498] sm:$0xff]
  %v302 = vld [vmem:[%s1 + $0x4a0] sm:$0xff]
  %v303 = vld [vmem:[%s1 + $0x4a8] sm:$0xff]
  %v304 = vld [vmem:[%s1 + $0x4b0] sm:$0xff]
  %v305 = vld [vmem:[%s1 + $0x4b8] sm:$0xff]
  %v306 = vld [vmem:[%s1 + $0x4c0] sm:$0xff]
  %v307 = vld [vmem:[%s1 + $0x4c8] sm:$0xff]
  %v308 = vld [vmem:[%s1 + $0x4d0] sm:$0xff]
  %v309 = vld [vmem:[%s1 + $0x4d8] sm:$0xff]
  %v310 = vld [vmem:[%s1 + $0x4e0] sm:$0xff]
  %v311 = vld [vmem:[%s1 + $0x4e8] sm:$0xff]
  %v312 = vld [vmem:[%s1 + $0x4f0] sm:$0xff]
  %v313 = vld [vmem:[%s1 + $0x4f8] sm:$0xff]
  %v314 = vld [vmem:[%s1 + $0x500] sm:$0xff]
  %v315 = vld [vmem:[%s1 + $0x508] sm:$0xff]
  %v316 = vld [vmem:[%s1 + $0x510] sm:$0xff]
  %v317 = vld [vmem:[%s1 + $0x518] sm:$0xff]
  %v318 = vld [vmem:[%s1 + $0x520] sm:$0xff]
  %v319 = vld [vmem:[%s1 + $0x528] sm:$0xff]
  %v320 = vld [vmem:[%s1 + $0x530] sm:$0xff]
  %v321 = vld [vmem:[%s1 + $0x538] sm:$0xff]
  %v322 = vld [vmem:[%s1 + $0x540] sm:$0xff]
  %v323 = vld [vmem:[%s1 + $0x548] sm:$0xff]
  %v324 = vld [vmem:[%s1 + $0x550] sm:$0xff]
  %v325 = vld [vmem:[%s1 + $0x558] sm:$0xff]
  %v326 = vld [vmem:[%s1 + $0x560] sm:$0xff]
  %v327 = vld [vmem:[%s1 + $0x568] sm:$0xff]
  %v328 = vld [vmem:[%s1 + $0x570] sm:$0xff]
  %v329 = vld [vmem:[%s1 + $0x578] sm:$0xff]
  %v330 = vld [vmem:[%s1 + $0x580] sm:$0xff]
  %v331 = vld [vmem:[%s1 + $0x588] sm:$0xff]
  %v332 = vld [vmem:[%s1 + $0x590] sm:$0xff]
  %v333 = vld [vmem:[%s1 + $0x598] sm:$0xff]
  %v334 = vld [vmem:[%s1 + $0x5a0] sm:$0xff]
  %v335 = vld [vmem:[%s1 + $0x5a8] sm:$0xff]
  %v336 = vld [vmem:[%s1 + $0x5b0] sm:$0xff]
  %v337 = vld [vmem:[%s1 + $0x5b8] sm:$0xff]
  %v338 = vld [vmem:[%s1 + $0x5c0] sm:$0xff]
  %v339 = vld [vmem:[%s1 + $0x5c8] sm:$0xff]
  %v340 = vld [vmem:[%s1 + $0x5d0] sm:$0xff]
  %v341 = vld [vmem:[%s1 + $0x5d8] sm:$0xff]
  %v342 = vld [vmem:[%s1 + $0x5e0] sm:$0xff]
  %v343 = vld [vmem:[%s1 + $0x5e8] sm:$0xff]
  %v344 = vld [vmem:[%s1 + $0x5f0] sm:$0xff]
  %v345 = vld [vmem:[%s1 + $0x5f8] sm:$0xff]
  %v346 = vld [vmem:[%s1 + $0x600] sm:$0xff]
  %v347 = vld [vmem:[%s1 + $0x608] sm:$0xff]
  %v348 = vld [vmem:[%s1 + $0x610] sm:$0xff]
  %v349 = vld [vmem:[%s1 + $0x618] sm:$0xff]
  %v350 = vld [vmem:[%s1 + $0x620] sm:$0xff]
  %v351 = vld [vmem:[%s1 + $0x628] sm:$0xff]
  %v352 = vld [vmem:[%s1 + $0x630] sm:$0xff]
  %v353 = vld [vmem:[%s1 + $0x638] sm:$0xff]
  %v354 = vld [vmem:[%s1 + $0x640] sm:$0xff]
  %v355 = vld [vmem:[%s1 + $0x648] sm:$0xff]
  %v356 = vld [vmem:[%s1 + $0x650] sm:$0xff]
  %v357 = vld [vmem:[%s1 + $0x658] sm:$0xff]
  %v358 = vld [vmem:[%s1 + $0x660] sm:$0xff]
  %v359 = vld [vmem:[%s1 + $0x668] sm:$0xff]
  %v360 = vld [vmem:[%s1 + $0x670] sm:$0xff]
  %v361 = vld [vmem:[%s1 + $0x678] sm:$0xff]
  %v362 = vld [vmem:[%s1 + $0x680] sm:$0xff]
  %v363 = vld [vmem:[%s1 + $0x688] sm:$0xff]
  %v364 = vld [vmem:[%s1 + $0x690] sm:$0xff]
  %v365 = vld [vmem:[%s1 + $0x698] sm:$0xff]
  %v366 = vld [vmem:[%s1 + $0x6a0] sm:$0xff]
  %v367 = vld [vmem:[%s1 + $0x6a8] sm:$0xff]
  %v368 = vld [vmem:[%s1 + $0x6b0] sm:$0xff]
  %v369 = vld [vmem:[%s1 + $0x6b8] sm:$0xff]
  %v370 = vld [vmem:[%s1 + $0x6c0] sm:$0xff]
  %v371 = vld [vmem:[%s1 + $0x6c8] sm:$0xff]
  %v372 = vld [vmem:[%s1 + $0x6d0] sm:$0xff]
  %v373 = vld [vmem:[%s1 + $0x6d8] sm:$0xff]
  %v374 = vld [vmem:[%s1 + $0x6e0] sm:$0xff]
  %v375 = vld [vmem:[%s1 + $0x6e8] sm:$0xff]
  %v376 = vld [vmem:[%s1 + $0x6f0] sm:$0xff]
  %v377 = vld [vmem:[%s1 + $0x6f8] sm:$0xff]
  %v378 = vld [vmem:[%s2] sm:$0x3]
  %v380 = vlaneseq
  %v381 = vshrl.u32 %v380, 7
  %v382 = vsub.s32 0, %v381
  %v383 = vrot.slane %v378, %v382
  %v384 = vlaneseq
  %v385 = vshrl.u32 %v384, 7
  %v386 = vsub.s32 1, %v385
  %v387 = vrot.slane %v378, %v386
  %v530 = vunpack.c.l.b16 %v14
  %v531 = vunpack.c.h.b16 %v14
  %v532 = vunpack.c.l.b16 %v15
  %v533 = vunpack.c.h.b16 %v15
  %v534 = vunpack.c.l.b16 %v16
  %v535 = vunpack.c.h.b16 %v16
  %v536 = vunpack.c.l.b16 %v17
  %v537 = vunpack.c.h.b16 %v17
  %v538 = vunpack.c.l.b16 %v18
  %v539 = vunpack.c.h.b16 %v18
  %v540 = vunpack.c.l.b16 %v19
  %v541 = vunpack.c.h.b16 %v19
  %v542 = vunpack.c.l.b16 %v20
  %v543 = vunpack.c.h.b16 %v20
  %v544 = vunpack.c.l.b16 %v21
  %v545 = vunpack.c.h.b16 %v21
  %v546 = vunpack.c.l.b16 %v22
  %v547 = vunpack.c.h.b16 %v22
  %v548 = vunpack.c.l.b16 %v23
  %v549 = vunpack.c.h.b16 %v23
  %v550 = vunpack.c.l.b16 %v24
  %v551 = vunpack.c.h.b16 %v24
  %v552 = vunpack.c.l.b16 %v25
  %v553 = vunpack.c.h.b16 %v25
  %v554 = vunpack.c.l.b16 %v26
  %v555 = vunpack.c.h.b16 %v26
  %v556 = vunpack.c.l.b16 %v27
  %v557 = vunpack.c.h.b16 %v27
  %v558 = vunpack.c.l.b16 %v28
  %v559 = vunpack.c.h.b16 %v28
  %v560 = vunpack.c.l.b16 %v29
  %v561 = vunpack.c.h.b16 %v29
  %v562 = vunpack.c.l.b16 %v30
  %v563 = vunpack.c.h.b16 %v30
  %v564 = vunpack.c.l.b16 %v31
  %v565 = vunpack.c.h.b16 %v31
  %v566 = vunpack.c.l.b16 %v32
  %v567 = vunpack.c.h.b16 %v32
  %v568 = vunpack.c.l.b16 %v33
  %v569 = vunpack.c.h.b16 %v33
  %v570 = vunpack.c.l.b16 %v34
  %v571 = vunpack.c.h.b16 %v34
  %v572 = vunpack.c.l.b16 %v35
  %v573 = vunpack.c.h.b16 %v35
  %v574 = vunpack.c.l.b16 %v36
  %v575 = vunpack.c.h.b16 %v36
  %v576 = vunpack.c.l.b16 %v37
  %v577 = vunpack.c.h.b16 %v37
  %v578 = vunpack.c.l.b16 %v38
  %v579 = vunpack.c.h.b16 %v38
  %v580 = vunpack.c.l.b16 %v39
  %v581 = vunpack.c.h.b16 %v39
  %v582 = vunpack.c.l.b16 %v40
  %v583 = vunpack.c.h.b16 %v40
  %v584 = vunpack.c.l.b16 %v41
  %v585 = vunpack.c.h.b16 %v41
  %v586 = vunpack.c.l.b16 %v42
  %v587 = vunpack.c.h.b16 %v42
  %v588 = vunpack.c.l.b16 %v43
  %v589 = vunpack.c.h.b16 %v43
  %v590 = vunpack.c.l.b16 %v44
  %v591 = vunpack.c.h.b16 %v44
  %v592 = vunpack.c.l.b16 %v45
  %v593 = vunpack.c.h.b16 %v45
  %v594 = vunpack.c.l.b16 %v46
  %v595 = vunpack.c.h.b16 %v46
  %v596 = vunpack.c.l.b16 %v47
  %v597 = vunpack.c.h.b16 %v47
  %v598 = vunpack.c.l.b16 %v48
  %v599 = vunpack.c.h.b16 %v48
  %v600 = vunpack.c.l.b16 %v49
  %v601 = vunpack.c.h.b16 %v49
  %v602 = vunpack.c.l.b16 %v50
  %v603 = vunpack.c.h.b16 %v50
  %v604 = vunpack.c.l.b16 %v51
  %v605 = vunpack.c.h.b16 %v51
  %v606 = vunpack.c.l.b16 %v52
  %v607 = vunpack.c.h.b16 %v52
  %v608 = vunpack.c.l.b16 %v53
  %v609 = vunpack.c.h.b16 %v53
  %v610 = vunpack.c.l.b16 %v54
  %v611 = vunpack.c.h.b16 %v54
  %v612 = vunpack.c.l.b16 %v55
  %v613 = vunpack.c.h.b16 %v55
  %v614 = vunpack.c.l.b16 %v56
  %v615 = vunpack.c.h.b16 %v56
  %v616 = vunpack.c.l.b16 %v57
  %v617 = vunpack.c.h.b16 %v57
  %v618 = vunpack.c.l.b16 %v58
  %v619 = vunpack.c.h.b16 %v58
  %v620 = vunpack.c.l.b16 %v59
  %v621 = vunpack.c.h.b16 %v59
  %v622 = vunpack.c.l.b16 %v60
  %v623 = vunpack.c.h.b16 %v60
  %v624 = vunpack.c.l.b16 %v61
  %v625 = vunpack.c.h.b16 %v61
  %v626 = vunpack.c.l.b16 %v62
  %v627 = vunpack.c.h.b16 %v62
  %v628 = vunpack.c.l.b16 %v63
  %v629 = vunpack.c.h.b16 %v63
  %v630 = vunpack.c.l.b16 %v64
  %v631 = vunpack.c.h.b16 %v64
  %v632 = vunpack.c.l.b16 %v65
  %v633 = vunpack.c.h.b16 %v65
  %v634 = vunpack.c.l.b16 %v66
  %v635 = vunpack.c.h.b16 %v66
  %v636 = vunpack.c.l.b16 %v67
  %v637 = vunpack.c.h.b16 %v67
  %v638 = vunpack.c.l.b16 %v68
  %v639 = vunpack.c.h.b16 %v68
  %v640 = vunpack.c.l.b16 %v69
  %v641 = vunpack.c.h.b16 %v69
  %v642 = vunpack.c.l.b16 %v70
  %v643 = vunpack.c.h.b16 %v70
  %v644 = vunpack.c.l.b16 %v71
  %v645 = vunpack.c.h.b16 %v71
  %v646 = vunpack.c.l.b16 %v72
  %v647 = vunpack.c.h.b16 %v72
  %v648 = vunpack.c.l.b16 %v73
  %v649 = vunpack.c.h.b16 %v73
  %v650 = vunpack.c.l.b16 %v74
  %v651 = vunpack.c.h.b16 %v74
  %v652 = vunpack.c.l.b16 %v75
  %v653 = vunpack.c.h.b16 %v75
  %v654 = vunpack.c.l.b16 %v76
  %v655 = vunpack.c.h.b16 %v76
  %v656 = vunpack.c.l.b16 %v77
  %v657 = vunpack.c.h.b16 %v77
  %v658 = vunpack.c.l.b16 %v78
  %v659 = vunpack.c.h.b16 %v78
  %v660 = vunpack.c.l.b16 %v79
  %v661 = vunpack.c.h.b16 %v79
  %v662 = vunpack.c.l.b16 %v80
  %v663 = vunpack.c.h.b16 %v80
  %v664 = vunpack.c.l.b16 %v81
  %v665 = vunpack.c.h.b16 %v81
  %v666 = vunpack.c.l.b16 %v82
  %v667 = vunpack.c.h.b16 %v82
  %v668 = vunpack.c.l.b16 %v83
  %v669 = vunpack.c.h.b16 %v83
  %v670 = vunpack.c.l.b16 %v84
  %v671 = vunpack.c.h.b16 %v84
  %v672 = vunpack.c.l.b16 %v85
  %v673 = vunpack.c.h.b16 %v85
  %v674 = vunpack.c.l.b16 %v86
  %v675 = vunpack.c.h.b16 %v86
  %v676 = vunpack.c.l.b16 %v87
  %v677 = vunpack.c.h.b16 %v87
  %v678 = vunpack.c.l.b16 %v88
  %v679 = vunpack.c.h.b16 %v88
  %v680 = vunpack.c.l.b16 %v89
  %v681 = vunpack.c.h.b16 %v89
  %v682 = vunpack.c.l.b16 %v90
  %v683 = vunpack.c.h.b16 %v90
  %v684 = vunpack.c.l.b16 %v91
  %v685 = vunpack.c.h.b16 %v91
  %v686 = vunpack.c.l.b16 %v92
  %v687 = vunpack.c.h.b16 %v92
  %v688 = vunpack.c.l.b16 %v93
  %v689 = vunpack.c.h.b16 %v93
  %v690 = vunpack.c.l.b16 %v94
  %v691 = vunpack.c.h.b16 %v94
  %v692 = vunpack.c.l.b16 %v95
  %v693 = vunpack.c.h.b16 %v95
  %v694 = vunpack.c.l.b16 %v96
  %v695 = vunpack.c.h.b16 %v96
  %v696 = vunpack.c.l.b16 %v97
  %v697 = vunpack.c.h.b16 %v97
  %v698 = vunpack.c.l.b16 %v98
  %v699 = vunpack.c.h.b16 %v98
  %v700 = vunpack.c.l.b16 %v99
  %v701 = vunpack.c.h.b16 %v99
  %v702 = vunpack.c.l.b16 %v100
  %v703 = vunpack.c.h.b16 %v100
  %v704 = vunpack.c.l.b16 %v101
  %v705 = vunpack.c.h.b16 %v101
  %v706 = vunpack.c.l.b16 %v102
  %v707 = vunpack.c.h.b16 %v102
  %v708 = vunpack.c.l.b16 %v103
  %v709 = vunpack.c.h.b16 %v103
  %v710 = vunpack.c.l.b16 %v104
  %v711 = vunpack.c.h.b16 %v104
  %v712 = vunpack.c.l.b16 %v105
  %v713 = vunpack.c.h.b16 %v105
  %v714 = vunpack.c.l.b16 %v106
  %v715 = vunpack.c.h.b16 %v106
  %v716 = vunpack.c.l.b16 %v107
  %v717 = vunpack.c.h.b16 %v107
  %v718 = vunpack.c.l.b16 %v108
  %v719 = vunpack.c.h.b16 %v108
  %v720 = vunpack.c.l.b16 %v109
  %v721 = vunpack.c.h.b16 %v109
  %v722 = vunpack.c.l.b16 %v110
  %v723 = vunpack.c.h.b16 %v110
  %v724 = vunpack.c.l.b16 %v111
  %v725 = vunpack.c.h.b16 %v111
  %v726 = vunpack.c.l.b16 %v112
  %v727 = vunpack.c.h.b16 %v112
  %v728 = vunpack.c.l.b16 %v113
  %v729 = vunpack.c.h.b16 %v113
  %v730 = vunpack.c.l.b16 %v114
  %v731 = vunpack.c.h.b16 %v114
  %v732 = vunpack.c.l.b16 %v115
  %v733 = vunpack.c.h.b16 %v115
  %v734 = vunpack.c.l.b16 %v116
  %v735 = vunpack.c.h.b16 %v116
  %v736 = vunpack.c.l.b16 %v117
  %v737 = vunpack.c.h.b16 %v117
  %v738 = vunpack.c.l.b16 %v118
  %v739 = vunpack.c.h.b16 %v118
  %v740 = vunpack.c.l.b16 %v119
  %v741 = vunpack.c.h.b16 %v119
  %v742 = vunpack.c.l.b16 %v120
  %v743 = vunpack.c.h.b16 %v120
  %v744 = vunpack.c.l.b16 %v121
  %v745 = vunpack.c.h.b16 %v121
  %v746 = vunpack.c.l.b16 %v122
  %v747 = vunpack.c.h.b16 %v122
  %v748 = vunpack.c.l.b16 %v123
  %v749 = vunpack.c.h.b16 %v123
  %v750 = vunpack.c.l.b16 %v124
  %v751 = vunpack.c.h.b16 %v124
  %v752 = vunpack.c.l.b16 %v125
  %v753 = vunpack.c.h.b16 %v125
  %v754 = vunpack.c.l.b16 %v126
  %v755 = vunpack.c.h.b16 %v126
  %v756 = vunpack.c.l.b16 %v127
  %v757 = vunpack.c.h.b16 %v127
  %v758 = vunpack.c.l.b16 %v128
  %v759 = vunpack.c.h.b16 %v128
  %v760 = vunpack.c.l.b16 %v129
  %v761 = vunpack.c.h.b16 %v129
  %v762 = vunpack.c.l.b16 %v130
  %v763 = vunpack.c.h.b16 %v130
  %v764 = vunpack.c.l.b16 %v131
  %v765 = vunpack.c.h.b16 %v131
  %v766 = vunpack.c.l.b16 %v132
  %v767 = vunpack.c.h.b16 %v132
  %v768 = vunpack.c.l.b16 %v133
  %v769 = vunpack.c.h.b16 %v133
  %v770 = vunpack.c.l.b16 %v134
  %v771 = vunpack.c.h.b16 %v134
  %v772 = vunpack.c.l.b16 %v135
  %v773 = vunpack.c.h.b16 %v135
  %v774 = vunpack.c.l.b16 %v136
  %v775 = vunpack.c.h.b16 %v136
  %v776 = vunpack.c.l.b16 %v137
  %v777 = vunpack.c.h.b16 %v137
  %v778 = vunpack.c.l.b16 %v138
  %v779 = vunpack.c.h.b16 %v138
  %v780 = vunpack.c.l.b16 %v139
  %v781 = vunpack.c.h.b16 %v139
  %v782 = vunpack.c.l.b16 %v140
  %v783 = vunpack.c.h.b16 %v140
  %v784 = vunpack.c.l.b16 %v141
  %v785 = vunpack.c.h.b16 %v141
  %v786 = vunpack.c.l.b16 %v142
  %v787 = vunpack.c.h.b16 %v142
  %v788 = vunpack.c.l.b16 %v143
  %v789 = vunpack.c.h.b16 %v143
  %v790 = vunpack.c.l.b16 %v144
  %v791 = vunpack.c.h.b16 %v144
  %v792 = vunpack.c.l.b16 %v145
  %v793 = vunpack.c.h.b16 %v145
  %v794 = vunpack.c.l.b16 %v146
  %v795 = vunpack.c.h.b16 %v146
  %v796 = vunpack.c.l.b16 %v147
  %v797 = vunpack.c.h.b16 %v147
  %v798 = vunpack.c.l.b16 %v148
  %v799 = vunpack.c.h.b16 %v148
  %v800 = vunpack.c.l.b16 %v149
  %v801 = vunpack.c.h.b16 %v149
  %v802 = vunpack.c.l.b16 %v150
  %v803 = vunpack.c.h.b16 %v150
  %v804 = vunpack.c.l.b16 %v151
  %v805 = vunpack.c.h.b16 %v151
  %v806 = vunpack.c.l.b16 %v152
  %v807 = vunpack.c.h.b16 %v152
  %v808 = vunpack.c.l.b16 %v153
  %v809 = vunpack.c.h.b16 %v153
  %v810 = vpack.c.b16 %v544, %v530
  %v811 = vpack.c.b16 %v545, %v531
  %v812 = vpack.c.b16 %v546, %v532
  %v813 = vpack.c.b16 %v547, %v533
  %v814 = vpack.c.b16 %v548, %v534
  %v815 = vpack.c.b16 %v549, %v535
  %v816 = vpack.c.b16 %v550, %v536
  %v817 = vpack.c.b16 %v551, %v537
  %v818 = vpack.c.b16 %v552, %v538
  %v819 = vpack.c.b16 %v553, %v539
  %v820 = vpack.c.b16 %v554, %v540
  %v821 = vpack.c.b16 %v555, %v541
  %v822 = vpack.c.b16 %v556, %v542
  %v823 = vpack.c.b16 %v557, %v543
  %v824 = vpack.c.b16 %v572, %v558
  %v825 = vpack.c.b16 %v573, %v559
  %v826 = vpack.c.b16 %v574, %v560
  %v827 = vpack.c.b16 %v575, %v561
  %v828 = vpack.c.b16 %v576, %v562
  %v829 = vpack.c.b16 %v577, %v563
  %v830 = vpack.c.b16 %v578, %v564
  %v831 = vpack.c.b16 %v579, %v565
  %v832 = vpack.c.b16 %v580, %v566
  %v833 = vpack.c.b16 %v581, %v567
  %v834 = vpack.c.b16 %v582, %v568
  %v835 = vpack.c.b16 %v583, %v569
  %v836 = vpack.c.b16 %v584, %v570
  %v837 = vpack.c.b16 %v585, %v571
  %v838 = vpack.c.b16 %v600, %v586
  %v839 = vpack.c.b16 %v601, %v587
  %v840 = vpack.c.b16 %v602, %v588
  %v841 = vpack.c.b16 %v603, %v589
  %v842 = vpack.c.b16 %v604, %v590
  %v843 = vpack.c.b16 %v605, %v591
  %v844 = vpack.c.b16 %v606, %v592
  %v845 = vpack.c.b16 %v607, %v593
  %v846 = vpack.c.b16 %v608, %v594
  %v847 = vpack.c.b16 %v609, %v595
  %v848 = vpack.c.b16 %v610, %v596
  %v849 = vpack.c.b16 %v611, %v597
  %v850 = vpack.c.b16 %v612, %v598
  %v851 = vpack.c.b16 %v613, %v599
  %v852 = vpack.c.b16 %v628, %v614
  %v853 = vpack.c.b16 %v629, %v615
  %v854 = vpack.c.b16 %v630, %v616
  %v855 = vpack.c.b16 %v631, %v617
  %v856 = vpack.c.b16 %v632, %v618
  %v857 = vpack.c.b16 %v633, %v619
  %v858 = vpack.c.b16 %v634, %v620
  %v859 = vpack.c.b16 %v635, %v621
  %v860 = vpack.c.b16 %v636, %v622
  %v861 = vpack.c.b16 %v637, %v623
  %v862 = vpack.c.b16 %v638, %v624
  %v863 = vpack.c.b16 %v639, %v625
  %v864 = vpack.c.b16 %v640, %v626
  %v865 = vpack.c.b16 %v641, %v627
  %v866 = vpack.c.b16 %v656, %v642
  %v867 = vpack.c.b16 %v657, %v643
  %v868 = vpack.c.b16 %v658, %v644
  %v869 = vpack.c.b16 %v659, %v645
  %v870 = vpack.c.b16 %v660, %v646
  %v871 = vpack.c.b16 %v661, %v647
  %v872 = vpack.c.b16 %v662, %v648
  %v873 = vpack.c.b16 %v663, %v649
  %v874 = vpack.c.b16 %v664, %v650
  %v875 = vpack.c.b16 %v665, %v651
  %v876 = vpack.c.b16 %v666, %v652
  %v877 = vpack.c.b16 %v667, %v653
  %v878 = vpack.c.b16 %v668, %v654
  %v879 = vpack.c.b16 %v669, %v655
  %v880 = vpack.c.b16 %v684, %v670
  %v881 = vpack.c.b16 %v685, %v671
  %v882 = vpack.c.b16 %v686, %v672
  %v883 = vpack.c.b16 %v687, %v673
  %v884 = vpack.c.b16 %v688, %v674
  %v885 = vpack.c.b16 %v689, %v675
  %v886 = vpack.c.b16 %v690, %v676
  %v887 = vpack.c.b16 %v691, %v677
  %v888 = vpack.c.b16 %v692, %v678
  %v889 = vpack.c.b16 %v693, %v679
  %v890 = vpack.c.b16 %v694, %v680
  %v891 = vpack.c.b16 %v695, %v681
  %v892 = vpack.c.b16 %v696, %v682
  %v893 = vpack.c.b16 %v697, %v683
  %v894 = vpack.c.b16 %v712, %v698
  %v895 = vpack.c.b16 %v713, %v699
  %v896 = vpack.c.b16 %v714, %v700
  %v897 = vpack.c.b16 %v715, %v701
  %v898 = vpack.c.b16 %v716, %v702
  %v899 = vpack.c.b16 %v717, %v703
  %v900 = vpack.c.b16 %v718, %v704
  %v901 = vpack.c.b16 %v719, %v705
  %v902 = vpack.c.b16 %v720, %v706
  %v903 = vpack.c.b16 %v721, %v707
  %v904 = vpack.c.b16 %v722, %v708
  %v905 = vpack.c.b16 %v723, %v709
  %v906 = vpack.c.b16 %v724, %v710
  %v907 = vpack.c.b16 %v725, %v711
  %v908 = vpack.c.b16 %v740, %v726
  %v909 = vpack.c.b16 %v741, %v727
  %v910 = vpack.c.b16 %v742, %v728
  %v911 = vpack.c.b16 %v743, %v729
  %v912 = vpack.c.b16 %v744, %v730
  %v913 = vpack.c.b16 %v745, %v731
  %v914 = vpack.c.b16 %v746, %v732
  %v915 = vpack.c.b16 %v747, %v733
  %v916 = vpack.c.b16 %v748, %v734
  %v917 = vpack.c.b16 %v749, %v735
  %v918 = vpack.c.b16 %v750, %v736
  %v919 = vpack.c.b16 %v751, %v737
  %v920 = vpack.c.b16 %v752, %v738
  %v921 = vpack.c.b16 %v753, %v739
  %v922 = vpack.c.b16 %v768, %v754
  %v923 = vpack.c.b16 %v769, %v755
  %v924 = vpack.c.b16 %v770, %v756
  %v925 = vpack.c.b16 %v771, %v757
  %v926 = vpack.c.b16 %v772, %v758
  %v927 = vpack.c.b16 %v773, %v759
  %v928 = vpack.c.b16 %v774, %v760
  %v929 = vpack.c.b16 %v775, %v761
  %v930 = vpack.c.b16 %v776, %v762
  %v931 = vpack.c.b16 %v777, %v763
  %v932 = vpack.c.b16 %v778, %v764
  %v933 = vpack.c.b16 %v779, %v765
  %v934 = vpack.c.b16 %v780, %v766
  %v935 = vpack.c.b16 %v781, %v767
  %v936 = vpack.c.b16 %v796, %v782
  %v937 = vpack.c.b16 %v797, %v783
  %v938 = vpack.c.b16 %v798, %v784
  %v939 = vpack.c.b16 %v799, %v785
  %v940 = vpack.c.b16 %v800, %v786
  %v941 = vpack.c.b16 %v801, %v787
  %v942 = vpack.c.b16 %v802, %v788
  %v943 = vpack.c.b16 %v803, %v789
  %v944 = vpack.c.b16 %v804, %v790
  %v945 = vpack.c.b16 %v805, %v791
  %v946 = vpack.c.b16 %v806, %v792
  %v947 = vpack.c.b16 %v807, %v793
  %v948 = vpack.c.b16 %v808, %v794
  %v949 = vpack.c.b16 %v809, %v795
  %v1314 = vunpack.c.l.b16 %v154
  %v1315 = vunpack.c.h.b16 %v154
  %v1316 = vunpack.c.l.b16 %v155
  %v1317 = vunpack.c.h.b16 %v155
  %v1318 = vunpack.c.l.b16 %v156
  %v1319 = vunpack.c.h.b16 %v156
  %v1320 = vunpack.c.l.b16 %v157
  %v1321 = vunpack.c.h.b16 %v157
  %v1322 = vunpack.c.l.b16 %v158
  %v1323 = vunpack.c.h.b16 %v158
  %v1324 = vunpack.c.l.b16 %v159
  %v1325 = vunpack.c.h.b16 %v159
  %v1326 = vunpack.c.l.b16 %v160
  %v1327 = vunpack.c.h.b16 %v160
  %v1328 = vunpack.c.l.b16 %v161
  %v1329 = vunpack.c.h.b16 %v161
  %v1330 = vunpack.c.l.b16 %v162
  %v1331 = vunpack.c.h.b16 %v162
  %v1332 = vunpack.c.l.b16 %v163
  %v1333 = vunpack.c.h.b16 %v163
  %v1334 = vunpack.c.l.b16 %v164
  %v1335 = vunpack.c.h.b16 %v164
  %v1336 = vunpack.c.l.b16 %v165
  %v1337 = vunpack.c.h.b16 %v165
  %v1338 = vunpack.c.l.b16 %v166
  %v1339 = vunpack.c.h.b16 %v166
  %v1340 = vunpack.c.l.b16 %v167
  %v1341 = vunpack.c.h.b16 %v167
  %v1342 = vunpack.c.l.b16 %v168
  %v1343 = vunpack.c.h.b16 %v168
  %v1344 = vunpack.c.l.b16 %v169
  %v1345 = vunpack.c.h.b16 %v169
  %v1346 = vunpack.c.l.b16 %v170
  %v1347 = vunpack.c.h.b16 %v170
  %v1348 = vunpack.c.l.b16 %v171
  %v1349 = vunpack.c.h.b16 %v171
  %v1350 = vunpack.c.l.b16 %v172
  %v1351 = vunpack.c.h.b16 %v172
  %v1352 = vunpack.c.l.b16 %v173
  %v1353 = vunpack.c.h.b16 %v173
  %v1354 = vunpack.c.l.b16 %v174
  %v1355 = vunpack.c.h.b16 %v174
  %v1356 = vunpack.c.l.b16 %v175
  %v1357 = vunpack.c.h.b16 %v175
  %v1358 = vunpack.c.l.b16 %v176
  %v1359 = vunpack.c.h.b16 %v176
  %v1360 = vunpack.c.l.b16 %v177
  %v1361 = vunpack.c.h.b16 %v177
  %v1362 = vunpack.c.l.b16 %v178
  %v1363 = vunpack.c.h.b16 %v178
  %v1364 = vunpack.c.l.b16 %v179
  %v1365 = vunpack.c.h.b16 %v179
  %v1366 = vunpack.c.l.b16 %v180
  %v1367 = vunpack.c.h.b16 %v180
  %v1368 = vunpack.c.l.b16 %v181
  %v1369 = vunpack.c.h.b16 %v181
  %v1370 = vunpack.c.l.b16 %v182
  %v1371 = vunpack.c.h.b16 %v182
  %v1372 = vunpack.c.l.b16 %v183
  %v1373 = vunpack.c.h.b16 %v183
  %v1374 = vunpack.c.l.b16 %v184
  %v1375 = vunpack.c.h.b16 %v184
  %v1376 = vunpack.c.l.b16 %v185
  %v1377 = vunpack.c.h.b16 %v185
  %v1378 = vunpack.c.l.b16 %v186
  %v1379 = vunpack.c.h.b16 %v186
  %v1380 = vunpack.c.l.b16 %v187
  %v1381 = vunpack.c.h.b16 %v187
  %v1382 = vunpack.c.l.b16 %v188
  %v1383 = vunpack.c.h.b16 %v188
  %v1384 = vunpack.c.l.b16 %v189
  %v1385 = vunpack.c.h.b16 %v189
  %v1386 = vunpack.c.l.b16 %v190
  %v1387 = vunpack.c.h.b16 %v190
  %v1388 = vunpack.c.l.b16 %v191
  %v1389 = vunpack.c.h.b16 %v191
  %v1390 = vunpack.c.l.b16 %v192
  %v1391 = vunpack.c.h.b16 %v192
  %v1392 = vunpack.c.l.b16 %v193
  %v1393 = vunpack.c.h.b16 %v193
  %v1394 = vunpack.c.l.b16 %v194
  %v1395 = vunpack.c.h.b16 %v194
  %v1396 = vunpack.c.l.b16 %v195
  %v1397 = vunpack.c.h.b16 %v195
  %v1398 = vunpack.c.l.b16 %v196
  %v1399 = vunpack.c.h.b16 %v196
  %v1400 = vunpack.c.l.b16 %v197
  %v1401 = vunpack.c.h.b16 %v197
  %v1402 = vunpack.c.l.b16 %v198
  %v1403 = vunpack.c.h.b16 %v198
  %v1404 = vunpack.c.l.b16 %v199
  %v1405 = vunpack.c.h.b16 %v199
  %v1406 = vunpack.c.l.b16 %v200
  %v1407 = vunpack.c.h.b16 %v200
  %v1408 = vunpack.c.l.b16 %v201
  %v1409 = vunpack.c.h.b16 %v201
  %v1410 = vunpack.c.l.b16 %v202
  %v1411 = vunpack.c.h.b16 %v202
  %v1412 = vunpack.c.l.b16 %v203
  %v1413 = vunpack.c.h.b16 %v203
  %v1414 = vunpack.c.l.b16 %v204
  %v1415 = vunpack.c.h.b16 %v204
  %v1416 = vunpack.c.l.b16 %v205
  %v1417 = vunpack.c.h.b16 %v205
  %v1418 = vunpack.c.l.b16 %v206
  %v1419 = vunpack.c.h.b16 %v206
  %v1420 = vunpack.c.l.b16 %v207
  %v1421 = vunpack.c.h.b16 %v207
  %v1422 = vunpack.c.l.b16 %v208
  %v1423 = vunpack.c.h.b16 %v208
  %v1424 = vunpack.c.l.b16 %v209
  %v1425 = vunpack.c.h.b16 %v209
  %v1426 = vunpack.c.l.b16 %v210
  %v1427 = vunpack.c.h.b16 %v210
  %v1428 = vunpack.c.l.b16 %v211
  %v1429 = vunpack.c.h.b16 %v211
  %v1430 = vunpack.c.l.b16 %v212
  %v1431 = vunpack.c.h.b16 %v212
  %v1432 = vunpack.c.l.b16 %v213
  %v1433 = vunpack.c.h.b16 %v213
  %v1434 = vunpack.c.l.b16 %v214
  %v1435 = vunpack.c.h.b16 %v214
  %v1436 = vunpack.c.l.b16 %v215
  %v1437 = vunpack.c.h.b16 %v215
  %v1438 = vunpack.c.l.b16 %v216
  %v1439 = vunpack.c.h.b16 %v216
  %v1440 = vunpack.c.l.b16 %v217
  %v1441 = vunpack.c.h.b16 %v217
  %v1442 = vunpack.c.l.b16 %v218
  %v1443 = vunpack.c.h.b16 %v218
  %v1444 = vunpack.c.l.b16 %v219
  %v1445 = vunpack.c.h.b16 %v219
  %v1446 = vunpack.c.l.b16 %v220
  %v1447 = vunpack.c.h.b16 %v220
  %v1448 = vunpack.c.l.b16 %v221
  %v1449 = vunpack.c.h.b16 %v221
  %v1450 = vunpack.c.l.b16 %v222
  %v1451 = vunpack.c.h.b16 %v222
  %v1452 = vunpack.c.l.b16 %v223
  %v1453 = vunpack.c.h.b16 %v223
  %v1454 = vunpack.c.l.b16 %v224
  %v1455 = vunpack.c.h.b16 %v224
  %v1456 = vunpack.c.l.b16 %v225
  %v1457 = vunpack.c.h.b16 %v225
  %v1458 = vunpack.c.l.b16 %v226
  %v1459 = vunpack.c.h.b16 %v226
  %v1460 = vunpack.c.l.b16 %v227
  %v1461 = vunpack.c.h.b16 %v227
  %v1462 = vunpack.c.l.b16 %v228
  %v1463 = vunpack.c.h.b16 %v228
  %v1464 = vunpack.c.l.b16 %v229
  %v1465 = vunpack.c.h.b16 %v229
  %v1466 = vunpack.c.l.b16 %v230
  %v1467 = vunpack.c.h.b16 %v230
  %v1468 = vunpack.c.l.b16 %v231
  %v1469 = vunpack.c.h.b16 %v231
  %v1470 = vunpack.c.l.b16 %v232
  %v1471 = vunpack.c.h.b16 %v232
  %v1472 = vunpack.c.l.b16 %v233
  %v1473 = vunpack.c.h.b16 %v233
  %v1474 = vunpack.c.l.b16 %v234
  %v1475 = vunpack.c.h.b16 %v234
  %v1476 = vunpack.c.l.b16 %v235
  %v1477 = vunpack.c.h.b16 %v235
  %v1478 = vunpack.c.l.b16 %v236
  %v1479 = vunpack.c.h.b16 %v236
  %v1480 = vunpack.c.l.b16 %v237
  %v1481 = vunpack.c.h.b16 %v237
  %v1482 = vunpack.c.l.b16 %v238
  %v1483 = vunpack.c.h.b16 %v238
  %v1484 = vunpack.c.l.b16 %v239
  %v1485 = vunpack.c.h.b16 %v239
  %v1486 = vunpack.c.l.b16 %v240
  %v1487 = vunpack.c.h.b16 %v240
  %v1488 = vunpack.c.l.b16 %v241
  %v1489 = vunpack.c.h.b16 %v241
  %v1490 = vunpack.c.l.b16 %v242
  %v1491 = vunpack.c.h.b16 %v242
  %v1492 = vunpack.c.l.b16 %v243
  %v1493 = vunpack.c.h.b16 %v243
  %v1494 = vunpack.c.l.b16 %v244
  %v1495 = vunpack.c.h.b16 %v244
  %v1496 = vunpack.c.l.b16 %v245
  %v1497 = vunpack.c.h.b16 %v245
  %v1498 = vunpack.c.l.b16 %v246
  %v1499 = vunpack.c.h.b16 %v246
  %v1500 = vunpack.c.l.b16 %v247
  %v1501 = vunpack.c.h.b16 %v247
  %v1502 = vunpack.c.l.b16 %v248
  %v1503 = vunpack.c.h.b16 %v248
  %v1504 = vunpack.c.l.b16 %v249
  %v1505 = vunpack.c.h.b16 %v249
  %v1506 = vunpack.c.l.b16 %v250
  %v1507 = vunpack.c.h.b16 %v250
  %v1508 = vunpack.c.l.b16 %v251
  %v1509 = vunpack.c.h.b16 %v251
  %v1510 = vunpack.c.l.b16 %v252
  %v1511 = vunpack.c.h.b16 %v252
  %v1512 = vunpack.c.l.b16 %v253
  %v1513 = vunpack.c.h.b16 %v253
  %v1514 = vunpack.c.l.b16 %v254
  %v1515 = vunpack.c.h.b16 %v254
  %v1516 = vunpack.c.l.b16 %v255
  %v1517 = vunpack.c.h.b16 %v255
  %v1518 = vunpack.c.l.b16 %v256
  %v1519 = vunpack.c.h.b16 %v256
  %v1520 = vunpack.c.l.b16 %v257
  %v1521 = vunpack.c.h.b16 %v257
  %v1522 = vunpack.c.l.b16 %v258
  %v1523 = vunpack.c.h.b16 %v258
  %v1524 = vunpack.c.l.b16 %v259
  %v1525 = vunpack.c.h.b16 %v259
  %v1526 = vunpack.c.l.b16 %v260
  %v1527 = vunpack.c.h.b16 %v260
  %v1528 = vunpack.c.l.b16 %v261
  %v1529 = vunpack.c.h.b16 %v261
  %v1530 = vunpack.c.l.b16 %v262
  %v1531 = vunpack.c.h.b16 %v262
  %v1532 = vunpack.c.l.b16 %v263
  %v1533 = vunpack.c.h.b16 %v263
  %v1534 = vunpack.c.l.b16 %v264
  %v1535 = vunpack.c.h.b16 %v264
  %v1536 = vunpack.c.l.b16 %v265
  %v1537 = vunpack.c.h.b16 %v265
  %v1538 = vunpack.c.l.b16 %v266
  %v1539 = vunpack.c.h.b16 %v266
  %v1540 = vunpack.c.l.b16 %v267
  %v1541 = vunpack.c.h.b16 %v267
  %v1542 = vunpack.c.l.b16 %v268
  %v1543 = vunpack.c.h.b16 %v268
  %v1544 = vunpack.c.l.b16 %v269
  %v1545 = vunpack.c.h.b16 %v269
  %v1546 = vunpack.c.l.b16 %v270
  %v1547 = vunpack.c.h.b16 %v270
  %v1548 = vunpack.c.l.b16 %v271
  %v1549 = vunpack.c.h.b16 %v271
  %v1550 = vunpack.c.l.b16 %v272
  %v1551 = vunpack.c.h.b16 %v272
  %v1552 = vunpack.c.l.b16 %v273
  %v1553 = vunpack.c.h.b16 %v273
  %v1554 = vunpack.c.l.b16 %v274
  %v1555 = vunpack.c.h.b16 %v274
  %v1556 = vunpack.c.l.b16 %v275
  %v1557 = vunpack.c.h.b16 %v275
  %v1558 = vunpack.c.l.b16 %v276
  %v1559 = vunpack.c.h.b16 %v276
  %v1560 = vunpack.c.l.b16 %v277
  %v1561 = vunpack.c.h.b16 %v277
  %v1562 = vunpack.c.l.b16 %v278
  %v1563 = vunpack.c.h.b16 %v278
  %v1564 = vunpack.c.l.b16 %v279
  %v1565 = vunpack.c.h.b16 %v279
  %v1566 = vunpack.c.l.b16 %v280
  %v1567 = vunpack.c.h.b16 %v280
  %v1568 = vunpack.c.l.b16 %v281
  %v1569 = vunpack.c.h.b16 %v281
  %v1570 = vunpack.c.l.b16 %v282
  %v1571 = vunpack.c.h.b16 %v282
  %v1572 = vunpack.c.l.b16 %v283
  %v1573 = vunpack.c.h.b16 %v283
  %v1574 = vunpack.c.l.b16 %v284
  %v1575 = vunpack.c.h.b16 %v284
  %v1576 = vunpack.c.l.b16 %v285
  %v1577 = vunpack.c.h.b16 %v285
  %v1578 = vunpack.c.l.b16 %v286
  %v1579 = vunpack.c.h.b16 %v286
  %v1580 = vunpack.c.l.b16 %v287
  %v1581 = vunpack.c.h.b16 %v287
  %v1582 = vunpack.c.l.b16 %v288
  %v1583 = vunpack.c.h.b16 %v288
  %v1584 = vunpack.c.l.b16 %v289
  %v1585 = vunpack.c.h.b16 %v289
  %v1586 = vunpack.c.l.b16 %v290
  %v1587 = vunpack.c.h.b16 %v290
  %v1588 = vunpack.c.l.b16 %v291
  %v1589 = vunpack.c.h.b16 %v291
  %v1590 = vunpack.c.l.b16 %v292
  %v1591 = vunpack.c.h.b16 %v292
  %v1592 = vunpack.c.l.b16 %v293
  %v1593 = vunpack.c.h.b16 %v293
  %v1594 = vunpack.c.l.b16 %v294
  %v1595 = vunpack.c.h.b16 %v294
  %v1596 = vunpack.c.l.b16 %v295
  %v1597 = vunpack.c.h.b16 %v295
  %v1598 = vunpack.c.l.b16 %v296
  %v1599 = vunpack.c.h.b16 %v296
  %v1600 = vunpack.c.l.b16 %v297
  %v1601 = vunpack.c.h.b16 %v297
  %v1602 = vunpack.c.l.b16 %v298
  %v1603 = vunpack.c.h.b16 %v298
  %v1604 = vunpack.c.l.b16 %v299
  %v1605 = vunpack.c.h.b16 %v299
  %v1606 = vunpack.c.l.b16 %v300
  %v1607 = vunpack.c.h.b16 %v300
  %v1608 = vunpack.c.l.b16 %v301
  %v1609 = vunpack.c.h.b16 %v301
  %v1610 = vunpack.c.l.b16 %v302
  %v1611 = vunpack.c.h.b16 %v302
  %v1612 = vunpack.c.l.b16 %v303
  %v1613 = vunpack.c.h.b16 %v303
  %v1614 = vunpack.c.l.b16 %v304
  %v1615 = vunpack.c.h.b16 %v304
  %v1616 = vunpack.c.l.b16 %v305
  %v1617 = vunpack.c.h.b16 %v305
  %v1618 = vunpack.c.l.b16 %v306
  %v1619 = vunpack.c.h.b16 %v306
  %v1620 = vunpack.c.l.b16 %v307
  %v1621 = vunpack.c.h.b16 %v307
  %v1622 = vunpack.c.l.b16 %v308
  %v1623 = vunpack.c.h.b16 %v308
  %v1624 = vunpack.c.l.b16 %v309
  %v1625 = vunpack.c.h.b16 %v309
  %v1626 = vunpack.c.l.b16 %v310
  %v1627 = vunpack.c.h.b16 %v310
  %v1628 = vunpack.c.l.b16 %v311
  %v1629 = vunpack.c.h.b16 %v311
  %v1630 = vunpack.c.l.b16 %v312
  %v1631 = vunpack.c.h.b16 %v312
  %v1632 = vunpack.c.l.b16 %v313
  %v1633 = vunpack.c.h.b16 %v313
  %v1634 = vunpack.c.l.b16 %v314
  %v1635 = vunpack.c.h.b16 %v314
  %v1636 = vunpack.c.l.b16 %v315
  %v1637 = vunpack.c.h.b16 %v315
  %v1638 = vunpack.c.l.b16 %v316
  %v1639 = vunpack.c.h.b16 %v316
  %v1640 = vunpack.c.l.b16 %v317
  %v1641 = vunpack.c.h.b16 %v317
  %v1642 = vunpack.c.l.b16 %v318
  %v1643 = vunpack.c.h.b16 %v318
  %v1644 = vunpack.c.l.b16 %v319
  %v1645 = vunpack.c.h.b16 %v319
  %v1646 = vunpack.c.l.b16 %v320
  %v1647 = vunpack.c.h.b16 %v320
  %v1648 = vunpack.c.l.b16 %v321
  %v1649 = vunpack.c.h.b16 %v321
  %v1650 = vunpack.c.l.b16 %v322
  %v1651 = vunpack.c.h.b16 %v322
  %v1652 = vunpack.c.l.b16 %v323
  %v1653 = vunpack.c.h.b16 %v323
  %v1654 = vunpack.c.l.b16 %v324
  %v1655 = vunpack.c.h.b16 %v324
  %v1656 = vunpack.c.l.b16 %v325
  %v1657 = vunpack.c.h.b16 %v325
  %v1658 = vunpack.c.l.b16 %v326
  %v1659 = vunpack.c.h.b16 %v326
  %v1660 = vunpack.c.l.b16 %v327
  %v1661 = vunpack.c.h.b16 %v327
  %v1662 = vunpack.c.l.b16 %v328
  %v1663 = vunpack.c.h.b16 %v328
  %v1664 = vunpack.c.l.b16 %v329
  %v1665 = vunpack.c.h.b16 %v329
  %v1666 = vunpack.c.l.b16 %v330
  %v1667 = vunpack.c.h.b16 %v330
  %v1668 = vunpack.c.l.b16 %v331
  %v1669 = vunpack.c.h.b16 %v331
  %v1670 = vunpack.c.l.b16 %v332
  %v1671 = vunpack.c.h.b16 %v332
  %v1672 = vunpack.c.l.b16 %v333
  %v1673 = vunpack.c.h.b16 %v333
  %v1674 = vunpack.c.l.b16 %v334
  %v1675 = vunpack.c.h.b16 %v334
  %v1676 = vunpack.c.l.b16 %v335
  %v1677 = vunpack.c.h.b16 %v335
  %v1678 = vunpack.c.l.b16 %v336
  %v1679 = vunpack.c.h.b16 %v336
  %v1680 = vunpack.c.l.b16 %v337
  %v1681 = vunpack.c.h.b16 %v337
  %v1682 = vunpack.c.l.b16 %v338
  %v1683 = vunpack.c.h.b16 %v338
  %v1684 = vunpack.c.l.b16 %v339
  %v1685 = vunpack.c.h.b16 %v339
  %v1686 = vunpack.c.l.b16 %v340
  %v1687 = vunpack.c.h.b16 %v340
  %v1688 = vunpack.c.l.b16 %v341
  %v1689 = vunpack.c.h.b16 %v341
  %v1690 = vunpack.c.l.b16 %v342
  %v1691 = vunpack.c.h.b16 %v342
  %v1692 = vunpack.c.l.b16 %v343
  %v1693 = vunpack.c.h.b16 %v343
  %v1694 = vunpack.c.l.b16 %v344
  %v1695 = vunpack.c.h.b16 %v344
  %v1696 = vunpack.c.l.b16 %v345
  %v1697 = vunpack.c.h.b16 %v345
  %v1698 = vunpack.c.l.b16 %v346
  %v1699 = vunpack.c.h.b16 %v346
  %v1700 = vunpack.c.l.b16 %v347
  %v1701 = vunpack.c.h.b16 %v347
  %v1702 = vunpack.c.l.b16 %v348
  %v1703 = vunpack.c.h.b16 %v348
  %v1704 = vunpack.c.l.b16 %v349
  %v1705 = vunpack.c.h.b16 %v349
  %v1706 = vunpack.c.l.b16 %v350
  %v1707 = vunpack.c.h.b16 %v350
  %v1708 = vunpack.c.l.b16 %v351
  %v1709 = vunpack.c.h.b16 %v351
  %v1710 = vunpack.c.l.b16 %v352
  %v1711 = vunpack.c.h.b16 %v352
  %v1712 = vunpack.c.l.b16 %v353
  %v1713 = vunpack.c.h.b16 %v353
  %v1714 = vunpack.c.l.b16 %v354
  %v1715 = vunpack.c.h.b16 %v354
  %v1716 = vunpack.c.l.b16 %v355
  %v1717 = vunpack.c.h.b16 %v355
  %v1718 = vunpack.c.l.b16 %v356
  %v1719 = vunpack.c.h.b16 %v356
  %v1720 = vunpack.c.l.b16 %v357
  %v1721 = vunpack.c.h.b16 %v357
  %v1722 = vunpack.c.l.b16 %v358
  %v1723 = vunpack.c.h.b16 %v358
  %v1724 = vunpack.c.l.b16 %v359
  %v1725 = vunpack.c.h.b16 %v359
  %v1726 = vunpack.c.l.b16 %v360
  %v1727 = vunpack.c.h.b16 %v360
  %v1728 = vunpack.c.l.b16 %v361
  %v1729 = vunpack.c.h.b16 %v361
  %v1730 = vunpack.c.l.b16 %v362
  %v1731 = vunpack.c.h.b16 %v362
  %v1732 = vunpack.c.l.b16 %v363
  %v1733 = vunpack.c.h.b16 %v363
  %v1734 = vunpack.c.l.b16 %v364
  %v1735 = vunpack.c.h.b16 %v364
  %v1736 = vunpack.c.l.b16 %v365
  %v1737 = vunpack.c.h.b16 %v365
  %v1738 = vunpack.c.l.b16 %v366
  %v1739 = vunpack.c.h.b16 %v366
  %v1740 = vunpack.c.l.b16 %v367
  %v1741 = vunpack.c.h.b16 %v367
  %v1742 = vunpack.c.l.b16 %v368
  %v1743 = vunpack.c.h.b16 %v368
  %v1744 = vunpack.c.l.b16 %v369
  %v1745 = vunpack.c.h.b16 %v369
  %v1746 = vunpack.c.l.b16 %v370
  %v1747 = vunpack.c.h.b16 %v370
  %v1748 = vunpack.c.l.b16 %v371
  %v1749 = vunpack.c.h.b16 %v371
  %v1750 = vunpack.c.l.b16 %v372
  %v1751 = vunpack.c.h.b16 %v372
  %v1752 = vunpack.c.l.b16 %v373
  %v1753 = vunpack.c.h.b16 %v373
  %v1754 = vunpack.c.l.b16 %v374
  %v1755 = vunpack.c.h.b16 %v374
  %v1756 = vunpack.c.l.b16 %v375
  %v1757 = vunpack.c.h.b16 %v375
  %v1758 = vunpack.c.l.b16 %v376
  %v1759 = vunpack.c.h.b16 %v376
  %v1760 = vunpack.c.l.b16 %v377
  %v1761 = vunpack.c.h.b16 %v377
  %v1762 = vpack.c.b16 %v1316, %v1314
  %v1763 = vpack.c.b16 %v1317, %v1315
  %v1764 = vpack.c.b16 %v1320, %v1318
  %v1765 = vpack.c.b16 %v1321, %v1319
  %v1766 = vpack.c.b16 %v1324, %v1322
  %v1767 = vpack.c.b16 %v1325, %v1323
  %v1768 = vpack.c.b16 %v1328, %v1326
  %v1769 = vpack.c.b16 %v1329, %v1327
  %v1770 = vpack.c.b16 %v1332, %v1330
  %v1771 = vpack.c.b16 %v1333, %v1331
  %v1772 = vpack.c.b16 %v1336, %v1334
  %v1773 = vpack.c.b16 %v1337, %v1335
  %v1774 = vpack.c.b16 %v1340, %v1338
  %v1775 = vpack.c.b16 %v1341, %v1339
  %v1776 = vpack.c.b16 %v1344, %v1342
  %v1777 = vpack.c.b16 %v1345, %v1343
  %v1778 = vpack.c.b16 %v1348, %v1346
  %v1779 = vpack.c.b16 %v1349, %v1347
  %v1780 = vpack.c.b16 %v1352, %v1350
  %v1781 = vpack.c.b16 %v1353, %v1351
  %v1782 = vpack.c.b16 %v1356, %v1354
  %v1783 = vpack.c.b16 %v1357, %v1355
  %v1784 = vpack.c.b16 %v1360, %v1358
  %v1785 = vpack.c.b16 %v1361, %v1359
  %v1786 = vpack.c.b16 %v1364, %v1362
  %v1787 = vpack.c.b16 %v1365, %v1363
  %v1788 = vpack.c.b16 %v1368, %v1366
  %v1789 = vpack.c.b16 %v1369, %v1367
  %v1790 = vpack.c.b16 %v1372, %v1370
  %v1791 = vpack.c.b16 %v1373, %v1371
  %v1792 = vpack.c.b16 %v1376, %v1374
  %v1793 = vpack.c.b16 %v1377, %v1375
  %v1794 = vpack.c.b16 %v1380, %v1378
  %v1795 = vpack.c.b16 %v1381, %v1379
  %v1796 = vpack.c.b16 %v1384, %v1382
  %v1797 = vpack.c.b16 %v1385, %v1383
  %v1798 = vpack.c.b16 %v1388, %v1386
  %v1799 = vpack.c.b16 %v1389, %v1387
  %v1800 = vpack.c.b16 %v1392, %v1390
  %v1801 = vpack.c.b16 %v1393, %v1391
  %v1802 = vpack.c.b16 %v1396, %v1394
  %v1803 = vpack.c.b16 %v1397, %v1395
  %v1804 = vpack.c.b16 %v1400, %v1398
  %v1805 = vpack.c.b16 %v1401, %v1399
  %v1806 = vpack.c.b16 %v1404, %v1402
  %v1807 = vpack.c.b16 %v1405, %v1403
  %v1808 = vpack.c.b16 %v1408, %v1406
  %v1809 = vpack.c.b16 %v1409, %v1407
  %v1810 = vpack.c.b16 %v1412, %v1410
  %v1811 = vpack.c.b16 %v1413, %v1411
  %v1812 = vpack.c.b16 %v1416, %v1414
  %v1813 = vpack.c.b16 %v1417, %v1415
  %v1814 = vpack.c.b16 %v1420, %v1418
  %v1815 = vpack.c.b16 %v1421, %v1419
  %v1816 = vpack.c.b16 %v1424, %v1422
  %v1817 = vpack.c.b16 %v1425, %v1423
  %v1818 = vpack.c.b16 %v1428, %v1426
  %v1819 = vpack.c.b16 %v1429, %v1427
  %v1820 = vpack.c.b16 %v1432, %v1430
  %v1821 = vpack.c.b16 %v1433, %v1431
  %v1822 = vpack.c.b16 %v1436, %v1434
  %v1823 = vpack.c.b16 %v1437, %v1435
  %v1824 = vpack.c.b16 %v1440, %v1438
  %v1825 = vpack.c.b16 %v1441, %v1439
  %v1826 = vpack.c.b16 %v1444, %v1442
  %v1827 = vpack.c.b16 %v1445, %v1443
  %v1828 = vpack.c.b16 %v1448, %v1446
  %v1829 = vpack.c.b16 %v1449, %v1447
  %v1830 = vpack.c.b16 %v1452, %v1450
  %v1831 = vpack.c.b16 %v1453, %v1451
  %v1832 = vpack.c.b16 %v1456, %v1454
  %v1833 = vpack.c.b16 %v1457, %v1455
  %v1834 = vpack.c.b16 %v1460, %v1458
  %v1835 = vpack.c.b16 %v1461, %v1459
  %v1836 = vpack.c.b16 %v1464, %v1462
  %v1837 = vpack.c.b16 %v1465, %v1463
  %v1838 = vpack.c.b16 %v1468, %v1466
  %v1839 = vpack.c.b16 %v1469, %v1467
  %v1840 = vpack.c.b16 %v1472, %v1470
  %v1841 = vpack.c.b16 %v1473, %v1471
  %v1842 = vpack.c.b16 %v1476, %v1474
  %v1843 = vpack.c.b16 %v1477, %v1475
  %v1844 = vpack.c.b16 %v1480, %v1478
  %v1845 = vpack.c.b16 %v1481, %v1479
  %v1846 = vpack.c.b16 %v1484, %v1482
  %v1847 = vpack.c.b16 %v1485, %v1483
  %v1848 = vpack.c.b16 %v1488, %v1486
  %v1849 = vpack.c.b16 %v1489, %v1487
  %v1850 = vpack.c.b16 %v1492, %v1490
  %v1851 = vpack.c.b16 %v1493, %v1491
  %v1852 = vpack.c.b16 %v1496, %v1494
  %v1853 = vpack.c.b16 %v1497, %v1495
  %v1854 = vpack.c.b16 %v1500, %v1498
  %v1855 = vpack.c.b16 %v1501, %v1499
  %v1856 = vpack.c.b16 %v1504, %v1502
  %v1857 = vpack.c.b16 %v1505, %v1503
  %v1858 = vpack.c.b16 %v1508, %v1506
  %v1859 = vpack.c.b16 %v1509, %v1507
  %v1860 = vpack.c.b16 %v1512, %v1510
  %v1861 = vpack.c.b16 %v1513, %v1511
  %v1862 = vpack.c.b16 %v1516, %v1514
  %v1863 = vpack.c.b16 %v1517, %v1515
  %v1864 = vpack.c.b16 %v1520, %v1518
  %v1865 = vpack.c.b16 %v1521, %v1519
  %v1866 = vpack.c.b16 %v1524, %v1522
  %v1867 = vpack.c.b16 %v1525, %v1523
  %v1868 = vpack.c.b16 %v1528, %v1526
  %v1869 = vpack.c.b16 %v1529, %v1527
  %v1870 = vpack.c.b16 %v1532, %v1530
  %v1871 = vpack.c.b16 %v1533, %v1531
  %v1872 = vpack.c.b16 %v1536, %v1534
  %v1873 = vpack.c.b16 %v1537, %v1535
  %v1874 = vpack.c.b16 %v1540, %v1538
  %v1875 = vpack.c.b16 %v1541, %v1539
  %v1876 = vpack.c.b16 %v1544, %v1542
  %v1877 = vpack.c.b16 %v1545, %v1543
  %v1878 = vpack.c.b16 %v1548, %v1546
  %v1879 = vpack.c.b16 %v1549, %v1547
  %v1880 = vpack.c.b16 %v1552, %v1550
  %v1881 = vpack.c.b16 %v1553, %v1551
  %v1882 = vpack.c.b16 %v1556, %v1554
  %v1883 = vpack.c.b16 %v1557, %v1555
  %v1884 = vpack.c.b16 %v1560, %v1558
  %v1885 = vpack.c.b16 %v1561, %v1559
  %v1886 = vpack.c.b16 %v1564, %v1562
  %v1887 = vpack.c.b16 %v1565, %v1563
  %v1888 = vpack.c.b16 %v1568, %v1566
  %v1889 = vpack.c.b16 %v1569, %v1567
  %v1890 = vpack.c.b16 %v1572, %v1570
  %v1891 = vpack.c.b16 %v1573, %v1571
  %v1892 = vpack.c.b16 %v1576, %v1574
  %v1893 = vpack.c.b16 %v1577, %v1575
  %v1894 = vpack.c.b16 %v1580, %v1578
  %v1895 = vpack.c.b16 %v1581, %v1579
  %v1896 = vpack.c.b16 %v1584, %v1582
  %v1897 = vpack.c.b16 %v1585, %v1583
  %v1898 = vpack.c.b16 %v1588, %v1586
  %v1899 = vpack.c.b16 %v1589, %v1587
  %v1900 = vpack.c.b16 %v1592, %v1590
  %v1901 = vpack.c.b16 %v1593, %v1591
  %v1902 = vpack.c.b16 %v1596, %v1594
  %v1903 = vpack.c.b16 %v1597, %v1595
  %v1904 = vpack.c.b16 %v1600, %v1598
  %v1905 = vpack.c.b16 %v1601, %v1599
  %v1906 = vpack.c.b16 %v1604, %v1602
  %v1907 = vpack.c.b16 %v1605, %v1603
  %v1908 = vpack.c.b16 %v1608, %v1606
  %v1909 = vpack.c.b16 %v1609, %v1607
  %v1910 = vpack.c.b16 %v1612, %v1610
  %v1911 = vpack.c.b16 %v1613, %v1611
  %v1912 = vpack.c.b16 %v1616, %v1614
  %v1913 = vpack.c.b16 %v1617, %v1615
  %v1914 = vpack.c.b16 %v1620, %v1618
  %v1915 = vpack.c.b16 %v1621, %v1619
  %v1916 = vpack.c.b16 %v1624, %v1622
  %v1917 = vpack.c.b16 %v1625, %v1623
  %v1918 = vpack.c.b16 %v1628, %v1626
  %v1919 = vpack.c.b16 %v1629, %v1627
  %v1920 = vpack.c.b16 %v1632, %v1630
  %v1921 = vpack.c.b16 %v1633, %v1631
  %v1922 = vpack.c.b16 %v1636, %v1634
  %v1923 = vpack.c.b16 %v1637, %v1635
  %v1924 = vpack.c.b16 %v1640, %v1638
  %v1925 = vpack.c.b16 %v1641, %v1639
  %v1926 = vpack.c.b16 %v1644, %v1642
  %v1927 = vpack.c.b16 %v1645, %v1643
  %v1928 = vpack.c.b16 %v1648, %v1646
  %v1929 = vpack.c.b16 %v1649, %v1647
  %v1930 = vpack.c.b16 %v1652, %v1650
  %v1931 = vpack.c.b16 %v1653, %v1651
  %v1932 = vpack.c.b16 %v1656, %v1654
  %v1933 = vpack.c.b16 %v1657, %v1655
  %v1934 = vpack.c.b16 %v1660, %v1658
  %v1935 = vpack.c.b16 %v1661, %v1659
  %v1936 = vpack.c.b16 %v1664, %v1662
  %v1937 = vpack.c.b16 %v1665, %v1663
  %v1938 = vpack.c.b16 %v1668, %v1666
  %v1939 = vpack.c.b16 %v1669, %v1667
  %v1940 = vpack.c.b16 %v1672, %v1670
  %v1941 = vpack.c.b16 %v1673, %v1671
  %v1942 = vpack.c.b16 %v1676, %v1674
  %v1943 = vpack.c.b16 %v1677, %v1675
  %v1944 = vpack.c.b16 %v1680, %v1678
  %v1945 = vpack.c.b16 %v1681, %v1679
  %v1946 = vpack.c.b16 %v1684, %v1682
  %v1947 = vpack.c.b16 %v1685, %v1683
  %v1948 = vpack.c.b16 %v1688, %v1686
  %v1949 = vpack.c.b16 %v1689, %v1687
  %v1950 = vpack.c.b16 %v1692, %v1690
  %v1951 = vpack.c.b16 %v1693, %v1691
  %v1952 = vpack.c.b16 %v1696, %v1694
  %v1953 = vpack.c.b16 %v1697, %v1695
  %v1954 = vpack.c.b16 %v1700, %v1698
  %v1955 = vpack.c.b16 %v1701, %v1699
  %v1956 = vpack.c.b16 %v1704, %v1702
  %v1957 = vpack.c.b16 %v1705, %v1703
  %v1958 = vpack.c.b16 %v1708, %v1706
  %v1959 = vpack.c.b16 %v1709, %v1707
  %v1960 = vpack.c.b16 %v1712, %v1710
  %v1961 = vpack.c.b16 %v1713, %v1711
  %v1962 = vpack.c.b16 %v1716, %v1714
  %v1963 = vpack.c.b16 %v1717, %v1715
  %v1964 = vpack.c.b16 %v1720, %v1718
  %v1965 = vpack.c.b16 %v1721, %v1719
  %v1966 = vpack.c.b16 %v1724, %v1722
  %v1967 = vpack.c.b16 %v1725, %v1723
  %v1968 = vpack.c.b16 %v1728, %v1726
  %v1969 = vpack.c.b16 %v1729, %v1727
  %v1970 = vpack.c.b16 %v1732, %v1730
  %v1971 = vpack.c.b16 %v1733, %v1731
  %v1972 = vpack.c.b16 %v1736, %v1734
  %v1973 = vpack.c.b16 %v1737, %v1735
  %v1974 = vpack.c.b16 %v1740, %v1738
  %v1975 = vpack.c.b16 %v1741, %v1739
  %v1976 = vpack.c.b16 %v1744, %v1742
  %v1977 = vpack.c.b16 %v1745, %v1743
  %v1978 = vpack.c.b16 %v1748, %v1746
  %v1979 = vpack.c.b16 %v1749, %v1747
  %v1980 = vpack.c.b16 %v1752, %v1750
  %v1981 = vpack.c.b16 %v1753, %v1751
  %v1982 = vpack.c.b16 %v1756, %v1754
  %v1983 = vpack.c.b16 %v1757, %v1755
  %v1984 = vpack.c.b16 %v1760, %v1758
  %v1985 = vpack.c.b16 %v1761, %v1759
  %2210 = vmatprep.subr.bf16.mxu0 %v1777
  %2211 = vmatpush1.bf16.msra.mxu0 %v1776
  %2212 = vmatprep.subr.bf16.mxu0 %v1775
  %2213 = vmatpush1.bf16.msra.mxu0 %v1774
  %2214 = vmatprep.subr.bf16.mxu0 %v1773
  %2215 = vmatpush1.bf16.msra.mxu0 %v1772
  %2216 = vmatprep.subr.bf16.mxu0 %v1771
  %2217 = vmatpush1.bf16.msra.mxu0 %v1770
  %2218 = vmatprep.subr.bf16.mxu0 %v1769
  %2219 = vmatpush1.bf16.msra.mxu0 %v1768
  %2220 = vmatprep.subr.bf16.mxu0 %v1767
  %2221 = vmatpush1.bf16.msra.mxu0 %v1766
  %2222 = vmatprep.subr.bf16.mxu0 %v1765
  %2223 = vmatpush1.bf16.msra.mxu0 %v1764
  %2224 = vmatprep.subr.bf16.mxu0 %v1763
  %2225 = vmatpush1.bf16.msra.mxu0 %v1762
  %2226 = vmatprep.subr.bf16.mxu0 %v1793
  %2227 = vmatpush2.bf16.msra.mxu0 %v1792
  %2228 = vmatprep.subr.bf16.mxu0 %v1791
  %2229 = vmatpush2.bf16.msra.mxu0 %v1790
  %2230 = vmatprep.subr.bf16.mxu0 %v1789
  %2231 = vmatpush2.bf16.msra.mxu0 %v1788
  %2232 = vmatprep.subr.bf16.mxu0 %v1787
  %2233 = vmatpush2.bf16.msra.mxu0 %v1786
  %2234 = vmatprep.subr.bf16.mxu0 %v1785
  %2235 = vmatpush2.bf16.msra.mxu0 %v1784
  %2236 = vmatprep.subr.bf16.mxu0 %v1783
  %2237 = vmatpush2.bf16.msra.mxu0 %v1782
  %2238 = vmatprep.subr.bf16.mxu0 %v1781
  %2239 = vmatpush2.bf16.msra.mxu0 %v1780
  %2240 = vmatprep.subr.bf16.mxu0 %v1779
  %2241 = vmatpush2.bf16.msra.mxu0 %v1778
  %2242 = vmatprep.mubr.bf16.mxu0 %v811
  %2243 = vmatmul.mubr.bf16.gmra.mxu0 %v810
  %v2244 = vpop.f32.mrf.mxu0
  %v2245 = vadd.f32 %v383, %v2244
  %v2246 = vpop.f32.mrf.mxu0
  %v2247 = vadd.f32 %v387, %v2246
  %v2248 = vpop.f32.mrf.mxu0
  %v2249 = vadd.f32 %v383, %v2248
  %v2250 = vpop.f32.mrf.mxu0
  %v2251 = vadd.f32 %v387, %v2250
  %2252 = vmatprep.mubr.bf16.mxu0 %v825
  %2253 = vmatmul.mubr.bf16.gmra.mxu0 %v824
  %v2254 = vpop.f32.mrf.mxu0
  %v2255 = vadd.f32 %v383, %v2254
  %v2256 = vpop.f32.mrf.mxu0
  %v2257 = vadd.f32 %v387, %v2256
  %v2258 = vpop.f32.mrf.mxu0
  %v2259 = vadd.f32 %v383, %v2258
  %v2260 = vpop.f32.mrf.mxu0
  %v2261 = vadd.f32 %v387, %v2260
  %2262 = vmatprep.mubr.bf16.mxu0 %v839
  %2263 = vmatmul.mubr.bf16.gmra.mxu0 %v838
  %v2264 = vpop.f32.mrf.mxu0
  %v2265 = vadd.f32 %v383, %v2264
  %v2266 = vpop.f32.mrf.mxu0
  %v2267 = vadd.f32 %v387, %v2266
  %v2268 = vpop.f32.mrf.mxu0
  %v2269 = vadd.f32 %v383, %v2268
  %v2270 = vpop.f32.mrf.mxu0
  %v2271 = vadd.f32 %v387, %v2270
  %2272 = vmatprep.mubr.bf16.mxu0 %v853
  %2273 = vmatmul.mubr.bf16.gmra.mxu0 %v852
  %v2274 = vpop.f32.mrf.mxu0
  %v2275 = vadd.f32 %v383, %v2274
  %v2276 = vpop.f32.mrf.mxu0
  %v2277 = vadd.f32 %v387, %v2276
  %v2278 = vpop.f32.mrf.mxu0
  %v2279 = vadd.f32 %v383, %v2278
  %v2280 = vpop.f32.mrf.mxu0
  %v2281 = vadd.f32 %v387, %v2280
  %2282 = vmatprep.mubr.bf16.mxu0 %v867
  %2283 = vmatmul.mubr.bf16.gmra.mxu0 %v866
  %v2284 = vpop.f32.mrf.mxu0
  %v2285 = vadd.f32 %v383, %v2284
  %v2286 = vpop.f32.mrf.mxu0
  %v2287 = vadd.f32 %v387, %v2286
  %v2288 = vpop.f32.mrf.mxu0
  %v2289 = vadd.f32 %v383, %v2288
  %v2290 = vpop.f32.mrf.mxu0
  %v2291 = vadd.f32 %v387, %v2290
  %2292 = vmatprep.mubr.bf16.mxu0 %v881
  %2293 = vmatmul.mubr.bf16.gmra.mxu0 %v880
  %v2294 = vpop.f32.mrf.mxu0
  %v2295 = vadd.f32 %v383, %v2294
  %v2296 = vpop.f32.mrf.mxu0
  %v2297 = vadd.f32 %v387, %v2296
  %v2298 = vpop.f32.mrf.mxu0
  %v2299 = vadd.f32 %v383, %v2298
  %v2300 = vpop.f32.mrf.mxu0
  %v2301 = vadd.f32 %v387, %v2300
  %2302 = vmatprep.mubr.bf16.mxu0 %v895
  %2303 = vmatmul.mubr.bf16.gmra.mxu0 %v894
  %v2304 = vpop.f32.mrf.mxu0
  %v2305 = vadd.f32 %v383, %v2304
  %v2306 = vpop.f32.mrf.mxu0
  %v2307 = vadd.f32 %v387, %v2306
  %v2308 = vpop.f32.mrf.mxu0
  %v2309 = vadd.f32 %v383, %v2308
  %v2310 = vpop.f32.mrf.mxu0
  %v2311 = vadd.f32 %v387, %v2310
  %2312 = vmatprep.mubr.bf16.mxu0 %v909
  %2313 = vmatmul.mubr.bf16.gmra.mxu0 %v908
  %v2314 = vpop.f32.mrf.mxu0
  %v2315 = vadd.f32 %v383, %v2314
  %v2316 = vpop.f32.mrf.mxu0
  %v2317 = vadd.f32 %v387, %v2316
  %v2318 = vpop.f32.mrf.mxu0
  %v2319 = vadd.f32 %v383, %v2318
  %v2320 = vpop.f32.mrf.mxu0
  %v2321 = vadd.f32 %v387, %v2320
  %2322 = vmatprep.mubr.bf16.mxu0 %v923
  %2323 = vmatmul.mubr.bf16.gmra.mxu0 %v922
  %v2324 = vpop.f32.mrf.mxu0
  %v2325 = vadd.f32 %v383, %v2324
  %v2326 = vpop.f32.mrf.mxu0
  %v2327 = vadd.f32 %v387, %v2326
  %v2328 = vpop.f32.mrf.mxu0
  %v2329 = vadd.f32 %v383, %v2328
  %v2330 = vpop.f32.mrf.mxu0
  %v2331 = vadd.f32 %v387, %v2330
  %2332 = vmatprep.mubr.bf16.mxu0 %v937
  %2333 = vmatmul.mubr.bf16.gmra.mxu0 %v936
  %v2334 = vpop.f32.mrf.mxu0
  %v2335 = vadd.f32 %v383, %v2334
  %v2336 = vpop.f32.mrf.mxu0
  %v2337 = vadd.f32 %v387, %v2336
  %v2338 = vpop.f32.mrf.mxu0
  %v2339 = vadd.f32 %v383, %v2338
  %v2340 = vpop.f32.mrf.mxu0
  %v2341 = vadd.f32 %v387, %v2340
  %2342 = vdwg.mxu0
  %2343 = vmatprep.subr.bf16.mxu0 %v1809
  %2344 = vmatpush1.bf16.msra.mxu0 %v1808
  %2345 = vmatprep.subr.bf16.mxu0 %v1807
  %2346 = vmatpush1.bf16.msra.mxu0 %v1806
  %2347 = vmatprep.subr.bf16.mxu0 %v1805
  %2348 = vmatpush1.bf16.msra.mxu0 %v1804
  %2349 = vmatprep.subr.bf16.mxu0 %v1803
  %2350 = vmatpush1.bf16.msra.mxu0 %v1802
  %2351 = vmatprep.subr.bf16.mxu0 %v1801
  %2352 = vmatpush1.bf16.msra.mxu0 %v1800
  %2353 = vmatprep.subr.bf16.mxu0 %v1799
  %2354 = vmatpush1.bf16.msra.mxu0 %v1798
  %2355 = vmatprep.subr.bf16.mxu0 %v1797
  %2356 = vmatpush1.bf16.msra.mxu0 %v1796
  %2357 = vmatprep.subr.bf16.mxu0 %v1795
  %2358 = vmatpush1.bf16.msra.mxu0 %v1794
  %2359 = vmatprep.subr.bf16.mxu0 %v1825
  %2360 = vmatpush2.bf16.msra.mxu0 %v1824
  %2361 = vmatprep.subr.bf16.mxu0 %v1823
  %2362 = vmatpush2.bf16.msra.mxu0 %v1822
  %2363 = vmatprep.subr.bf16.mxu0 %v1821
  %2364 = vmatpush2.bf16.msra.mxu0 %v1820
  %2365 = vmatprep.subr.bf16.mxu0 %v1819
  %2366 = vmatpush2.bf16.msra.mxu0 %v1818
  %2367 = vmatprep.subr.bf16.mxu0 %v1817
  %2368 = vmatpush2.bf16.msra.mxu0 %v1816
  %2369 = vmatprep.subr.bf16.mxu0 %v1815
  %2370 = vmatpush2.bf16.msra.mxu0 %v1814
  %2371 = vmatprep.subr.bf16.mxu0 %v1813
  %2372 = vmatpush2.bf16.msra.mxu0 %v1812
  %2373 = vmatprep.subr.bf16.mxu0 %v1811
  %2374 = vmatpush2.bf16.msra.mxu0 %v1810
  %2375 = vmatprep.mubr.bf16.mxu0 %v813
  %2376 = vmatmul.mubr.bf16.gmra.mxu0 %v812
  %v2377 = vpop.f32.mrf.mxu0
  %v2378 = vadd.f32 %v2245, %v2377
  %v2379 = vpop.f32.mrf.mxu0
  %v2380 = vadd.f32 %v2247, %v2379
  %v2381 = vpop.f32.mrf.mxu0
  %v2382 = vadd.f32 %v2249, %v2381
  %v2383 = vpop.f32.mrf.mxu0
  %v2384 = vadd.f32 %v2251, %v2383
  %2385 = vmatprep.mubr.bf16.mxu0 %v827
  %2386 = vmatmul.mubr.bf16.gmra.mxu0 %v826
  %v2387 = vpop.f32.mrf.mxu0
  %v2388 = vadd.f32 %v2255, %v2387
  %v2389 = vpop.f32.mrf.mxu0
  %v2390 = vadd.f32 %v2257, %v2389
  %v2391 = vpop.f32.mrf.mxu0
  %v2392 = vadd.f32 %v2259, %v2391
  %v2393 = vpop.f32.mrf.mxu0
  %v2394 = vadd.f32 %v2261, %v2393
  %2395 = vmatprep.mubr.bf16.mxu0 %v841
  %2396 = vmatmul.mubr.bf16.gmra.mxu0 %v840
  %v2397 = vpop.f32.mrf.mxu0
  %v2398 = vadd.f32 %v2265, %v2397
  %v2399 = vpop.f32.mrf.mxu0
  %v2400 = vadd.f32 %v2267, %v2399
  %v2401 = vpop.f32.mrf.mxu0
  %v2402 = vadd.f32 %v2269, %v2401
  %v2403 = vpop.f32.mrf.mxu0
  %v2404 = vadd.f32 %v2271, %v2403
  %2405 = vmatprep.mubr.bf16.mxu0 %v855
  %2406 = vmatmul.mubr.bf16.gmra.mxu0 %v854
  %v2407 = vpop.f32.mrf.mxu0
  %v2408 = vadd.f32 %v2275, %v2407
  %v2409 = vpop.f32.mrf.mxu0
  %v2410 = vadd.f32 %v2277, %v2409
  %v2411 = vpop.f32.mrf.mxu0
  %v2412 = vadd.f32 %v2279, %v2411
  %v2413 = vpop.f32.mrf.mxu0
  %v2414 = vadd.f32 %v2281, %v2413
  %2415 = vmatprep.mubr.bf16.mxu0 %v869
  %2416 = vmatmul.mubr.bf16.gmra.mxu0 %v868
  %v2417 = vpop.f32.mrf.mxu0
  %v2418 = vadd.f32 %v2285, %v2417
  %v2419 = vpop.f32.mrf.mxu0
  %v2420 = vadd.f32 %v2287, %v2419
  %v2421 = vpop.f32.mrf.mxu0
  %v2422 = vadd.f32 %v2289, %v2421
  %v2423 = vpop.f32.mrf.mxu0
  %v2424 = vadd.f32 %v2291, %v2423
  %2425 = vmatprep.mubr.bf16.mxu0 %v883
  %2426 = vmatmul.mubr.bf16.gmra.mxu0 %v882
  %v2427 = vpop.f32.mrf.mxu0
  %v2428 = vadd.f32 %v2295, %v2427
  %v2429 = vpop.f32.mrf.mxu0
  %v2430 = vadd.f32 %v2297, %v2429
  %v2431 = vpop.f32.mrf.mxu0
  %v2432 = vadd.f32 %v2299, %v2431
  %v2433 = vpop.f32.mrf.mxu0
  %v2434 = vadd.f32 %v2301, %v2433
  %2435 = vmatprep.mubr.bf16.mxu0 %v897
  %2436 = vmatmul.mubr.bf16.gmra.mxu0 %v896
  %v2437 = vpop.f32.mrf.mxu0
  %v2438 = vadd.f32 %v2305, %v2437
  %v2439 = vpop.f32.mrf.mxu0
  %v2440 = vadd.f32 %v2307, %v2439
  %v2441 = vpop.f32.mrf.mxu0
  %v2442 = vadd.f32 %v2309, %v2441
  %v2443 = vpop.f32.mrf.mxu0
  %v2444 = vadd.f32 %v2311, %v2443
  %2445 = vmatprep.mubr.bf16.mxu0 %v911
  %2446 = vmatmul.mubr.bf16.gmra.mxu0 %v910
  %v2447 = vpop.f32.mrf.mxu0
  %v2448 = vadd.f32 %v2315, %v2447
  %v2449 = vpop.f32.mrf.mxu0
  %v2450 = vadd.f32 %v2317, %v2449
  %v2451 = vpop.f32.mrf.mxu0
  %v2452 = vadd.f32 %v2319, %v2451
  %v2453 = vpop.f32.mrf.mxu0
  %v2454 = vadd.f32 %v2321, %v2453
  %2455 = vmatprep.mubr.bf16.mxu0 %v925
  %2456 = vmatmul.mubr.bf16.gmra.mxu0 %v924
  %v2457 = vpop.f32.mrf.mxu0
  %v2458 = vadd.f32 %v2325, %v2457
  %v2459 = vpop.f32.mrf.mxu0
  %v2460 = vadd.f32 %v2327, %v2459
  %v2461 = vpop.f32.mrf.mxu0
  %v2462 = vadd.f32 %v2329, %v2461
  %v2463 = vpop.f32.mrf.mxu0
  %v2464 = vadd.f32 %v2331, %v2463
  %2465 = vmatprep.mubr.bf16.mxu0 %v939
  %2466 = vmatmul.mubr.bf16.gmra.mxu0 %v938
  %v2467 = vpop.f32.mrf.mxu0
  %v2468 = vadd.f32 %v2335, %v2467
  %v2469 = vpop.f32.mrf.mxu0
  %v2470 = vadd.f32 %v2337, %v2469
  %v2471 = vpop.f32.mrf.mxu0
  %v2472 = vadd.f32 %v2339, %v2471
  %v2473 = vpop.f32.mrf.mxu0
  %v2474 = vadd.f32 %v2341, %v2473
  %2475 = vdwg.mxu0
  %2476 = vmatprep.subr.bf16.mxu0 %v1841
  %2477 = vmatpush1.bf16.msra.mxu0 %v1840
  %2478 = vmatprep.subr.bf16.mxu0 %v1839
  %2479 = vmatpush1.bf16.msra.mxu0 %v1838
  %2480 = vmatprep.subr.bf16.mxu0 %v1837
  %2481 = vmatpush1.bf16.msra.mxu0 %v1836
  %2482 = vmatprep.subr.bf16.mxu0 %v1835
  %2483 = vmatpush1.bf16.msra.mxu0 %v1834
  %2484 = vmatprep.subr.bf16.mxu0 %v1833
  %2485 = vmatpush1.bf16.msra.mxu0 %v1832
  %2486 = vmatprep.subr.bf16.mxu0 %v1831
  %2487 = vmatpush1.bf16.msra.mxu0 %v1830
  %2488 = vmatprep.subr.bf16.mxu0 %v1829
  %2489 = vmatpush1.bf16.msra.mxu0 %v1828
  %2490 = vmatprep.subr.bf16.mxu0 %v1827
  %2491 = vmatpush1.bf16.msra.mxu0 %v1826
  %2492 = vmatprep.subr.bf16.mxu0 %v1857
  %2493 = vmatpush2.bf16.msra.mxu0 %v1856
  %2494 = vmatprep.subr.bf16.mxu0 %v1855
  %2495 = vmatpush2.bf16.msra.mxu0 %v1854
  %2496 = vmatprep.subr.bf16.mxu0 %v1853
  %2497 = vmatpush2.bf16.msra.mxu0 %v1852
  %2498 = vmatprep.subr.bf16.mxu0 %v1851
  %2499 = vmatpush2.bf16.msra.mxu0 %v1850
  %2500 = vmatprep.subr.bf16.mxu0 %v1849
  %2501 = vmatpush2.bf16.msra.mxu0 %v1848
  %2502 = vmatprep.subr.bf16.mxu0 %v1847
  %2503 = vmatpush2.bf16.msra.mxu0 %v1846
  %2504 = vmatprep.subr.bf16.mxu0 %v1845
  %2505 = vmatpush2.bf16.msra.mxu0 %v1844
  %2506 = vmatprep.subr.bf16.mxu0 %v1843
  %2507 = vmatpush2.bf16.msra.mxu0 %v1842
  %2508 = vmatprep.mubr.bf16.mxu0 %v815
  %2509 = vmatmul.mubr.bf16.gmra.mxu0 %v814
  %v2510 = vpop.f32.mrf.mxu0
  %v2511 = vadd.f32 %v2378, %v2510
  %v2512 = vpop.f32.mrf.mxu0
  %v2513 = vadd.f32 %v2380, %v2512
  %v2514 = vpop.f32.mrf.mxu0
  %v2515 = vadd.f32 %v2382, %v2514
  %v2516 = vpop.f32.mrf.mxu0
  %v2517 = vadd.f32 %v2384, %v2516
  %2518 = vmatprep.mubr.bf16.mxu0 %v829
  %2519 = vmatmul.mubr.bf16.gmra.mxu0 %v828
  %v2520 = vpop.f32.mrf.mxu0
  %v2521 = vadd.f32 %v2388, %v2520
  %v2522 = vpop.f32.mrf.mxu0
  %v2523 = vadd.f32 %v2390, %v2522
  %v2524 = vpop.f32.mrf.mxu0
  %v2525 = vadd.f32 %v2392, %v2524
  %v2526 = vpop.f32.mrf.mxu0
  %v2527 = vadd.f32 %v2394, %v2526
  %2528 = vmatprep.mubr.bf16.mxu0 %v843
  %2529 = vmatmul.mubr.bf16.gmra.mxu0 %v842
  %v2530 = vpop.f32.mrf.mxu0
  %v2531 = vadd.f32 %v2398, %v2530
  %v2532 = vpop.f32.mrf.mxu0
  %v2533 = vadd.f32 %v2400, %v2532
  %v2534 = vpop.f32.mrf.mxu0
  %v2535 = vadd.f32 %v2402, %v2534
  %v2536 = vpop.f32.mrf.mxu0
  %v2537 = vadd.f32 %v2404, %v2536
  %2538 = vmatprep.mubr.bf16.mxu0 %v857
  %2539 = vmatmul.mubr.bf16.gmra.mxu0 %v856
  %v2540 = vpop.f32.mrf.mxu0
  %v2541 = vadd.f32 %v2408, %v2540
  %v2542 = vpop.f32.mrf.mxu0
  %v2543 = vadd.f32 %v2410, %v2542
  %v2544 = vpop.f32.mrf.mxu0
  %v2545 = vadd.f32 %v2412, %v2544
  %v2546 = vpop.f32.mrf.mxu0
  %v2547 = vadd.f32 %v2414, %v2546
  %2548 = vmatprep.mubr.bf16.mxu0 %v871
  %2549 = vmatmul.mubr.bf16.gmra.mxu0 %v870
  %v2550 = vpop.f32.mrf.mxu0
  %v2551 = vadd.f32 %v2418, %v2550
  %v2552 = vpop.f32.mrf.mxu0
  %v2553 = vadd.f32 %v2420, %v2552
  %v2554 = vpop.f32.mrf.mxu0
  %v2555 = vadd.f32 %v2422, %v2554
  %v2556 = vpop.f32.mrf.mxu0
  %v2557 = vadd.f32 %v2424, %v2556
  %2558 = vmatprep.mubr.bf16.mxu0 %v885
  %2559 = vmatmul.mubr.bf16.gmra.mxu0 %v884
  %v2560 = vpop.f32.mrf.mxu0
  %v2561 = vadd.f32 %v2428, %v2560
  %v2562 = vpop.f32.mrf.mxu0
  %v2563 = vadd.f32 %v2430, %v2562
  %v2564 = vpop.f32.mrf.mxu0
  %v2565 = vadd.f32 %v2432, %v2564
  %v2566 = vpop.f32.mrf.mxu0
  %v2567 = vadd.f32 %v2434, %v2566
  %2568 = vmatprep.mubr.bf16.mxu0 %v899
  %2569 = vmatmul.mubr.bf16.gmra.mxu0 %v898
  %v2570 = vpop.f32.mrf.mxu0
  %v2571 = vadd.f32 %v2438, %v2570
  %v2572 = vpop.f32.mrf.mxu0
  %v2573 = vadd.f32 %v2440, %v2572
  %v2574 = vpop.f32.mrf.mxu0
  %v2575 = vadd.f32 %v2442, %v2574
  %v2576 = vpop.f32.mrf.mxu0
  %v2577 = vadd.f32 %v2444, %v2576
  %2578 = vmatprep.mubr.bf16.mxu0 %v913
  %2579 = vmatmul.mubr.bf16.gmra.mxu0 %v912
  %v2580 = vpop.f32.mrf.mxu0
  %v2581 = vadd.f32 %v2448, %v2580
  %v2582 = vpop.f32.mrf.mxu0
  %v2583 = vadd.f32 %v2450, %v2582
  %v2584 = vpop.f32.mrf.mxu0
  %v2585 = vadd.f32 %v2452, %v2584
  %v2586 = vpop.f32.mrf.mxu0
  %v2587 = vadd.f32 %v2454, %v2586
  %2588 = vmatprep.mubr.bf16.mxu0 %v927
  %2589 = vmatmul.mubr.bf16.gmra.mxu0 %v926
  %v2590 = vpop.f32.mrf.mxu0
  %v2591 = vadd.f32 %v2458, %v2590
  %v2592 = vpop.f32.mrf.mxu0
  %v2593 = vadd.f32 %v2460, %v2592
  %v2594 = vpop.f32.mrf.mxu0
  %v2595 = vadd.f32 %v2462, %v2594
  %v2596 = vpop.f32.mrf.mxu0
  %v2597 = vadd.f32 %v2464, %v2596
  %2598 = vmatprep.mubr.bf16.mxu0 %v941
  %2599 = vmatmul.mubr.bf16.gmra.mxu0 %v940
  %v2600 = vpop.f32.mrf.mxu0
  %v2601 = vadd.f32 %v2468, %v2600
  %v2602 = vpop.f32.mrf.mxu0
  %v2603 = vadd.f32 %v2470, %v2602
  %v2604 = vpop.f32.mrf.mxu0
  %v2605 = vadd.f32 %v2472, %v2604
  %v2606 = vpop.f32.mrf.mxu0
  %v2607 = vadd.f32 %v2474, %v2606
  %2608 = vdwg.mxu0
  %2609 = vmatprep.subr.bf16.mxu0 %v1873
  %2610 = vmatpush1.bf16.msra.mxu0 %v1872
  %2611 = vmatprep.subr.bf16.mxu0 %v1871
  %2612 = vmatpush1.bf16.msra.mxu0 %v1870
  %2613 = vmatprep.subr.bf16.mxu0 %v1869
  %2614 = vmatpush1.bf16.msra.mxu0 %v1868
  %2615 = vmatprep.subr.bf16.mxu0 %v1867
  %2616 = vmatpush1.bf16.msra.mxu0 %v1866
  %2617 = vmatprep.subr.bf16.mxu0 %v1865
  %2618 = vmatpush1.bf16.msra.mxu0 %v1864
  %2619 = vmatprep.subr.bf16.mxu0 %v1863
  %2620 = vmatpush1.bf16.msra.mxu0 %v1862
  %2621 = vmatprep.subr.bf16.mxu0 %v1861
  %2622 = vmatpush1.bf16.msra.mxu0 %v1860
  %2623 = vmatprep.subr.bf16.mxu0 %v1859
  %2624 = vmatpush1.bf16.msra.mxu0 %v1858
  %2625 = vmatprep.subr.bf16.mxu0 %v1889
  %2626 = vmatpush2.bf16.msra.mxu0 %v1888
  %2627 = vmatprep.subr.bf16.mxu0 %v1887
  %2628 = vmatpush2.bf16.msra.mxu0 %v1886
  %2629 = vmatprep.subr.bf16.mxu0 %v1885
  %2630 = vmatpush2.bf16.msra.mxu0 %v1884
  %2631 = vmatprep.subr.bf16.mxu0 %v1883
  %2632 = vmatpush2.bf16.msra.mxu0 %v1882
  %2633 = vmatprep.subr.bf16.mxu0 %v1881
  %2634 = vmatpush2.bf16.msra.mxu0 %v1880
  %2635 = vmatprep.subr.bf16.mxu0 %v1879
  %2636 = vmatpush2.bf16.msra.mxu0 %v1878
  %2637 = vmatprep.subr.bf16.mxu0 %v1877
  %2638 = vmatpush2.bf16.msra.mxu0 %v1876
  %2639 = vmatprep.subr.bf16.mxu0 %v1875
  %2640 = vmatpush2.bf16.msra.mxu0 %v1874
  %2641 = vmatprep.mubr.bf16.mxu0 %v817
  %2642 = vmatmul.mubr.bf16.gmra.mxu0 %v816
  %v2643 = vpop.f32.mrf.mxu0
  %v2644 = vadd.f32 %v2511, %v2643
  %v2645 = vpop.f32.mrf.mxu0
  %v2646 = vadd.f32 %v2513, %v2645
  %v2647 = vpop.f32.mrf.mxu0
  %v2648 = vadd.f32 %v2515, %v2647
  %v2649 = vpop.f32.mrf.mxu0
  %v2650 = vadd.f32 %v2517, %v2649
  %2651 = vmatprep.mubr.bf16.mxu0 %v831
  %2652 = vmatmul.mubr.bf16.gmra.mxu0 %v830
  %v2653 = vpop.f32.mrf.mxu0
  %v2654 = vadd.f32 %v2521, %v2653
  %v2655 = vpop.f32.mrf.mxu0
  %v2656 = vadd.f32 %v2523, %v2655
  %v2657 = vpop.f32.mrf.mxu0
  %v2658 = vadd.f32 %v2525, %v2657
  %v2659 = vpop.f32.mrf.mxu0
  %v2660 = vadd.f32 %v2527, %v2659
  %2661 = vmatprep.mubr.bf16.mxu0 %v845
  %2662 = vmatmul.mubr.bf16.gmra.mxu0 %v844
  %v2663 = vpop.f32.mrf.mxu0
  %v2664 = vadd.f32 %v2531, %v2663
  %v2665 = vpop.f32.mrf.mxu0
  %v2666 = vadd.f32 %v2533, %v2665
  %v2667 = vpop.f32.mrf.mxu0
  %v2668 = vadd.f32 %v2535, %v2667
  %v2669 = vpop.f32.mrf.mxu0
  %v2670 = vadd.f32 %v2537, %v2669
  %2671 = vmatprep.mubr.bf16.mxu0 %v859
  %2672 = vmatmul.mubr.bf16.gmra.mxu0 %v858
  %v2673 = vpop.f32.mrf.mxu0
  %v2674 = vadd.f32 %v2541, %v2673
  %v2675 = vpop.f32.mrf.mxu0
  %v2676 = vadd.f32 %v2543, %v2675
  %v2677 = vpop.f32.mrf.mxu0
  %v2678 = vadd.f32 %v2545, %v2677
  %v2679 = vpop.f32.mrf.mxu0
  %v2680 = vadd.f32 %v2547, %v2679
  %2681 = vmatprep.mubr.bf16.mxu0 %v873
  %2682 = vmatmul.mubr.bf16.gmra.mxu0 %v872
  %v2683 = vpop.f32.mrf.mxu0
  %v2684 = vadd.f32 %v2551, %v2683
  %v2685 = vpop.f32.mrf.mxu0
  %v2686 = vadd.f32 %v2553, %v2685
  %v2687 = vpop.f32.mrf.mxu0
  %v2688 = vadd.f32 %v2555, %v2687
  %v2689 = vpop.f32.mrf.mxu0
  %v2690 = vadd.f32 %v2557, %v2689
  %2691 = vmatprep.mubr.bf16.mxu0 %v887
  %2692 = vmatmul.mubr.bf16.gmra.mxu0 %v886
  %v2693 = vpop.f32.mrf.mxu0
  %v2694 = vadd.f32 %v2561, %v2693
  %v2695 = vpop.f32.mrf.mxu0
  %v2696 = vadd.f32 %v2563, %v2695
  %v2697 = vpop.f32.mrf.mxu0
  %v2698 = vadd.f32 %v2565, %v2697
  %v2699 = vpop.f32.mrf.mxu0
  %v2700 = vadd.f32 %v2567, %v2699
  %2701 = vmatprep.mubr.bf16.mxu0 %v901
  %2702 = vmatmul.mubr.bf16.gmra.mxu0 %v900
  %v2703 = vpop.f32.mrf.mxu0
  %v2704 = vadd.f32 %v2571, %v2703
  %v2705 = vpop.f32.mrf.mxu0
  %v2706 = vadd.f32 %v2573, %v2705
  %v2707 = vpop.f32.mrf.mxu0
  %v2708 = vadd.f32 %v2575, %v2707
  %v2709 = vpop.f32.mrf.mxu0
  %v2710 = vadd.f32 %v2577, %v2709
  %2711 = vmatprep.mubr.bf16.mxu0 %v915
  %2712 = vmatmul.mubr.bf16.gmra.mxu0 %v914
  %v2713 = vpop.f32.mrf.mxu0
  %v2714 = vadd.f32 %v2581, %v2713
  %v2715 = vpop.f32.mrf.mxu0
  %v2716 = vadd.f32 %v2583, %v2715
  %v2717 = vpop.f32.mrf.mxu0
  %v2718 = vadd.f32 %v2585, %v2717
  %v2719 = vpop.f32.mrf.mxu0
  %v2720 = vadd.f32 %v2587, %v2719
  %2721 = vmatprep.mubr.bf16.mxu0 %v929
  %2722 = vmatmul.mubr.bf16.gmra.mxu0 %v928
  %v2723 = vpop.f32.mrf.mxu0
  %v2724 = vadd.f32 %v2591, %v2723
  %v2725 = vpop.f32.mrf.mxu0
  %v2726 = vadd.f32 %v2593, %v2725
  %v2727 = vpop.f32.mrf.mxu0
  %v2728 = vadd.f32 %v2595, %v2727
  %v2729 = vpop.f32.mrf.mxu0
  %v2730 = vadd.f32 %v2597, %v2729
  %2731 = vmatprep.mubr.bf16.mxu0 %v943
  %2732 = vmatmul.mubr.bf16.gmra.mxu0 %v942
  %v2733 = vpop.f32.mrf.mxu0
  %v2734 = vadd.f32 %v2601, %v2733
  %v2735 = vpop.f32.mrf.mxu0
  %v2736 = vadd.f32 %v2603, %v2735
  %v2737 = vpop.f32.mrf.mxu0
  %v2738 = vadd.f32 %v2605, %v2737
  %v2739 = vpop.f32.mrf.mxu0
  %v2740 = vadd.f32 %v2607, %v2739
  %2741 = vdwg.mxu0
  %2742 = vmatprep.subr.bf16.mxu0 %v1905
  %2743 = vmatpush1.bf16.msra.mxu0 %v1904
  %2744 = vmatprep.subr.bf16.mxu0 %v1903
  %2745 = vmatpush1.bf16.msra.mxu0 %v1902
  %2746 = vmatprep.subr.bf16.mxu0 %v1901
  %2747 = vmatpush1.bf16.msra.mxu0 %v1900
  %2748 = vmatprep.subr.bf16.mxu0 %v1899
  %2749 = vmatpush1.bf16.msra.mxu0 %v1898
  %2750 = vmatprep.subr.bf16.mxu0 %v1897
  %2751 = vmatpush1.bf16.msra.mxu0 %v1896
  %2752 = vmatprep.subr.bf16.mxu0 %v1895
  %2753 = vmatpush1.bf16.msra.mxu0 %v1894
  %2754 = vmatprep.subr.bf16.mxu0 %v1893
  %2755 = vmatpush1.bf16.msra.mxu0 %v1892
  %2756 = vmatprep.subr.bf16.mxu0 %v1891
  %2757 = vmatpush1.bf16.msra.mxu0 %v1890
  %2758 = vmatprep.subr.bf16.mxu0 %v1921
  %2759 = vmatpush2.bf16.msra.mxu0 %v1920
  %2760 = vmatprep.subr.bf16.mxu0 %v1919
  %2761 = vmatpush2.bf16.msra.mxu0 %v1918
  %2762 = vmatprep.subr.bf16.mxu0 %v1917
  %2763 = vmatpush2.bf16.msra.mxu0 %v1916
  %2764 = vmatprep.subr.bf16.mxu0 %v1915
  %2765 = vmatpush2.bf16.msra.mxu0 %v1914
  %2766 = vmatprep.subr.bf16.mxu0 %v1913
  %2767 = vmatpush2.bf16.msra.mxu0 %v1912
  %2768 = vmatprep.subr.bf16.mxu0 %v1911
  %2769 = vmatpush2.bf16.msra.mxu0 %v1910
  %2770 = vmatprep.subr.bf16.mxu0 %v1909
  %2771 = vmatpush2.bf16.msra.mxu0 %v1908
  %2772 = vmatprep.subr.bf16.mxu0 %v1907
  %2773 = vmatpush2.bf16.msra.mxu0 %v1906
  %2774 = vmatprep.mubr.bf16.mxu0 %v819
  %2775 = vmatmul.mubr.bf16.gmra.mxu0 %v818
  %v2776 = vpop.f32.mrf.mxu0
  %v2777 = vadd.f32 %v2644, %v2776
  %v2778 = vpop.f32.mrf.mxu0
  %v2779 = vadd.f32 %v2646, %v2778
  %v2780 = vpop.f32.mrf.mxu0
  %v2781 = vadd.f32 %v2648, %v2780
  %v2782 = vpop.f32.mrf.mxu0
  %v2783 = vadd.f32 %v2650, %v2782
  %2784 = vmatprep.mubr.bf16.mxu0 %v833
  %2785 = vmatmul.mubr.bf16.gmra.mxu0 %v832
  %v2786 = vpop.f32.mrf.mxu0
  %v2787 = vadd.f32 %v2654, %v2786
  %v2788 = vpop.f32.mrf.mxu0
  %v2789 = vadd.f32 %v2656, %v2788
  %v2790 = vpop.f32.mrf.mxu0
  %v2791 = vadd.f32 %v2658, %v2790
  %v2792 = vpop.f32.mrf.mxu0
  %v2793 = vadd.f32 %v2660, %v2792
  %2794 = vmatprep.mubr.bf16.mxu0 %v847
  %2795 = vmatmul.mubr.bf16.gmra.mxu0 %v846
  %v2796 = vpop.f32.mrf.mxu0
  %v2797 = vadd.f32 %v2664, %v2796
  %v2798 = vpop.f32.mrf.mxu0
  %v2799 = vadd.f32 %v2666, %v2798
  %v2800 = vpop.f32.mrf.mxu0
  %v2801 = vadd.f32 %v2668, %v2800
  %v2802 = vpop.f32.mrf.mxu0
  %v2803 = vadd.f32 %v2670, %v2802
  %2804 = vmatprep.mubr.bf16.mxu0 %v861
  %2805 = vmatmul.mubr.bf16.gmra.mxu0 %v860
  %v2806 = vpop.f32.mrf.mxu0
  %v2807 = vadd.f32 %v2674, %v2806
  %v2808 = vpop.f32.mrf.mxu0
  %v2809 = vadd.f32 %v2676, %v2808
  %v2810 = vpop.f32.mrf.mxu0
  %v2811 = vadd.f32 %v2678, %v2810
  %v2812 = vpop.f32.mrf.mxu0
  %v2813 = vadd.f32 %v2680, %v2812
  %2814 = vmatprep.mubr.bf16.mxu0 %v875
  %2815 = vmatmul.mubr.bf16.gmra.mxu0 %v874
  %v2816 = vpop.f32.mrf.mxu0
  %v2817 = vadd.f32 %v2684, %v2816
  %v2818 = vpop.f32.mrf.mxu0
  %v2819 = vadd.f32 %v2686, %v2818
  %v2820 = vpop.f32.mrf.mxu0
  %v2821 = vadd.f32 %v2688, %v2820
  %v2822 = vpop.f32.mrf.mxu0
  %v2823 = vadd.f32 %v2690, %v2822
  %2824 = vmatprep.mubr.bf16.mxu0 %v889
  %2825 = vmatmul.mubr.bf16.gmra.mxu0 %v888
  %v2826 = vpop.f32.mrf.mxu0
  %v2827 = vadd.f32 %v2694, %v2826
  %v2828 = vpop.f32.mrf.mxu0
  %v2829 = vadd.f32 %v2696, %v2828
  %v2830 = vpop.f32.mrf.mxu0
  %v2831 = vadd.f32 %v2698, %v2830
  %v2832 = vpop.f32.mrf.mxu0
  %v2833 = vadd.f32 %v2700, %v2832
  %2834 = vmatprep.mubr.bf16.mxu0 %v903
  %2835 = vmatmul.mubr.bf16.gmra.mxu0 %v902
  %v2836 = vpop.f32.mrf.mxu0
  %v2837 = vadd.f32 %v2704, %v2836
  %v2838 = vpop.f32.mrf.mxu0
  %v2839 = vadd.f32 %v2706, %v2838
  %v2840 = vpop.f32.mrf.mxu0
  %v2841 = vadd.f32 %v2708, %v2840
  %v2842 = vpop.f32.mrf.mxu0
  %v2843 = vadd.f32 %v2710, %v2842
  %2844 = vmatprep.mubr.bf16.mxu0 %v917
  %2845 = vmatmul.mubr.bf16.gmra.mxu0 %v916
  %v2846 = vpop.f32.mrf.mxu0
  %v2847 = vadd.f32 %v2714, %v2846
  %v2848 = vpop.f32.mrf.mxu0
  %v2849 = vadd.f32 %v2716, %v2848
  %v2850 = vpop.f32.mrf.mxu0
  %v2851 = vadd.f32 %v2718, %v2850
  %v2852 = vpop.f32.mrf.mxu0
  %v2853 = vadd.f32 %v2720, %v2852
  %2854 = vmatprep.mubr.bf16.mxu0 %v931
  %2855 = vmatmul.mubr.bf16.gmra.mxu0 %v930
  %v2856 = vpop.f32.mrf.mxu0
  %v2857 = vadd.f32 %v2724, %v2856
  %v2858 = vpop.f32.mrf.mxu0
  %v2859 = vadd.f32 %v2726, %v2858
  %v2860 = vpop.f32.mrf.mxu0
  %v2861 = vadd.f32 %v2728, %v2860
  %v2862 = vpop.f32.mrf.mxu0
  %v2863 = vadd.f32 %v2730, %v2862
  %2864 = vmatprep.mubr.bf16.mxu0 %v945
  %2865 = vmatmul.mubr.bf16.gmra.mxu0 %v944
  %v2866 = vpop.f32.mrf.mxu0
  %v2867 = vadd.f32 %v2734, %v2866
  %v2868 = vpop.f32.mrf.mxu0
  %v2869 = vadd.f32 %v2736, %v2868
  %v2870 = vpop.f32.mrf.mxu0
  %v2871 = vadd.f32 %v2738, %v2870
  %v2872 = vpop.f32.mrf.mxu0
  %v2873 = vadd.f32 %v2740, %v2872
  %2874 = vdwg.mxu0
  %2875 = vmatprep.subr.bf16.mxu0 %v1937
  %2876 = vmatpush1.bf16.msra.mxu0 %v1936
  %2877 = vmatprep.subr.bf16.mxu0 %v1935
  %2878 = vmatpush1.bf16.msra.mxu0 %v1934
  %2879 = vmatprep.subr.bf16.mxu0 %v1933
  %2880 = vmatpush1.bf16.msra.mxu0 %v1932
  %2881 = vmatprep.subr.bf16.mxu0 %v1931
  %2882 = vmatpush1.bf16.msra.mxu0 %v1930
  %2883 = vmatprep.subr.bf16.mxu0 %v1929
  %2884 = vmatpush1.bf16.msra.mxu0 %v1928
  %2885 = vmatprep.subr.bf16.mxu0 %v1927
  %2886 = vmatpush1.bf16.msra.mxu0 %v1926
  %2887 = vmatprep.subr.bf16.mxu0 %v1925
  %2888 = vmatpush1.bf16.msra.mxu0 %v1924
  %2889 = vmatprep.subr.bf16.mxu0 %v1923
  %2890 = vmatpush1.bf16.msra.mxu0 %v1922
  %2891 = vmatprep.subr.bf16.mxu0 %v1953
  %2892 = vmatpush2.bf16.msra.mxu0 %v1952
  %2893 = vmatprep.subr.bf16.mxu0 %v1951
  %2894 = vmatpush2.bf16.msra.mxu0 %v1950
  %2895 = vmatprep.subr.bf16.mxu0 %v1949
  %2896 = vmatpush2.bf16.msra.mxu0 %v1948
  %2897 = vmatprep.subr.bf16.mxu0 %v1947
  %2898 = vmatpush2.bf16.msra.mxu0 %v1946
  %2899 = vmatprep.subr.bf16.mxu0 %v1945
  %2900 = vmatpush2.bf16.msra.mxu0 %v1944
  %2901 = vmatprep.subr.bf16.mxu0 %v1943
  %2902 = vmatpush2.bf16.msra.mxu0 %v1942
  %2903 = vmatprep.subr.bf16.mxu0 %v1941
  %2904 = vmatpush2.bf16.msra.mxu0 %v1940
  %2905 = vmatprep.subr.bf16.mxu0 %v1939
  %2906 = vmatpush2.bf16.msra.mxu0 %v1938
  %2907 = vmatprep.mubr.bf16.mxu0 %v821
  %2908 = vmatmul.mubr.bf16.gmra.mxu0 %v820
  %v2909 = vpop.f32.mrf.mxu0
  %v2910 = vadd.f32 %v2777, %v2909
  %v2911 = vpop.f32.mrf.mxu0
  %v2912 = vadd.f32 %v2779, %v2911
  %v2913 = vpop.f32.mrf.mxu0
  %v2914 = vadd.f32 %v2781, %v2913
  %v2915 = vpop.f32.mrf.mxu0
  %v2916 = vadd.f32 %v2783, %v2915
  %2917 = vmatprep.mubr.bf16.mxu0 %v835
  %2918 = vmatmul.mubr.bf16.gmra.mxu0 %v834
  %v2919 = vpop.f32.mrf.mxu0
  %v2920 = vadd.f32 %v2787, %v2919
  %v2921 = vpop.f32.mrf.mxu0
  %v2922 = vadd.f32 %v2789, %v2921
  %v2923 = vpop.f32.mrf.mxu0
  %v2924 = vadd.f32 %v2791, %v2923
  %v2925 = vpop.f32.mrf.mxu0
  %v2926 = vadd.f32 %v2793, %v2925
  %2927 = vmatprep.mubr.bf16.mxu0 %v849
  %2928 = vmatmul.mubr.bf16.gmra.mxu0 %v848
  %v2929 = vpop.f32.mrf.mxu0
  %v2930 = vadd.f32 %v2797, %v2929
  %v2931 = vpop.f32.mrf.mxu0
  %v2932 = vadd.f32 %v2799, %v2931
  %v2933 = vpop.f32.mrf.mxu0
  %v2934 = vadd.f32 %v2801, %v2933
  %v2935 = vpop.f32.mrf.mxu0
  %v2936 = vadd.f32 %v2803, %v2935
  %2937 = vmatprep.mubr.bf16.mxu0 %v863
  %2938 = vmatmul.mubr.bf16.gmra.mxu0 %v862
  %v2939 = vpop.f32.mrf.mxu0
  %v2940 = vadd.f32 %v2807, %v2939
  %v2941 = vpop.f32.mrf.mxu0
  %v2942 = vadd.f32 %v2809, %v2941
  %v2943 = vpop.f32.mrf.mxu0
  %v2944 = vadd.f32 %v2811, %v2943
  %v2945 = vpop.f32.mrf.mxu0
  %v2946 = vadd.f32 %v2813, %v2945
  %2947 = vmatprep.mubr.bf16.mxu0 %v877
  %2948 = vmatmul.mubr.bf16.gmra.mxu0 %v876
  %v2949 = vpop.f32.mrf.mxu0
  %v2950 = vadd.f32 %v2817, %v2949
  %v2951 = vpop.f32.mrf.mxu0
  %v2952 = vadd.f32 %v2819, %v2951
  %v2953 = vpop.f32.mrf.mxu0
  %v2954 = vadd.f32 %v2821, %v2953
  %v2955 = vpop.f32.mrf.mxu0
  %v2956 = vadd.f32 %v2823, %v2955
  %2957 = vmatprep.mubr.bf16.mxu0 %v891
  %2958 = vmatmul.mubr.bf16.gmra.mxu0 %v890
  %v2959 = vpop.f32.mrf.mxu0
  %v2960 = vadd.f32 %v2827, %v2959
  %v2961 = vpop.f32.mrf.mxu0
  %v2962 = vadd.f32 %v2829, %v2961
  %v2963 = vpop.f32.mrf.mxu0
  %v2964 = vadd.f32 %v2831, %v2963
  %v2965 = vpop.f32.mrf.mxu0
  %v2966 = vadd.f32 %v2833, %v2965
  %2967 = vmatprep.mubr.bf16.mxu0 %v905
  %2968 = vmatmul.mubr.bf16.gmra.mxu0 %v904
  %v2969 = vpop.f32.mrf.mxu0
  %v2970 = vadd.f32 %v2837, %v2969
  %v2971 = vpop.f32.mrf.mxu0
  %v2972 = vadd.f32 %v2839, %v2971
  %v2973 = vpop.f32.mrf.mxu0
  %v2974 = vadd.f32 %v2841, %v2973
  %v2975 = vpop.f32.mrf.mxu0
  %v2976 = vadd.f32 %v2843, %v2975
  %2977 = vmatprep.mubr.bf16.mxu0 %v919
  %2978 = vmatmul.mubr.bf16.gmra.mxu0 %v918
  %v2979 = vpop.f32.mrf.mxu0
  %v2980 = vadd.f32 %v2847, %v2979
  %v2981 = vpop.f32.mrf.mxu0
  %v2982 = vadd.f32 %v2849, %v2981
  %v2983 = vpop.f32.mrf.mxu0
  %v2984 = vadd.f32 %v2851, %v2983
  %v2985 = vpop.f32.mrf.mxu0
  %v2986 = vadd.f32 %v2853, %v2985
  %2987 = vmatprep.mubr.bf16.mxu0 %v933
  %2988 = vmatmul.mubr.bf16.gmra.mxu0 %v932
  %v2989 = vpop.f32.mrf.mxu0
  %v2990 = vadd.f32 %v2857, %v2989
  %v2991 = vpop.f32.mrf.mxu0
  %v2992 = vadd.f32 %v2859, %v2991
  %v2993 = vpop.f32.mrf.mxu0
  %v2994 = vadd.f32 %v2861, %v2993
  %v2995 = vpop.f32.mrf.mxu0
  %v2996 = vadd.f32 %v2863, %v2995
  %2997 = vmatprep.mubr.bf16.mxu0 %v947
  %2998 = vmatmul.mubr.bf16.gmra.mxu0 %v946
  %v2999 = vpop.f32.mrf.mxu0
  %v3000 = vadd.f32 %v2867, %v2999
  %v3001 = vpop.f32.mrf.mxu0
  %v3002 = vadd.f32 %v2869, %v3001
  %v3003 = vpop.f32.mrf.mxu0
  %v3004 = vadd.f32 %v2871, %v3003
  %v3005 = vpop.f32.mrf.mxu0
  %v3006 = vadd.f32 %v2873, %v3005
  %3007 = vdwg.mxu0
  %3008 = vmatprep.subr.bf16.mxu0 %v1969
  %3009 = vmatpush1.bf16.msra.mxu0 %v1968
  %3010 = vmatprep.subr.bf16.mxu0 %v1967
  %3011 = vmatpush1.bf16.msra.mxu0 %v1966
  %3012 = vmatprep.subr.bf16.mxu0 %v1965
  %3013 = vmatpush1.bf16.msra.mxu0 %v1964
  %3014 = vmatprep.subr.bf16.mxu0 %v1963
  %3015 = vmatpush1.bf16.msra.mxu0 %v1962
  %3016 = vmatprep.subr.bf16.mxu0 %v1961
  %3017 = vmatpush1.bf16.msra.mxu0 %v1960
  %3018 = vmatprep.subr.bf16.mxu0 %v1959
  %3019 = vmatpush1.bf16.msra.mxu0 %v1958
  %3020 = vmatprep.subr.bf16.mxu0 %v1957
  %3021 = vmatpush1.bf16.msra.mxu0 %v1956
  %3022 = vmatprep.subr.bf16.mxu0 %v1955
  %3023 = vmatpush1.bf16.msra.mxu0 %v1954
  %3024 = vmatprep.subr.bf16.mxu0 %v1985
  %3025 = vmatpush2.bf16.msra.mxu0 %v1984
  %3026 = vmatprep.subr.bf16.mxu0 %v1983
  %3027 = vmatpush2.bf16.msra.mxu0 %v1982
  %3028 = vmatprep.subr.bf16.mxu0 %v1981
  %3029 = vmatpush2.bf16.msra.mxu0 %v1980
  %3030 = vmatprep.subr.bf16.mxu0 %v1979
  %3031 = vmatpush2.bf16.msra.mxu0 %v1978
  %3032 = vmatprep.subr.bf16.mxu0 %v1977
  %3033 = vmatpush2.bf16.msra.mxu0 %v1976
  %3034 = vmatprep.subr.bf16.mxu0 %v1975
  %3035 = vmatpush2.bf16.msra.mxu0 %v1974
  %3036 = vmatprep.subr.bf16.mxu0 %v1973
  %3037 = vmatpush2.bf16.msra.mxu0 %v1972
  %3038 = vmatprep.subr.bf16.mxu0 %v1971
  %3039 = vmatpush2.bf16.msra.mxu0 %v1970
  %3040 = vmatprep.mubr.bf16.mxu0 %v823
  %3041 = vmatmul.mubr.bf16.gmra.mxu0 %v822
  %v3042 = vpop.f32.mrf.mxu0
  %v3043 = vadd.f32 %v2910, %v3042
  %v3044 = vpop.f32.mrf.mxu0
  %v3045 = vadd.f32 %v2912, %v3044
  %v3046 = vpop.f32.mrf.mxu0
  %v3047 = vadd.f32 %v2914, %v3046
  %v3048 = vpop.f32.mrf.mxu0
  %v3049 = vadd.f32 %v2916, %v3048
  %3050 = vmatprep.mubr.bf16.mxu0 %v837
  %3051 = vmatmul.mubr.bf16.gmra.mxu0 %v836
  %v3052 = vpop.f32.mrf.mxu0
  %v3053 = vadd.f32 %v2920, %v3052
  %v3054 = vpop.f32.mrf.mxu0
  %v3055 = vadd.f32 %v2922, %v3054
  %v3056 = vpop.f32.mrf.mxu0
  %v3057 = vadd.f32 %v2924, %v3056
  %v3058 = vpop.f32.mrf.mxu0
  %v3059 = vadd.f32 %v2926, %v3058
  %3060 = vmatprep.mubr.bf16.mxu0 %v851
  %3061 = vmatmul.mubr.bf16.gmra.mxu0 %v850
  %v3062 = vpop.f32.mrf.mxu0
  %v3063 = vadd.f32 %v2930, %v3062
  %v3064 = vpop.f32.mrf.mxu0
  %v3065 = vadd.f32 %v2932, %v3064
  %v3066 = vpop.f32.mrf.mxu0
  %v3067 = vadd.f32 %v2934, %v3066
  %v3068 = vpop.f32.mrf.mxu0
  %v3069 = vadd.f32 %v2936, %v3068
  %3070 = vmatprep.mubr.bf16.mxu0 %v865
  %3071 = vmatmul.mubr.bf16.gmra.mxu0 %v864
  %v3072 = vpop.f32.mrf.mxu0
  %v3073 = vadd.f32 %v2940, %v3072
  %v3074 = vpop.f32.mrf.mxu0
  %v3075 = vadd.f32 %v2942, %v3074
  %v3076 = vpop.f32.mrf.mxu0
  %v3077 = vadd.f32 %v2944, %v3076
  %v3078 = vpop.f32.mrf.mxu0
  %v3079 = vadd.f32 %v2946, %v3078
  %3080 = vmatprep.mubr.bf16.mxu0 %v879
  %3081 = vmatmul.mubr.bf16.gmra.mxu0 %v878
  %v3082 = vpop.f32.mrf.mxu0
  %v3083 = vadd.f32 %v2950, %v3082
  %v3084 = vpop.f32.mrf.mxu0
  %v3085 = vadd.f32 %v2952, %v3084
  %v3086 = vpop.f32.mrf.mxu0
  %v3087 = vadd.f32 %v2954, %v3086
  %v3088 = vpop.f32.mrf.mxu0
  %v3089 = vadd.f32 %v2956, %v3088
  %3090 = vmatprep.mubr.bf16.mxu0 %v893
  %3091 = vmatmul.mubr.bf16.gmra.mxu0 %v892
  %v3092 = vpop.f32.mrf.mxu0
  %v3093 = vadd.f32 %v2960, %v3092
  %v3094 = vpop.f32.mrf.mxu0
  %v3095 = vadd.f32 %v2962, %v3094
  %v3096 = vpop.f32.mrf.mxu0
  %v3097 = vadd.f32 %v2964, %v3096
  %v3098 = vpop.f32.mrf.mxu0
  %v3099 = vadd.f32 %v2966, %v3098
  %3100 = vmatprep.mubr.bf16.mxu0 %v907
  %3101 = vmatmul.mubr.bf16.gmra.mxu0 %v906
  %v3102 = vpop.f32.mrf.mxu0
  %v3103 = vadd.f32 %v2970, %v3102
  %v3104 = vpop.f32.mrf.mxu0
  %v3105 = vadd.f32 %v2972, %v3104
  %v3106 = vpop.f32.mrf.mxu0
  %v3107 = vadd.f32 %v2974, %v3106
  %v3108 = vpop.f32.mrf.mxu0
  %v3109 = vadd.f32 %v2976, %v3108
  %3110 = vmatprep.mubr.bf16.mxu0 %v921
  %3111 = vmatmul.mubr.bf16.gmra.mxu0 %v920
  %v3112 = vpop.f32.mrf.mxu0
  %v3113 = vadd.f32 %v2980, %v3112
  %v3114 = vpop.f32.mrf.mxu0
  %v3115 = vadd.f32 %v2982, %v3114
  %v3116 = vpop.f32.mrf.mxu0
  %v3117 = vadd.f32 %v2984, %v3116
  %v3118 = vpop.f32.mrf.mxu0
  %v3119 = vadd.f32 %v2986, %v3118
  %3120 = vmatprep.mubr.bf16.mxu0 %v935
  %3121 = vmatmul.mubr.bf16.gmra.mxu0 %v934
  %v3122 = vpop.f32.mrf.mxu0
  %v3123 = vadd.f32 %v2990, %v3122
  %v3124 = vpop.f32.mrf.mxu0
  %v3125 = vadd.f32 %v2992, %v3124
  %v3126 = vpop.f32.mrf.mxu0
  %v3127 = vadd.f32 %v2994, %v3126
  %v3128 = vpop.f32.mrf.mxu0
  %v3129 = vadd.f32 %v2996, %v3128
  %3130 = vmatprep.mubr.bf16.mxu0 %v949
  %3131 = vmatmul.mubr.bf16.gmra.mxu0 %v948
  %v3132 = vpop.f32.mrf.mxu0
  %v3133 = vadd.f32 %v3000, %v3132
  %v3134 = vpop.f32.mrf.mxu0
  %v3135 = vadd.f32 %v3002, %v3134
  %v3136 = vpop.f32.mrf.mxu0
  %v3137 = vadd.f32 %v3004, %v3136
  %v3138 = vpop.f32.mrf.mxu0
  %v3139 = vadd.f32 %v3006, %v3138
  %3140 = vdwg.mxu0
  %3141 = vst [vmem:[%s3] sm:$0xff] %v3043
  %3142 = vst [vmem:[%s3 + $0x8] sm:$0xff] %v3045
  %3143 = vst [vmem:[%s3 + $0x10] sm:$0xff] %v3047
  %3144 = vst [vmem:[%s3 + $0x18] sm:$0xff] %v3049
  %3145 = vst [vmem:[%s3 + $0x20] sm:$0xff] %v3053
  %3146 = vst [vmem:[%s3 + $0x28] sm:$0xff] %v3055
  %3147 = vst [vmem:[%s3 + $0x30] sm:$0xff] %v3057
  %3148 = vst [vmem:[%s3 + $0x38] sm:$0xff] %v3059
  %3149 = vst [vmem:[%s3 + $0x40] sm:$0xff] %v3063
  %3150 = vst [vmem:[%s3 + $0x48] sm:$0xff] %v3065
  %3151 = vst [vmem:[%s3 + $0x50] sm:$0xff] %v3067
  %3152 = vst [vmem:[%s3 + $0x58] sm:$0xff] %v3069
  %3153 = vst [vmem:[%s3 + $0x60] sm:$0xff] %v3073
  %3154 = vst [vmem:[%s3 + $0x68] sm:$0xff] %v3075
  %3155 = vst [vmem:[%s3 + $0x70] sm:$0xff] %v3077
  %3156 = vst [vmem:[%s3 + $0x78] sm:$0xff] %v3079
  %3157 = vst [vmem:[%s3 + $0x80] sm:$0xff] %v3083
  %3158 = vst [vmem:[%s3 + $0x88] sm:$0xff] %v3085
  %3159 = vst [vmem:[%s3 + $0x90] sm:$0xff] %v3087
  %3160 = vst [vmem:[%s3 + $0x98] sm:$0xff] %v3089
  %3161 = vst [vmem:[%s3 + $0xa0] sm:$0xff] %v3093
  %3162 = vst [vmem:[%s3 + $0xa8] sm:$0xff] %v3095
  %3163 = vst [vmem:[%s3 + $0xb0] sm:$0xff] %v3097
  %3164 = vst [vmem:[%s3 + $0xb8] sm:$0xff] %v3099
  %3165 = vst [vmem:[%s3 + $0xc0] sm:$0xff] %v3103
  %3166 = vst [vmem:[%s3 + $0xc8] sm:$0xff] %v3105
  %3167 = vst [vmem:[%s3 + $0xd0] sm:$0xff] %v3107
  %3168 = vst [vmem:[%s3 + $0xd8] sm:$0xff] %v3109
  %3169 = vst [vmem:[%s3 + $0xe0] sm:$0xff] %v3113
  %3170 = vst [vmem:[%s3 + $0xe8] sm:$0xff] %v3115
  %3171 = vst [vmem:[%s3 + $0xf0] sm:$0xff] %v3117
  %3172 = vst [vmem:[%s3 + $0xf8] sm:$0xff] %v3119
  %3173 = vst [vmem:[%s3 + $0x100] sm:$0xff] %v3123
  %3174 = vst [vmem:[%s3 + $0x108] sm:$0xff] %v3125
  %3175 = vst [vmem:[%s3 + $0x110] sm:$0xff] %v3127
  %3176 = vst [vmem:[%s3 + $0x118] sm:$0xff] %v3129
  %3177 = vst [vmem:[%s3 + $0x120] sm:$0xff] %v3133
  %3178 = vst [vmem:[%s3 + $0x128] sm:$0xff] %v3135
  %3179 = vst [vmem:[%s3 + $0x130] sm:$0xff] %v3137
  %3180 = vst [vmem:[%s3 + $0x138] sm:$0xff] %v3139
  // Predicated region
  $region14: #{frequency_kd2_forward.8} parent=0 // pred_check
    _
  $region15: #{frequency_kd2_forward.8} parent=0 // pred_check_branch
    %3182 = sbr.rel (0) target = $region17
  $region16: #{frequency_kd2_forward.8} parent=0 // pred_region
    _
  $region17: #{frequency_kd2_forward.8} parent=0 // pred_fallthru
    _
  // Predicated region
  $region18: #{frequency_kd2_forward.8} parent=0 // pred_check
    _
  $region19: #{frequency_kd2_forward.8} parent=0 // pred_check_branch
    %3184 = sbr.rel (0) target = $region21
  $region20: #{frequency_kd2_forward.8} parent=0 // pred_region
    _
  $region21: #{frequency_kd2_forward.8} parent=0 // pred_fallthru
    _

// kernel: frequency_kd2_forward.7
$region0: #{frequency_kd2_forward.7}
  #allocation0 [shape = 'u32[]', space=smem, size = 0x4, offset = 0x4, fixed_abs, tag = 'smem constant byte address 0x4 - core index']
  #allocation1 [shape = 'u32[144,128]{1,0:T(1,128)}', space=vmem, size = 0x12000, scoped, tag = 'internal scratch']
  %s0 = inlined_call_operand.vmem [shape: bf16[800,640], index: 0, kind: input, shape index: {}]
  %s1 = inlined_call_operand.vmem [shape: bf16[640,256], index: 1, kind: input, shape index: {}]
  %s2 = inlined_call_operand.vmem [shape: f32[1,256], index: 2, kind: input, shape index: {}]
  %s3 = inlined_call_operand.vmem [shape: f32[800,256], index: 3, kind: output, shape index: {}]
  %s4 = sld [smem:[#allocation0]]
  $region22: #{frequency_kd2_forward.7} parent=0
    _
  %s6 = ssub.s32 1, %s4
  %s7 = scalar_select 0, %s6, %s4
  // Predicated region
  $region2: #{frequency_kd2_forward.7} parent=0 // pred_check
    _
  $region3: #{frequency_kd2_forward.7} parent=0 // pred_check_branch
    %9 = sbr.rel (0) target = $region5
  $region4: #{frequency_kd2_forward.7} parent=0 // pred_region
    _
  $region5: #{frequency_kd2_forward.7} parent=0 // pred_fallthru
    _
  // Predicated region
  $region6: #{frequency_kd2_forward.7} parent=0 // pred_check
    _
  $region7: #{frequency_kd2_forward.7} parent=0 // pred_check_branch
    %11 = sbr.rel (0) target = $region9
  $region8: #{frequency_kd2_forward.7} parent=0 // pred_region
    _
  $region9: #{frequency_kd2_forward.7} parent=0 // pred_fallthru
    _
  // Predicated region
  $region10: #{frequency_kd2_forward.7} parent=0 // pred_check
    _
  $region11: #{frequency_kd2_forward.7} parent=0 // pred_check_branch
    %13 = sbr.rel (0) target = $region13
  $region12: #{frequency_kd2_forward.7} parent=0 // pred_region
    _
  $region13: #{frequency_kd2_forward.7} parent=0 // pred_fallthru
    _
  %v15 = vld [vmem:[%s0] sm:$0xff]
  %v16 = vld [vmem:[%s0 + $0x8] sm:$0xff]
  %v17 = vld [vmem:[%s0 + $0x10] sm:$0xf]
  %v18 = vld [vmem:[%s0 + $0x14] sm:$0xff]
  %v19 = vld [vmem:[%s0 + $0x1c] sm:$0xff]
  %v20 = vld [vmem:[%s0 + $0x24] sm:$0xf]
  %v21 = vld [vmem:[%s0 + $0x28] sm:$0xff]
  %v22 = vld [vmem:[%s0 + $0x30] sm:$0xff]
  %v23 = vld [vmem:[%s0 + $0x38] sm:$0xf]
  %v24 = vld [vmem:[%s0 + $0x3c] sm:$0xff]
  %v25 = vld [vmem:[%s0 + $0x44] sm:$0xff]
  %v26 = vld [vmem:[%s0 + $0x4c] sm:$0xf]
  %v27 = vld [vmem:[%s0 + $0x50] sm:$0xff]
  %v28 = vld [vmem:[%s0 + $0x58] sm:$0xff]
  %v29 = vld [vmem:[%s0 + $0x60] sm:$0xf]
  %v30 = vld [vmem:[%s0 + $0x64] sm:$0xff]
  %v31 = vld [vmem:[%s0 + $0x6c] sm:$0xff]
  %v32 = vld [vmem:[%s0 + $0x74] sm:$0xf]
  %v33 = vld [vmem:[%s0 + $0x78] sm:$0xff]
  %v34 = vld [vmem:[%s0 + $0x80] sm:$0xff]
  %v35 = vld [vmem:[%s0 + $0x88] sm:$0xf]
  %v36 = vld [vmem:[%s0 + $0x8c] sm:$0xff]
  %v37 = vld [vmem:[%s0 + $0x94] sm:$0xff]
  %v38 = vld [vmem:[%s0 + $0x9c] sm:$0xf]
  %v39 = vld [vmem:[%s0 + $0xa0] sm:$0xff]
  %v40 = vld [vmem:[%s0 + $0xa8] sm:$0xff]
  %v41 = vld [vmem:[%s0 + $0xb0] sm:$0xf]
  %v42 = vld [vmem:[%s0 + $0xb4] sm:$0xff]
  %v43 = vld [vmem:[%s0 + $0xbc] sm:$0xff]
  %v44 = vld [vmem:[%s0 + $0xc4] sm:$0xf]
  %v45 = vld [vmem:[%s0 + $0xc8] sm:$0xff]
  %v46 = vld [vmem:[%s0 + $0xd0] sm:$0xff]
  %v47 = vld [vmem:[%s0 + $0xd8] sm:$0xf]
  %v48 = vld [vmem:[%s0 + $0xdc] sm:$0xff]
  %v49 = vld [vmem:[%s0 + $0xe4] sm:$0xff]
  %v50 = vld [vmem:[%s0 + $0xec] sm:$0xf]
  %v51 = vld [vmem:[%s0 + $0xf0] sm:$0xff]
  %v52 = vld [vmem:[%s0 + $0xf8] sm:$0xff]
  %v53 = vld [vmem:[%s0 + $0x100] sm:$0xf]
  %v54 = vld [vmem:[%s0 + $0x104] sm:$0xff]
  %v55 = vld [vmem:[%s0 + $0x10c] sm:$0xff]
  %v56 = vld [vmem:[%s0 + $0x114] sm:$0xf]
  %v57 = vld [vmem:[%s0 + $0x118] sm:$0xff]
  %v58 = vld [vmem:[%s0 + $0x120] sm:$0xff]
  %v59 = vld [vmem:[%s0 + $0x128] sm:$0xf]
  %v60 = vld [vmem:[%s0 + $0x12c] sm:$0xff]
  %v61 = vld [vmem:[%s0 + $0x134] sm:$0xff]
  %v62 = vld [vmem:[%s0 + $0x13c] sm:$0xf]
  %v63 = vld [vmem:[%s0 + $0x140] sm:$0xff]
  %v64 = vld [vmem:[%s0 + $0x148] sm:$0xff]
  %v65 = vld [vmem:[%s0 + $0x150] sm:$0xf]
  %v66 = vld [vmem:[%s0 + $0x154] sm:$0xff]
  %v67 = vld [vmem:[%s0 + $0x15c] sm:$0xff]
  %v68 = vld [vmem:[%s0 + $0x164] sm:$0xf]
  %v69 = vld [vmem:[%s0 + $0x168] sm:$0xff]
  %v70 = vld [vmem:[%s0 + $0x170] sm:$0xff]
  %v71 = vld [vmem:[%s0 + $0x178] sm:$0xf]
  %v72 = vld [vmem:[%s0 + $0x17c] sm:$0xff]
  %v73 = vld [vmem:[%s0 + $0x184] sm:$0xff]
  %v74 = vld [vmem:[%s0 + $0x18c] sm:$0xf]
  %v75 = vld [vmem:[%s0 + $0x190] sm:$0xff]
  %v76 = vld [vmem:[%s0 + $0x198] sm:$0xff]
  %v77 = vld [vmem:[%s0 + $0x1a0] sm:$0xf]
  %v78 = vld [vmem:[%s0 + $0x1a4] sm:$0xff]
  %v79 = vld [vmem:[%s0 + $0x1ac] sm:$0xff]
  %v80 = vld [vmem:[%s0 + $0x1b4] sm:$0xf]
  %v81 = vld [vmem:[%s0 + $0x1b8] sm:$0xff]
  %v82 = vld [vmem:[%s0 + $0x1c0] sm:$0xff]
  %v83 = vld [vmem:[%s0 + $0x1c8] sm:$0xf]
  %v84 = vld [vmem:[%s0 + $0x1cc] sm:$0xff]
  %v85 = vld [vmem:[%s0 + $0x1d4] sm:$0xff]
  %v86 = vld [vmem:[%s0 + $0x1dc] sm:$0xf]
  %v87 = vld [vmem:[%s0 + $0x1e0] sm:$0xff]
  %v88 = vld [vmem:[%s0 + $0x1e8] sm:$0xff]
  %v89 = vld [vmem:[%s0 + $0x1f0] sm:$0xf]
  %v90 = vld [vmem:[%s0 + $0x1f4] sm:$0xff]
  %v91 = vld [vmem:[%s0 + $0x1fc] sm:$0xff]
  %v92 = vld [vmem:[%s0 + $0x204] sm:$0xf]
  %v93 = vld [vmem:[%s0 + $0x208] sm:$0xff]
  %v94 = vld [vmem:[%s0 + $0x210] sm:$0xff]
  %v95 = vld [vmem:[%s0 + $0x218] sm:$0xf]
  %v96 = vld [vmem:[%s0 + $0x21c] sm:$0xff]
  %v97 = vld [vmem:[%s0 + $0x224] sm:$0xff]
  %v98 = vld [vmem:[%s0 + $0x22c] sm:$0xf]
  %v99 = vld [vmem:[%s0 + $0x230] sm:$0xff]
  %v100 = vld [vmem:[%s0 + $0x238] sm:$0xff]
  %v101 = vld [vmem:[%s0 + $0x240] sm:$0xf]
  %v102 = vld [vmem:[%s0 + $0x244] sm:$0xff]
  %v103 = vld [vmem:[%s0 + $0x24c] sm:$0xff]
  %v104 = vld [vmem:[%s0 + $0x254] sm:$0xf]
  %v105 = vld [vmem:[%s0 + $0x258] sm:$0xff]
  %v106 = vld [vmem:[%s0 + $0x260] sm:$0xff]
  %v107 = vld [vmem:[%s0 + $0x268] sm:$0xf]
  %v108 = vld [vmem:[%s0 + $0x26c] sm:$0xff]
  %v109 = vld [vmem:[%s0 + $0x274] sm:$0xff]
  %v110 = vld [vmem:[%s0 + $0x27c] sm:$0xf]
  %v111 = vld [vmem:[%s0 + $0x280] sm:$0xff]
  %v112 = vld [vmem:[%s0 + $0x288] sm:$0xff]
  %v113 = vld [vmem:[%s0 + $0x290] sm:$0xf]
  %v114 = vld [vmem:[%s0 + $0x294] sm:$0xff]
  %v115 = vld [vmem:[%s0 + $0x29c] sm:$0xff]
  %v116 = vld [vmem:[%s0 + $0x2a4] sm:$0xf]
  %v117 = vld [vmem:[%s0 + $0x2a8] sm:$0xff]
  %v118 = vld [vmem:[%s0 + $0x2b0] sm:$0xff]
  %v119 = vld [vmem:[%s0 + $0x2b8] sm:$0xf]
  %v120 = vld [vmem:[%s0 + $0x2bc] sm:$0xff]
  %v121 = vld [vmem:[%s0 + $0x2c4] sm:$0xff]
  %v122 = vld [vmem:[%s0 + $0x2cc] sm:$0xf]
  %v123 = vld [vmem:[%s0 + $0x2d0] sm:$0xff]
  %v124 = vld [vmem:[%s0 + $0x2d8] sm:$0xff]
  %v125 = vld [vmem:[%s0 + $0x2e0] sm:$0xf]
  %v126 = vld [vmem:[%s0 + $0x2e4] sm:$0xff]
  %v127 = vld [vmem:[%s0 + $0x2ec] sm:$0xff]
  %v128 = vld [vmem:[%s0 + $0x2f4] sm:$0xf]
  %v129 = vld [vmem:[%s0 + $0x2f8] sm:$0xff]
  %v130 = vld [vmem:[%s0 + $0x300] sm:$0xff]
  %v131 = vld [vmem:[%s0 + $0x308] sm:$0xf]
  %v132 = vld [vmem:[%s0 + $0x30c] sm:$0xff]
  %v133 = vld [vmem:[%s0 + $0x314] sm:$0xff]
  %v134 = vld [vmem:[%s0 + $0x31c] sm:$0xf]
  %v135 = vld [vmem:[%s0 + $0x320] sm:$0xff]
  %v136 = vld [vmem:[%s0 + $0x328] sm:$0xff]
  %v137 = vld [vmem:[%s0 + $0x330] sm:$0xf]
  %v138 = vld [vmem:[%s0 + $0x334] sm:$0xff]
  %v139 = vld [vmem:[%s0 + $0x33c] sm:$0xff]
  %v140 = vld [vmem:[%s0 + $0x344] sm:$0xf]
  %v141 = vld [vmem:[%s0 + $0x348] sm:$0xff]
  %v142 = vld [vmem:[%s0 + $0x350] sm:$0xff]
  %v143 = vld [vmem:[%s0 + $0x358] sm:$0xf]
  %v144 = vld [vmem:[%s0 + $0x35c] sm:$0xff]
  %v145 = vld [vmem:[%s0 + $0x364] sm:$0xff]
  %v146 = vld [vmem:[%s0 + $0x36c] sm:$0xf]
  %v147 = vld [vmem:[%s0 + $0x370] sm:$0xff]
  %v148 = vld [vmem:[%s0 + $0x378] sm:$0xff]
  %v149 = vld [vmem:[%s0 + $0x380] sm:$0xf]
  %v150 = vld [vmem:[%s0 + $0x384] sm:$0xff]
  %v151 = vld [vmem:[%s0 + $0x38c] sm:$0xff]
  %v152 = vld [vmem:[%s0 + $0x394] sm:$0xf]
  %v153 = vld [vmem:[%s0 + $0x398] sm:$0xff]
  %v154 = vld [vmem:[%s0 + $0x3a0] sm:$0xff]
  %v155 = vld [vmem:[%s0 + $0x3a8] sm:$0xf]
  %v156 = vld [vmem:[%s0 + $0x3ac] sm:$0xff]
  %v157 = vld [vmem:[%s0 + $0x3b4] sm:$0xff]
  %v158 = vld [vmem:[%s0 + $0x3bc] sm:$0xf]
  %v159 = vld [vmem:[%s0 + $0x3c0] sm:$0xff]
  %v160 = vld [vmem:[%s0 + $0x3c8] sm:$0xff]
  %v161 = vld [vmem:[%s0 + $0x3d0] sm:$0xf]
  %v162 = vld [vmem:[%s0 + $0x3d4] sm:$0xff]
  %v163 = vld [vmem:[%s0 + $0x3dc] sm:$0xff]
  %v164 = vld [vmem:[%s0 + $0x3e4] sm:$0xf]
  %v165 = vld [vmem:[%s0 + $0x3e8] sm:$0xff]
  %v166 = vld [vmem:[%s0 + $0x3f0] sm:$0xff]
  %v167 = vld [vmem:[%s0 + $0x3f8] sm:$0xf]
  %v168 = vld [vmem:[%s0 + $0x3fc] sm:$0xff]
  %v169 = vld [vmem:[%s0 + $0x404] sm:$0xff]
  %v170 = vld [vmem:[%s0 + $0x40c] sm:$0xf]
  %v171 = vld [vmem:[%s0 + $0x410] sm:$0xff]
  %v172 = vld [vmem:[%s0 + $0x418] sm:$0xff]
  %v173 = vld [vmem:[%s0 + $0x420] sm:$0xf]
  %v174 = vld [vmem:[%s0 + $0x424] sm:$0xff]
  %v175 = vld [vmem:[%s0 + $0x42c] sm:$0xff]
  %v176 = vld [vmem:[%s0 + $0x434] sm:$0xf]
  %v177 = vld [vmem:[%s0 + $0x438] sm:$0xff]
  %v178 = vld [vmem:[%s0 + $0x440] sm:$0xff]
  %v179 = vld [vmem:[%s0 + $0x448] sm:$0xf]
  %v180 = vld [vmem:[%s0 + $0x44c] sm:$0xff]
  %v181 = vld [vmem:[%s0 + $0x454] sm:$0xff]
  %v182 = vld [vmem:[%s0 + $0x45c] sm:$0xf]
  %v183 = vld [vmem:[%s0 + $0x460] sm:$0xff]
  %v184 = vld [vmem:[%s0 + $0x468] sm:$0xff]
  %v185 = vld [vmem:[%s0 + $0x470] sm:$0xf]
  %v186 = vld [vmem:[%s0 + $0x474] sm:$0xff]
  %v187 = vld [vmem:[%s0 + $0x47c] sm:$0xff]
  %v188 = vld [vmem:[%s0 + $0x484] sm:$0xf]
  %v189 = vld [vmem:[%s0 + $0x488] sm:$0xff]
  %v190 = vld [vmem:[%s0 + $0x490] sm:$0xff]
  %v191 = vld [vmem:[%s0 + $0x498] sm:$0xf]
  %v192 = vld [vmem:[%s0 + $0x49c] sm:$0xff]
  %v193 = vld [vmem:[%s0 + $0x4a4] sm:$0xff]
  %v194 = vld [vmem:[%s0 + $0x4ac] sm:$0xf]
  %v195 = vld [vmem:[%s0 + $0x4b0] sm:$0xff]
  %v196 = vld [vmem:[%s0 + $0x4b8] sm:$0xff]
  %v197 = vld [vmem:[%s0 + $0x4c0] sm:$0xf]
  %v198 = vld [vmem:[%s0 + $0x4c4] sm:$0xff]
  %v199 = vld [vmem:[%s0 + $0x4cc] sm:$0xff]
  %v200 = vld [vmem:[%s0 + $0x4d4] sm:$0xf]
  %v201 = vld [vmem:[%s0 + $0x4d8] sm:$0xff]
  %v202 = vld [vmem:[%s0 + $0x4e0] sm:$0xff]
  %v203 = vld [vmem:[%s0 + $0x4e8] sm:$0xf]
  %v204 = vld [vmem:[%s0 + $0x4ec] sm:$0xff]
  %v205 = vld [vmem:[%s0 + $0x4f4] sm:$0xff]
  %v206 = vld [vmem:[%s0 + $0x4fc] sm:$0xf]
  %v207 = vld [vmem:[%s0 + $0x500] sm:$0xff]
  %v208 = vld [vmem:[%s0 + $0x508] sm:$0xff]
  %v209 = vld [vmem:[%s0 + $0x510] sm:$0xf]
  %v210 = vld [vmem:[%s0 + $0x514] sm:$0xff]
  %v211 = vld [vmem:[%s0 + $0x51c] sm:$0xff]
  %v212 = vld [vmem:[%s0 + $0x524] sm:$0xf]
  %v213 = vld [vmem:[%s0 + $0x528] sm:$0xff]
  %v214 = vld [vmem:[%s0 + $0x530] sm:$0xff]
  %v215 = vld [vmem:[%s0 + $0x538] sm:$0xf]
  %v216 = vld [vmem:[%s0 + $0x53c] sm:$0xff]
  %v217 = vld [vmem:[%s0 + $0x544] sm:$0xff]
  %v218 = vld [vmem:[%s0 + $0x54c] sm:$0xf]
  %v219 = vld [vmem:[%s0 + $0x550] sm:$0xff]
  %v220 = vld [vmem:[%s0 + $0x558] sm:$0xff]
  %v221 = vld [vmem:[%s0 + $0x560] sm:$0xf]
  %v222 = vld [vmem:[%s0 + $0x564] sm:$0xff]
  %v223 = vld [vmem:[%s0 + $0x56c] sm:$0xff]
  %v224 = vld [vmem:[%s0 + $0x574] sm:$0xf]
  %v225 = vld [vmem:[%s0 + $0x578] sm:$0xff]
  %v226 = vld [vmem:[%s0 + $0x580] sm:$0xff]
  %v227 = vld [vmem:[%s0 + $0x588] sm:$0xf]
  %v228 = vld [vmem:[%s0 + $0x58c] sm:$0xff]
  %v229 = vld [vmem:[%s0 + $0x594] sm:$0xff]
  %v230 = vld [vmem:[%s0 + $0x59c] sm:$0xf]
  %v231 = vld [vmem:[%s0 + $0x5a0] sm:$0xff]
  %v232 = vld [vmem:[%s0 + $0x5a8] sm:$0xff]
  %v233 = vld [vmem:[%s0 + $0x5b0] sm:$0xf]
  %v234 = vld [vmem:[%s0 + $0x5b4] sm:$0xff]
  %v235 = vld [vmem:[%s0 + $0x5bc] sm:$0xff]
  %v236 = vld [vmem:[%s0 + $0x5c4] sm:$0xf]
  %v237 = vld [vmem:[%s0 + $0x5c8] sm:$0xff]
  %v238 = vld [vmem:[%s0 + $0x5d0] sm:$0xff]
  %v239 = vld [vmem:[%s0 + $0x5d8] sm:$0xf]
  %v240 = vld [vmem:[%s0 + $0x5dc] sm:$0xff]
  %v241 = vld [vmem:[%s0 + $0x5e4] sm:$0xff]
  %v242 = vld [vmem:[%s0 + $0x5ec] sm:$0xf]
  %v243 = vld [vmem:[%s0 + $0x5f0] sm:$0xff]
  %v244 = vld [vmem:[%s0 + $0x5f8] sm:$0xff]
  %v245 = vld [vmem:[%s0 + $0x600] sm:$0xf]
  %v246 = vld [vmem:[%s0 + $0x604] sm:$0xff]
  %v247 = vld [vmem:[%s0 + $0x60c] sm:$0xff]
  %v248 = vld [vmem:[%s0 + $0x614] sm:$0xf]
  %v249 = vld [vmem:[%s0 + $0x618] sm:$0xff]
  %v250 = vld [vmem:[%s0 + $0x620] sm:$0xff]
  %v251 = vld [vmem:[%s0 + $0x628] sm:$0xf]
  %v252 = vld [vmem:[%s0 + $0x62c] sm:$0xff]
  %v253 = vld [vmem:[%s0 + $0x634] sm:$0xff]
  %v254 = vld [vmem:[%s0 + $0x63c] sm:$0xf]
  %v255 = vld [vmem:[%s0 + $0x640] sm:$0xff]
  %v256 = vld [vmem:[%s0 + $0x648] sm:$0xff]
  %v257 = vld [vmem:[%s0 + $0x650] sm:$0xf]
  %v258 = vld [vmem:[%s0 + $0x654] sm:$0xff]
  %v259 = vld [vmem:[%s0 + $0x65c] sm:$0xff]
  %v260 = vld [vmem:[%s0 + $0x664] sm:$0xf]
  %v261 = vld [vmem:[%s0 + $0x668] sm:$0xff]
  %v262 = vld [vmem:[%s0 + $0x670] sm:$0xff]
  %v263 = vld [vmem:[%s0 + $0x678] sm:$0xf]
  %v264 = vld [vmem:[%s0 + $0x67c] sm:$0xff]
  %v265 = vld [vmem:[%s0 + $0x684] sm:$0xff]
  %v266 = vld [vmem:[%s0 + $0x68c] sm:$0xf]
  %v267 = vld [vmem:[%s0 + $0x690] sm:$0xff]
  %v268 = vld [vmem:[%s0 + $0x698] sm:$0xff]
  %v269 = vld [vmem:[%s0 + $0x6a0] sm:$0xf]
  %v270 = vld [vmem:[%s0 + $0x6a4] sm:$0xff]
  %v271 = vld [vmem:[%s0 + $0x6ac] sm:$0xff]
  %v272 = vld [vmem:[%s0 + $0x6b4] sm:$0xf]
  %v273 = vld [vmem:[%s0 + $0x6b8] sm:$0xff]
  %v274 = vld [vmem:[%s0 + $0x6c0] sm:$0xff]
  %v275 = vld [vmem:[%s0 + $0x6c8] sm:$0xf]
  %v276 = vld [vmem:[%s0 + $0x6cc] sm:$0xff]
  %v277 = vld [vmem:[%s0 + $0x6d4] sm:$0xff]
  %v278 = vld [vmem:[%s0 + $0x6dc] sm:$0xf]
  %v279 = vld [vmem:[%s0 + $0x6e0] sm:$0xff]
  %v280 = vld [vmem:[%s0 + $0x6e8] sm:$0xff]
  %v281 = vld [vmem:[%s0 + $0x6f0] sm:$0xf]
  %v282 = vld [vmem:[%s0 + $0x6f4] sm:$0xff]
  %v283 = vld [vmem:[%s0 + $0x6fc] sm:$0xff]
  %v284 = vld [vmem:[%s0 + $0x704] sm:$0xf]
  %v285 = vld [vmem:[%s0 + $0x708] sm:$0xff]
  %v286 = vld [vmem:[%s0 + $0x710] sm:$0xff]
  %v287 = vld [vmem:[%s0 + $0x718] sm:$0xf]
  %v288 = vld [vmem:[%s0 + $0x71c] sm:$0xff]
  %v289 = vld [vmem:[%s0 + $0x724] sm:$0xff]
  %v290 = vld [vmem:[%s0 + $0x72c] sm:$0xf]
  %v291 = vld [vmem:[%s0 + $0x730] sm:$0xff]
  %v292 = vld [vmem:[%s0 + $0x738] sm:$0xff]
  %v293 = vld [vmem:[%s0 + $0x740] sm:$0xf]
  %v294 = vld [vmem:[%s0 + $0x744] sm:$0xff]
  %v295 = vld [vmem:[%s0 + $0x74c] sm:$0xff]
  %v296 = vld [vmem:[%s0 + $0x754] sm:$0xf]
  %v297 = vld [vmem:[%s0 + $0x758] sm:$0xff]
  %v298 = vld [vmem:[%s0 + $0x760] sm:$0xff]
  %v299 = vld [vmem:[%s0 + $0x768] sm:$0xf]
  %v300 = vld [vmem:[%s0 + $0x76c] sm:$0xff]
  %v301 = vld [vmem:[%s0 + $0x774] sm:$0xff]
  %v302 = vld [vmem:[%s0 + $0x77c] sm:$0xf]
  %v303 = vld [vmem:[%s0 + $0x780] sm:$0xff]
  %v304 = vld [vmem:[%s0 + $0x788] sm:$0xff]
  %v305 = vld [vmem:[%s0 + $0x790] sm:$0xf]
  %v306 = vld [vmem:[%s0 + $0x794] sm:$0xff]
  %v307 = vld [vmem:[%s0 + $0x79c] sm:$0xff]
  %v308 = vld [vmem:[%s0 + $0x7a4] sm:$0xf]
  %v309 = vld [vmem:[%s0 + $0x7a8] sm:$0xff]
  %v310 = vld [vmem:[%s0 + $0x7b0] sm:$0xff]
  %v311 = vld [vmem:[%s0 + $0x7b8] sm:$0xf]
  %v312 = vld [vmem:[%s0 + $0x7bc] sm:$0xff]
  %v313 = vld [vmem:[%s0 + $0x7c4] sm:$0xff]
  %v314 = vld [vmem:[%s0 + $0x7cc] sm:$0xf]
  %v315 = vld [vmem:[%s1] sm:$0xff]
  %v316 = vld [vmem:[%s1 + $0x8] sm:$0xff]
  %v317 = vld [vmem:[%s1 + $0x10] sm:$0xff]
  %v318 = vld [vmem:[%s1 + $0x18] sm:$0xff]
  %v319 = vld [vmem:[%s1 + $0x20] sm:$0xff]
  %v320 = vld [vmem:[%s1 + $0x28] sm:$0xff]
  %v321 = vld [vmem:[%s1 + $0x30] sm:$0xff]
  %v322 = vld [vmem:[%s1 + $0x38] sm:$0xff]
  %v323 = vld [vmem:[%s1 + $0x40] sm:$0xff]
  %v324 = vld [vmem:[%s1 + $0x48] sm:$0xff]
  %v325 = vld [vmem:[%s1 + $0x50] sm:$0xff]
  %v326 = vld [vmem:[%s1 + $0x58] sm:$0xff]
  %v327 = vld [vmem:[%s1 + $0x60] sm:$0xff]
  %v328 = vld [vmem:[%s1 + $0x68] sm:$0xff]
  %v329 = vld [vmem:[%s1 + $0x70] sm:$0xff]
  %v330 = vld [vmem:[%s1 + $0x78] sm:$0xff]
  %v331 = vld [vmem:[%s1 + $0x80] sm:$0xff]
  %v332 = vld [vmem:[%s1 + $0x88] sm:$0xff]
  %v333 = vld [vmem:[%s1 + $0x90] sm:$0xff]
  %v334 = vld [vmem:[%s1 + $0x98] sm:$0xff]
  %v335 = vld [vmem:[%s1 + $0xa0] sm:$0xff]
  %v336 = vld [vmem:[%s1 + $0xa8] sm:$0xff]
  %v337 = vld [vmem:[%s1 + $0xb0] sm:$0xff]
  %v338 = vld [vmem:[%s1 + $0xb8] sm:$0xff]
  %v339 = vld [vmem:[%s1 + $0xc0] sm:$0xff]
  %v340 = vld [vmem:[%s1 + $0xc8] sm:$0xff]
  %v341 = vld [vmem:[%s1 + $0xd0] sm:$0xff]
  %v342 = vld [vmem:[%s1 + $0xd8] sm:$0xff]
  %v343 = vld [vmem:[%s1 + $0xe0] sm:$0xff]
  %v344 = vld [vmem:[%s1 + $0xe8] sm:$0xff]
  %v345 = vld [vmem:[%s1 + $0xf0] sm:$0xff]
  %v346 = vld [vmem:[%s1 + $0xf8] sm:$0xff]
  %v347 = vld [vmem:[%s1 + $0x100] sm:$0xff]
  %v348 = vld [vmem:[%s1 + $0x108] sm:$0xff]
  %v349 = vld [vmem:[%s1 + $0x110] sm:$0xff]
  %v350 = vld [vmem:[%s1 + $0x118] sm:$0xff]
  %v351 = vld [vmem:[%s1 + $0x120] sm:$0xff]
  %v352 = vld [vmem:[%s1 + $0x128] sm:$0xff]
  %v353 = vld [vmem:[%s1 + $0x130] sm:$0xff]
  %v354 = vld [vmem:[%s1 + $0x138] sm:$0xff]
  %v355 = vld [vmem:[%s1 + $0x140] sm:$0xff]
  %v356 = vld [vmem:[%s1 + $0x148] sm:$0xff]
  %v357 = vld [vmem:[%s1 + $0x150] sm:$0xff]
  %v358 = vld [vmem:[%s1 + $0x158] sm:$0xff]
  %v359 = vld [vmem:[%s1 + $0x160] sm:$0xff]
  %v360 = vld [vmem:[%s1 + $0x168] sm:$0xff]
  %v361 = vld [vmem:[%s1 + $0x170] sm:$0xff]
  %v362 = vld [vmem:[%s1 + $0x178] sm:$0xff]
  %v363 = vld [vmem:[%s1 + $0x180] sm:$0xff]
  %v364 = vld [vmem:[%s1 + $0x188] sm:$0xff]
  %v365 = vld [vmem:[%s1 + $0x190] sm:$0xff]
  %v366 = vld [vmem:[%s1 + $0x198] sm:$0xff]
  %v367 = vld [vmem:[%s1 + $0x1a0] sm:$0xff]
  %v368 = vld [vmem:[%s1 + $0x1a8] sm:$0xff]
  %v369 = vld [vmem:[%s1 + $0x1b0] sm:$0xff]
  %v370 = vld [vmem:[%s1 + $0x1b8] sm:$0xff]
  %v371 = vld [vmem:[%s1 + $0x1c0] sm:$0xff]
  %v372 = vld [vmem:[%s1 + $0x1c8] sm:$0xff]
  %v373 = vld [vmem:[%s1 + $0x1d0] sm:$0xff]
  %v374 = vld [vmem:[%s1 + $0x1d8] sm:$0xff]
  %v375 = vld [vmem:[%s1 + $0x1e0] sm:$0xff]
  %v376 = vld [vmem:[%s1 + $0x1e8] sm:$0xff]
  %v377 = vld [vmem:[%s1 + $0x1f0] sm:$0xff]
  %v378 = vld [vmem:[%s1 + $0x1f8] sm:$0xff]
  %v379 = vld [vmem:[%s1 + $0x200] sm:$0xff]
  %v380 = vld [vmem:[%s1 + $0x208] sm:$0xff]
  %v381 = vld [vmem:[%s1 + $0x210] sm:$0xff]
  %v382 = vld [vmem:[%s1 + $0x218] sm:$0xff]
  %v383 = vld [vmem:[%s1 + $0x220] sm:$0xff]
  %v384 = vld [vmem:[%s1 + $0x228] sm:$0xff]
  %v385 = vld [vmem:[%s1 + $0x230] sm:$0xff]
  %v386 = vld [vmem:[%s1 + $0x238] sm:$0xff]
  %v387 = vld [vmem:[%s1 + $0x240] sm:$0xff]
  %v388 = vld [vmem:[%s1 + $0x248] sm:$0xff]
  %v389 = vld [vmem:[%s1 + $0x250] sm:$0xff]
  %v390 = vld [vmem:[%s1 + $0x258] sm:$0xff]
  %v391 = vld [vmem:[%s1 + $0x260] sm:$0xff]
  %v392 = vld [vmem:[%s1 + $0x268] sm:$0xff]
  %v393 = vld [vmem:[%s1 + $0x270] sm:$0xff]
  %v394 = vld [vmem:[%s1 + $0x278] sm:$0xff]
  %v395 = vld [vmem:[%s2] sm:$0x3]
  %v397 = vlaneseq
  %v398 = vshrl.u32 %v397, 7
  %v399 = vsub.s32 0, %v398
  %v400 = vrot.slane %v395, %v399
  %v401 = vlaneseq
  %v402 = vshrl.u32 %v401, 7
  %v403 = vsub.s32 1, %v402
  %v404 = vrot.slane %v395, %v403
  %v707 = vunpack.c.l.b16 %v15
  %v708 = vunpack.c.h.b16 %v15
  %v709 = vunpack.c.l.b16 %v16
  %v710 = vunpack.c.h.b16 %v16
  %v711 = vunpack.c.l.b16 %v17
  %v712 = vunpack.c.l.b16 %v18
  %v713 = vunpack.c.h.b16 %v18
  %v714 = vunpack.c.l.b16 %v19
  %v715 = vunpack.c.h.b16 %v19
  %v716 = vunpack.c.l.b16 %v20
  %v717 = vunpack.c.l.b16 %v21
  %v718 = vunpack.c.h.b16 %v21
  %v719 = vunpack.c.l.b16 %v22
  %v720 = vunpack.c.h.b16 %v22
  %v721 = vunpack.c.l.b16 %v23
  %v722 = vunpack.c.l.b16 %v24
  %v723 = vunpack.c.h.b16 %v24
  %v724 = vunpack.c.l.b16 %v25
  %v725 = vunpack.c.h.b16 %v25
  %v726 = vunpack.c.l.b16 %v26
  %v727 = vunpack.c.l.b16 %v27
  %v728 = vunpack.c.h.b16 %v27
  %v729 = vunpack.c.l.b16 %v28
  %v730 = vunpack.c.h.b16 %v28
  %v731 = vunpack.c.l.b16 %v29
  %v732 = vunpack.c.l.b16 %v30
  %v733 = vunpack.c.h.b16 %v30
  %v734 = vunpack.c.l.b16 %v31
  %v735 = vunpack.c.h.b16 %v31
  %v736 = vunpack.c.l.b16 %v32
  %v737 = vunpack.c.l.b16 %v33
  %v738 = vunpack.c.h.b16 %v33
  %v739 = vunpack.c.l.b16 %v34
  %v740 = vunpack.c.h.b16 %v34
  %v741 = vunpack.c.l.b16 %v35
  %v742 = vunpack.c.l.b16 %v36
  %v743 = vunpack.c.h.b16 %v36
  %v744 = vunpack.c.l.b16 %v37
  %v745 = vunpack.c.h.b16 %v37
  %v746 = vunpack.c.l.b16 %v38
  %v747 = vunpack.c.l.b16 %v39
  %v748 = vunpack.c.h.b16 %v39
  %v749 = vunpack.c.l.b16 %v40
  %v750 = vunpack.c.h.b16 %v40
  %v751 = vunpack.c.l.b16 %v41
  %v752 = vunpack.c.l.b16 %v42
  %v753 = vunpack.c.h.b16 %v42
  %v754 = vunpack.c.l.b16 %v43
  %v755 = vunpack.c.h.b16 %v43
  %v756 = vunpack.c.l.b16 %v44
  %v757 = vunpack.c.l.b16 %v45
  %v758 = vunpack.c.h.b16 %v45
  %v759 = vunpack.c.l.b16 %v46
  %v760 = vunpack.c.h.b16 %v46
  %v761 = vunpack.c.l.b16 %v47
  %v762 = vunpack.c.l.b16 %v48
  %v763 = vunpack.c.h.b16 %v48
  %v764 = vunpack.c.l.b16 %v49
  %v765 = vunpack.c.h.b16 %v49
  %v766 = vunpack.c.l.b16 %v50
  %v767 = vunpack.c.l.b16 %v51
  %v768 = vunpack.c.h.b16 %v51
  %v769 = vunpack.c.l.b16 %v52
  %v770 = vunpack.c.h.b16 %v52
  %v771 = vunpack.c.l.b16 %v53
  %v772 = vunpack.c.l.b16 %v54
  %v773 = vunpack.c.h.b16 %v54
  %v774 = vunpack.c.l.b16 %v55
  %v775 = vunpack.c.h.b16 %v55
  %v776 = vunpack.c.l.b16 %v56
  %v777 = vunpack.c.l.b16 %v57
  %v778 = vunpack.c.h.b16 %v57
  %v779 = vunpack.c.l.b16 %v58
  %v780 = vunpack.c.h.b16 %v58
  %v781 = vunpack.c.l.b16 %v59
  %v782 = vunpack.c.l.b16 %v60
  %v783 = vunpack.c.h.b16 %v60
  %v784 = vunpack.c.l.b16 %v61
  %v785 = vunpack.c.h.b16 %v61
  %v786 = vunpack.c.l.b16 %v62
  %v787 = vunpack.c.l.b16 %v63
  %v788 = vunpack.c.h.b16 %v63
  %v789 = vunpack.c.l.b16 %v64
  %v790 = vunpack.c.h.b16 %v64
  %v791 = vunpack.c.l.b16 %v65
  %v792 = vunpack.c.l.b16 %v66
  %v793 = vunpack.c.h.b16 %v66
  %v794 = vunpack.c.l.b16 %v67
  %v795 = vunpack.c.h.b16 %v67
  %v796 = vunpack.c.l.b16 %v68
  %v797 = vunpack.c.l.b16 %v69
  %v798 = vunpack.c.h.b16 %v69
  %v799 = vunpack.c.l.b16 %v70
  %v800 = vunpack.c.h.b16 %v70
  %v801 = vunpack.c.l.b16 %v71
  %v802 = vunpack.c.l.b16 %v72
  %v803 = vunpack.c.h.b16 %v72
  %v804 = vunpack.c.l.b16 %v73
  %v805 = vunpack.c.h.b16 %v73
  %v806 = vunpack.c.l.b16 %v74
  %v807 = vunpack.c.l.b16 %v75
  %v808 = vunpack.c.h.b16 %v75
  %v809 = vunpack.c.l.b16 %v76
  %v810 = vunpack.c.h.b16 %v76
  %v811 = vunpack.c.l.b16 %v77
  %v812 = vunpack.c.l.b16 %v78
  %v813 = vunpack.c.h.b16 %v78
  %v814 = vunpack.c.l.b16 %v79
  %v815 = vunpack.c.h.b16 %v79
  %v816 = vunpack.c.l.b16 %v80
  %v817 = vunpack.c.l.b16 %v81
  %v818 = vunpack.c.h.b16 %v81
  %v819 = vunpack.c.l.b16 %v82
  %v820 = vunpack.c.h.b16 %v82
  %v821 = vunpack.c.l.b16 %v83
  %v822 = vunpack.c.l.b16 %v84
  %v823 = vunpack.c.h.b16 %v84
  %v824 = vunpack.c.l.b16 %v85
  %v825 = vunpack.c.h.b16 %v85
  %v826 = vunpack.c.l.b16 %v86
  %v827 = vunpack.c.l.b16 %v87
  %v828 = vunpack.c.h.b16 %v87
  %v829 = vunpack.c.l.b16 %v88
  %v830 = vunpack.c.h.b16 %v88
  %v831 = vunpack.c.l.b16 %v89
  %v832 = vunpack.c.l.b16 %v90
  %v833 = vunpack.c.h.b16 %v90
  %v834 = vunpack.c.l.b16 %v91
  %v835 = vunpack.c.h.b16 %v91
  %v836 = vunpack.c.l.b16 %v92
  %v837 = vunpack.c.l.b16 %v93
  %v838 = vunpack.c.h.b16 %v93
  %v839 = vunpack.c.l.b16 %v94
  %v840 = vunpack.c.h.b16 %v94
  %v841 = vunpack.c.l.b16 %v95
  %v842 = vunpack.c.l.b16 %v96
  %v843 = vunpack.c.h.b16 %v96
  %v844 = vunpack.c.l.b16 %v97
  %v845 = vunpack.c.h.b16 %v97
  %v846 = vunpack.c.l.b16 %v98
  %v847 = vunpack.c.l.b16 %v99
  %v848 = vunpack.c.h.b16 %v99
  %v849 = vunpack.c.l.b16 %v100
  %v850 = vunpack.c.h.b16 %v100
  %v851 = vunpack.c.l.b16 %v101
  %v852 = vunpack.c.l.b16 %v102
  %v853 = vunpack.c.h.b16 %v102
  %v854 = vunpack.c.l.b16 %v103
  %v855 = vunpack.c.h.b16 %v103
  %v856 = vunpack.c.l.b16 %v104
  %v857 = vunpack.c.l.b16 %v105
  %v858 = vunpack.c.h.b16 %v105
  %v859 = vunpack.c.l.b16 %v106
  %v860 = vunpack.c.h.b16 %v106
  %v861 = vunpack.c.l.b16 %v107
  %v862 = vunpack.c.l.b16 %v108
  %v863 = vunpack.c.h.b16 %v108
  %v864 = vunpack.c.l.b16 %v109
  %v865 = vunpack.c.h.b16 %v109
  %v866 = vunpack.c.l.b16 %v110
  %v867 = vunpack.c.l.b16 %v111
  %v868 = vunpack.c.h.b16 %v111
  %v869 = vunpack.c.l.b16 %v112
  %v870 = vunpack.c.h.b16 %v112
  %v871 = vunpack.c.l.b16 %v113
  %v872 = vunpack.c.l.b16 %v114
  %v873 = vunpack.c.h.b16 %v114
  %v874 = vunpack.c.l.b16 %v115
  %v875 = vunpack.c.h.b16 %v115
  %v876 = vunpack.c.l.b16 %v116
  %v877 = vunpack.c.l.b16 %v117
  %v878 = vunpack.c.h.b16 %v117
  %v879 = vunpack.c.l.b16 %v118
  %v880 = vunpack.c.h.b16 %v118
  %v881 = vunpack.c.l.b16 %v119
  %v882 = vunpack.c.l.b16 %v120
  %v883 = vunpack.c.h.b16 %v120
  %v884 = vunpack.c.l.b16 %v121
  %v885 = vunpack.c.h.b16 %v121
  %v886 = vunpack.c.l.b16 %v122
  %v887 = vunpack.c.l.b16 %v123
  %v888 = vunpack.c.h.b16 %v123
  %v889 = vunpack.c.l.b16 %v124
  %v890 = vunpack.c.h.b16 %v124
  %v891 = vunpack.c.l.b16 %v125
  %v892 = vunpack.c.l.b16 %v126
  %v893 = vunpack.c.h.b16 %v126
  %v894 = vunpack.c.l.b16 %v127
  %v895 = vunpack.c.h.b16 %v127
  %v896 = vunpack.c.l.b16 %v128
  %v897 = vunpack.c.l.b16 %v129
  %v898 = vunpack.c.h.b16 %v129
  %v899 = vunpack.c.l.b16 %v130
  %v900 = vunpack.c.h.b16 %v130
  %v901 = vunpack.c.l.b16 %v131
  %v902 = vunpack.c.l.b16 %v132
  %v903 = vunpack.c.h.b16 %v132
  %v904 = vunpack.c.l.b16 %v133
  %v905 = vunpack.c.h.b16 %v133
  %v906 = vunpack.c.l.b16 %v134
  %v907 = vunpack.c.l.b16 %v135
  %v908 = vunpack.c.h.b16 %v135
  %v909 = vunpack.c.l.b16 %v136
  %v910 = vunpack.c.h.b16 %v136
  %v911 = vunpack.c.l.b16 %v137
  %v912 = vunpack.c.l.b16 %v138
  %v913 = vunpack.c.h.b16 %v138
  %v914 = vunpack.c.l.b16 %v139
  %v915 = vunpack.c.h.b16 %v139
  %v916 = vunpack.c.l.b16 %v140
  %v917 = vunpack.c.l.b16 %v141
  %v918 = vunpack.c.h.b16 %v141
  %v919 = vunpack.c.l.b16 %v142
  %v920 = vunpack.c.h.b16 %v142
  %v921 = vunpack.c.l.b16 %v143
  %v922 = vunpack.c.l.b16 %v144
  %v923 = vunpack.c.h.b16 %v144
  %v924 = vunpack.c.l.b16 %v145
  %v925 = vunpack.c.h.b16 %v145
  %v926 = vunpack.c.l.b16 %v146
  %v927 = vunpack.c.l.b16 %v147
  %v928 = vunpack.c.h.b16 %v147
  %v929 = vunpack.c.l.b16 %v148
  %v930 = vunpack.c.h.b16 %v148
  %v931 = vunpack.c.l.b16 %v149
  %v932 = vunpack.c.l.b16 %v150
  %v933 = vunpack.c.h.b16 %v150
  %v934 = vunpack.c.l.b16 %v151
  %v935 = vunpack.c.h.b16 %v151
  %v936 = vunpack.c.l.b16 %v152
  %v937 = vunpack.c.l.b16 %v153
  %v938 = vunpack.c.h.b16 %v153
  %v939 = vunpack.c.l.b16 %v154
  %v940 = vunpack.c.h.b16 %v154
  %v941 = vunpack.c.l.b16 %v155
  %v942 = vunpack.c.l.b16 %v156
  %v943 = vunpack.c.h.b16 %v156
  %v944 = vunpack.c.l.b16 %v157
  %v945 = vunpack.c.h.b16 %v157
  %v946 = vunpack.c.l.b16 %v158
  %v947 = vunpack.c.l.b16 %v159
  %v948 = vunpack.c.h.b16 %v159
  %v949 = vunpack.c.l.b16 %v160
  %v950 = vunpack.c.h.b16 %v160
  %v951 = vunpack.c.l.b16 %v161
  %v952 = vunpack.c.l.b16 %v162
  %v953 = vunpack.c.h.b16 %v162
  %v954 = vunpack.c.l.b16 %v163
  %v955 = vunpack.c.h.b16 %v163
  %v956 = vunpack.c.l.b16 %v164
  %v957 = vunpack.c.l.b16 %v165
  %v958 = vunpack.c.h.b16 %v165
  %v959 = vunpack.c.l.b16 %v166
  %v960 = vunpack.c.h.b16 %v166
  %v961 = vunpack.c.l.b16 %v167
  %v962 = vunpack.c.l.b16 %v168
  %v963 = vunpack.c.h.b16 %v168
  %v964 = vunpack.c.l.b16 %v169
  %v965 = vunpack.c.h.b16 %v169
  %v966 = vunpack.c.l.b16 %v170
  %v967 = vunpack.c.l.b16 %v171
  %v968 = vunpack.c.h.b16 %v171
  %v969 = vunpack.c.l.b16 %v172
  %v970 = vunpack.c.h.b16 %v172
  %v971 = vunpack.c.l.b16 %v173
  %v972 = vunpack.c.l.b16 %v174
  %v973 = vunpack.c.h.b16 %v174
  %v974 = vunpack.c.l.b16 %v175
  %v975 = vunpack.c.h.b16 %v175
  %v976 = vunpack.c.l.b16 %v176
  %v977 = vunpack.c.l.b16 %v177
  %v978 = vunpack.c.h.b16 %v177
  %v979 = vunpack.c.l.b16 %v178
  %v980 = vunpack.c.h.b16 %v178
  %v981 = vunpack.c.l.b16 %v179
  %v982 = vunpack.c.l.b16 %v180
  %v983 = vunpack.c.h.b16 %v180
  %v984 = vunpack.c.l.b16 %v181
  %v985 = vunpack.c.h.b16 %v181
  %v986 = vunpack.c.l.b16 %v182
  %v987 = vunpack.c.l.b16 %v183
  %v988 = vunpack.c.h.b16 %v183
  %v989 = vunpack.c.l.b16 %v184
  %v990 = vunpack.c.h.b16 %v184
  %v991 = vunpack.c.l.b16 %v185
  %v992 = vunpack.c.l.b16 %v186
  %v993 = vunpack.c.h.b16 %v186
  %v994 = vunpack.c.l.b16 %v187
  %v995 = vunpack.c.h.b16 %v187
  %v996 = vunpack.c.l.b16 %v188
  %v997 = vunpack.c.l.b16 %v189
  %v998 = vunpack.c.h.b16 %v189
  %v999 = vunpack.c.l.b16 %v190
  %v1000 = vunpack.c.h.b16 %v190
  %v1001 = vunpack.c.l.b16 %v191
  %v1002 = vunpack.c.l.b16 %v192
  %v1003 = vunpack.c.h.b16 %v192
  %v1004 = vunpack.c.l.b16 %v193
  %v1005 = vunpack.c.h.b16 %v193
  %v1006 = vunpack.c.l.b16 %v194
  %v1007 = vunpack.c.l.b16 %v195
  %v1008 = vunpack.c.h.b16 %v195
  %v1009 = vunpack.c.l.b16 %v196
  %v1010 = vunpack.c.h.b16 %v196
  %v1011 = vunpack.c.l.b16 %v197
  %v1012 = vunpack.c.l.b16 %v198
  %v1013 = vunpack.c.h.b16 %v198
  %v1014 = vunpack.c.l.b16 %v199
  %v1015 = vunpack.c.h.b16 %v199
  %v1016 = vunpack.c.l.b16 %v200
  %v1017 = vunpack.c.l.b16 %v201
  %v1018 = vunpack.c.h.b16 %v201
  %v1019 = vunpack.c.l.b16 %v202
  %v1020 = vunpack.c.h.b16 %v202
  %v1021 = vunpack.c.l.b16 %v203
  %v1022 = vunpack.c.l.b16 %v204
  %v1023 = vunpack.c.h.b16 %v204
  %v1024 = vunpack.c.l.b16 %v205
  %v1025 = vunpack.c.h.b16 %v205
  %v1026 = vunpack.c.l.b16 %v206
  %v1027 = vunpack.c.l.b16 %v207
  %v1028 = vunpack.c.h.b16 %v207
  %v1029 = vunpack.c.l.b16 %v208
  %v1030 = vunpack.c.h.b16 %v208
  %v1031 = vunpack.c.l.b16 %v209
  %v1032 = vunpack.c.l.b16 %v210
  %v1033 = vunpack.c.h.b16 %v210
  %v1034 = vunpack.c.l.b16 %v211
  %v1035 = vunpack.c.h.b16 %v211
  %v1036 = vunpack.c.l.b16 %v212
  %v1037 = vunpack.c.l.b16 %v213
  %v1038 = vunpack.c.h.b16 %v213
  %v1039 = vunpack.c.l.b16 %v214
  %v1040 = vunpack.c.h.b16 %v214
  %v1041 = vunpack.c.l.b16 %v215
  %v1042 = vunpack.c.l.b16 %v216
  %v1043 = vunpack.c.h.b16 %v216
  %v1044 = vunpack.c.l.b16 %v217
  %v1045 = vunpack.c.h.b16 %v217
  %v1046 = vunpack.c.l.b16 %v218
  %v1047 = vunpack.c.l.b16 %v219
  %v1048 = vunpack.c.h.b16 %v219
  %v1049 = vunpack.c.l.b16 %v220
  %v1050 = vunpack.c.h.b16 %v220
  %v1051 = vunpack.c.l.b16 %v221
  %v1052 = vunpack.c.l.b16 %v222
  %v1053 = vunpack.c.h.b16 %v222
  %v1054 = vunpack.c.l.b16 %v223
  %v1055 = vunpack.c.h.b16 %v223
  %v1056 = vunpack.c.l.b16 %v224
  %v1057 = vunpack.c.l.b16 %v225
  %v1058 = vunpack.c.h.b16 %v225
  %v1059 = vunpack.c.l.b16 %v226
  %v1060 = vunpack.c.h.b16 %v226
  %v1061 = vunpack.c.l.b16 %v227
  %v1062 = vunpack.c.l.b16 %v228
  %v1063 = vunpack.c.h.b16 %v228
  %v1064 = vunpack.c.l.b16 %v229
  %v1065 = vunpack.c.h.b16 %v229
  %v1066 = vunpack.c.l.b16 %v230
  %v1067 = vunpack.c.l.b16 %v231
  %v1068 = vunpack.c.h.b16 %v231
  %v1069 = vunpack.c.l.b16 %v232
  %v1070 = vunpack.c.h.b16 %v232
  %v1071 = vunpack.c.l.b16 %v233
  %v1072 = vunpack.c.l.b16 %v234
  %v1073 = vunpack.c.h.b16 %v234
  %v1074 = vunpack.c.l.b16 %v235
  %v1075 = vunpack.c.h.b16 %v235
  %v1076 = vunpack.c.l.b16 %v236
  %v1077 = vunpack.c.l.b16 %v237
  %v1078 = vunpack.c.h.b16 %v237
  %v1079 = vunpack.c.l.b16 %v238
  %v1080 = vunpack.c.h.b16 %v238
  %v1081 = vunpack.c.l.b16 %v239
  %v1082 = vunpack.c.l.b16 %v240
  %v1083 = vunpack.c.h.b16 %v240
  %v1084 = vunpack.c.l.b16 %v241
  %v1085 = vunpack.c.h.b16 %v241
  %v1086 = vunpack.c.l.b16 %v242
  %v1087 = vunpack.c.l.b16 %v243
  %v1088 = vunpack.c.h.b16 %v243
  %v1089 = vunpack.c.l.b16 %v244
  %v1090 = vunpack.c.h.b16 %v244
  %v1091 = vunpack.c.l.b16 %v245
  %v1092 = vunpack.c.l.b16 %v246
  %v1093 = vunpack.c.h.b16 %v246
  %v1094 = vunpack.c.l.b16 %v247
  %v1095 = vunpack.c.h.b16 %v247
  %v1096 = vunpack.c.l.b16 %v248
  %v1097 = vunpack.c.l.b16 %v249
  %v1098 = vunpack.c.h.b16 %v249
  %v1099 = vunpack.c.l.b16 %v250
  %v1100 = vunpack.c.h.b16 %v250
  %v1101 = vunpack.c.l.b16 %v251
  %v1102 = vunpack.c.l.b16 %v252
  %v1103 = vunpack.c.h.b16 %v252
  %v1104 = vunpack.c.l.b16 %v253
  %v1105 = vunpack.c.h.b16 %v253
  %v1106 = vunpack.c.l.b16 %v254
  %v1107 = vunpack.c.l.b16 %v255
  %v1108 = vunpack.c.h.b16 %v255
  %v1109 = vunpack.c.l.b16 %v256
  %v1110 = vunpack.c.h.b16 %v256
  %v1111 = vunpack.c.l.b16 %v257
  %v1112 = vunpack.c.l.b16 %v258
  %v1113 = vunpack.c.h.b16 %v258
  %v1114 = vunpack.c.l.b16 %v259
  %v1115 = vunpack.c.h.b16 %v259
  %v1116 = vunpack.c.l.b16 %v260
  %v1117 = vunpack.c.l.b16 %v261
  %v1118 = vunpack.c.h.b16 %v261
  %v1119 = vunpack.c.l.b16 %v262
  %v1120 = vunpack.c.h.b16 %v262
  %v1121 = vunpack.c.l.b16 %v263
  %v1122 = vunpack.c.l.b16 %v264
  %v1123 = vunpack.c.h.b16 %v264
  %v1124 = vunpack.c.l.b16 %v265
  %v1125 = vunpack.c.h.b16 %v265
  %v1126 = vunpack.c.l.b16 %v266
  %v1127 = vunpack.c.l.b16 %v267
  %v1128 = vunpack.c.h.b16 %v267
  %v1129 = vunpack.c.l.b16 %v268
  %v1130 = vunpack.c.h.b16 %v268
  %v1131 = vunpack.c.l.b16 %v269
  %v1132 = vunpack.c.l.b16 %v270
  %v1133 = vunpack.c.h.b16 %v270
  %v1134 = vunpack.c.l.b16 %v271
  %v1135 = vunpack.c.h.b16 %v271
  %v1136 = vunpack.c.l.b16 %v272
  %v1137 = vunpack.c.l.b16 %v273
  %v1138 = vunpack.c.h.b16 %v273
  %v1139 = vunpack.c.l.b16 %v274
  %v1140 = vunpack.c.h.b16 %v274
  %v1141 = vunpack.c.l.b16 %v275
  %v1142 = vunpack.c.l.b16 %v276
  %v1143 = vunpack.c.h.b16 %v276
  %v1144 = vunpack.c.l.b16 %v277
  %v1145 = vunpack.c.h.b16 %v277
  %v1146 = vunpack.c.l.b16 %v278
  %v1147 = vunpack.c.l.b16 %v279
  %v1148 = vunpack.c.h.b16 %v279
  %v1149 = vunpack.c.l.b16 %v280
  %v1150 = vunpack.c.h.b16 %v280
  %v1151 = vunpack.c.l.b16 %v281
  %v1152 = vunpack.c.l.b16 %v282
  %v1153 = vunpack.c.h.b16 %v282
  %v1154 = vunpack.c.l.b16 %v283
  %v1155 = vunpack.c.h.b16 %v283
  %v1156 = vunpack.c.l.b16 %v284
  %v1157 = vunpack.c.l.b16 %v285
  %v1158 = vunpack.c.h.b16 %v285
  %v1159 = vunpack.c.l.b16 %v286
  %v1160 = vunpack.c.h.b16 %v286
  %v1161 = vunpack.c.l.b16 %v287
  %v1162 = vunpack.c.l.b16 %v288
  %v1163 = vunpack.c.h.b16 %v288
  %v1164 = vunpack.c.l.b16 %v289
  %v1165 = vunpack.c.h.b16 %v289
  %v1166 = vunpack.c.l.b16 %v290
  %v1167 = vunpack.c.l.b16 %v291
  %v1168 = vunpack.c.h.b16 %v291
  %v1169 = vunpack.c.l.b16 %v292
  %v1170 = vunpack.c.h.b16 %v292
  %v1171 = vunpack.c.l.b16 %v293
  %v1172 = vunpack.c.l.b16 %v294
  %v1173 = vunpack.c.h.b16 %v294
  %v1174 = vunpack.c.l.b16 %v295
  %v1175 = vunpack.c.h.b16 %v295
  %v1176 = vunpack.c.l.b16 %v296
  %v1177 = vunpack.c.l.b16 %v297
  %v1178 = vunpack.c.h.b16 %v297
  %v1179 = vunpack.c.l.b16 %v298
  %v1180 = vunpack.c.h.b16 %v298
  %v1181 = vunpack.c.l.b16 %v299
  %v1182 = vunpack.c.l.b16 %v300
  %v1183 = vunpack.c.h.b16 %v300
  %v1184 = vunpack.c.l.b16 %v301
  %v1185 = vunpack.c.h.b16 %v301
  %v1186 = vunpack.c.l.b16 %v302
  %v1187 = vunpack.c.l.b16 %v303
  %v1188 = vunpack.c.h.b16 %v303
  %v1189 = vunpack.c.l.b16 %v304
  %v1190 = vunpack.c.h.b16 %v304
  %v1191 = vunpack.c.l.b16 %v305
  %v1192 = vunpack.c.l.b16 %v306
  %v1193 = vunpack.c.h.b16 %v306
  %v1194 = vunpack.c.l.b16 %v307
  %v1195 = vunpack.c.h.b16 %v307
  %v1196 = vunpack.c.l.b16 %v308
  %v1197 = vunpack.c.l.b16 %v309
  %v1198 = vunpack.c.h.b16 %v309
  %v1199 = vunpack.c.l.b16 %v310
  %v1200 = vunpack.c.h.b16 %v310
  %v1201 = vunpack.c.l.b16 %v311
  %v1202 = vunpack.c.l.b16 %v312
  %v1203 = vunpack.c.h.b16 %v312
  %v1204 = vunpack.c.l.b16 %v313
  %v1205 = vunpack.c.h.b16 %v313
  %v1206 = vunpack.c.l.b16 %v314
  %v1207 = vpack.c.b16 %v712, %v707
  %v1208 = vpack.c.b16 %v713, %v708
  %v1209 = vpack.c.b16 %v714, %v709
  %v1210 = vpack.c.b16 %v715, %v710
  %v1211 = vpack.c.b16 %v716, %v711
  %v1212 = vpack.c.b16 %v722, %v717
  %v1213 = vpack.c.b16 %v723, %v718
  %v1214 = vpack.c.b16 %v724, %v719
  %v1215 = vpack.c.b16 %v725, %v720
  %v1216 = vpack.c.b16 %v726, %v721
  %v1217 = vpack.c.b16 %v732, %v727
  %v1218 = vpack.c.b16 %v733, %v728
  %v1219 = vpack.c.b16 %v734, %v729
  %v1220 = vpack.c.b16 %v735, %v730
  %v1221 = vpack.c.b16 %v736, %v731
  %v1222 = vpack.c.b16 %v742, %v737
  %v1223 = vpack.c.b16 %v743, %v738
  %v1224 = vpack.c.b16 %v744, %v739
  %v1225 = vpack.c.b16 %v745, %v740
  %v1226 = vpack.c.b16 %v746, %v741
  %v1227 = vpack.c.b16 %v752, %v747
  %v1228 = vpack.c.b16 %v753, %v748
  %v1229 = vpack.c.b16 %v754, %v749
  %v1230 = vpack.c.b16 %v755, %v750
  %v1231 = vpack.c.b16 %v756, %v751
  %v1232 = vpack.c.b16 %v762, %v757
  %v1233 = vpack.c.b16 %v763, %v758
  %v1234 = vpack.c.b16 %v764, %v759
  %v1235 = vpack.c.b16 %v765, %v760
  %v1236 = vpack.c.b16 %v766, %v761
  %v1237 = vpack.c.b16 %v772, %v767
  %v1238 = vpack.c.b16 %v773, %v768
  %v1239 = vpack.c.b16 %v774, %v769
  %v1240 = vpack.c.b16 %v775, %v770
  %v1241 = vpack.c.b16 %v776, %v771
  %v1242 = vpack.c.b16 %v782, %v777
  %v1243 = vpack.c.b16 %v783, %v778
  %v1244 = vpack.c.b16 %v784, %v779
  %v1245 = vpack.c.b16 %v785, %v780
  %v1246 = vpack.c.b16 %v786, %v781
  %v1247 = vpack.c.b16 %v792, %v787
  %v1248 = vpack.c.b16 %v793, %v788
  %v1249 = vpack.c.b16 %v794, %v789
  %v1250 = vpack.c.b16 %v795, %v790
  %v1251 = vpack.c.b16 %v796, %v791
  %v1252 = vpack.c.b16 %v802, %v797
  %v1253 = vpack.c.b16 %v803, %v798
  %v1254 = vpack.c.b16 %v804, %v799
  %v1255 = vpack.c.b16 %v805, %v800
  %v1256 = vpack.c.b16 %v806, %v801
  %v1257 = vpack.c.b16 %v812, %v807
  %v1258 = vpack.c.b16 %v813, %v808
  %v1259 = vpack.c.b16 %v814, %v809
  %v1260 = vpack.c.b16 %v815, %v810
  %v1261 = vpack.c.b16 %v816, %v811
  %v1262 = vpack.c.b16 %v822, %v817
  %v1263 = vpack.c.b16 %v823, %v818
  %v1264 = vpack.c.b16 %v824, %v819
  %v1265 = vpack.c.b16 %v825, %v820
  %v1266 = vpack.c.b16 %v826, %v821
  %v1267 = vpack.c.b16 %v832, %v827
  %v1268 = vpack.c.b16 %v833, %v828
  %v1269 = vpack.c.b16 %v834, %v829
  %v1270 = vpack.c.b16 %v835, %v830
  %v1271 = vpack.c.b16 %v836, %v831
  %v1272 = vpack.c.b16 %v842, %v837
  %v1273 = vpack.c.b16 %v843, %v838
  %v1274 = vpack.c.b16 %v844, %v839
  %v1275 = vpack.c.b16 %v845, %v840
  %v1276 = vpack.c.b16 %v846, %v841
  %v1277 = vpack.c.b16 %v852, %v847
  %v1278 = vpack.c.b16 %v853, %v848
  %v1279 = vpack.c.b16 %v854, %v849
  %v1280 = vpack.c.b16 %v855, %v850
  %v1281 = vpack.c.b16 %v856, %v851
  %v1282 = vpack.c.b16 %v862, %v857
  %v1283 = vpack.c.b16 %v863, %v858
  %v1284 = vpack.c.b16 %v864, %v859
  %v1285 = vpack.c.b16 %v865, %v860
  %v1286 = vpack.c.b16 %v866, %v861
  %v1287 = vpack.c.b16 %v872, %v867
  %v1288 = vpack.c.b16 %v873, %v868
  %v1289 = vpack.c.b16 %v874, %v869
  %v1290 = vpack.c.b16 %v875, %v870
  %v1291 = vpack.c.b16 %v876, %v871
  %v1292 = vpack.c.b16 %v882, %v877
  %v1293 = vpack.c.b16 %v883, %v878
  %v1294 = vpack.c.b16 %v884, %v879
  %v1295 = vpack.c.b16 %v885, %v880
  %v1296 = vpack.c.b16 %v886, %v881
  %v1297 = vpack.c.b16 %v892, %v887
  %v1298 = vpack.c.b16 %v893, %v888
  %v1299 = vpack.c.b16 %v894, %v889
  %v1300 = vpack.c.b16 %v895, %v890
  %v1301 = vpack.c.b16 %v896, %v891
  %v1302 = vpack.c.b16 %v902, %v897
  %v1303 = vpack.c.b16 %v903, %v898
  %v1304 = vpack.c.b16 %v904, %v899
  %v1305 = vpack.c.b16 %v905, %v900
  %v1306 = vpack.c.b16 %v906, %v901
  %v1307 = vpack.c.b16 %v912, %v907
  %v1308 = vpack.c.b16 %v913, %v908
  %v1309 = vpack.c.b16 %v914, %v909
  %v1310 = vpack.c.b16 %v915, %v910
  %v1311 = vpack.c.b16 %v916, %v911
  %v1312 = vpack.c.b16 %v922, %v917
  %v1313 = vpack.c.b16 %v923, %v918
  %v1314 = vpack.c.b16 %v924, %v919
  %v1315 = vpack.c.b16 %v925, %v920
  %v1316 = vpack.c.b16 %v926, %v921
  %v1317 = vpack.c.b16 %v932, %v927
  %v1318 = vpack.c.b16 %v933, %v928
  %v1319 = vpack.c.b16 %v934, %v929
  %v1320 = vpack.c.b16 %v935, %v930
  %v1321 = vpack.c.b16 %v936, %v931
  %v1322 = vpack.c.b16 %v942, %v937
  %v1323 = vpack.c.b16 %v943, %v938
  %v1324 = vpack.c.b16 %v944, %v939
  %v1325 = vpack.c.b16 %v945, %v940
  %v1326 = vpack.c.b16 %v946, %v941
  %v1327 = vpack.c.b16 %v952, %v947
  %v1328 = vpack.c.b16 %v953, %v948
  %v1329 = vpack.c.b16 %v954, %v949
  %v1330 = vpack.c.b16 %v955, %v950
  %v1331 = vpack.c.b16 %v956, %v951
  %v1332 = vpack.c.b16 %v962, %v957
  %v1333 = vpack.c.b16 %v963, %v958
  %v1334 = vpack.c.b16 %v964, %v959
  %v1335 = vpack.c.b16 %v965, %v960
  %v1336 = vpack.c.b16 %v966, %v961
  %v1337 = vpack.c.b16 %v972, %v967
  %v1338 = vpack.c.b16 %v973, %v968
  %v1339 = vpack.c.b16 %v974, %v969
  %v1340 = vpack.c.b16 %v975, %v970
  %v1341 = vpack.c.b16 %v976, %v971
  %v1342 = vpack.c.b16 %v982, %v977
  %v1343 = vpack.c.b16 %v983, %v978
  %v1344 = vpack.c.b16 %v984, %v979
  %v1345 = vpack.c.b16 %v985, %v980
  %v1346 = vpack.c.b16 %v986, %v981
  %v1347 = vpack.c.b16 %v992, %v987
  %v1348 = vpack.c.b16 %v993, %v988
  %v1349 = vpack.c.b16 %v994, %v989
  %v1350 = vpack.c.b16 %v995, %v990
  %v1351 = vpack.c.b16 %v996, %v991
  %v1352 = vpack.c.b16 %v1002, %v997
  %v1353 = vpack.c.b16 %v1003, %v998
  %v1354 = vpack.c.b16 %v1004, %v999
  %v1355 = vpack.c.b16 %v1005, %v1000
  %v1356 = vpack.c.b16 %v1006, %v1001
  %v1357 = vpack.c.b16 %v1012, %v1007
  %v1358 = vpack.c.b16 %v1013, %v1008
  %v1359 = vpack.c.b16 %v1014, %v1009
  %v1360 = vpack.c.b16 %v1015, %v1010
  %v1361 = vpack.c.b16 %v1016, %v1011
  %v1362 = vpack.c.b16 %v1022, %v1017
  %v1363 = vpack.c.b16 %v1023, %v1018
  %v1364 = vpack.c.b16 %v1024, %v1019
  %v1365 = vpack.c.b16 %v1025, %v1020
  %v1366 = vpack.c.b16 %v1026, %v1021
  %v1367 = vpack.c.b16 %v1032, %v1027
  %v1368 = vpack.c.b16 %v1033, %v1028
  %v1369 = vpack.c.b16 %v1034, %v1029
  %v1370 = vpack.c.b16 %v1035, %v1030
  %v1371 = vpack.c.b16 %v1036, %v1031
  %v1372 = vpack.c.b16 %v1042, %v1037
  %v1373 = vpack.c.b16 %v1043, %v1038
  %v1374 = vpack.c.b16 %v1044, %v1039
  %v1375 = vpack.c.b16 %v1045, %v1040
  %v1376 = vpack.c.b16 %v1046, %v1041
  %v1377 = vpack.c.b16 %v1052, %v1047
  %v1378 = vpack.c.b16 %v1053, %v1048
  %v1379 = vpack.c.b16 %v1054, %v1049
  %v1380 = vpack.c.b16 %v1055, %v1050
  %v1381 = vpack.c.b16 %v1056, %v1051
  %v1382 = vpack.c.b16 %v1062, %v1057
  %v1383 = vpack.c.b16 %v1063, %v1058
  %v1384 = vpack.c.b16 %v1064, %v1059
  %v1385 = vpack.c.b16 %v1065, %v1060
  %v1386 = vpack.c.b16 %v1066, %v1061
  %v1387 = vpack.c.b16 %v1072, %v1067
  %v1388 = vpack.c.b16 %v1073, %v1068
  %v1389 = vpack.c.b16 %v1074, %v1069
  %v1390 = vpack.c.b16 %v1075, %v1070
  %v1391 = vpack.c.b16 %v1076, %v1071
  %v1392 = vpack.c.b16 %v1082, %v1077
  %v1393 = vpack.c.b16 %v1083, %v1078
  %v1394 = vpack.c.b16 %v1084, %v1079
  %v1395 = vpack.c.b16 %v1085, %v1080
  %v1396 = vpack.c.b16 %v1086, %v1081
  %v1397 = vpack.c.b16 %v1092, %v1087
  %v1398 = vpack.c.b16 %v1093, %v1088
  %v1399 = vpack.c.b16 %v1094, %v1089
  %v1400 = vpack.c.b16 %v1095, %v1090
  %v1401 = vpack.c.b16 %v1096, %v1091
  %v1402 = vpack.c.b16 %v1102, %v1097
  %v1403 = vpack.c.b16 %v1103, %v1098
  %v1404 = vpack.c.b16 %v1104, %v1099
  %v1405 = vpack.c.b16 %v1105, %v1100
  %v1406 = vpack.c.b16 %v1106, %v1101
  %v1407 = vpack.c.b16 %v1112, %v1107
  %v1408 = vpack.c.b16 %v1113, %v1108
  %v1409 = vpack.c.b16 %v1114, %v1109
  %v1410 = vpack.c.b16 %v1115, %v1110
  %v1411 = vpack.c.b16 %v1116, %v1111
  %v1412 = vpack.c.b16 %v1122, %v1117
  %v1413 = vpack.c.b16 %v1123, %v1118
  %v1414 = vpack.c.b16 %v1124, %v1119
  %v1415 = vpack.c.b16 %v1125, %v1120
  %v1416 = vpack.c.b16 %v1126, %v1121
  %v1417 = vpack.c.b16 %v1132, %v1127
  %v1418 = vpack.c.b16 %v1133, %v1128
  %v1419 = vpack.c.b16 %v1134, %v1129
  %v1420 = vpack.c.b16 %v1135, %v1130
  %v1421 = vpack.c.b16 %v1136, %v1131
  %v1422 = vpack.c.b16 %v1142, %v1137
  %v1423 = vpack.c.b16 %v1143, %v1138
  %v1424 = vpack.c.b16 %v1144, %v1139
  %v1425 = vpack.c.b16 %v1145, %v1140
  %v1426 = vpack.c.b16 %v1146, %v1141
  %v1427 = vpack.c.b16 %v1152, %v1147
  %v1428 = vpack.c.b16 %v1153, %v1148
  %v1429 = vpack.c.b16 %v1154, %v1149
  %v1430 = vpack.c.b16 %v1155, %v1150
  %v1431 = vpack.c.b16 %v1156, %v1151
  %v1432 = vpack.c.b16 %v1162, %v1157
  %v1433 = vpack.c.b16 %v1163, %v1158
  %v1434 = vpack.c.b16 %v1164, %v1159
  %v1435 = vpack.c.b16 %v1165, %v1160
  %v1436 = vpack.c.b16 %v1166, %v1161
  %v1437 = vpack.c.b16 %v1172, %v1167
  %v1438 = vpack.c.b16 %v1173, %v1168
  %v1439 = vpack.c.b16 %v1174, %v1169
  %v1440 = vpack.c.b16 %v1175, %v1170
  %v1441 = vpack.c.b16 %v1176, %v1171
  %v1442 = vpack.c.b16 %v1182, %v1177
  %v1443 = vpack.c.b16 %v1183, %v1178
  %v1444 = vpack.c.b16 %v1184, %v1179
  %v1445 = vpack.c.b16 %v1185, %v1180
  %v1446 = vpack.c.b16 %v1186, %v1181
  %v1447 = vpack.c.b16 %v1192, %v1187
  %v1448 = vpack.c.b16 %v1193, %v1188
  %v1449 = vpack.c.b16 %v1194, %v1189
  %v1450 = vpack.c.b16 %v1195, %v1190
  %v1451 = vpack.c.b16 %v1196, %v1191
  %v1452 = vpack.c.b16 %v1202, %v1197
  %v1453 = vpack.c.b16 %v1203, %v1198
  %v1454 = vpack.c.b16 %v1204, %v1199
  %v1455 = vpack.c.b16 %v1205, %v1200
  %v1456 = vpack.c.b16 %v1206, %v1201
  %v1787 = vunpack.c.l.b16 %v315
  %v1788 = vunpack.c.h.b16 %v315
  %v1789 = vunpack.c.l.b16 %v316
  %v1790 = vunpack.c.h.b16 %v316
  %v1791 = vunpack.c.l.b16 %v317
  %v1792 = vunpack.c.h.b16 %v317
  %v1793 = vunpack.c.l.b16 %v318
  %v1794 = vunpack.c.h.b16 %v318
  %v1795 = vunpack.c.l.b16 %v319
  %v1796 = vunpack.c.h.b16 %v319
  %v1797 = vunpack.c.l.b16 %v320
  %v1798 = vunpack.c.h.b16 %v320
  %v1799 = vunpack.c.l.b16 %v321
  %v1800 = vunpack.c.h.b16 %v321
  %v1801 = vunpack.c.l.b16 %v322
  %v1802 = vunpack.c.h.b16 %v322
  %v1803 = vunpack.c.l.b16 %v323
  %v1804 = vunpack.c.h.b16 %v323
  %v1805 = vunpack.c.l.b16 %v324
  %v1806 = vunpack.c.h.b16 %v324
  %v1807 = vunpack.c.l.b16 %v325
  %v1808 = vunpack.c.h.b16 %v325
  %v1809 = vunpack.c.l.b16 %v326
  %v1810 = vunpack.c.h.b16 %v326
  %v1811 = vunpack.c.l.b16 %v327
  %v1812 = vunpack.c.h.b16 %v327
  %v1813 = vunpack.c.l.b16 %v328
  %v1814 = vunpack.c.h.b16 %v328
  %v1815 = vunpack.c.l.b16 %v329
  %v1816 = vunpack.c.h.b16 %v329
  %v1817 = vunpack.c.l.b16 %v330
  %v1818 = vunpack.c.h.b16 %v330
  %v1819 = vunpack.c.l.b16 %v331
  %v1820 = vunpack.c.h.b16 %v331
  %v1821 = vunpack.c.l.b16 %v332
  %v1822 = vunpack.c.h.b16 %v332
  %v1823 = vunpack.c.l.b16 %v333
  %v1824 = vunpack.c.h.b16 %v333
  %v1825 = vunpack.c.l.b16 %v334
  %v1826 = vunpack.c.h.b16 %v334
  %v1827 = vunpack.c.l.b16 %v335
  %v1828 = vunpack.c.h.b16 %v335
  %v1829 = vunpack.c.l.b16 %v336
  %v1830 = vunpack.c.h.b16 %v336
  %v1831 = vunpack.c.l.b16 %v337
  %v1832 = vunpack.c.h.b16 %v337
  %v1833 = vunpack.c.l.b16 %v338
  %v1834 = vunpack.c.h.b16 %v338
  %v1835 = vunpack.c.l.b16 %v339
  %v1836 = vunpack.c.h.b16 %v339
  %v1837 = vunpack.c.l.b16 %v340
  %v1838 = vunpack.c.h.b16 %v340
  %v1839 = vunpack.c.l.b16 %v341
  %v1840 = vunpack.c.h.b16 %v341
  %v1841 = vunpack.c.l.b16 %v342
  %v1842 = vunpack.c.h.b16 %v342
  %v1843 = vunpack.c.l.b16 %v343
  %v1844 = vunpack.c.h.b16 %v343
  %v1845 = vunpack.c.l.b16 %v344
  %v1846 = vunpack.c.h.b16 %v344
  %v1847 = vunpack.c.l.b16 %v345
  %v1848 = vunpack.c.h.b16 %v345
  %v1849 = vunpack.c.l.b16 %v346
  %v1850 = vunpack.c.h.b16 %v346
  %v1851 = vunpack.c.l.b16 %v347
  %v1852 = vunpack.c.h.b16 %v347
  %v1853 = vunpack.c.l.b16 %v348
  %v1854 = vunpack.c.h.b16 %v348
  %v1855 = vunpack.c.l.b16 %v349
  %v1856 = vunpack.c.h.b16 %v349
  %v1857 = vunpack.c.l.b16 %v350
  %v1858 = vunpack.c.h.b16 %v350
  %v1859 = vunpack.c.l.b16 %v351
  %v1860 = vunpack.c.h.b16 %v351
  %v1861 = vunpack.c.l.b16 %v352
  %v1862 = vunpack.c.h.b16 %v352
  %v1863 = vunpack.c.l.b16 %v353
  %v1864 = vunpack.c.h.b16 %v353
  %v1865 = vunpack.c.l.b16 %v354
  %v1866 = vunpack.c.h.b16 %v354
  %v1867 = vunpack.c.l.b16 %v355
  %v1868 = vunpack.c.h.b16 %v355
  %v1869 = vunpack.c.l.b16 %v356
  %v1870 = vunpack.c.h.b16 %v356
  %v1871 = vunpack.c.l.b16 %v357
  %v1872 = vunpack.c.h.b16 %v357
  %v1873 = vunpack.c.l.b16 %v358
  %v1874 = vunpack.c.h.b16 %v358
  %v1875 = vunpack.c.l.b16 %v359
  %v1876 = vunpack.c.h.b16 %v359
  %v1877 = vunpack.c.l.b16 %v360
  %v1878 = vunpack.c.h.b16 %v360
  %v1879 = vunpack.c.l.b16 %v361
  %v1880 = vunpack.c.h.b16 %v361
  %v1881 = vunpack.c.l.b16 %v362
  %v1882 = vunpack.c.h.b16 %v362
  %v1883 = vunpack.c.l.b16 %v363
  %v1884 = vunpack.c.h.b16 %v363
  %v1885 = vunpack.c.l.b16 %v364
  %v1886 = vunpack.c.h.b16 %v364
  %v1887 = vunpack.c.l.b16 %v365
  %v1888 = vunpack.c.h.b16 %v365
  %v1889 = vunpack.c.l.b16 %v366
  %v1890 = vunpack.c.h.b16 %v366
  %v1891 = vunpack.c.l.b16 %v367
  %v1892 = vunpack.c.h.b16 %v367
  %v1893 = vunpack.c.l.b16 %v368
  %v1894 = vunpack.c.h.b16 %v368
  %v1895 = vunpack.c.l.b16 %v369
  %v1896 = vunpack.c.h.b16 %v369
  %v1897 = vunpack.c.l.b16 %v370
  %v1898 = vunpack.c.h.b16 %v370
  %v1899 = vunpack.c.l.b16 %v371
  %v1900 = vunpack.c.h.b16 %v371
  %v1901 = vunpack.c.l.b16 %v372
  %v1902 = vunpack.c.h.b16 %v372
  %v1903 = vunpack.c.l.b16 %v373
  %v1904 = vunpack.c.h.b16 %v373
  %v1905 = vunpack.c.l.b16 %v374
  %v1906 = vunpack.c.h.b16 %v374
  %v1907 = vunpack.c.l.b16 %v375
  %v1908 = vunpack.c.h.b16 %v375
  %v1909 = vunpack.c.l.b16 %v376
  %v1910 = vunpack.c.h.b16 %v376
  %v1911 = vunpack.c.l.b16 %v377
  %v1912 = vunpack.c.h.b16 %v377
  %v1913 = vunpack.c.l.b16 %v378
  %v1914 = vunpack.c.h.b16 %v378
  %v1915 = vunpack.c.l.b16 %v379
  %v1916 = vunpack.c.h.b16 %v379
  %v1917 = vunpack.c.l.b16 %v380
  %v1918 = vunpack.c.h.b16 %v380
  %v1919 = vunpack.c.l.b16 %v381
  %v1920 = vunpack.c.h.b16 %v381
  %v1921 = vunpack.c.l.b16 %v382
  %v1922 = vunpack.c.h.b16 %v382
  %v1923 = vunpack.c.l.b16 %v383
  %v1924 = vunpack.c.h.b16 %v383
  %v1925 = vunpack.c.l.b16 %v384
  %v1926 = vunpack.c.h.b16 %v384
  %v1927 = vunpack.c.l.b16 %v385
  %v1928 = vunpack.c.h.b16 %v385
  %v1929 = vunpack.c.l.b16 %v386
  %v1930 = vunpack.c.h.b16 %v386
  %v1931 = vunpack.c.l.b16 %v387
  %v1932 = vunpack.c.h.b16 %v387
  %v1933 = vunpack.c.l.b16 %v388
  %v1934 = vunpack.c.h.b16 %v388
  %v1935 = vunpack.c.l.b16 %v389
  %v1936 = vunpack.c.h.b16 %v389
  %v1937 = vunpack.c.l.b16 %v390
  %v1938 = vunpack.c.h.b16 %v390
  %v1939 = vunpack.c.l.b16 %v391
  %v1940 = vunpack.c.h.b16 %v391
  %v1941 = vunpack.c.l.b16 %v392
  %v1942 = vunpack.c.h.b16 %v392
  %v1943 = vunpack.c.l.b16 %v393
  %v1944 = vunpack.c.h.b16 %v393
  %v1945 = vunpack.c.l.b16 %v394
  %v1946 = vunpack.c.h.b16 %v394
  %v1947 = vpack.c.b16 %v1789, %v1787
  %v1948 = vpack.c.b16 %v1790, %v1788
  %v1949 = vpack.c.b16 %v1793, %v1791
  %v1950 = vpack.c.b16 %v1794, %v1792
  %v1951 = vpack.c.b16 %v1797, %v1795
  %v1952 = vpack.c.b16 %v1798, %v1796
  %v1953 = vpack.c.b16 %v1801, %v1799
  %v1954 = vpack.c.b16 %v1802, %v1800
  %v1955 = vpack.c.b16 %v1805, %v1803
  %v1956 = vpack.c.b16 %v1806, %v1804
  %v1957 = vpack.c.b16 %v1809, %v1807
  %v1958 = vpack.c.b16 %v1810, %v1808
  %v1959 = vpack.c.b16 %v1813, %v1811
  %v1960 = vpack.c.b16 %v1814, %v1812
  %v1961 = vpack.c.b16 %v1817, %v1815
  %v1962 = vpack.c.b16 %v1818, %v1816
  %v1963 = vpack.c.b16 %v1821, %v1819
  %v1964 = vpack.c.b16 %v1822, %v1820
  %v1965 = vpack.c.b16 %v1825, %v1823
  %v1966 = vpack.c.b16 %v1826, %v1824
  %v1967 = vpack.c.b16 %v1829, %v1827
  %v1968 = vpack.c.b16 %v1830, %v1828
  %v1969 = vpack.c.b16 %v1833, %v1831
  %v1970 = vpack.c.b16 %v1834, %v1832
  %v1971 = vpack.c.b16 %v1837, %v1835
  %v1972 = vpack.c.b16 %v1838, %v1836
  %v1973 = vpack.c.b16 %v1841, %v1839
  %v1974 = vpack.c.b16 %v1842, %v1840
  %v1975 = vpack.c.b16 %v1845, %v1843
  %v1976 = vpack.c.b16 %v1846, %v1844
  %v1977 = vpack.c.b16 %v1849, %v1847
  %v1978 = vpack.c.b16 %v1850, %v1848
  %v1979 = vpack.c.b16 %v1853, %v1851
  %v1980 = vpack.c.b16 %v1854, %v1852
  %v1981 = vpack.c.b16 %v1857, %v1855
  %v1982 = vpack.c.b16 %v1858, %v1856
  %v1983 = vpack.c.b16 %v1861, %v1859
  %v1984 = vpack.c.b16 %v1862, %v1860
  %v1985 = vpack.c.b16 %v1865, %v1863
  %v1986 = vpack.c.b16 %v1866, %v1864
  %v1987 = vpack.c.b16 %v1869, %v1867
  %v1988 = vpack.c.b16 %v1870, %v1868
  %v1989 = vpack.c.b16 %v1873, %v1871
  %v1990 = vpack.c.b16 %v1874, %v1872
  %v1991 = vpack.c.b16 %v1877, %v1875
  %v1992 = vpack.c.b16 %v1878, %v1876
  %v1993 = vpack.c.b16 %v1881, %v1879
  %v1994 = vpack.c.b16 %v1882, %v1880
  %v1995 = vpack.c.b16 %v1885, %v1883
  %v1996 = vpack.c.b16 %v1886, %v1884
  %v1997 = vpack.c.b16 %v1889, %v1887
  %v1998 = vpack.c.b16 %v1890, %v1888
  %v1999 = vpack.c.b16 %v1893, %v1891
  %v2000 = vpack.c.b16 %v1894, %v1892
  %v2001 = vpack.c.b16 %v1897, %v1895
  %v2002 = vpack.c.b16 %v1898, %v1896
  %v2003 = vpack.c.b16 %v1901, %v1899
  %v2004 = vpack.c.b16 %v1902, %v1900
  %v2005 = vpack.c.b16 %v1905, %v1903
  %v2006 = vpack.c.b16 %v1906, %v1904
  %v2007 = vpack.c.b16 %v1909, %v1907
  %v2008 = vpack.c.b16 %v1910, %v1908
  %v2009 = vpack.c.b16 %v1913, %v1911
  %v2010 = vpack.c.b16 %v1914, %v1912
  %v2011 = vpack.c.b16 %v1917, %v1915
  %v2012 = vpack.c.b16 %v1918, %v1916
  %v2013 = vpack.c.b16 %v1921, %v1919
  %v2014 = vpack.c.b16 %v1922, %v1920
  %v2015 = vpack.c.b16 %v1925, %v1923
  %v2016 = vpack.c.b16 %v1926, %v1924
  %v2017 = vpack.c.b16 %v1929, %v1927
  %v2018 = vpack.c.b16 %v1930, %v1928
  %v2019 = vpack.c.b16 %v1933, %v1931
  %v2020 = vpack.c.b16 %v1934, %v1932
  %v2021 = vpack.c.b16 %v1937, %v1935
  %v2022 = vpack.c.b16 %v1938, %v1936
  %v2023 = vpack.c.b16 %v1941, %v1939
  %v2024 = vpack.c.b16 %v1942, %v1940
  %v2025 = vpack.c.b16 %v1945, %v1943
  %v2026 = vpack.c.b16 %v1946, %v1944
  %2107 = vmatprep.subr.bf16.mxu0 %v1962
  %2108 = vmatpush1.bf16.msra.mxu0 %v1961
  %2109 = vmatprep.subr.bf16.mxu0 %v1960
  %2110 = vmatpush1.bf16.msra.mxu0 %v1959
  %2111 = vmatprep.subr.bf16.mxu0 %v1958
  %2112 = vmatpush1.bf16.msra.mxu0 %v1957
  %2113 = vmatprep.subr.bf16.mxu0 %v1956
  %2114 = vmatpush1.bf16.msra.mxu0 %v1955
  %2115 = vmatprep.subr.bf16.mxu0 %v1954
  %2116 = vmatpush1.bf16.msra.mxu0 %v1953
  %2117 = vmatprep.subr.bf16.mxu0 %v1952
  %2118 = vmatpush1.bf16.msra.mxu0 %v1951
  %2119 = vmatprep.subr.bf16.mxu0 %v1950
  %2120 = vmatpush1.bf16.msra.mxu0 %v1949
  %2121 = vmatprep.subr.bf16.mxu0 %v1948
  %2122 = vmatpush1.bf16.msra.mxu0 %v1947
  %2123 = vmatprep.subr.bf16.mxu0 %v1978
  %2124 = vmatpush2.bf16.msra.mxu0 %v1977
  %2125 = vmatprep.subr.bf16.mxu0 %v1976
  %2126 = vmatpush2.bf16.msra.mxu0 %v1975
  %2127 = vmatprep.subr.bf16.mxu0 %v1974
  %2128 = vmatpush2.bf16.msra.mxu0 %v1973
  %2129 = vmatprep.subr.bf16.mxu0 %v1972
  %2130 = vmatpush2.bf16.msra.mxu0 %v1971
  %2131 = vmatprep.subr.bf16.mxu0 %v1970
  %2132 = vmatpush2.bf16.msra.mxu0 %v1969
  %2133 = vmatprep.subr.bf16.mxu0 %v1968
  %2134 = vmatpush2.bf16.msra.mxu0 %v1967
  %2135 = vmatprep.subr.bf16.mxu0 %v1966
  %2136 = vmatpush2.bf16.msra.mxu0 %v1965
  %2137 = vmatprep.subr.bf16.mxu0 %v1964
  %2138 = vmatpush2.bf16.msra.mxu0 %v1963
  %2139 = vmatprep.mubr.bf16.mxu0 %v1208
  %2140 = vmatmul.mubr.bf16.gmra.mxu0 %v1207
  %v2141 = vpop.f32.mrf.mxu0
  %v2142 = vadd.f32 %v400, %v2141
  %v2143 = vpop.f32.mrf.mxu0
  %v2144 = vadd.f32 %v404, %v2143
  %v2145 = vpop.f32.mrf.mxu0
  %v2146 = vadd.f32 %v400, %v2145
  %v2147 = vpop.f32.mrf.mxu0
  %v2148 = vadd.f32 %v404, %v2147
  %2149 = vmatprep.mubr.bf16.mxu0 %v1213
  %2150 = vmatmul.mubr.bf16.gmra.mxu0 %v1212
  %v2151 = vpop.f32.mrf.mxu0
  %v2152 = vadd.f32 %v400, %v2151
  %v2153 = vpop.f32.mrf.mxu0
  %v2154 = vadd.f32 %v404, %v2153
  %v2155 = vpop.f32.mrf.mxu0
  %v2156 = vadd.f32 %v400, %v2155
  %v2157 = vpop.f32.mrf.mxu0
  %v2158 = vadd.f32 %v404, %v2157
  %2159 = vmatprep.mubr.bf16.mxu0 %v1218
  %2160 = vmatmul.mubr.bf16.gmra.mxu0 %v1217
  %v2161 = vpop.f32.mrf.mxu0
  %v2162 = vadd.f32 %v400, %v2161
  %v2163 = vpop.f32.mrf.mxu0
  %v2164 = vadd.f32 %v404, %v2163
  %v2165 = vpop.f32.mrf.mxu0
  %v2166 = vadd.f32 %v400, %v2165
  %v2167 = vpop.f32.mrf.mxu0
  %v2168 = vadd.f32 %v404, %v2167
  %2169 = vmatprep.mubr.bf16.mxu0 %v1223
  %2170 = vmatmul.mubr.bf16.gmra.mxu0 %v1222
  %v2171 = vpop.f32.mrf.mxu0
  %v2172 = vadd.f32 %v400, %v2171
  %v2173 = vpop.f32.mrf.mxu0
  %v2174 = vadd.f32 %v404, %v2173
  %v2175 = vpop.f32.mrf.mxu0
  %v2176 = vadd.f32 %v400, %v2175
  %v2177 = vpop.f32.mrf.mxu0
  %v2178 = vadd.f32 %v404, %v2177
  %2179 = vmatprep.mubr.bf16.mxu0 %v1228
  %2180 = vmatmul.mubr.bf16.gmra.mxu0 %v1227
  %v2181 = vpop.f32.mrf.mxu0
  %v2182 = vadd.f32 %v400, %v2181
  %v2183 = vpop.f32.mrf.mxu0
  %v2184 = vadd.f32 %v404, %v2183
  %v2185 = vpop.f32.mrf.mxu0
  %v2186 = vadd.f32 %v400, %v2185
  %v2187 = vpop.f32.mrf.mxu0
  %v2188 = vadd.f32 %v404, %v2187
  %2189 = vmatprep.mubr.bf16.mxu0 %v1233
  %2190 = vmatmul.mubr.bf16.gmra.mxu0 %v1232
  %v2191 = vpop.f32.mrf.mxu0
  %v2192 = vadd.f32 %v400, %v2191
  %v2193 = vpop.f32.mrf.mxu0
  %v2194 = vadd.f32 %v404, %v2193
  %v2195 = vpop.f32.mrf.mxu0
  %v2196 = vadd.f32 %v400, %v2195
  %v2197 = vpop.f32.mrf.mxu0
  %v2198 = vadd.f32 %v404, %v2197
  %2199 = vmatprep.mubr.bf16.mxu0 %v1238
  %2200 = vmatmul.mubr.bf16.gmra.mxu0 %v1237
  %v2201 = vpop.f32.mrf.mxu0
  %v2202 = vadd.f32 %v400, %v2201
  %v2203 = vpop.f32.mrf.mxu0
  %v2204 = vadd.f32 %v404, %v2203
  %v2205 = vpop.f32.mrf.mxu0
  %v2206 = vadd.f32 %v400, %v2205
  %v2207 = vpop.f32.mrf.mxu0
  %v2208 = vadd.f32 %v404, %v2207
  %2209 = vmatprep.mubr.bf16.mxu0 %v1243
  %2210 = vmatmul.mubr.bf16.gmra.mxu0 %v1242
  %v2211 = vpop.f32.mrf.mxu0
  %v2212 = vadd.f32 %v400, %v2211
  %v2213 = vpop.f32.mrf.mxu0
  %v2214 = vadd.f32 %v404, %v2213
  %v2215 = vpop.f32.mrf.mxu0
  %v2216 = vadd.f32 %v400, %v2215
  %v2217 = vpop.f32.mrf.mxu0
  %v2218 = vadd.f32 %v404, %v2217
  %2219 = vmatprep.mubr.bf16.mxu0 %v1248
  %2220 = vmatmul.mubr.bf16.gmra.mxu0 %v1247
  %v2221 = vpop.f32.mrf.mxu0
  %v2222 = vadd.f32 %v400, %v2221
  %v2223 = vpop.f32.mrf.mxu0
  %v2224 = vadd.f32 %v404, %v2223
  %v2225 = vpop.f32.mrf.mxu0
  %v2226 = vadd.f32 %v400, %v2225
  %v2227 = vpop.f32.mrf.mxu0
  %v2228 = vadd.f32 %v404, %v2227
  %2229 = vmatprep.mubr.bf16.mxu0 %v1253
  %2230 = vmatmul.mubr.bf16.gmra.mxu0 %v1252
  %v2231 = vpop.f32.mrf.mxu0
  %v2232 = vadd.f32 %v400, %v2231
  %v2233 = vpop.f32.mrf.mxu0
  %v2234 = vadd.f32 %v404, %v2233
  %v2235 = vpop.f32.mrf.mxu0
  %v2236 = vadd.f32 %v400, %v2235
  %v2237 = vpop.f32.mrf.mxu0
  %v2238 = vadd.f32 %v404, %v2237
  %2239 = vmatprep.mubr.bf16.mxu0 %v1258
  %2240 = vmatmul.mubr.bf16.gmra.mxu0 %v1257
  %v2241 = vpop.f32.mrf.mxu0
  %v2242 = vadd.f32 %v400, %v2241
  %v2243 = vpop.f32.mrf.mxu0
  %v2244 = vadd.f32 %v404, %v2243
  %v2245 = vpop.f32.mrf.mxu0
  %v2246 = vadd.f32 %v400, %v2245
  %v2247 = vpop.f32.mrf.mxu0
  %v2248 = vadd.f32 %v404, %v2247
  %2249 = vmatprep.mubr.bf16.mxu0 %v1263
  %2250 = vmatmul.mubr.bf16.gmra.mxu0 %v1262
  %v2251 = vpop.f32.mrf.mxu0
  %v2252 = vadd.f32 %v400, %v2251
  %v2253 = vpop.f32.mrf.mxu0
  %v2254 = vadd.f32 %v404, %v2253
  %v2255 = vpop.f32.mrf.mxu0
  %v2256 = vadd.f32 %v400, %v2255
  %v2257 = vpop.f32.mrf.mxu0
  %v2258 = vadd.f32 %v404, %v2257
  %2259 = vmatprep.mubr.bf16.mxu0 %v1268
  %2260 = vmatmul.mubr.bf16.gmra.mxu0 %v1267
  %v2261 = vpop.f32.mrf.mxu0
  %v2262 = vadd.f32 %v400, %v2261
  %v2263 = vpop.f32.mrf.mxu0
  %v2264 = vadd.f32 %v404, %v2263
  %v2265 = vpop.f32.mrf.mxu0
  %v2266 = vadd.f32 %v400, %v2265
  %v2267 = vpop.f32.mrf.mxu0
  %v2268 = vadd.f32 %v404, %v2267
  %2269 = vmatprep.mubr.bf16.mxu0 %v1273
  %2270 = vmatmul.mubr.bf16.gmra.mxu0 %v1272
  %v2271 = vpop.f32.mrf.mxu0
  %v2272 = vadd.f32 %v400, %v2271
  %v2273 = vpop.f32.mrf.mxu0
  %v2274 = vadd.f32 %v404, %v2273
  %v2275 = vpop.f32.mrf.mxu0
  %v2276 = vadd.f32 %v400, %v2275
  %v2277 = vpop.f32.mrf.mxu0
  %v2278 = vadd.f32 %v404, %v2277
  %2279 = vmatprep.mubr.bf16.mxu0 %v1278
  %2280 = vmatmul.mubr.bf16.gmra.mxu0 %v1277
  %v2281 = vpop.f32.mrf.mxu0
  %v2282 = vadd.f32 %v400, %v2281
  %v2283 = vpop.f32.mrf.mxu0
  %v2284 = vadd.f32 %v404, %v2283
  %v2285 = vpop.f32.mrf.mxu0
  %v2286 = vadd.f32 %v400, %v2285
  %v2287 = vpop.f32.mrf.mxu0
  %v2288 = vadd.f32 %v404, %v2287
  %2289 = vmatprep.mubr.bf16.mxu0 %v1283
  %2290 = vmatmul.mubr.bf16.gmra.mxu0 %v1282
  %v2291 = vpop.f32.mrf.mxu0
  %v2292 = vadd.f32 %v400, %v2291
  %v2293 = vpop.f32.mrf.mxu0
  %v2294 = vadd.f32 %v404, %v2293
  %v2295 = vpop.f32.mrf.mxu0
  %v2296 = vadd.f32 %v400, %v2295
  %v2297 = vpop.f32.mrf.mxu0
  %v2298 = vadd.f32 %v404, %v2297
  %2299 = vmatprep.mubr.bf16.mxu0 %v1288
  %2300 = vmatmul.mubr.bf16.gmra.mxu0 %v1287
  %v2301 = vpop.f32.mrf.mxu0
  %v2302 = vadd.f32 %v400, %v2301
  %v2303 = vpop.f32.mrf.mxu0
  %v2304 = vadd.f32 %v404, %v2303
  %v2305 = vpop.f32.mrf.mxu0
  %v2306 = vadd.f32 %v400, %v2305
  %v2307 = vpop.f32.mrf.mxu0
  %v2308 = vadd.f32 %v404, %v2307
  %2309 = vmatprep.mubr.bf16.mxu0 %v1293
  %2310 = vmatmul.mubr.bf16.gmra.mxu0 %v1292
  %v2311 = vpop.f32.mrf.mxu0
  %v2312 = vadd.f32 %v400, %v2311
  %v2313 = vpop.f32.mrf.mxu0
  %v2314 = vadd.f32 %v404, %v2313
  %v2315 = vpop.f32.mrf.mxu0
  %v2316 = vadd.f32 %v400, %v2315
  %v2317 = vpop.f32.mrf.mxu0
  %v2318 = vadd.f32 %v404, %v2317
  %2319 = vmatprep.mubr.bf16.mxu0 %v1298
  %2320 = vmatmul.mubr.bf16.gmra.mxu0 %v1297
  %v2321 = vpop.f32.mrf.mxu0
  %v2322 = vadd.f32 %v400, %v2321
  %v2323 = vpop.f32.mrf.mxu0
  %v2324 = vadd.f32 %v404, %v2323
  %v2325 = vpop.f32.mrf.mxu0
  %v2326 = vadd.f32 %v400, %v2325
  %v2327 = vpop.f32.mrf.mxu0
  %v2328 = vadd.f32 %v404, %v2327
  %2329 = vmatprep.mubr.bf16.mxu0 %v1303
  %2330 = vmatmul.mubr.bf16.gmra.mxu0 %v1302
  %v2331 = vpop.f32.mrf.mxu0
  %v2332 = vadd.f32 %v400, %v2331
  %v2333 = vpop.f32.mrf.mxu0
  %v2334 = vadd.f32 %v404, %v2333
  %v2335 = vpop.f32.mrf.mxu0
  %v2336 = vadd.f32 %v400, %v2335
  %v2337 = vpop.f32.mrf.mxu0
  %v2338 = vadd.f32 %v404, %v2337
  %2339 = vmatprep.mubr.bf16.mxu0 %v1308
  %2340 = vmatmul.mubr.bf16.gmra.mxu0 %v1307
  %v2341 = vpop.f32.mrf.mxu0
  %v2342 = vadd.f32 %v400, %v2341
  %v2343 = vpop.f32.mrf.mxu0
  %v2344 = vadd.f32 %v404, %v2343
  %v2345 = vpop.f32.mrf.mxu0
  %v2346 = vadd.f32 %v400, %v2345
  %v2347 = vpop.f32.mrf.mxu0
  %v2348 = vadd.f32 %v404, %v2347
  %2349 = vmatprep.mubr.bf16.mxu0 %v1313
  %2350 = vmatmul.mubr.bf16.gmra.mxu0 %v1312
  %v2351 = vpop.f32.mrf.mxu0
  %v2352 = vadd.f32 %v400, %v2351
  %v2353 = vpop.f32.mrf.mxu0
  %v2354 = vadd.f32 %v404, %v2353
  %v2355 = vpop.f32.mrf.mxu0
  %v2356 = vadd.f32 %v400, %v2355
  %v2357 = vpop.f32.mrf.mxu0
  %v2358 = vadd.f32 %v404, %v2357
  %2359 = vmatprep.mubr.bf16.mxu0 %v1318
  %2360 = vmatmul.mubr.bf16.gmra.mxu0 %v1317
  %v2361 = vpop.f32.mrf.mxu0
  %v2362 = vadd.f32 %v400, %v2361
  %v2363 = vpop.f32.mrf.mxu0
  %v2364 = vadd.f32 %v404, %v2363
  %v2365 = vpop.f32.mrf.mxu0
  %v2366 = vadd.f32 %v400, %v2365
  %v2367 = vpop.f32.mrf.mxu0
  %v2368 = vadd.f32 %v404, %v2367
  %2369 = vmatprep.mubr.bf16.mxu0 %v1323
  %2370 = vmatmul.mubr.bf16.gmra.mxu0 %v1322
  %v2371 = vpop.f32.mrf.mxu0
  %v2372 = vadd.f32 %v400, %v2371
  %v2373 = vpop.f32.mrf.mxu0
  %v2374 = vadd.f32 %v404, %v2373
  %v2375 = vpop.f32.mrf.mxu0
  %v2376 = vadd.f32 %v400, %v2375
  %v2377 = vpop.f32.mrf.mxu0
  %v2378 = vadd.f32 %v404, %v2377
  %2379 = vmatprep.mubr.bf16.mxu0 %v1328
  %2380 = vmatmul.mubr.bf16.gmra.mxu0 %v1327
  %v2381 = vpop.f32.mrf.mxu0
  %v2382 = vadd.f32 %v400, %v2381
  %v2383 = vpop.f32.mrf.mxu0
  %v2384 = vadd.f32 %v404, %v2383
  %v2385 = vpop.f32.mrf.mxu0
  %v2386 = vadd.f32 %v400, %v2385
  %v2387 = vpop.f32.mrf.mxu0
  %v2388 = vadd.f32 %v404, %v2387
  %2389 = vmatprep.mubr.bf16.mxu0 %v1333
  %2390 = vmatmul.mubr.bf16.gmra.mxu0 %v1332
  %v2391 = vpop.f32.mrf.mxu0
  %v2392 = vadd.f32 %v400, %v2391
  %v2393 = vpop.f32.mrf.mxu0
  %v2394 = vadd.f32 %v404, %v2393
  %v2395 = vpop.f32.mrf.mxu0
  %v2396 = vadd.f32 %v400, %v2395
  %v2397 = vpop.f32.mrf.mxu0
  %v2398 = vadd.f32 %v404, %v2397
  %2399 = vmatprep.mubr.bf16.mxu0 %v1338
  %2400 = vmatmul.mubr.bf16.gmra.mxu0 %v1337
  %v2401 = vpop.f32.mrf.mxu0
  %v2402 = vadd.f32 %v400, %v2401
  %v2403 = vpop.f32.mrf.mxu0
  %v2404 = vadd.f32 %v404, %v2403
  %v2405 = vpop.f32.mrf.mxu0
  %v2406 = vadd.f32 %v400, %v2405
  %v2407 = vpop.f32.mrf.mxu0
  %v2408 = vadd.f32 %v404, %v2407
  %2409 = vmatprep.mubr.bf16.mxu0 %v1343
  %2410 = vmatmul.mubr.bf16.gmra.mxu0 %v1342
  %v2411 = vpop.f32.mrf.mxu0
  %v2412 = vadd.f32 %v400, %v2411
  %v2413 = vpop.f32.mrf.mxu0
  %v2414 = vadd.f32 %v404, %v2413
  %v2415 = vpop.f32.mrf.mxu0
  %v2416 = vadd.f32 %v400, %v2415
  %v2417 = vpop.f32.mrf.mxu0
  %v2418 = vadd.f32 %v404, %v2417
  %2419 = vmatprep.mubr.bf16.mxu0 %v1348
  %2420 = vmatmul.mubr.bf16.gmra.mxu0 %v1347
  %v2421 = vpop.f32.mrf.mxu0
  %v2422 = vadd.f32 %v400, %v2421
  %v2423 = vpop.f32.mrf.mxu0
  %v2424 = vadd.f32 %v404, %v2423
  %v2425 = vpop.f32.mrf.mxu0
  %v2426 = vadd.f32 %v400, %v2425
  %v2427 = vpop.f32.mrf.mxu0
  %v2428 = vadd.f32 %v404, %v2427
  %2429 = vmatprep.mubr.bf16.mxu0 %v1353
  %2430 = vmatmul.mubr.bf16.gmra.mxu0 %v1352
  %v2431 = vpop.f32.mrf.mxu0
  %v2432 = vadd.f32 %v400, %v2431
  %v2433 = vpop.f32.mrf.mxu0
  %v2434 = vadd.f32 %v404, %v2433
  %v2435 = vpop.f32.mrf.mxu0
  %v2436 = vadd.f32 %v400, %v2435
  %v2437 = vpop.f32.mrf.mxu0
  %v2438 = vadd.f32 %v404, %v2437
  %2439 = vmatprep.mubr.bf16.mxu0 %v1358
  %2440 = vmatmul.mubr.bf16.gmra.mxu0 %v1357
  %v2441 = vpop.f32.mrf.mxu0
  %v2442 = vadd.f32 %v400, %v2441
  %v2443 = vpop.f32.mrf.mxu0
  %v2444 = vadd.f32 %v404, %v2443
  %v2445 = vpop.f32.mrf.mxu0
  %v2446 = vadd.f32 %v400, %v2445
  %v2447 = vpop.f32.mrf.mxu0
  %v2448 = vadd.f32 %v404, %v2447
  %2449 = vmatprep.mubr.bf16.mxu0 %v1363
  %2450 = vmatmul.mubr.bf16.gmra.mxu0 %v1362
  %v2451 = vpop.f32.mrf.mxu0
  %v2452 = vadd.f32 %v400, %v2451
  %v2453 = vpop.f32.mrf.mxu0
  %v2454 = vadd.f32 %v404, %v2453
  %v2455 = vpop.f32.mrf.mxu0
  %v2456 = vadd.f32 %v400, %v2455
  %v2457 = vpop.f32.mrf.mxu0
  %v2458 = vadd.f32 %v404, %v2457
  %2459 = vmatprep.mubr.bf16.mxu0 %v1368
  %2460 = vmatmul.mubr.bf16.gmra.mxu0 %v1367
  %v2461 = vpop.f32.mrf.mxu0
  %v2462 = vadd.f32 %v400, %v2461
  %v2463 = vpop.f32.mrf.mxu0
  %v2464 = vadd.f32 %v404, %v2463
  %v2465 = vpop.f32.mrf.mxu0
  %v2466 = vadd.f32 %v400, %v2465
  %v2467 = vpop.f32.mrf.mxu0
  %v2468 = vadd.f32 %v404, %v2467
  %2469 = vmatprep.mubr.bf16.mxu0 %v1373
  %2470 = vmatmul.mubr.bf16.gmra.mxu0 %v1372
  %v2471 = vpop.f32.mrf.mxu0
  %v2472 = vadd.f32 %v400, %v2471
  %v2473 = vpop.f32.mrf.mxu0
  %v2474 = vadd.f32 %v404, %v2473
  %v2475 = vpop.f32.mrf.mxu0
  %v2476 = vadd.f32 %v400, %v2475
  %v2477 = vpop.f32.mrf.mxu0
  %v2478 = vadd.f32 %v404, %v2477
  %2479 = vmatprep.mubr.bf16.mxu0 %v1378
  %2480 = vmatmul.mubr.bf16.gmra.mxu0 %v1377
  %v2481 = vpop.f32.mrf.mxu0
  %v2482 = vadd.f32 %v400, %v2481
  %v2483 = vpop.f32.mrf.mxu0
  %v2484 = vadd.f32 %v404, %v2483
  %v2485 = vpop.f32.mrf.mxu0
  %v2486 = vadd.f32 %v400, %v2485
  %v2487 = vpop.f32.mrf.mxu0
  %v2488 = vadd.f32 %v404, %v2487
  %2489 = vmatprep.mubr.bf16.mxu0 %v1383
  %2490 = vmatmul.mubr.bf16.gmra.mxu0 %v1382
  %v2491 = vpop.f32.mrf.mxu0
  %v2492 = vadd.f32 %v400, %v2491
  %v2493 = vpop.f32.mrf.mxu0
  %v2494 = vadd.f32 %v404, %v2493
  %v2495 = vpop.f32.mrf.mxu0
  %v2496 = vadd.f32 %v400, %v2495
  %v2497 = vpop.f32.mrf.mxu0
  %v2498 = vadd.f32 %v404, %v2497
  %2499 = vmatprep.mubr.bf16.mxu0 %v1388
  %2500 = vmatmul.mubr.bf16.gmra.mxu0 %v1387
  %v2501 = vpop.f32.mrf.mxu0
  %v2502 = vadd.f32 %v400, %v2501
  %v2503 = vpop.f32.mrf.mxu0
  %v2504 = vadd.f32 %v404, %v2503
  %v2505 = vpop.f32.mrf.mxu0
  %v2506 = vadd.f32 %v400, %v2505
  %v2507 = vpop.f32.mrf.mxu0
  %v2508 = vadd.f32 %v404, %v2507
  %2509 = vmatprep.mubr.bf16.mxu0 %v1393
  %2510 = vmatmul.mubr.bf16.gmra.mxu0 %v1392
  %v2511 = vpop.f32.mrf.mxu0
  %v2512 = vadd.f32 %v400, %v2511
  %v2513 = vpop.f32.mrf.mxu0
  %v2514 = vadd.f32 %v404, %v2513
  %v2515 = vpop.f32.mrf.mxu0
  %v2516 = vadd.f32 %v400, %v2515
  %v2517 = vpop.f32.mrf.mxu0
  %v2518 = vadd.f32 %v404, %v2517
  %2519 = vmatprep.mubr.bf16.mxu0 %v1398
  %2520 = vmatmul.mubr.bf16.gmra.mxu0 %v1397
  %v2521 = vpop.f32.mrf.mxu0
  %v2522 = vadd.f32 %v400, %v2521
  %v2523 = vpop.f32.mrf.mxu0
  %v2524 = vadd.f32 %v404, %v2523
  %v2525 = vpop.f32.mrf.mxu0
  %v2526 = vadd.f32 %v400, %v2525
  %v2527 = vpop.f32.mrf.mxu0
  %v2528 = vadd.f32 %v404, %v2527
  %2529 = vmatprep.mubr.bf16.mxu0 %v1403
  %2530 = vmatmul.mubr.bf16.gmra.mxu0 %v1402
  %v2531 = vpop.f32.mrf.mxu0
  %v2532 = vadd.f32 %v400, %v2531
  %v2533 = vpop.f32.mrf.mxu0
  %v2534 = vadd.f32 %v404, %v2533
  %v2535 = vpop.f32.mrf.mxu0
  %v2536 = vadd.f32 %v400, %v2535
  %v2537 = vpop.f32.mrf.mxu0
  %v2538 = vadd.f32 %v404, %v2537
  %2539 = vmatprep.mubr.bf16.mxu0 %v1408
  %2540 = vmatmul.mubr.bf16.gmra.mxu0 %v1407
  %v2541 = vpop.f32.mrf.mxu0
  %v2542 = vadd.f32 %v400, %v2541
  %v2543 = vpop.f32.mrf.mxu0
  %v2544 = vadd.f32 %v404, %v2543
  %v2545 = vpop.f32.mrf.mxu0
  %v2546 = vadd.f32 %v400, %v2545
  %v2547 = vpop.f32.mrf.mxu0
  %v2548 = vadd.f32 %v404, %v2547
  %2549 = vmatprep.mubr.bf16.mxu0 %v1413
  %2550 = vmatmul.mubr.bf16.gmra.mxu0 %v1412
  %v2551 = vpop.f32.mrf.mxu0
  %v2552 = vadd.f32 %v400, %v2551
  %v2553 = vpop.f32.mrf.mxu0
  %v2554 = vadd.f32 %v404, %v2553
  %v2555 = vpop.f32.mrf.mxu0
  %v2556 = vadd.f32 %v400, %v2555
  %v2557 = vpop.f32.mrf.mxu0
  %v2558 = vadd.f32 %v404, %v2557
  %2559 = vmatprep.mubr.bf16.mxu0 %v1418
  %2560 = vmatmul.mubr.bf16.gmra.mxu0 %v1417
  %v2561 = vpop.f32.mrf.mxu0
  %v2562 = vadd.f32 %v400, %v2561
  %v2563 = vpop.f32.mrf.mxu0
  %v2564 = vadd.f32 %v404, %v2563
  %v2565 = vpop.f32.mrf.mxu0
  %v2566 = vadd.f32 %v400, %v2565
  %v2567 = vpop.f32.mrf.mxu0
  %v2568 = vadd.f32 %v404, %v2567
  %2569 = vmatprep.mubr.bf16.mxu0 %v1423
  %2570 = vmatmul.mubr.bf16.gmra.mxu0 %v1422
  %v2571 = vpop.f32.mrf.mxu0
  %v2572 = vadd.f32 %v400, %v2571
  %v2573 = vpop.f32.mrf.mxu0
  %v2574 = vadd.f32 %v404, %v2573
  %v2575 = vpop.f32.mrf.mxu0
  %v2576 = vadd.f32 %v400, %v2575
  %v2577 = vpop.f32.mrf.mxu0
  %v2578 = vadd.f32 %v404, %v2577
  %2579 = vmatprep.mubr.bf16.mxu0 %v1428
  %2580 = vmatmul.mubr.bf16.gmra.mxu0 %v1427
  %v2581 = vpop.f32.mrf.mxu0
  %v2582 = vadd.f32 %v400, %v2581
  %v2583 = vpop.f32.mrf.mxu0
  %v2584 = vadd.f32 %v404, %v2583
  %v2585 = vpop.f32.mrf.mxu0
  %v2586 = vadd.f32 %v400, %v2585
  %v2587 = vpop.f32.mrf.mxu0
  %v2588 = vadd.f32 %v404, %v2587
  %2589 = vmatprep.mubr.bf16.mxu0 %v1433
  %2590 = vmatmul.mubr.bf16.gmra.mxu0 %v1432
  %v2591 = vpop.f32.mrf.mxu0
  %v2592 = vadd.f32 %v400, %v2591
  %v2593 = vpop.f32.mrf.mxu0
  %v2594 = vadd.f32 %v404, %v2593
  %v2595 = vpop.f32.mrf.mxu0
  %v2596 = vadd.f32 %v400, %v2595
  %v2597 = vpop.f32.mrf.mxu0
  %v2598 = vadd.f32 %v404, %v2597
  %2599 = vmatprep.mubr.bf16.mxu0 %v1438
  %2600 = vmatmul.mubr.bf16.gmra.mxu0 %v1437
  %v2601 = vpop.f32.mrf.mxu0
  %v2602 = vadd.f32 %v400, %v2601
  %v2603 = vpop.f32.mrf.mxu0
  %v2604 = vadd.f32 %v404, %v2603
  %v2605 = vpop.f32.mrf.mxu0
  %v2606 = vadd.f32 %v400, %v2605
  %v2607 = vpop.f32.mrf.mxu0
  %v2608 = vadd.f32 %v404, %v2607
  %2609 = vmatprep.mubr.bf16.mxu0 %v1443
  %2610 = vmatmul.mubr.bf16.gmra.mxu0 %v1442
  %v2611 = vpop.f32.mrf.mxu0
  %v2612 = vadd.f32 %v400, %v2611
  %v2613 = vpop.f32.mrf.mxu0
  %v2614 = vadd.f32 %v404, %v2613
  %v2615 = vpop.f32.mrf.mxu0
  %v2616 = vadd.f32 %v400, %v2615
  %v2617 = vpop.f32.mrf.mxu0
  %v2618 = vadd.f32 %v404, %v2617
  %2619 = vmatprep.mubr.bf16.mxu0 %v1448
  %2620 = vmatmul.mubr.bf16.gmra.mxu0 %v1447
  %v2621 = vpop.f32.mrf.mxu0
  %v2622 = vadd.f32 %v400, %v2621
  %v2623 = vpop.f32.mrf.mxu0
  %v2624 = vadd.f32 %v404, %v2623
  %v2625 = vpop.f32.mrf.mxu0
  %v2626 = vadd.f32 %v400, %v2625
  %v2627 = vpop.f32.mrf.mxu0
  %v2628 = vadd.f32 %v404, %v2627
  %2629 = vmatprep.mubr.bf16.mxu0 %v1453
  %2630 = vmatmul.mubr.bf16.gmra.mxu0 %v1452
  %v2631 = vpop.f32.mrf.mxu0
  %v2632 = vadd.f32 %v400, %v2631
  %v2633 = vpop.f32.mrf.mxu0
  %v2634 = vadd.f32 %v404, %v2633
  %v2635 = vpop.f32.mrf.mxu0
  %v2636 = vadd.f32 %v400, %v2635
  %v2637 = vpop.f32.mrf.mxu0
  %v2638 = vadd.f32 %v404, %v2637
  %2639 = vdwg.mxu0
  %2640 = vmatprep.subr.bf16.mxu0 %v1994
  %2641 = vmatpush1.bf16.msra.mxu0 %v1993
  %2642 = vmatprep.subr.bf16.mxu0 %v1992
  %2643 = vmatpush1.bf16.msra.mxu0 %v1991
  %2644 = vmatprep.subr.bf16.mxu0 %v1990
  %2645 = vmatpush1.bf16.msra.mxu0 %v1989
  %2646 = vmatprep.subr.bf16.mxu0 %v1988
  %2647 = vmatpush1.bf16.msra.mxu0 %v1987
  %2648 = vmatprep.subr.bf16.mxu0 %v1986
  %2649 = vmatpush1.bf16.msra.mxu0 %v1985
  %2650 = vmatprep.subr.bf16.mxu0 %v1984
  %2651 = vmatpush1.bf16.msra.mxu0 %v1983
  %2652 = vmatprep.subr.bf16.mxu0 %v1982
  %2653 = vmatpush1.bf16.msra.mxu0 %v1981
  %2654 = vmatprep.subr.bf16.mxu0 %v1980
  %2655 = vmatpush1.bf16.msra.mxu0 %v1979
  %2656 = vmatprep.subr.bf16.mxu0 %v2010
  %2657 = vmatpush2.bf16.msra.mxu0 %v2009
  %2658 = vmatprep.subr.bf16.mxu0 %v2008
  %2659 = vmatpush2.bf16.msra.mxu0 %v2007
  %2660 = vmatprep.subr.bf16.mxu0 %v2006
  %2661 = vmatpush2.bf16.msra.mxu0 %v2005
  %2662 = vmatprep.subr.bf16.mxu0 %v2004
  %2663 = vmatpush2.bf16.msra.mxu0 %v2003
  %2664 = vmatprep.subr.bf16.mxu0 %v2002
  %2665 = vmatpush2.bf16.msra.mxu0 %v2001
  %2666 = vmatprep.subr.bf16.mxu0 %v2000
  %2667 = vmatpush2.bf16.msra.mxu0 %v1999
  %2668 = vmatprep.subr.bf16.mxu0 %v1998
  %2669 = vmatpush2.bf16.msra.mxu0 %v1997
  %2670 = vmatprep.subr.bf16.mxu0 %v1996
  %2671 = vmatpush2.bf16.msra.mxu0 %v1995
  %2672 = vmatprep.mubr.bf16.mxu0 %v1210
  %2673 = vmatmul.mubr.bf16.gmra.mxu0 %v1209
  %v2674 = vpop.f32.mrf.mxu0
  %v2675 = vadd.f32 %v2142, %v2674
  %v2676 = vpop.f32.mrf.mxu0
  %v2677 = vadd.f32 %v2144, %v2676
  %v2678 = vpop.f32.mrf.mxu0
  %v2679 = vadd.f32 %v2146, %v2678
  %v2680 = vpop.f32.mrf.mxu0
  %v2681 = vadd.f32 %v2148, %v2680
  %2682 = vmatprep.mubr.bf16.mxu0 %v1215
  %2683 = vmatmul.mubr.bf16.gmra.mxu0 %v1214
  %v2684 = vpop.f32.mrf.mxu0
  %v2685 = vadd.f32 %v2152, %v2684
  %v2686 = vpop.f32.mrf.mxu0
  %v2687 = vadd.f32 %v2154, %v2686
  %v2688 = vpop.f32.mrf.mxu0
  %v2689 = vadd.f32 %v2156, %v2688
  %v2690 = vpop.f32.mrf.mxu0
  %v2691 = vadd.f32 %v2158, %v2690
  %2692 = vmatprep.mubr.bf16.mxu0 %v1220
  %2693 = vmatmul.mubr.bf16.gmra.mxu0 %v1219
  %v2694 = vpop.f32.mrf.mxu0
  %v2695 = vadd.f32 %v2162, %v2694
  %v2696 = vpop.f32.mrf.mxu0
  %v2697 = vadd.f32 %v2164, %v2696
  %v2698 = vpop.f32.mrf.mxu0
  %v2699 = vadd.f32 %v2166, %v2698
  %v2700 = vpop.f32.mrf.mxu0
  %v2701 = vadd.f32 %v2168, %v2700
  %2702 = vmatprep.mubr.bf16.mxu0 %v1225
  %2703 = vmatmul.mubr.bf16.gmra.mxu0 %v1224
  %v2704 = vpop.f32.mrf.mxu0
  %v2705 = vadd.f32 %v2172, %v2704
  %v2706 = vpop.f32.mrf.mxu0
  %v2707 = vadd.f32 %v2174, %v2706
  %v2708 = vpop.f32.mrf.mxu0
  %v2709 = vadd.f32 %v2176, %v2708
  %v2710 = vpop.f32.mrf.mxu0
  %v2711 = vadd.f32 %v2178, %v2710
  %2712 = vmatprep.mubr.bf16.mxu0 %v1230
  %2713 = vmatmul.mubr.bf16.gmra.mxu0 %v1229
  %v2714 = vpop.f32.mrf.mxu0
  %v2715 = vadd.f32 %v2182, %v2714
  %v2716 = vpop.f32.mrf.mxu0
  %v2717 = vadd.f32 %v2184, %v2716
  %v2718 = vpop.f32.mrf.mxu0
  %v2719 = vadd.f32 %v2186, %v2718
  %v2720 = vpop.f32.mrf.mxu0
  %v2721 = vadd.f32 %v2188, %v2720
  %2722 = vmatprep.mubr.bf16.mxu0 %v1235
  %2723 = vmatmul.mubr.bf16.gmra.mxu0 %v1234
  %v2724 = vpop.f32.mrf.mxu0
  %v2725 = vadd.f32 %v2192, %v2724
  %v2726 = vpop.f32.mrf.mxu0
  %v2727 = vadd.f32 %v2194, %v2726
  %v2728 = vpop.f32.mrf.mxu0
  %v2729 = vadd.f32 %v2196, %v2728
  %v2730 = vpop.f32.mrf.mxu0
  %v2731 = vadd.f32 %v2198, %v2730
  %2732 = vmatprep.mubr.bf16.mxu0 %v1240
  %2733 = vmatmul.mubr.bf16.gmra.mxu0 %v1239
  %v2734 = vpop.f32.mrf.mxu0
  %v2735 = vadd.f32 %v2202, %v2734
  %v2736 = vpop.f32.mrf.mxu0
  %v2737 = vadd.f32 %v2204, %v2736
  %v2738 = vpop.f32.mrf.mxu0
  %v2739 = vadd.f32 %v2206, %v2738
  %v2740 = vpop.f32.mrf.mxu0
  %v2741 = vadd.f32 %v2208, %v2740
  %2742 = vmatprep.mubr.bf16.mxu0 %v1245
  %2743 = vmatmul.mubr.bf16.gmra.mxu0 %v1244
  %v2744 = vpop.f32.mrf.mxu0
  %v2745 = vadd.f32 %v2212, %v2744
  %v2746 = vpop.f32.mrf.mxu0
  %v2747 = vadd.f32 %v2214, %v2746
  %v2748 = vpop.f32.mrf.mxu0
  %v2749 = vadd.f32 %v2216, %v2748
  %v2750 = vpop.f32.mrf.mxu0
  %v2751 = vadd.f32 %v2218, %v2750
  %2752 = vmatprep.mubr.bf16.mxu0 %v1250
  %2753 = vmatmul.mubr.bf16.gmra.mxu0 %v1249
  %v2754 = vpop.f32.mrf.mxu0
  %v2755 = vadd.f32 %v2222, %v2754
  %v2756 = vpop.f32.mrf.mxu0
  %v2757 = vadd.f32 %v2224, %v2756
  %v2758 = vpop.f32.mrf.mxu0
  %v2759 = vadd.f32 %v2226, %v2758
  %v2760 = vpop.f32.mrf.mxu0
  %v2761 = vadd.f32 %v2228, %v2760
  %2762 = vmatprep.mubr.bf16.mxu0 %v1255
  %2763 = vmatmul.mubr.bf16.gmra.mxu0 %v1254
  %v2764 = vpop.f32.mrf.mxu0
  %v2765 = vadd.f32 %v2232, %v2764
  %v2766 = vpop.f32.mrf.mxu0
  %v2767 = vadd.f32 %v2234, %v2766
  %v2768 = vpop.f32.mrf.mxu0
  %v2769 = vadd.f32 %v2236, %v2768
  %v2770 = vpop.f32.mrf.mxu0
  %v2771 = vadd.f32 %v2238, %v2770
  %2772 = vmatprep.mubr.bf16.mxu0 %v1260
  %2773 = vmatmul.mubr.bf16.gmra.mxu0 %v1259
  %v2774 = vpop.f32.mrf.mxu0
  %v2775 = vadd.f32 %v2242, %v2774
  %v2776 = vpop.f32.mrf.mxu0
  %v2777 = vadd.f32 %v2244, %v2776
  %v2778 = vpop.f32.mrf.mxu0
  %v2779 = vadd.f32 %v2246, %v2778
  %v2780 = vpop.f32.mrf.mxu0
  %v2781 = vadd.f32 %v2248, %v2780
  %2782 = vmatprep.mubr.bf16.mxu0 %v1265
  %2783 = vmatmul.mubr.bf16.gmra.mxu0 %v1264
  %v2784 = vpop.f32.mrf.mxu0
  %v2785 = vadd.f32 %v2252, %v2784
  %v2786 = vpop.f32.mrf.mxu0
  %v2787 = vadd.f32 %v2254, %v2786
  %v2788 = vpop.f32.mrf.mxu0
  %v2789 = vadd.f32 %v2256, %v2788
  %v2790 = vpop.f32.mrf.mxu0
  %v2791 = vadd.f32 %v2258, %v2790
  %2792 = vmatprep.mubr.bf16.mxu0 %v1270
  %2793 = vmatmul.mubr.bf16.gmra.mxu0 %v1269
  %v2794 = vpop.f32.mrf.mxu0
  %v2795 = vadd.f32 %v2262, %v2794
  %v2796 = vpop.f32.mrf.mxu0
  %v2797 = vadd.f32 %v2264, %v2796
  %v2798 = vpop.f32.mrf.mxu0
  %v2799 = vadd.f32 %v2266, %v2798
  %v2800 = vpop.f32.mrf.mxu0
  %v2801 = vadd.f32 %v2268, %v2800
  %2802 = vmatprep.mubr.bf16.mxu0 %v1275
  %2803 = vmatmul.mubr.bf16.gmra.mxu0 %v1274
  %v2804 = vpop.f32.mrf.mxu0
  %v2805 = vadd.f32 %v2272, %v2804
  %v2806 = vpop.f32.mrf.mxu0
  %v2807 = vadd.f32 %v2274, %v2806
  %v2808 = vpop.f32.mrf.mxu0
  %v2809 = vadd.f32 %v2276, %v2808
  %v2810 = vpop.f32.mrf.mxu0
  %v2811 = vadd.f32 %v2278, %v2810
  %2812 = vmatprep.mubr.bf16.mxu0 %v1280
  %2813 = vmatmul.mubr.bf16.gmra.mxu0 %v1279
  %v2814 = vpop.f32.mrf.mxu0
  %v2815 = vadd.f32 %v2282, %v2814
  %v2816 = vpop.f32.mrf.mxu0
  %v2817 = vadd.f32 %v2284, %v2816
  %v2818 = vpop.f32.mrf.mxu0
  %v2819 = vadd.f32 %v2286, %v2818
  %v2820 = vpop.f32.mrf.mxu0
  %v2821 = vadd.f32 %v2288, %v2820
  %2822 = vmatprep.mubr.bf16.mxu0 %v1285
  %2823 = vmatmul.mubr.bf16.gmra.mxu0 %v1284
  %v2824 = vpop.f32.mrf.mxu0
  %v2825 = vadd.f32 %v2292, %v2824
  %v2826 = vpop.f32.mrf.mxu0
  %v2827 = vadd.f32 %v2294, %v2826
  %v2828 = vpop.f32.mrf.mxu0
  %v2829 = vadd.f32 %v2296, %v2828
  %v2830 = vpop.f32.mrf.mxu0
  %v2831 = vadd.f32 %v2298, %v2830
  %2832 = vmatprep.mubr.bf16.mxu0 %v1290
  %2833 = vmatmul.mubr.bf16.gmra.mxu0 %v1289
  %v2834 = vpop.f32.mrf.mxu0
  %v2835 = vadd.f32 %v2302, %v2834
  %v2836 = vpop.f32.mrf.mxu0
  %v2837 = vadd.f32 %v2304, %v2836
  %v2838 = vpop.f32.mrf.mxu0
  %v2839 = vadd.f32 %v2306, %v2838
  %v2840 = vpop.f32.mrf.mxu0
  %v2841 = vadd.f32 %v2308, %v2840
  %2842 = vmatprep.mubr.bf16.mxu0 %v1295
  %2843 = vmatmul.mubr.bf16.gmra.mxu0 %v1294
  %v2844 = vpop.f32.mrf.mxu0
  %v2845 = vadd.f32 %v2312, %v2844
  %v2846 = vpop.f32.mrf.mxu0
  %v2847 = vadd.f32 %v2314, %v2846
  %v2848 = vpop.f32.mrf.mxu0
  %v2849 = vadd.f32 %v2316, %v2848
  %v2850 = vpop.f32.mrf.mxu0
  %v2851 = vadd.f32 %v2318, %v2850
  %2852 = vmatprep.mubr.bf16.mxu0 %v1300
  %2853 = vmatmul.mubr.bf16.gmra.mxu0 %v1299
  %v2854 = vpop.f32.mrf.mxu0
  %v2855 = vadd.f32 %v2322, %v2854
  %v2856 = vpop.f32.mrf.mxu0
  %v2857 = vadd.f32 %v2324, %v2856
  %v2858 = vpop.f32.mrf.mxu0
  %v2859 = vadd.f32 %v2326, %v2858
  %v2860 = vpop.f32.mrf.mxu0
  %v2861 = vadd.f32 %v2328, %v2860
  %2862 = vmatprep.mubr.bf16.mxu0 %v1305
  %2863 = vmatmul.mubr.bf16.gmra.mxu0 %v1304
  %v2864 = vpop.f32.mrf.mxu0
  %v2865 = vadd.f32 %v2332, %v2864
  %v2866 = vpop.f32.mrf.mxu0
  %v2867 = vadd.f32 %v2334, %v2866
  %v2868 = vpop.f32.mrf.mxu0
  %v2869 = vadd.f32 %v2336, %v2868
  %v2870 = vpop.f32.mrf.mxu0
  %v2871 = vadd.f32 %v2338, %v2870
  %2872 = vmatprep.mubr.bf16.mxu0 %v1310
  %2873 = vmatmul.mubr.bf16.gmra.mxu0 %v1309
  %v2874 = vpop.f32.mrf.mxu0
  %v2875 = vadd.f32 %v2342, %v2874
  %v2876 = vpop.f32.mrf.mxu0
  %v2877 = vadd.f32 %v2344, %v2876
  %v2878 = vpop.f32.mrf.mxu0
  %v2879 = vadd.f32 %v2346, %v2878
  %v2880 = vpop.f32.mrf.mxu0
  %v2881 = vadd.f32 %v2348, %v2880
  %2882 = vmatprep.mubr.bf16.mxu0 %v1315
  %2883 = vmatmul.mubr.bf16.gmra.mxu0 %v1314
  %v2884 = vpop.f32.mrf.mxu0
  %v2885 = vadd.f32 %v2352, %v2884
  %v2886 = vpop.f32.mrf.mxu0
  %v2887 = vadd.f32 %v2354, %v2886
  %v2888 = vpop.f32.mrf.mxu0
  %v2889 = vadd.f32 %v2356, %v2888
  %v2890 = vpop.f32.mrf.mxu0
  %v2891 = vadd.f32 %v2358, %v2890
  %2892 = vmatprep.mubr.bf16.mxu0 %v1320
  %2893 = vmatmul.mubr.bf16.gmra.mxu0 %v1319
  %v2894 = vpop.f32.mrf.mxu0
  %v2895 = vadd.f32 %v2362, %v2894
  %v2896 = vpop.f32.mrf.mxu0
  %v2897 = vadd.f32 %v2364, %v2896
  %v2898 = vpop.f32.mrf.mxu0
  %v2899 = vadd.f32 %v2366, %v2898
  %v2900 = vpop.f32.mrf.mxu0
  %v2901 = vadd.f32 %v2368, %v2900
  %2902 = vmatprep.mubr.bf16.mxu0 %v1325
  %2903 = vmatmul.mubr.bf16.gmra.mxu0 %v1324
  %v2904 = vpop.f32.mrf.mxu0
  %v2905 = vadd.f32 %v2372, %v2904
  %v2906 = vpop.f32.mrf.mxu0
  %v2907 = vadd.f32 %v2374, %v2906
  %v2908 = vpop.f32.mrf.mxu0
  %v2909 = vadd.f32 %v2376, %v2908
  %v2910 = vpop.f32.mrf.mxu0
  %v2911 = vadd.f32 %v2378, %v2910
  %2912 = vmatprep.mubr.bf16.mxu0 %v1330
  %2913 = vmatmul.mubr.bf16.gmra.mxu0 %v1329
  %v2914 = vpop.f32.mrf.mxu0
  %v2915 = vadd.f32 %v2382, %v2914
  %v2916 = vpop.f32.mrf.mxu0
  %v2917 = vadd.f32 %v2384, %v2916
  %v2918 = vpop.f32.mrf.mxu0
  %v2919 = vadd.f32 %v2386, %v2918
  %v2920 = vpop.f32.mrf.mxu0
  %v2921 = vadd.f32 %v2388, %v2920
  %2922 = vmatprep.mubr.bf16.mxu0 %v1335
  %2923 = vmatmul.mubr.bf16.gmra.mxu0 %v1334
  %v2924 = vpop.f32.mrf.mxu0
  %v2925 = vadd.f32 %v2392, %v2924
  %v2926 = vpop.f32.mrf.mxu0
  %v2927 = vadd.f32 %v2394, %v2926
  %v2928 = vpop.f32.mrf.mxu0
  %v2929 = vadd.f32 %v2396, %v2928
  %v2930 = vpop.f32.mrf.mxu0
  %v2931 = vadd.f32 %v2398, %v2930
  %2932 = vmatprep.mubr.bf16.mxu0 %v1340
  %2933 = vmatmul.mubr.bf16.gmra.mxu0 %v1339
  %v2934 = vpop.f32.mrf.mxu0
  %v2935 = vadd.f32 %v2402, %v2934
  %v2936 = vpop.f32.mrf.mxu0
  %v2937 = vadd.f32 %v2404, %v2936
  %v2938 = vpop.f32.mrf.mxu0
  %v2939 = vadd.f32 %v2406, %v2938
  %v2940 = vpop.f32.mrf.mxu0
  %v2941 = vadd.f32 %v2408, %v2940
  %2942 = vmatprep.mubr.bf16.mxu0 %v1345
  %2943 = vmatmul.mubr.bf16.gmra.mxu0 %v1344
  %v2944 = vpop.f32.mrf.mxu0
  %v2945 = vadd.f32 %v2412, %v2944
  %v2946 = vpop.f32.mrf.mxu0
  %v2947 = vadd.f32 %v2414, %v2946
  %v2948 = vpop.f32.mrf.mxu0
  %v2949 = vadd.f32 %v2416, %v2948
  %v2950 = vpop.f32.mrf.mxu0
  %v2951 = vadd.f32 %v2418, %v2950
  %2952 = vmatprep.mubr.bf16.mxu0 %v1350
  %2953 = vmatmul.mubr.bf16.gmra.mxu0 %v1349
  %v2954 = vpop.f32.mrf.mxu0
  %v2955 = vadd.f32 %v2422, %v2954
  %v2956 = vpop.f32.mrf.mxu0
  %v2957 = vadd.f32 %v2424, %v2956
  %v2958 = vpop.f32.mrf.mxu0
  %v2959 = vadd.f32 %v2426, %v2958
  %v2960 = vpop.f32.mrf.mxu0
  %v2961 = vadd.f32 %v2428, %v2960
  %2962 = vmatprep.mubr.bf16.mxu0 %v1355
  %2963 = vmatmul.mubr.bf16.gmra.mxu0 %v1354
  %v2964 = vpop.f32.mrf.mxu0
  %v2965 = vadd.f32 %v2432, %v2964
  %v2966 = vpop.f32.mrf.mxu0
  %v2967 = vadd.f32 %v2434, %v2966
  %v2968 = vpop.f32.mrf.mxu0
  %v2969 = vadd.f32 %v2436, %v2968
  %v2970 = vpop.f32.mrf.mxu0
  %v2971 = vadd.f32 %v2438, %v2970
  %2972 = vmatprep.mubr.bf16.mxu0 %v1360
  %2973 = vmatmul.mubr.bf16.gmra.mxu0 %v1359
  %v2974 = vpop.f32.mrf.mxu0
  %v2975 = vadd.f32 %v2442, %v2974
  %v2976 = vpop.f32.mrf.mxu0
  %v2977 = vadd.f32 %v2444, %v2976
  %v2978 = vpop.f32.mrf.mxu0
  %v2979 = vadd.f32 %v2446, %v2978
  %v2980 = vpop.f32.mrf.mxu0
  %v2981 = vadd.f32 %v2448, %v2980
  %2982 = vmatprep.mubr.bf16.mxu0 %v1365
  %2983 = vmatmul.mubr.bf16.gmra.mxu0 %v1364
  %v2984 = vpop.f32.mrf.mxu0
  %v2985 = vadd.f32 %v2452, %v2984
  %v2986 = vpop.f32.mrf.mxu0
  %v2987 = vadd.f32 %v2454, %v2986
  %v2988 = vpop.f32.mrf.mxu0
  %v2989 = vadd.f32 %v2456, %v2988
  %v2990 = vpop.f32.mrf.mxu0
  %v2991 = vadd.f32 %v2458, %v2990
  %2992 = vmatprep.mubr.bf16.mxu0 %v1370
  %2993 = vmatmul.mubr.bf16.gmra.mxu0 %v1369
  %v2994 = vpop.f32.mrf.mxu0
  %v2995 = vadd.f32 %v2462, %v2994
  %v2996 = vpop.f32.mrf.mxu0
  %v2997 = vadd.f32 %v2464, %v2996
  %v2998 = vpop.f32.mrf.mxu0
  %v2999 = vadd.f32 %v2466, %v2998
  %v3000 = vpop.f32.mrf.mxu0
  %v3001 = vadd.f32 %v2468, %v3000
  %3002 = vmatprep.mubr.bf16.mxu0 %v1375
  %3003 = vmatmul.mubr.bf16.gmra.mxu0 %v1374
  %v3004 = vpop.f32.mrf.mxu0
  %v3005 = vadd.f32 %v2472, %v3004
  %v3006 = vpop.f32.mrf.mxu0
  %v3007 = vadd.f32 %v2474, %v3006
  %v3008 = vpop.f32.mrf.mxu0
  %v3009 = vadd.f32 %v2476, %v3008
  %v3010 = vpop.f32.mrf.mxu0
  %v3011 = vadd.f32 %v2478, %v3010
  %3012 = vmatprep.mubr.bf16.mxu0 %v1380
  %3013 = vmatmul.mubr.bf16.gmra.mxu0 %v1379
  %v3014 = vpop.f32.mrf.mxu0
  %v3015 = vadd.f32 %v2482, %v3014
  %v3016 = vpop.f32.mrf.mxu0
  %v3017 = vadd.f32 %v2484, %v3016
  %v3018 = vpop.f32.mrf.mxu0
  %v3019 = vadd.f32 %v2486, %v3018
  %v3020 = vpop.f32.mrf.mxu0
  %v3021 = vadd.f32 %v2488, %v3020
  %3022 = vmatprep.mubr.bf16.mxu0 %v1385
  %3023 = vmatmul.mubr.bf16.gmra.mxu0 %v1384
  %v3024 = vpop.f32.mrf.mxu0
  %v3025 = vadd.f32 %v2492, %v3024
  %v3026 = vpop.f32.mrf.mxu0
  %v3027 = vadd.f32 %v2494, %v3026
  %v3028 = vpop.f32.mrf.mxu0
  %v3029 = vadd.f32 %v2496, %v3028
  %v3030 = vpop.f32.mrf.mxu0
  %v3031 = vadd.f32 %v2498, %v3030
  %3032 = vmatprep.mubr.bf16.mxu0 %v1390
  %3033 = vmatmul.mubr.bf16.gmra.mxu0 %v1389
  %v3034 = vpop.f32.mrf.mxu0
  %v3035 = vadd.f32 %v2502, %v3034
  %v3036 = vpop.f32.mrf.mxu0
  %v3037 = vadd.f32 %v2504, %v3036
  %v3038 = vpop.f32.mrf.mxu0
  %v3039 = vadd.f32 %v2506, %v3038
  %v3040 = vpop.f32.mrf.mxu0
  %v3041 = vadd.f32 %v2508, %v3040
  %3042 = vmatprep.mubr.bf16.mxu0 %v1395
  %3043 = vmatmul.mubr.bf16.gmra.mxu0 %v1394
  %v3044 = vpop.f32.mrf.mxu0
  %v3045 = vadd.f32 %v2512, %v3044
  %v3046 = vpop.f32.mrf.mxu0
  %v3047 = vadd.f32 %v2514, %v3046
  %v3048 = vpop.f32.mrf.mxu0
  %v3049 = vadd.f32 %v2516, %v3048
  %v3050 = vpop.f32.mrf.mxu0
  %v3051 = vadd.f32 %v2518, %v3050
  %3052 = vmatprep.mubr.bf16.mxu0 %v1400
  %3053 = vmatmul.mubr.bf16.gmra.mxu0 %v1399
  %v3054 = vpop.f32.mrf.mxu0
  %v3055 = vadd.f32 %v2522, %v3054
  %v3056 = vpop.f32.mrf.mxu0
  %v3057 = vadd.f32 %v2524, %v3056
  %v3058 = vpop.f32.mrf.mxu0
  %v3059 = vadd.f32 %v2526, %v3058
  %v3060 = vpop.f32.mrf.mxu0
  %v3061 = vadd.f32 %v2528, %v3060
  %3062 = vmatprep.mubr.bf16.mxu0 %v1405
  %3063 = vmatmul.mubr.bf16.gmra.mxu0 %v1404
  %v3064 = vpop.f32.mrf.mxu0
  %v3065 = vadd.f32 %v2532, %v3064
  %v3066 = vpop.f32.mrf.mxu0
  %v3067 = vadd.f32 %v2534, %v3066
  %v3068 = vpop.f32.mrf.mxu0
  %v3069 = vadd.f32 %v2536, %v3068
  %v3070 = vpop.f32.mrf.mxu0
  %v3071 = vadd.f32 %v2538, %v3070
  %3072 = vmatprep.mubr.bf16.mxu0 %v1410
  %3073 = vmatmul.mubr.bf16.gmra.mxu0 %v1409
  %v3074 = vpop.f32.mrf.mxu0
  %v3075 = vadd.f32 %v2542, %v3074
  %v3076 = vpop.f32.mrf.mxu0
  %v3077 = vadd.f32 %v2544, %v3076
  %v3078 = vpop.f32.mrf.mxu0
  %v3079 = vadd.f32 %v2546, %v3078
  %v3080 = vpop.f32.mrf.mxu0
  %v3081 = vadd.f32 %v2548, %v3080
  %3082 = vmatprep.mubr.bf16.mxu0 %v1415
  %3083 = vmatmul.mubr.bf16.gmra.mxu0 %v1414
  %v3084 = vpop.f32.mrf.mxu0
  %v3085 = vadd.f32 %v2552, %v3084
  %v3086 = vpop.f32.mrf.mxu0
  %v3087 = vadd.f32 %v2554, %v3086
  %v3088 = vpop.f32.mrf.mxu0
  %v3089 = vadd.f32 %v2556, %v3088
  %v3090 = vpop.f32.mrf.mxu0
  %v3091 = vadd.f32 %v2558, %v3090
  %3092 = vmatprep.mubr.bf16.mxu0 %v1420
  %3093 = vmatmul.mubr.bf16.gmra.mxu0 %v1419
  %v3094 = vpop.f32.mrf.mxu0
  %v3095 = vadd.f32 %v2562, %v3094
  %v3096 = vpop.f32.mrf.mxu0
  %v3097 = vadd.f32 %v2564, %v3096
  %v3098 = vpop.f32.mrf.mxu0
  %v3099 = vadd.f32 %v2566, %v3098
  %v3100 = vpop.f32.mrf.mxu0
  %v3101 = vadd.f32 %v2568, %v3100
  %3102 = vmatprep.mubr.bf16.mxu0 %v1425
  %3103 = vmatmul.mubr.bf16.gmra.mxu0 %v1424
  %v3104 = vpop.f32.mrf.mxu0
  %v3105 = vadd.f32 %v2572, %v3104
  %v3106 = vpop.f32.mrf.mxu0
  %v3107 = vadd.f32 %v2574, %v3106
  %v3108 = vpop.f32.mrf.mxu0
  %v3109 = vadd.f32 %v2576, %v3108
  %v3110 = vpop.f32.mrf.mxu0
  %v3111 = vadd.f32 %v2578, %v3110
  %3112 = vmatprep.mubr.bf16.mxu0 %v1430
  %3113 = vmatmul.mubr.bf16.gmra.mxu0 %v1429
  %v3114 = vpop.f32.mrf.mxu0
  %v3115 = vadd.f32 %v2582, %v3114
  %v3116 = vpop.f32.mrf.mxu0
  %v3117 = vadd.f32 %v2584, %v3116
  %v3118 = vpop.f32.mrf.mxu0
  %v3119 = vadd.f32 %v2586, %v3118
  %v3120 = vpop.f32.mrf.mxu0
  %v3121 = vadd.f32 %v2588, %v3120
  %3122 = vmatprep.mubr.bf16.mxu0 %v1435
  %3123 = vmatmul.mubr.bf16.gmra.mxu0 %v1434
  %v3124 = vpop.f32.mrf.mxu0
  %v3125 = vadd.f32 %v2592, %v3124
  %v3126 = vpop.f32.mrf.mxu0
  %v3127 = vadd.f32 %v2594, %v3126
  %v3128 = vpop.f32.mrf.mxu0
  %v3129 = vadd.f32 %v2596, %v3128
  %v3130 = vpop.f32.mrf.mxu0
  %v3131 = vadd.f32 %v2598, %v3130
  %3132 = vmatprep.mubr.bf16.mxu0 %v1440
  %3133 = vmatmul.mubr.bf16.gmra.mxu0 %v1439
  %v3134 = vpop.f32.mrf.mxu0
  %v3135 = vadd.f32 %v2602, %v3134
  %v3136 = vpop.f32.mrf.mxu0
  %v3137 = vadd.f32 %v2604, %v3136
  %v3138 = vpop.f32.mrf.mxu0
  %v3139 = vadd.f32 %v2606, %v3138
  %v3140 = vpop.f32.mrf.mxu0
  %v3141 = vadd.f32 %v2608, %v3140
  %3142 = vmatprep.mubr.bf16.mxu0 %v1445
  %3143 = vmatmul.mubr.bf16.gmra.mxu0 %v1444
  %v3144 = vpop.f32.mrf.mxu0
  %v3145 = vadd.f32 %v2612, %v3144
  %v3146 = vpop.f32.mrf.mxu0
  %v3147 = vadd.f32 %v2614, %v3146
  %v3148 = vpop.f32.mrf.mxu0
  %v3149 = vadd.f32 %v2616, %v3148
  %v3150 = vpop.f32.mrf.mxu0
  %v3151 = vadd.f32 %v2618, %v3150
  %3152 = vmatprep.mubr.bf16.mxu0 %v1450
  %3153 = vmatmul.mubr.bf16.gmra.mxu0 %v1449
  %v3154 = vpop.f32.mrf.mxu0
  %v3155 = vadd.f32 %v2622, %v3154
  %v3156 = vpop.f32.mrf.mxu0
  %v3157 = vadd.f32 %v2624, %v3156
  %v3158 = vpop.f32.mrf.mxu0
  %v3159 = vadd.f32 %v2626, %v3158
  %v3160 = vpop.f32.mrf.mxu0
  %v3161 = vadd.f32 %v2628, %v3160
  %3162 = vmatprep.mubr.bf16.mxu0 %v1455
  %3163 = vmatmul.mubr.bf16.gmra.mxu0 %v1454
  %v3164 = vpop.f32.mrf.mxu0
  %v3165 = vadd.f32 %v2632, %v3164
  %v3166 = vpop.f32.mrf.mxu0
  %v3167 = vadd.f32 %v2634, %v3166
  %v3168 = vpop.f32.mrf.mxu0
  %v3169 = vadd.f32 %v2636, %v3168
  %v3170 = vpop.f32.mrf.mxu0
  %v3171 = vadd.f32 %v2638, %v3170
  %3172 = vdwg.mxu0
  %3173 = vmatprep.subr.bf16.mxu0 %v2026
  %3174 = vmatpush1.bf16.msra.mxu0 %v2025
  %3175 = vmatprep.subr.bf16.mxu0 %v2024
  %3176 = vmatpush1.bf16.msra.mxu0 %v2023
  %3177 = vmatprep.subr.bf16.mxu0 %v2022
  %3178 = vmatpush1.bf16.msra.mxu0 %v2021
  %3179 = vmatprep.subr.bf16.mxu0 %v2020
  %3180 = vmatpush1.bf16.msra.mxu0 %v2019
  %3181 = vmatprep.subr.bf16.mxu0 %v2018
  %3182 = vmatpush1.bf16.msra.mxu0 %v2017
  %3183 = vmatprep.subr.bf16.mxu0 %v2016
  %3184 = vmatpush1.bf16.msra.mxu0 %v2015
  %3185 = vmatprep.subr.bf16.mxu0 %v2014
  %3186 = vmatpush1.bf16.msra.mxu0 %v2013
  %3187 = vmatprep.subr.bf16.mxu0 %v2012
  %3188 = vmatpush1.bf16.msra.mxu0 %v2011
  %3189 = vmatprep.subr.bf16.mxu0 0
  %3190 = vmatpush2.bf16.msra.mxu0 0
  %3191 = vmatprep.subr.bf16.mxu0 0
  %3192 = vmatpush2.bf16.msra.mxu0 0
  %3193 = vmatprep.subr.bf16.mxu0 0
  %3194 = vmatpush2.bf16.msra.mxu0 0
  %3195 = vmatprep.subr.bf16.mxu0 0
  %3196 = vmatpush2.bf16.msra.mxu0 0
  %3197 = vmatprep.subr.bf16.mxu0 0
  %3198 = vmatpush2.bf16.msra.mxu0 0
  %3199 = vmatprep.subr.bf16.mxu0 0
  %3200 = vmatpush2.bf16.msra.mxu0 0
  %3201 = vmatprep.subr.bf16.mxu0 0
  %3202 = vmatpush2.bf16.msra.mxu0 0
  %3203 = vmatprep.subr.bf16.mxu0 0
  %3204 = vmatpush2.bf16.msra.mxu0 0
  %3205 = vmatprep.mubr.bf16.mxu0 0
  %3206 = vmatmul.mubr.bf16.gmra.mxu0 %v1211
  %v3207 = vpop.f32.mrf.mxu0
  %v3208 = vadd.f32 %v2675, %v3207
  %v3209 = vpop.f32.mrf.mxu0
  %v3210 = vadd.f32 %v2677, %v3209
  %v3211 = vpop.f32.mrf.mxu0
  %v3212 = vadd.f32 %v2679, %v3211
  %v3213 = vpop.f32.mrf.mxu0
  %v3214 = vadd.f32 %v2681, %v3213
  %3215 = vmatprep.mubr.bf16.mxu0 0
  %3216 = vmatmul.mubr.bf16.gmra.mxu0 %v1216
  %v3217 = vpop.f32.mrf.mxu0
  %v3218 = vadd.f32 %v2685, %v3217
  %v3219 = vpop.f32.mrf.mxu0
  %v3220 = vadd.f32 %v2687, %v3219
  %v3221 = vpop.f32.mrf.mxu0
  %v3222 = vadd.f32 %v2689, %v3221
  %v3223 = vpop.f32.mrf.mxu0
  %v3224 = vadd.f32 %v2691, %v3223
  %3225 = vmatprep.mubr.bf16.mxu0 0
  %3226 = vmatmul.mubr.bf16.gmra.mxu0 %v1221
  %v3227 = vpop.f32.mrf.mxu0
  %v3228 = vadd.f32 %v2695, %v3227
  %v3229 = vpop.f32.mrf.mxu0
  %v3230 = vadd.f32 %v2697, %v3229
  %v3231 = vpop.f32.mrf.mxu0
  %v3232 = vadd.f32 %v2699, %v3231
  %v3233 = vpop.f32.mrf.mxu0
  %v3234 = vadd.f32 %v2701, %v3233
  %3235 = vmatprep.mubr.bf16.mxu0 0
  %3236 = vmatmul.mubr.bf16.gmra.mxu0 %v1226
  %v3237 = vpop.f32.mrf.mxu0
  %v3238 = vadd.f32 %v2705, %v3237
  %v3239 = vpop.f32.mrf.mxu0
  %v3240 = vadd.f32 %v2707, %v3239
  %v3241 = vpop.f32.mrf.mxu0
  %v3242 = vadd.f32 %v2709, %v3241
  %v3243 = vpop.f32.mrf.mxu0
  %v3244 = vadd.f32 %v2711, %v3243
  %3245 = vmatprep.mubr.bf16.mxu0 0
  %3246 = vmatmul.mubr.bf16.gmra.mxu0 %v1231
  %v3247 = vpop.f32.mrf.mxu0
  %v3248 = vadd.f32 %v2715, %v3247
  %v3249 = vpop.f32.mrf.mxu0
  %v3250 = vadd.f32 %v2717, %v3249
  %v3251 = vpop.f32.mrf.mxu0
  %v3252 = vadd.f32 %v2719, %v3251
  %v3253 = vpop.f32.mrf.mxu0
  %v3254 = vadd.f32 %v2721, %v3253
  %3255 = vmatprep.mubr.bf16.mxu0 0
  %3256 = vmatmul.mubr.bf16.gmra.mxu0 %v1236
  %v3257 = vpop.f32.mrf.mxu0
  %v3258 = vadd.f32 %v2725, %v3257
  %v3259 = vpop.f32.mrf.mxu0
  %v3260 = vadd.f32 %v2727, %v3259
  %v3261 = vpop.f32.mrf.mxu0
  %v3262 = vadd.f32 %v2729, %v3261
  %v3263 = vpop.f32.mrf.mxu0
  %v3264 = vadd.f32 %v2731, %v3263
  %3265 = vmatprep.mubr.bf16.mxu0 0
  %3266 = vmatmul.mubr.bf16.gmra.mxu0 %v1241
  %v3267 = vpop.f32.mrf.mxu0
  %v3268 = vadd.f32 %v2735, %v3267
  %v3269 = vpop.f32.mrf.mxu0
  %v3270 = vadd.f32 %v2737, %v3269
  %v3271 = vpop.f32.mrf.mxu0
  %v3272 = vadd.f32 %v2739, %v3271
  %v3273 = vpop.f32.mrf.mxu0
  %v3274 = vadd.f32 %v2741, %v3273
  %3275 = vmatprep.mubr.bf16.mxu0 0
  %3276 = vmatmul.mubr.bf16.gmra.mxu0 %v1246
  %v3277 = vpop.f32.mrf.mxu0
  %v3278 = vadd.f32 %v2745, %v3277
  %v3279 = vpop.f32.mrf.mxu0
  %v3280 = vadd.f32 %v2747, %v3279
  %v3281 = vpop.f32.mrf.mxu0
  %v3282 = vadd.f32 %v2749, %v3281
  %v3283 = vpop.f32.mrf.mxu0
  %v3284 = vadd.f32 %v2751, %v3283
  %3285 = vmatprep.mubr.bf16.mxu0 0
  %3286 = vmatmul.mubr.bf16.gmra.mxu0 %v1251
  %v3287 = vpop.f32.mrf.mxu0
  %v3288 = vadd.f32 %v2755, %v3287
  %v3289 = vpop.f32.mrf.mxu0
  %v3290 = vadd.f32 %v2757, %v3289
  %v3291 = vpop.f32.mrf.mxu0
  %v3292 = vadd.f32 %v2759, %v3291
  %v3293 = vpop.f32.mrf.mxu0
  %v3294 = vadd.f32 %v2761, %v3293
  %3295 = vmatprep.mubr.bf16.mxu0 0
  %3296 = vmatmul.mubr.bf16.gmra.mxu0 %v1256
  %v3297 = vpop.f32.mrf.mxu0
  %v3298 = vadd.f32 %v2765, %v3297
  %v3299 = vpop.f32.mrf.mxu0
  %v3300 = vadd.f32 %v2767, %v3299
  %v3301 = vpop.f32.mrf.mxu0
  %v3302 = vadd.f32 %v2769, %v3301
  %v3303 = vpop.f32.mrf.mxu0
  %v3304 = vadd.f32 %v2771, %v3303
  %3305 = vmatprep.mubr.bf16.mxu0 0
  %3306 = vmatmul.mubr.bf16.gmra.mxu0 %v1261
  %v3307 = vpop.f32.mrf.mxu0
  %v3308 = vadd.f32 %v2775, %v3307
  %v3309 = vpop.f32.mrf.mxu0
  %v3310 = vadd.f32 %v2777, %v3309
  %v3311 = vpop.f32.mrf.mxu0
  %v3312 = vadd.f32 %v2779, %v3311
  %v3313 = vpop.f32.mrf.mxu0
  %v3314 = vadd.f32 %v2781, %v3313
  %3315 = vmatprep.mubr.bf16.mxu0 0
  %3316 = vmatmul.mubr.bf16.gmra.mxu0 %v1266
  %v3317 = vpop.f32.mrf.mxu0
  %v3318 = vadd.f32 %v2785, %v3317
  %v3319 = vpop.f32.mrf.mxu0
  %v3320 = vadd.f32 %v2787, %v3319
  %v3321 = vpop.f32.mrf.mxu0
  %v3322 = vadd.f32 %v2789, %v3321
  %v3323 = vpop.f32.mrf.mxu0
  %v3324 = vadd.f32 %v2791, %v3323
  %3325 = vmatprep.mubr.bf16.mxu0 0
  %3326 = vmatmul.mubr.bf16.gmra.mxu0 %v1271
  %v3327 = vpop.f32.mrf.mxu0
  %v3328 = vadd.f32 %v2795, %v3327
  %v3329 = vpop.f32.mrf.mxu0
  %v3330 = vadd.f32 %v2797, %v3329
  %v3331 = vpop.f32.mrf.mxu0
  %v3332 = vadd.f32 %v2799, %v3331
  %v3333 = vpop.f32.mrf.mxu0
  %v3334 = vadd.f32 %v2801, %v3333
  %3335 = vmatprep.mubr.bf16.mxu0 0
  %3336 = vmatmul.mubr.bf16.gmra.mxu0 %v1276
  %v3337 = vpop.f32.mrf.mxu0
  %v3338 = vadd.f32 %v2805, %v3337
  %v3339 = vpop.f32.mrf.mxu0
  %v3340 = vadd.f32 %v2807, %v3339
  %v3341 = vpop.f32.mrf.mxu0
  %v3342 = vadd.f32 %v2809, %v3341
  %v3343 = vpop.f32.mrf.mxu0
  %v3344 = vadd.f32 %v2811, %v3343
  %3345 = vmatprep.mubr.bf16.mxu0 0
  %3346 = vmatmul.mubr.bf16.gmra.mxu0 %v1281
  %v3347 = vpop.f32.mrf.mxu0
  %v3348 = vadd.f32 %v2815, %v3347
  %v3349 = vpop.f32.mrf.mxu0
  %v3350 = vadd.f32 %v2817, %v3349
  %v3351 = vpop.f32.mrf.mxu0
  %v3352 = vadd.f32 %v2819, %v3351
  %v3353 = vpop.f32.mrf.mxu0
  %v3354 = vadd.f32 %v2821, %v3353
  %3355 = vmatprep.mubr.bf16.mxu0 0
  %3356 = vmatmul.mubr.bf16.gmra.mxu0 %v1286
  %v3357 = vpop.f32.mrf.mxu0
  %v3358 = vadd.f32 %v2825, %v3357
  %v3359 = vpop.f32.mrf.mxu0
  %v3360 = vadd.f32 %v2827, %v3359
  %v3361 = vpop.f32.mrf.mxu0
  %v3362 = vadd.f32 %v2829, %v3361
  %v3363 = vpop.f32.mrf.mxu0
  %v3364 = vadd.f32 %v2831, %v3363
  %3365 = vmatprep.mubr.bf16.mxu0 0
  %3366 = vmatmul.mubr.bf16.gmra.mxu0 %v1291
  %v3367 = vpop.f32.mrf.mxu0
  %v3368 = vadd.f32 %v2835, %v3367
  %v3369 = vpop.f32.mrf.mxu0
  %v3370 = vadd.f32 %v2837, %v3369
  %v3371 = vpop.f32.mrf.mxu0
  %v3372 = vadd.f32 %v2839, %v3371
  %v3373 = vpop.f32.mrf.mxu0
  %v3374 = vadd.f32 %v2841, %v3373
  %3375 = vmatprep.mubr.bf16.mxu0 0
  %3376 = vmatmul.mubr.bf16.gmra.mxu0 %v1296
  %v3377 = vpop.f32.mrf.mxu0
  %v3378 = vadd.f32 %v2845, %v3377
  %v3379 = vpop.f32.mrf.mxu0
  %v3380 = vadd.f32 %v2847, %v3379
  %v3381 = vpop.f32.mrf.mxu0
  %v3382 = vadd.f32 %v2849, %v3381
  %v3383 = vpop.f32.mrf.mxu0
  %v3384 = vadd.f32 %v2851, %v3383
  %3385 = vmatprep.mubr.bf16.mxu0 0
  %3386 = vmatmul.mubr.bf16.gmra.mxu0 %v1301
  %v3387 = vpop.f32.mrf.mxu0
  %v3388 = vadd.f32 %v2855, %v3387
  %v3389 = vpop.f32.mrf.mxu0
  %v3390 = vadd.f32 %v2857, %v3389
  %v3391 = vpop.f32.mrf.mxu0
  %v3392 = vadd.f32 %v2859, %v3391
  %v3393 = vpop.f32.mrf.mxu0
  %v3394 = vadd.f32 %v2861, %v3393
  %3395 = vmatprep.mubr.bf16.mxu0 0
  %3396 = vmatmul.mubr.bf16.gmra.mxu0 %v1306
  %v3397 = vpop.f32.mrf.mxu0
  %v3398 = vadd.f32 %v2865, %v3397
  %v3399 = vpop.f32.mrf.mxu0
  %v3400 = vadd.f32 %v2867, %v3399
  %v3401 = vpop.f32.mrf.mxu0
  %v3402 = vadd.f32 %v2869, %v3401
  %v3403 = vpop.f32.mrf.mxu0
  %v3404 = vadd.f32 %v2871, %v3403
  %3405 = vmatprep.mubr.bf16.mxu0 0
  %3406 = vmatmul.mubr.bf16.gmra.mxu0 %v1311
  %v3407 = vpop.f32.mrf.mxu0
  %v3408 = vadd.f32 %v2875, %v3407
  %v3409 = vpop.f32.mrf.mxu0
  %v3410 = vadd.f32 %v2877, %v3409
  %v3411 = vpop.f32.mrf.mxu0
  %v3412 = vadd.f32 %v2879, %v3411
  %v3413 = vpop.f32.mrf.mxu0
  %v3414 = vadd.f32 %v2881, %v3413
  %3415 = vmatprep.mubr.bf16.mxu0 0
  %3416 = vmatmul.mubr.bf16.gmra.mxu0 %v1316
  %v3417 = vpop.f32.mrf.mxu0
  %v3418 = vadd.f32 %v2885, %v3417
  %v3419 = vpop.f32.mrf.mxu0
  %v3420 = vadd.f32 %v2887, %v3419
  %v3421 = vpop.f32.mrf.mxu0
  %v3422 = vadd.f32 %v2889, %v3421
  %v3423 = vpop.f32.mrf.mxu0
  %v3424 = vadd.f32 %v2891, %v3423
  %3425 = vmatprep.mubr.bf16.mxu0 0
  %3426 = vmatmul.mubr.bf16.gmra.mxu0 %v1321
  %v3427 = vpop.f32.mrf.mxu0
  %v3428 = vadd.f32 %v2895, %v3427
  %v3429 = vpop.f32.mrf.mxu0
  %v3430 = vadd.f32 %v2897, %v3429
  %v3431 = vpop.f32.mrf.mxu0
  %v3432 = vadd.f32 %v2899, %v3431
  %v3433 = vpop.f32.mrf.mxu0
  %v3434 = vadd.f32 %v2901, %v3433
  %3435 = vmatprep.mubr.bf16.mxu0 0
  %3436 = vmatmul.mubr.bf16.gmra.mxu0 %v1326
  %v3437 = vpop.f32.mrf.mxu0
  %v3438 = vadd.f32 %v2905, %v3437
  %v3439 = vpop.f32.mrf.mxu0
  %v3440 = vadd.f32 %v2907, %v3439
  %v3441 = vpop.f32.mrf.mxu0
  %v3442 = vadd.f32 %v2909, %v3441
  %v3443 = vpop.f32.mrf.mxu0
  %v3444 = vadd.f32 %v2911, %v3443
  %3445 = vmatprep.mubr.bf16.mxu0 0
  %3446 = vmatmul.mubr.bf16.gmra.mxu0 %v1331
  %v3447 = vpop.f32.mrf.mxu0
  %v3448 = vadd.f32 %v2915, %v3447
  %v3449 = vpop.f32.mrf.mxu0
  %v3450 = vadd.f32 %v2917, %v3449
  %v3451 = vpop.f32.mrf.mxu0
  %v3452 = vadd.f32 %v2919, %v3451
  %v3453 = vpop.f32.mrf.mxu0
  %v3454 = vadd.f32 %v2921, %v3453
  %3455 = vmatprep.mubr.bf16.mxu0 0
  %3456 = vmatmul.mubr.bf16.gmra.mxu0 %v1336
  %v3457 = vpop.f32.mrf.mxu0
  %v3458 = vadd.f32 %v2925, %v3457
  %v3459 = vpop.f32.mrf.mxu0
  %v3460 = vadd.f32 %v2927, %v3459
  %v3461 = vpop.f32.mrf.mxu0
  %v3462 = vadd.f32 %v2929, %v3461
  %v3463 = vpop.f32.mrf.mxu0
  %v3464 = vadd.f32 %v2931, %v3463
  %3465 = vmatprep.mubr.bf16.mxu0 0
  %3466 = vmatmul.mubr.bf16.gmra.mxu0 %v1341
  %v3467 = vpop.f32.mrf.mxu0
  %v3468 = vadd.f32 %v2935, %v3467
  %v3469 = vpop.f32.mrf.mxu0
  %v3470 = vadd.f32 %v2937, %v3469
  %v3471 = vpop.f32.mrf.mxu0
  %v3472 = vadd.f32 %v2939, %v3471
  %v3473 = vpop.f32.mrf.mxu0
  %v3474 = vadd.f32 %v2941, %v3473
  %3475 = vmatprep.mubr.bf16.mxu0 0
  %3476 = vmatmul.mubr.bf16.gmra.mxu0 %v1346
  %v3477 = vpop.f32.mrf.mxu0
  %v3478 = vadd.f32 %v2945, %v3477
  %v3479 = vpop.f32.mrf.mxu0
  %v3480 = vadd.f32 %v2947, %v3479
  %v3481 = vpop.f32.mrf.mxu0
  %v3482 = vadd.f32 %v2949, %v3481
  %v3483 = vpop.f32.mrf.mxu0
  %v3484 = vadd.f32 %v2951, %v3483
  %3485 = vmatprep.mubr.bf16.mxu0 0
  %3486 = vmatmul.mubr.bf16.gmra.mxu0 %v1351
  %v3487 = vpop.f32.mrf.mxu0
  %v3488 = vadd.f32 %v2955, %v3487
  %v3489 = vpop.f32.mrf.mxu0
  %v3490 = vadd.f32 %v2957, %v3489
  %v3491 = vpop.f32.mrf.mxu0
  %v3492 = vadd.f32 %v2959, %v3491
  %v3493 = vpop.f32.mrf.mxu0
  %v3494 = vadd.f32 %v2961, %v3493
  %3495 = vmatprep.mubr.bf16.mxu0 0
  %3496 = vmatmul.mubr.bf16.gmra.mxu0 %v1356
  %v3497 = vpop.f32.mrf.mxu0
  %v3498 = vadd.f32 %v2965, %v3497
  %v3499 = vpop.f32.mrf.mxu0
  %v3500 = vadd.f32 %v2967, %v3499
  %v3501 = vpop.f32.mrf.mxu0
  %v3502 = vadd.f32 %v2969, %v3501
  %v3503 = vpop.f32.mrf.mxu0
  %v3504 = vadd.f32 %v2971, %v3503
  %3505 = vmatprep.mubr.bf16.mxu0 0
  %3506 = vmatmul.mubr.bf16.gmra.mxu0 %v1361
  %v3507 = vpop.f32.mrf.mxu0
  %v3508 = vadd.f32 %v2975, %v3507
  %v3509 = vpop.f32.mrf.mxu0
  %v3510 = vadd.f32 %v2977, %v3509
  %v3511 = vpop.f32.mrf.mxu0
  %v3512 = vadd.f32 %v2979, %v3511
  %v3513 = vpop.f32.mrf.mxu0
  %v3514 = vadd.f32 %v2981, %v3513
  %3515 = vmatprep.mubr.bf16.mxu0 0
  %3516 = vmatmul.mubr.bf16.gmra.mxu0 %v1366
  %v3517 = vpop.f32.mrf.mxu0
  %v3518 = vadd.f32 %v2985, %v3517
  %v3519 = vpop.f32.mrf.mxu0
  %v3520 = vadd.f32 %v2987, %v3519
  %v3521 = vpop.f32.mrf.mxu0
  %v3522 = vadd.f32 %v2989, %v3521
  %v3523 = vpop.f32.mrf.mxu0
  %v3524 = vadd.f32 %v2991, %v3523
  %3525 = vmatprep.mubr.bf16.mxu0 0
  %3526 = vmatmul.mubr.bf16.gmra.mxu0 %v1371
  %v3527 = vpop.f32.mrf.mxu0
  %v3528 = vadd.f32 %v2995, %v3527
  %v3529 = vpop.f32.mrf.mxu0
  %v3530 = vadd.f32 %v2997, %v3529
  %v3531 = vpop.f32.mrf.mxu0
  %v3532 = vadd.f32 %v2999, %v3531
  %v3533 = vpop.f32.mrf.mxu0
  %v3534 = vadd.f32 %v3001, %v3533
  %3535 = vmatprep.mubr.bf16.mxu0 0
  %3536 = vmatmul.mubr.bf16.gmra.mxu0 %v1376
  %v3537 = vpop.f32.mrf.mxu0
  %v3538 = vadd.f32 %v3005, %v3537
  %v3539 = vpop.f32.mrf.mxu0
  %v3540 = vadd.f32 %v3007, %v3539
  %v3541 = vpop.f32.mrf.mxu0
  %v3542 = vadd.f32 %v3009, %v3541
  %v3543 = vpop.f32.mrf.mxu0
  %v3544 = vadd.f32 %v3011, %v3543
  %3545 = vmatprep.mubr.bf16.mxu0 0
  %3546 = vmatmul.mubr.bf16.gmra.mxu0 %v1381
  %v3547 = vpop.f32.mrf.mxu0
  %v3548 = vadd.f32 %v3015, %v3547
  %v3549 = vpop.f32.mrf.mxu0
  %v3550 = vadd.f32 %v3017, %v3549
  %v3551 = vpop.f32.mrf.mxu0
  %v3552 = vadd.f32 %v3019, %v3551
  %v3553 = vpop.f32.mrf.mxu0
  %v3554 = vadd.f32 %v3021, %v3553
  %3555 = vmatprep.mubr.bf16.mxu0 0
  %3556 = vmatmul.mubr.bf16.gmra.mxu0 %v1386
  %v3557 = vpop.f32.mrf.mxu0
  %v3558 = vadd.f32 %v3025, %v3557
  %v3559 = vpop.f32.mrf.mxu0
  %v3560 = vadd.f32 %v3027, %v3559
  %v3561 = vpop.f32.mrf.mxu0
  %v3562 = vadd.f32 %v3029, %v3561
  %v3563 = vpop.f32.mrf.mxu0
  %v3564 = vadd.f32 %v3031, %v3563
  %3565 = vmatprep.mubr.bf16.mxu0 0
  %3566 = vmatmul.mubr.bf16.gmra.mxu0 %v1391
  %v3567 = vpop.f32.mrf.mxu0
  %v3568 = vadd.f32 %v3035, %v3567
  %v3569 = vpop.f32.mrf.mxu0
  %v3570 = vadd.f32 %v3037, %v3569
  %v3571 = vpop.f32.mrf.mxu0
  %v3572 = vadd.f32 %v3039, %v3571
  %v3573 = vpop.f32.mrf.mxu0
  %v3574 = vadd.f32 %v3041, %v3573
  %3575 = vmatprep.mubr.bf16.mxu0 0
  %3576 = vmatmul.mubr.bf16.gmra.mxu0 %v1396
  %v3577 = vpop.f32.mrf.mxu0
  %v3578 = vadd.f32 %v3045, %v3577
  %v3579 = vpop.f32.mrf.mxu0
  %v3580 = vadd.f32 %v3047, %v3579
  %v3581 = vpop.f32.mrf.mxu0
  %v3582 = vadd.f32 %v3049, %v3581
  %v3583 = vpop.f32.mrf.mxu0
  %v3584 = vadd.f32 %v3051, %v3583
  %3585 = vmatprep.mubr.bf16.mxu0 0
  %3586 = vmatmul.mubr.bf16.gmra.mxu0 %v1401
  %v3587 = vpop.f32.mrf.mxu0
  %v3588 = vadd.f32 %v3055, %v3587
  %v3589 = vpop.f32.mrf.mxu0
  %v3590 = vadd.f32 %v3057, %v3589
  %v3591 = vpop.f32.mrf.mxu0
  %v3592 = vadd.f32 %v3059, %v3591
  %v3593 = vpop.f32.mrf.mxu0
  %v3594 = vadd.f32 %v3061, %v3593
  %3595 = vmatprep.mubr.bf16.mxu0 0
  %3596 = vmatmul.mubr.bf16.gmra.mxu0 %v1406
  %v3597 = vpop.f32.mrf.mxu0
  %v3598 = vadd.f32 %v3065, %v3597
  %v3599 = vpop.f32.mrf.mxu0
  %v3600 = vadd.f32 %v3067, %v3599
  %v3601 = vpop.f32.mrf.mxu0
  %v3602 = vadd.f32 %v3069, %v3601
  %v3603 = vpop.f32.mrf.mxu0
  %v3604 = vadd.f32 %v3071, %v3603
  %3605 = vmatprep.mubr.bf16.mxu0 0
  %3606 = vmatmul.mubr.bf16.gmra.mxu0 %v1411
  %v3607 = vpop.f32.mrf.mxu0
  %v3608 = vadd.f32 %v3075, %v3607
  %v3609 = vpop.f32.mrf.mxu0
  %v3610 = vadd.f32 %v3077, %v3609
  %v3611 = vpop.f32.mrf.mxu0
  %v3612 = vadd.f32 %v3079, %v3611
  %v3613 = vpop.f32.mrf.mxu0
  %v3614 = vadd.f32 %v3081, %v3613
  %3615 = vmatprep.mubr.bf16.mxu0 0
  %3616 = vmatmul.mubr.bf16.gmra.mxu0 %v1416
  %v3617 = vpop.f32.mrf.mxu0
  %v3618 = vadd.f32 %v3085, %v3617
  %v3619 = vpop.f32.mrf.mxu0
  %v3620 = vadd.f32 %v3087, %v3619
  %v3621 = vpop.f32.mrf.mxu0
  %v3622 = vadd.f32 %v3089, %v3621
  %v3623 = vpop.f32.mrf.mxu0
  %v3624 = vadd.f32 %v3091, %v3623
  %3625 = vmatprep.mubr.bf16.mxu0 0
  %3626 = vmatmul.mubr.bf16.gmra.mxu0 %v1421
  %v3627 = vpop.f32.mrf.mxu0
  %v3628 = vadd.f32 %v3095, %v3627
  %v3629 = vpop.f32.mrf.mxu0
  %v3630 = vadd.f32 %v3097, %v3629
  %v3631 = vpop.f32.mrf.mxu0
  %v3632 = vadd.f32 %v3099, %v3631
  %v3633 = vpop.f32.mrf.mxu0
  %v3634 = vadd.f32 %v3101, %v3633
  %3635 = vmatprep.mubr.bf16.mxu0 0
  %3636 = vmatmul.mubr.bf16.gmra.mxu0 %v1426
  %v3637 = vpop.f32.mrf.mxu0
  %v3638 = vadd.f32 %v3105, %v3637
  %v3639 = vpop.f32.mrf.mxu0
  %v3640 = vadd.f32 %v3107, %v3639
  %v3641 = vpop.f32.mrf.mxu0
  %v3642 = vadd.f32 %v3109, %v3641
  %v3643 = vpop.f32.mrf.mxu0
  %v3644 = vadd.f32 %v3111, %v3643
  %3645 = vmatprep.mubr.bf16.mxu0 0
  %3646 = vmatmul.mubr.bf16.gmra.mxu0 %v1431
  %v3647 = vpop.f32.mrf.mxu0
  %v3648 = vadd.f32 %v3115, %v3647
  %v3649 = vpop.f32.mrf.mxu0
  %v3650 = vadd.f32 %v3117, %v3649
  %v3651 = vpop.f32.mrf.mxu0
  %v3652 = vadd.f32 %v3119, %v3651
  %v3653 = vpop.f32.mrf.mxu0
  %v3654 = vadd.f32 %v3121, %v3653
  %3655 = vmatprep.mubr.bf16.mxu0 0
  %3656 = vmatmul.mubr.bf16.gmra.mxu0 %v1436
  %v3657 = vpop.f32.mrf.mxu0
  %v3658 = vadd.f32 %v3125, %v3657
  %v3659 = vpop.f32.mrf.mxu0
  %v3660 = vadd.f32 %v3127, %v3659
  %v3661 = vpop.f32.mrf.mxu0
  %v3662 = vadd.f32 %v3129, %v3661
  %v3663 = vpop.f32.mrf.mxu0
  %v3664 = vadd.f32 %v3131, %v3663
  %3665 = vmatprep.mubr.bf16.mxu0 0
  %3666 = vmatmul.mubr.bf16.gmra.mxu0 %v1441
  %v3667 = vpop.f32.mrf.mxu0
  %v3668 = vadd.f32 %v3135, %v3667
  %v3669 = vpop.f32.mrf.mxu0
  %v3670 = vadd.f32 %v3137, %v3669
  %v3671 = vpop.f32.mrf.mxu0
  %v3672 = vadd.f32 %v3139, %v3671
  %v3673 = vpop.f32.mrf.mxu0
  %v3674 = vadd.f32 %v3141, %v3673
  %3675 = vmatprep.mubr.bf16.mxu0 0
  %3676 = vmatmul.mubr.bf16.gmra.mxu0 %v1446
  %v3677 = vpop.f32.mrf.mxu0
  %v3678 = vadd.f32 %v3145, %v3677
  %v3679 = vpop.f32.mrf.mxu0
  %v3680 = vadd.f32 %v3147, %v3679
  %v3681 = vpop.f32.mrf.mxu0
  %v3682 = vadd.f32 %v3149, %v3681
  %v3683 = vpop.f32.mrf.mxu0
  %v3684 = vadd.f32 %v3151, %v3683
  %3685 = vmatprep.mubr.bf16.mxu0 0
  %3686 = vmatmul.mubr.bf16.gmra.mxu0 %v1451
  %v3687 = vpop.f32.mrf.mxu0
  %v3688 = vadd.f32 %v3155, %v3687
  %v3689 = vpop.f32.mrf.mxu0
  %v3690 = vadd.f32 %v3157, %v3689
  %v3691 = vpop.f32.mrf.mxu0
  %v3692 = vadd.f32 %v3159, %v3691
  %v3693 = vpop.f32.mrf.mxu0
  %v3694 = vadd.f32 %v3161, %v3693
  %3695 = vmatprep.mubr.bf16.mxu0 0
  %3696 = vmatmul.mubr.bf16.gmra.mxu0 %v1456
  %v3697 = vpop.f32.mrf.mxu0
  %v3698 = vadd.f32 %v3165, %v3697
  %v3699 = vpop.f32.mrf.mxu0
  %v3700 = vadd.f32 %v3167, %v3699
  %v3701 = vpop.f32.mrf.mxu0
  %v3702 = vadd.f32 %v3169, %v3701
  %v3703 = vpop.f32.mrf.mxu0
  %v3704 = vadd.f32 %v3171, %v3703
  %3705 = vdwg.mxu0
  %3706 = vst [vmem:[%s3] sm:$0xff] %v3208
  %3707 = vst [vmem:[%s3 + $0x8] sm:$0xff] %v3210
  %3708 = vst [vmem:[%s3 + $0x10] sm:$0xff] %v3212
  %3709 = vst [vmem:[%s3 + $0x18] sm:$0xff] %v3214
  %3710 = vst [vmem:[%s3 + $0x20] sm:$0xff] %v3218
  %3711 = vst [vmem:[%s3 + $0x28] sm:$0xff] %v3220
  %3712 = vst [vmem:[%s3 + $0x30] sm:$0xff] %v3222
  %3713 = vst [vmem:[%s3 + $0x38] sm:$0xff] %v3224
  %3714 = vst [vmem:[%s3 + $0x40] sm:$0xff] %v3228
  %3715 = vst [vmem:[%s3 + $0x48] sm:$0xff] %v3230
  %3716 = vst [vmem:[%s3 + $0x50] sm:$0xff] %v3232
  %3717 = vst [vmem:[%s3 + $0x58] sm:$0xff] %v3234
  %3718 = vst [vmem:[%s3 + $0x60] sm:$0xff] %v3238
  %3719 = vst [vmem:[%s3 + $0x68] sm:$0xff] %v3240
  %3720 = vst [vmem:[%s3 + $0x70] sm:$0xff] %v3242
  %3721 = vst [vmem:[%s3 + $0x78] sm:$0xff] %v3244
  %3722 = vst [vmem:[%s3 + $0x80] sm:$0xff] %v3248
  %3723 = vst [vmem:[%s3 + $0x88] sm:$0xff] %v3250
  %3724 = vst [vmem:[%s3 + $0x90] sm:$0xff] %v3252
  %3725 = vst [vmem:[%s3 + $0x98] sm:$0xff] %v3254
  %3726 = vst [vmem:[%s3 + $0xa0] sm:$0xff] %v3258
  %3727 = vst [vmem:[%s3 + $0xa8] sm:$0xff] %v3260
  %3728 = vst [vmem:[%s3 + $0xb0] sm:$0xff] %v3262
  %3729 = vst [vmem:[%s3 + $0xb8] sm:$0xff] %v3264
  %3730 = vst [vmem:[%s3 + $0xc0] sm:$0xff] %v3268
  %3731 = vst [vmem:[%s3 + $0xc8] sm:$0xff] %v3270
  %3732 = vst [vmem:[%s3 + $0xd0] sm:$0xff] %v3272
  %3733 = vst [vmem:[%s3 + $0xd8] sm:$0xff] %v3274
  %3734 = vst [vmem:[%s3 + $0xe0] sm:$0xff] %v3278
  %3735 = vst [vmem:[%s3 + $0xe8] sm:$0xff] %v3280
  %3736 = vst [vmem:[%s3 + $0xf0] sm:$0xff] %v3282
  %3737 = vst [vmem:[%s3 + $0xf8] sm:$0xff] %v3284
  %3738 = vst [vmem:[%s3 + $0x100] sm:$0xff] %v3288
  %3739 = vst [vmem:[%s3 + $0x108] sm:$0xff] %v3290
  %3740 = vst [vmem:[%s3 + $0x110] sm:$0xff] %v3292
  %3741 = vst [vmem:[%s3 + $0x118] sm:$0xff] %v3294
  %3742 = vst [vmem:[%s3 + $0x120] sm:$0xff] %v3298
  %3743 = vst [vmem:[%s3 + $0x128] sm:$0xff] %v3300
  %3744 = vst [vmem:[%s3 + $0x130] sm:$0xff] %v3302
  %3745 = vst [vmem:[%s3 + $0x138] sm:$0xff] %v3304
  %3746 = vst [vmem:[%s3 + $0x140] sm:$0xff] %v3308
  %3747 = vst [vmem:[%s3 + $0x148] sm:$0xff] %v3310
  %3748 = vst [vmem:[%s3 + $0x150] sm:$0xff] %v3312
  %3749 = vst [vmem:[%s3 + $0x158] sm:$0xff] %v3314
  %3750 = vst [vmem:[%s3 + $0x160] sm:$0xff] %v3318
  %3751 = vst [vmem:[%s3 + $0x168] sm:$0xff] %v3320
  %3752 = vst [vmem:[%s3 + $0x170] sm:$0xff] %v3322
  %3753 = vst [vmem:[%s3 + $0x178] sm:$0xff] %v3324
  %3754 = vst [vmem:[%s3 + $0x180] sm:$0xff] %v3328
  %3755 = vst [vmem:[%s3 + $0x188] sm:$0xff] %v3330
  %3756 = vst [vmem:[%s3 + $0x190] sm:$0xff] %v3332
  %3757 = vst [vmem:[%s3 + $0x198] sm:$0xff] %v3334
  %3758 = vst [vmem:[%s3 + $0x1a0] sm:$0xff] %v3338
  %3759 = vst [vmem:[%s3 + $0x1a8] sm:$0xff] %v3340
  %3760 = vst [vmem:[%s3 + $0x1b0] sm:$0xff] %v3342
  %3761 = vst [vmem:[%s3 + $0x1b8] sm:$0xff] %v3344
  %3762 = vst [vmem:[%s3 + $0x1c0] sm:$0xff] %v3348
  %3763 = vst [vmem:[%s3 + $0x1c8] sm:$0xff] %v3350
  %3764 = vst [vmem:[%s3 + $0x1d0] sm:$0xff] %v3352
  %3765 = vst [vmem:[%s3 + $0x1d8] sm:$0xff] %v3354
  %3766 = vst [vmem:[%s3 + $0x1e0] sm:$0xff] %v3358
  %3767 = vst [vmem:[%s3 + $0x1e8] sm:$0xff] %v3360
  %3768 = vst [vmem:[%s3 + $0x1f0] sm:$0xff] %v3362
  %3769 = vst [vmem:[%s3 + $0x1f8] sm:$0xff] %v3364
  %3770 = vst [vmem:[%s3 + $0x200] sm:$0xff] %v3368
  %3771 = vst [vmem:[%s3 + $0x208] sm:$0xff] %v3370
  %3772 = vst [vmem:[%s3 + $0x210] sm:$0xff] %v3372
  %3773 = vst [vmem:[%s3 + $0x218] sm:$0xff] %v3374
  %3774 = vst [vmem:[%s3 + $0x220] sm:$0xff] %v3378
  %3775 = vst [vmem:[%s3 + $0x228] sm:$0xff] %v3380
  %3776 = vst [vmem:[%s3 + $0x230] sm:$0xff] %v3382
  %3777 = vst [vmem:[%s3 + $0x238] sm:$0xff] %v3384
  %3778 = vst [vmem:[%s3 + $0x240] sm:$0xff] %v3388
  %3779 = vst [vmem:[%s3 + $0x248] sm:$0xff] %v3390
  %3780 = vst [vmem:[%s3 + $0x250] sm:$0xff] %v3392
  %3781 = vst [vmem:[%s3 + $0x258] sm:$0xff] %v3394
  %3782 = vst [vmem:[%s3 + $0x260] sm:$0xff] %v3398
  %3783 = vst [vmem:[%s3 + $0x268] sm:$0xff] %v3400
  %3784 = vst [vmem:[%s3 + $0x270] sm:$0xff] %v3402
  %3785 = vst [vmem:[%s3 + $0x278] sm:$0xff] %v3404
  %3786 = vst [vmem:[%s3 + $0x280] sm:$0xff] %v3408
  %3787 = vst [vmem:[%s3 + $0x288] sm:$0xff] %v3410
  %3788 = vst [vmem:[%s3 + $0x290] sm:$0xff] %v3412
  %3789 = vst [vmem:[%s3 + $0x298] sm:$0xff] %v3414
  %3790 = vst [vmem:[%s3 + $0x2a0] sm:$0xff] %v3418
  %3791 = vst [vmem:[%s3 + $0x2a8] sm:$0xff] %v3420
  %3792 = vst [vmem:[%s3 + $0x2b0] sm:$0xff] %v3422
  %3793 = vst [vmem:[%s3 + $0x2b8] sm:$0xff] %v3424
  %3794 = vst [vmem:[%s3 + $0x2c0] sm:$0xff] %v3428
  %3795 = vst [vmem:[%s3 + $0x2c8] sm:$0xff] %v3430
  %3796 = vst [vmem:[%s3 + $0x2d0] sm:$0xff] %v3432
  %3797 = vst [vmem:[%s3 + $0x2d8] sm:$0xff] %v3434
  %3798 = vst [vmem:[%s3 + $0x2e0] sm:$0xff] %v3438
  %3799 = vst [vmem:[%s3 + $0x2e8] sm:$0xff] %v3440
  %3800 = vst [vmem:[%s3 + $0x2f0] sm:$0xff] %v3442
  %3801 = vst [vmem:[%s3 + $0x2f8] sm:$0xff] %v3444
  %3802 = vst [vmem:[%s3 + $0x300] sm:$0xff] %v3448
  %3803 = vst [vmem:[%s3 + $0x308] sm:$0xff] %v3450
  %3804 = vst [vmem:[%s3 + $0x310] sm:$0xff] %v3452
  %3805 = vst [vmem:[%s3 + $0x318] sm:$0xff] %v3454
  %3806 = vst [vmem:[%s3 + $0x320] sm:$0xff] %v3458
  %3807 = vst [vmem:[%s3 + $0x328] sm:$0xff] %v3460
  %3808 = vst [vmem:[%s3 + $0x330] sm:$0xff] %v3462
  %3809 = vst [vmem:[%s3 + $0x338] sm:$0xff] %v3464
  %3810 = vst [vmem:[%s3 + $0x340] sm:$0xff] %v3468
  %3811 = vst [vmem:[%s3 + $0x348] sm:$0xff] %v3470
  %3812 = vst [vmem:[%s3 + $0x350] sm:$0xff] %v3472
  %3813 = vst [vmem:[%s3 + $0x358] sm:$0xff] %v3474
  %3814 = vst [vmem:[%s3 + $0x360] sm:$0xff] %v3478
  %3815 = vst [vmem:[%s3 + $0x368] sm:$0xff] %v3480
  %3816 = vst [vmem:[%s3 + $0x370] sm:$0xff] %v3482
  %3817 = vst [vmem:[%s3 + $0x378] sm:$0xff] %v3484
  %3818 = vst [vmem:[%s3 + $0x380] sm:$0xff] %v3488
  %3819 = vst [vmem:[%s3 + $0x388] sm:$0xff] %v3490
  %3820 = vst [vmem:[%s3 + $0x390] sm:$0xff] %v3492
  %3821 = vst [vmem:[%s3 + $0x398] sm:$0xff] %v3494
  %3822 = vst [vmem:[%s3 + $0x3a0] sm:$0xff] %v3498
  %3823 = vst [vmem:[%s3 + $0x3a8] sm:$0xff] %v3500
  %3824 = vst [vmem:[%s3 + $0x3b0] sm:$0xff] %v3502
  %3825 = vst [vmem:[%s3 + $0x3b8] sm:$0xff] %v3504
  %3826 = vst [vmem:[%s3 + $0x3c0] sm:$0xff] %v3508
  %3827 = vst [vmem:[%s3 + $0x3c8] sm:$0xff] %v3510
  %3828 = vst [vmem:[%s3 + $0x3d0] sm:$0xff] %v3512
  %3829 = vst [vmem:[%s3 + $0x3d8] sm:$0xff] %v3514
  %3830 = vst [vmem:[%s3 + $0x3e0] sm:$0xff] %v3518
  %3831 = vst [vmem:[%s3 + $0x3e8] sm:$0xff] %v3520
  %3832 = vst [vmem:[%s3 + $0x3f0] sm:$0xff] %v3522
  %3833 = vst [vmem:[%s3 + $0x3f8] sm:$0xff] %v3524
  %3834 = vst [vmem:[%s3 + $0x400] sm:$0xff] %v3528
  %3835 = vst [vmem:[%s3 + $0x408] sm:$0xff] %v3530
  %3836 = vst [vmem:[%s3 + $0x410] sm:$0xff] %v3532
  %3837 = vst [vmem:[%s3 + $0x418] sm:$0xff] %v3534
  %3838 = vst [vmem:[%s3 + $0x420] sm:$0xff] %v3538
  %3839 = vst [vmem:[%s3 + $0x428] sm:$0xff] %v3540
  %3840 = vst [vmem:[%s3 + $0x430] sm:$0xff] %v3542
  %3841 = vst [vmem:[%s3 + $0x438] sm:$0xff] %v3544
  %3842 = vst [vmem:[%s3 + $0x440] sm:$0xff] %v3548
  %3843 = vst [vmem:[%s3 + $0x448] sm:$0xff] %v3550
  %3844 = vst [vmem:[%s3 + $0x450] sm:$0xff] %v3552
  %3845 = vst [vmem:[%s3 + $0x458] sm:$0xff] %v3554
  %3846 = vst [vmem:[%s3 + $0x460] sm:$0xff] %v3558
  %3847 = vst [vmem:[%s3 + $0x468] sm:$0xff] %v3560
  %3848 = vst [vmem:[%s3 + $0x470] sm:$0xff] %v3562
  %3849 = vst [vmem:[%s3 + $0x478] sm:$0xff] %v3564
  %3850 = vst [vmem:[%s3 + $0x480] sm:$0xff] %v3568
  %3851 = vst [vmem:[%s3 + $0x488] sm:$0xff] %v3570
  %3852 = vst [vmem:[%s3 + $0x490] sm:$0xff] %v3572
  %3853 = vst [vmem:[%s3 + $0x498] sm:$0xff] %v3574
  %3854 = vst [vmem:[%s3 + $0x4a0] sm:$0xff] %v3578
  %3855 = vst [vmem:[%s3 + $0x4a8] sm:$0xff] %v3580
  %3856 = vst [vmem:[%s3 + $0x4b0] sm:$0xff] %v3582
  %3857 = vst [vmem:[%s3 + $0x4b8] sm:$0xff] %v3584
  %3858 = vst [vmem:[%s3 + $0x4c0] sm:$0xff] %v3588
  %3859 = vst [vmem:[%s3 + $0x4c8] sm:$0xff] %v3590
  %3860 = vst [vmem:[%s3 + $0x4d0] sm:$0xff] %v3592
  %3861 = vst [vmem:[%s3 + $0x4d8] sm:$0xff] %v3594
  %3862 = vst [vmem:[%s3 + $0x4e0] sm:$0xff] %v3598
  %3863 = vst [vmem:[%s3 + $0x4e8] sm:$0xff] %v3600
  %3864 = vst [vmem:[%s3 + $0x4f0] sm:$0xff] %v3602
  %3865 = vst [vmem:[%s3 + $0x4f8] sm:$0xff] %v3604
  %3866 = vst [vmem:[%s3 + $0x500] sm:$0xff] %v3608
  %3867 = vst [vmem:[%s3 + $0x508] sm:$0xff] %v3610
  %3868 = vst [vmem:[%s3 + $0x510] sm:$0xff] %v3612
  %3869 = vst [vmem:[%s3 + $0x518] sm:$0xff] %v3614
  %3870 = vst [vmem:[%s3 + $0x520] sm:$0xff] %v3618
  %3871 = vst [vmem:[%s3 + $0x528] sm:$0xff] %v3620
  %3872 = vst [vmem:[%s3 + $0x530] sm:$0xff] %v3622
  %3873 = vst [vmem:[%s3 + $0x538] sm:$0xff] %v3624
  %3874 = vst [vmem:[%s3 + $0x540] sm:$0xff] %v3628
  %3875 = vst [vmem:[%s3 + $0x548] sm:$0xff] %v3630
  %3876 = vst [vmem:[%s3 + $0x550] sm:$0xff] %v3632
  %3877 = vst [vmem:[%s3 + $0x558] sm:$0xff] %v3634
  %3878 = vst [vmem:[%s3 + $0x560] sm:$0xff] %v3638
  %3879 = vst [vmem:[%s3 + $0x568] sm:$0xff] %v3640
  %3880 = vst [vmem:[%s3 + $0x570] sm:$0xff] %v3642
  %3881 = vst [vmem:[%s3 + $0x578] sm:$0xff] %v3644
  %3882 = vst [vmem:[%s3 + $0x580] sm:$0xff] %v3648
  %3883 = vst [vmem:[%s3 + $0x588] sm:$0xff] %v3650
  %3884 = vst [vmem:[%s3 + $0x590] sm:$0xff] %v3652
  %3885 = vst [vmem:[%s3 + $0x598] sm:$0xff] %v3654
  %3886 = vst [vmem:[%s3 + $0x5a0] sm:$0xff] %v3658
  %3887 = vst [vmem:[%s3 + $0x5a8] sm:$0xff] %v3660
  %3888 = vst [vmem:[%s3 + $0x5b0] sm:$0xff] %v3662
  %3889 = vst [vmem:[%s3 + $0x5b8] sm:$0xff] %v3664
  %3890 = vst [vmem:[%s3 + $0x5c0] sm:$0xff] %v3668
  %3891 = vst [vmem:[%s3 + $0x5c8] sm:$0xff] %v3670
  %3892 = vst [vmem:[%s3 + $0x5d0] sm:$0xff] %v3672
  %3893 = vst [vmem:[%s3 + $0x5d8] sm:$0xff] %v3674
  %3894 = vst [vmem:[%s3 + $0x5e0] sm:$0xff] %v3678
  %3895 = vst [vmem:[%s3 + $0x5e8] sm:$0xff] %v3680
  %3896 = vst [vmem:[%s3 + $0x5f0] sm:$0xff] %v3682
  %3897 = vst [vmem:[%s3 + $0x5f8] sm:$0xff] %v3684
  %3898 = vst [vmem:[%s3 + $0x600] sm:$0xff] %v3688
  %3899 = vst [vmem:[%s3 + $0x608] sm:$0xff] %v3690
  %3900 = vst [vmem:[%s3 + $0x610] sm:$0xff] %v3692
  %3901 = vst [vmem:[%s3 + $0x618] sm:$0xff] %v3694
  %3902 = vst [vmem:[%s3 + $0x620] sm:$0xff] %v3698
  %3903 = vst [vmem:[%s3 + $0x628] sm:$0xff] %v3700
  %3904 = vst [vmem:[%s3 + $0x630] sm:$0xff] %v3702
  %3905 = vst [vmem:[%s3 + $0x638] sm:$0xff] %v3704
  // Predicated region
  $region14: #{frequency_kd2_forward.7} parent=0 // pred_check
    _
  $region15: #{frequency_kd2_forward.7} parent=0 // pred_check_branch
    %3907 = sbr.rel (0) target = $region17
  $region16: #{frequency_kd2_forward.7} parent=0 // pred_region
    _
  $region17: #{frequency_kd2_forward.7} parent=0 // pred_fallthru
    _
  // Predicated region
  $region18: #{frequency_kd2_forward.7} parent=0 // pred_check
    _
  $region19: #{frequency_kd2_forward.7} parent=0 // pred_check_branch
    %3909 = sbr.rel (0) target = $region21
  $region20: #{frequency_kd2_forward.7} parent=0 // pred_region
    _
  $region21: #{frequency_kd2_forward.7} parent=0 // pred_fallthru
    _

// kernel: frequency_kd2_forward.9
$region0: #{frequency_kd2_forward.9}
  #allocation0 [shape = 'u32[]', space=smem, size = 0x4, offset = 0x4, fixed_abs, tag = 'smem constant byte address 0x4 - core index']
  #allocation1 [shape = 'u32[144,128]{1,0:T(1,128)}', space=vmem, size = 0x12000, scoped, tag = 'internal scratch']
  %s0 = inlined_call_operand.vmem [shape: f32[46,8,128], index: 0, kind: input, shape index: {}]
  %s1 = inlined_call_operand.vmem [shape: f32[8,128], index: 1, kind: output, shape index: {}]
  %s2 = sld [smem:[#allocation0]]
  $region18: #{frequency_kd2_forward.9} parent=0
    _
  %s4 = ssub.s32 1, %s2
  %s5 = scalar_select 0, %s4, %s2
  // Predicated region
  $region2: #{frequency_kd2_forward.9} parent=0 // pred_check
    _
  $region3: #{frequency_kd2_forward.9} parent=0 // pred_check_branch
    %7 = sbr.rel (0) target = $region5
  $region4: #{frequency_kd2_forward.9} parent=0 // pred_region
    _
  $region5: #{frequency_kd2_forward.9} parent=0 // pred_fallthru
    _
  %p8 = scmp.eq.s32.totalorder 0, 0
  // Predicated region
  $region6: #{frequency_kd2_forward.9} parent=0 // pred_check
    %p9 = pneg %p8
  $region7: #{frequency_kd2_forward.9} parent=0 // pred_check_branch
    %11 = sbr.rel (%p9) target = $region9
  $region8: #{frequency_kd2_forward.9} parent=0 // pred_region
    %12 = vst [vmem:[%s1] sm:$0xff] 0.0
  $region9: #{frequency_kd2_forward.9} parent=0 // pred_fallthru
    _
  %v13 = vld [vmem:[%s0] sm:$0xff]
  %v14 = vld [vmem:[%s0 + $0x8] sm:$0xff]
  %v15 = vld [vmem:[%s0 + $0x10] sm:$0xff]
  %v16 = vld [vmem:[%s0 + $0x18] sm:$0xff]
  %v17 = vld [vmem:[%s0 + $0x20] sm:$0xff]
  %v18 = vld [vmem:[%s0 + $0x28] sm:$0xff]
  %v19 = vld [vmem:[%s0 + $0x30] sm:$0xff]
  %v20 = vld [vmem:[%s0 + $0x38] sm:$0xff]
  %v21 = vld [vmem:[%s0 + $0x40] sm:$0xff]
  %v22 = vld [vmem:[%s0 + $0x48] sm:$0xff]
  %v23 = vld [vmem:[%s0 + $0x50] sm:$0xff]
  %v24 = vld [vmem:[%s0 + $0x58] sm:$0xff]
  %v25 = vld [vmem:[%s0 + $0x60] sm:$0xff]
  %v26 = vld [vmem:[%s0 + $0x68] sm:$0xff]
  %v27 = vld [vmem:[%s0 + $0x70] sm:$0xff]
  %v28 = vld [vmem:[%s0 + $0x78] sm:$0xff]
  %v29 = vld [vmem:[%s0 + $0x80] sm:$0xff]
  %v30 = vld [vmem:[%s0 + $0x88] sm:$0xff]
  %v31 = vld [vmem:[%s0 + $0x90] sm:$0xff]
  %v32 = vld [vmem:[%s0 + $0x98] sm:$0xff]
  %v33 = vld [vmem:[%s0 + $0xa0] sm:$0xff]
  %v34 = vld [vmem:[%s0 + $0xa8] sm:$0xff]
  %v35 = vld [vmem:[%s0 + $0xb0] sm:$0xff]
  %v36 = vld [vmem:[%s0 + $0xb8] sm:$0xff]
  %v37 = vld [vmem:[%s0 + $0xc0] sm:$0xff]
  %v38 = vld [vmem:[%s0 + $0xc8] sm:$0xff]
  %v39 = vld [vmem:[%s0 + $0xd0] sm:$0xff]
  %v40 = vld [vmem:[%s0 + $0xd8] sm:$0xff]
  %v41 = vld [vmem:[%s0 + $0xe0] sm:$0xff]
  %v42 = vld [vmem:[%s0 + $0xe8] sm:$0xff]
  %v43 = vld [vmem:[%s0 + $0xf0] sm:$0xff]
  %v44 = vld [vmem:[%s0 + $0xf8] sm:$0xff]
  %v45 = vld [vmem:[%s0 + $0x100] sm:$0xff]
  %v46 = vld [vmem:[%s0 + $0x108] sm:$0xff]
  %v47 = vld [vmem:[%s0 + $0x110] sm:$0xff]
  %v48 = vld [vmem:[%s0 + $0x118] sm:$0xff]
  %v49 = vld [vmem:[%s0 + $0x120] sm:$0xff]
  %v50 = vld [vmem:[%s0 + $0x128] sm:$0xff]
  %v51 = vld [vmem:[%s0 + $0x130] sm:$0xff]
  %v52 = vld [vmem:[%s0 + $0x138] sm:$0xff]
  %v53 = vld [vmem:[%s0 + $0x140] sm:$0xff]
  %v54 = vld [vmem:[%s0 + $0x148] sm:$0xff]
  %v55 = vld [vmem:[%s0 + $0x150] sm:$0xff]
  %v56 = vld [vmem:[%s0 + $0x158] sm:$0xff]
  %v57 = vld [vmem:[%s0 + $0x160] sm:$0xff]
  %v58 = vld [vmem:[%s0 + $0x168] sm:$0xff]
  %v59 = vld [vmem:[%s1] sm:$0xff]
  %v60 = vmul.f32 %v13, %v13
  %v61 = vmul.f32 %v14, %v14
  %v62 = vmul.f32 %v15, %v15
  %v63 = vmul.f32 %v16, %v16
  %v64 = vmul.f32 %v17, %v17
  %v65 = vmul.f32 %v18, %v18
  %v66 = vmul.f32 %v19, %v19
  %v67 = vmul.f32 %v20, %v20
  %v68 = vmul.f32 %v21, %v21
  %v69 = vmul.f32 %v22, %v22
  %v70 = vmul.f32 %v23, %v23
  %v71 = vmul.f32 %v24, %v24
  %v72 = vmul.f32 %v25, %v25
  %v73 = vmul.f32 %v26, %v26
  %v74 = vmul.f32 %v27, %v27
  %v75 = vmul.f32 %v28, %v28
  %v76 = vmul.f32 %v29, %v29
  %v77 = vmul.f32 %v30, %v30
  %v78 = vmul.f32 %v31, %v31
  %v79 = vmul.f32 %v32, %v32
  %v80 = vmul.f32 %v33, %v33
  %v81 = vmul.f32 %v34, %v34
  %v82 = vmul.f32 %v35, %v35
  %v83 = vmul.f32 %v36, %v36
  %v84 = vmul.f32 %v37, %v37
  %v85 = vmul.f32 %v38, %v38
  %v86 = vmul.f32 %v39, %v39
  %v87 = vmul.f32 %v40, %v40
  %v88 = vmul.f32 %v41, %v41
  %v89 = vmul.f32 %v42, %v42
  %v90 = vmul.f32 %v43, %v43
  %v91 = vmul.f32 %v44, %v44
  %v92 = vmul.f32 %v45, %v45
  %v93 = vmul.f32 %v46, %v46
  %v94 = vmul.f32 %v47, %v47
  %v95 = vmul.f32 %v48, %v48
  %v96 = vmul.f32 %v49, %v49
  %v97 = vmul.f32 %v50, %v50
  %v98 = vmul.f32 %v51, %v51
  %v99 = vmul.f32 %v52, %v52
  %v100 = vmul.f32 %v53, %v53
  %v101 = vmul.f32 %v54, %v54
  %v102 = vmul.f32 %v55, %v55
  %v103 = vmul.f32 %v56, %v56
  %v104 = vmul.f32 %v57, %v57
  %v105 = vmul.f32 %v58, %v58
  %v106 = vadd.f32 %v60, %v61
  %v107 = vadd.f32 %v106, %v62
  %v108 = vadd.f32 %v107, %v63
  %v109 = vadd.f32 %v108, %v64
  %v110 = vadd.f32 %v109, %v65
  %v111 = vadd.f32 %v110, %v66
  %v112 = vadd.f32 %v111, %v67
  %v113 = vadd.f32 %v112, %v68
  %v114 = vadd.f32 %v113, %v69
  %v115 = vadd.f32 %v114, %v70
  %v116 = vadd.f32 %v115, %v71
  %v117 = vadd.f32 %v116, %v72
  %v118 = vadd.f32 %v117, %v73
  %v119 = vadd.f32 %v118, %v74
  %v120 = vadd.f32 %v119, %v75
  %v121 = vadd.f32 %v120, %v76
  %v122 = vadd.f32 %v121, %v77
  %v123 = vadd.f32 %v122, %v78
  %v124 = vadd.f32 %v123, %v79
  %v125 = vadd.f32 %v124, %v80
  %v126 = vadd.f32 %v125, %v81
  %v127 = vadd.f32 %v126, %v82
  %v128 = vadd.f32 %v127, %v83
  %v129 = vadd.f32 %v128, %v84
  %v130 = vadd.f32 %v129, %v85
  %v131 = vadd.f32 %v130, %v86
  %v132 = vadd.f32 %v131, %v87
  %v133 = vadd.f32 %v132, %v88
  %v134 = vadd.f32 %v133, %v89
  %v135 = vadd.f32 %v134, %v90
  %v136 = vadd.f32 %v135, %v91
  %v137 = vadd.f32 %v136, %v92
  %v138 = vadd.f32 %v137, %v93
  %v139 = vadd.f32 %v138, %v94
  %v140 = vadd.f32 %v139, %v95
  %v141 = vadd.f32 %v140, %v96
  %v142 = vadd.f32 %v141, %v97
  %v143 = vadd.f32 %v142, %v98
  %v144 = vadd.f32 %v143, %v99
  %v145 = vadd.f32 %v144, %v100
  %v146 = vadd.f32 %v145, %v101
  %v147 = vadd.f32 %v146, %v102
  %v148 = vadd.f32 %v147, %v103
  %v149 = vadd.f32 %v148, %v104
  %v150 = vadd.f32 %v149, %v105
  %v151 = vadd.f32 %v59, %v150
  %152 = vst [vmem:[%s1] sm:$0xff] %v151
  // Predicated region
  $region10: #{frequency_kd2_forward.9} parent=0 // pred_check
    _
  $region11: #{frequency_kd2_forward.9} parent=0 // pred_check_branch
    %154 = sbr.rel (0) target = $region13
  $region12: #{frequency_kd2_forward.9} parent=0 // pred_region
    _
  $region13: #{frequency_kd2_forward.9} parent=0 // pred_fallthru
    _
  // Predicated region
  $region14: #{frequency_kd2_forward.9} parent=0 // pred_check
    _
  $region15: #{frequency_kd2_forward.9} parent=0 // pred_check_branch
    %156 = sbr.rel (0) target = $region17
  $region16: #{frequency_kd2_forward.9} parent=0 // pred_region
    _
  $region17: #{frequency_kd2_forward.9} parent=0 // pred_fallthru
    _

</llo_original>
